<compile_context>
chip_gen: v5e
topology: v5e:2x2
jax: 0.10.0
libtpu: 0.0.40
codegen_flags: <defaults>
</compile_context>

<pallas_src>
import math

import jax
import jax.numpy as jnp
from jax import lax
from jax.experimental import pallas as pl
from jax.experimental.pallas import tpu as pltpu  # noqa: F401  (kept per harness convention)

# ---------------- model config (small, consistent with the module) -----------
VOCAB = 50
D_MODEL = 32
N_LAYERS = 2
HEADS = 4
D_FF = 128          # FeedForward hidden width (tutorial default 2048; kept small)
D_HEAD = D_MODEL // HEADS
EPS = 1e-6          # Norm eps
MAX_LEN = 64
_SCALE = 1.0 / math.sqrt(D_HEAD)
_SQRT_D = math.sqrt(D_MODEL)
_TRANS_B = (((1,), (1,)), ((), ()))   # contract last dims: q @ k^T without transpose


# ---------------- the single fused kernel -------------------------------------
def _decoder_kernel(
    tok_ref, embed_ref, pe_ref, enc_ref, tmask_ref, smask_ref,   # ids + tables + masks
    na_ref, nb_ref,                                              # Norm params (3*L+1, 1, D)
    wq1_ref, bq1_ref, wk1_ref, bk1_ref, wv1_ref, bv1_ref, wo1_ref, bo1_ref,   # self-attn
    wq2_ref, bq2_ref, wk2_ref, bk2_ref, wv2_ref, bv2_ref, wo2_ref, bo2_ref,   # cross-attn
    ffw1_ref, ffb1_ref, ffw2_ref, ffb2_ref,                      # feed-forward
    o_ref,                                                       # output (B*S, D)
):
    n_layers = wq1_ref.shape[0]
    heads = wq1_ref.shape[1]
    S = tmask_ref.shape[1]                 # target sequence length
    BS = tok_ref.shape[0]                  # B*S
    B = BS // S
    S_src = smask_ref.shape[1]

    # ---- prologue: embedding gather (one-hot matmul) * sqrt(D) + PE ---------
    tok = tok_ref[...]                                             # (B*S, 1) int32
    vocab_iota = lax.broadcasted_iota(jnp.int32, (BS, VOCAB), 1)   # (B*S, VOCAB)
    onehot = (vocab_iota == tok).astype(jnp.float32)
    x = (jnp.dot(onehot, embed_ref[...], preferred_element_type=jnp.float32)
         * _SQRT_D + pe_ref[...])                                  # (B*S, D) residual stream

    enc = enc_ref[...]                                             # (B*S_src, D)

    # ---- additive masks, built once (0 => allowed, -1e9 => masked) ----------
    tmask_add = (tmask_ref[...] - 1.0) * 1e9                       # (B*S, S)
    smask_add = (smask_ref[...] - 1.0) * 1e9                       # (B, S_src)
    self_masks = [tmask_add[b * S:(b + 1) * S, :] for b in range(B)]      # (S, S)
    cross_masks = [smask_add[b:b + 1, :] for b in range(B)]               # (1, S_src)

    def norm(v, idx):
        # alpha * (v - mean) / (std + eps) + bias ; unbiased std (torch .std()).
        a = na_ref[idx]                    # (1, D)
        bb = nb_ref[idx]                   # (1, D)
        mean = jnp.mean(v, axis=-1, keepdims=True)
        vc = v - mean
        var = jnp.sum(vc * vc, axis=-1, keepdims=True) * (1.0 / (D_MODEL - 1))
        inv = 1.0 / (jnp.sqrt(var) + EPS)          # exact: strict torch parity
        return a * (vc * inv) + bb

    def mha(xq, xkv, masks, l, wq_ref, bq_ref, wk_ref, bk_ref, wv_ref, bv_ref,
            wo_ref, bo_ref, Sq, Sk):
        # Head-major weights: every per-head projection lands at lane offset 0;
        # per-batch slicing below is sublane-aligned (S, S_src multiples of 8).
        wq_l, wk_l, wv_l, wo_l = wq_ref[l], wk_ref[l], wv_ref[l], wo_ref[l]
        bq_l, bk_l, bv_l = bq_ref[l], bk_ref[l], bv_ref[l]
        bo_l = bo_ref[l]                                           # (1, D)
        qs = [jnp.dot(xq, wq_l[h], preferred_element_type=jnp.float32) + bq_l[h]
              for h in range(heads)]                               # (B*Sq, Dh)
        ks = [jnp.dot(xkv, wk_l[h], preferred_element_type=jnp.float32) + bk_l[h]
              for h in range(heads)]                               # (B*Sk, Dh)
        vs = [jnp.dot(xkv, wv_l[h], preferred_element_type=jnp.float32) + bv_l[h]
              for h in range(heads)]                               # (B*Sk, Dh)
        blocks = []
        for b in range(B):
            madd = masks[b]                                        # bcast to (Sq, Sk)
            contribs = []
            for h in range(heads):
                qh = qs[h][b * Sq:(b + 1) * Sq, :]                 # (Sq, Dh)
                kh = ks[h][b * Sk:(b + 1) * Sk, :]                 # (Sk, Dh)
                vh = vs[h][b * Sk:(b + 1) * Sk, :]                 # (Sk, Dh)
                s = lax.dot_general(qh, kh, _TRANS_B,
                                    preferred_element_type=jnp.float32) * _SCALE
                s = s + madd                                       # additive mask
                s = s - jnp.max(s, axis=-1, keepdims=True)
                p = jnp.exp(s)
                p = p / jnp.sum(p, axis=-1, keepdims=True)         # exact softmax
                oh = jnp.dot(p, vh, preferred_element_type=jnp.float32)     # (Sq, Dh)
                # concat-of-heads @ Wo == sum_h oh @ Wo_h
                contribs.append(jnp.dot(oh, wo_l[h],
                                        preferred_element_type=jnp.float32))  # (Sq, D)
            # balanced-tree reduction of head contributions
            while len(contribs) > 1:
                nxt = []
                for i in range(0, len(contribs) - 1, 2):
                    nxt.append(contribs[i] + contribs[i + 1])
                if len(contribs) % 2:
                    nxt.append(contribs[-1])
                contribs = nxt
            blocks.append(contribs[0] + bo_l)                      # (Sq, D) in vregs
        return jnp.concatenate(blocks, axis=0) if B > 1 else blocks[0]

    for l in range(n_layers):
        # ---- masked self-attention sublayer (dropout_1 = identity in eval) ----
        x2 = norm(x, 3 * l + 0)
        x = x + mha(x2, x2, self_masks, l,
                    wq1_ref, bq1_ref, wk1_ref, bk1_ref, wv1_ref, bv1_ref,
                    wo1_ref, bo1_ref, S, S)

        # ---- encoder-decoder cross-attention sublayer (dropout_2 = identity) --
        x2 = norm(x, 3 * l + 1)
        x = x + mha(x2, enc, cross_masks, l,
                    wq2_ref, bq2_ref, wk2_ref, bk2_ref, wv2_ref, bv2_ref,
                    wo2_ref, bo2_ref, S, S_src)

        # ---- position-wise feed-forward sublayer (dropout_3 = identity) -------
        x2 = norm(x, 3 * l + 2)
        h1 = jnp.maximum(
            jnp.dot(x2, ffw1_ref[l],
                    preferred_element_type=jnp.float32) + ffb1_ref[l], 0.0)  # (B*S, D_FF)
        x = x + jnp.dot(h1, ffw2_ref[l],
                        preferred_element_type=jnp.float32) + ffb2_ref[l]

    # ---- final Norm --------------------------------------------------------
    o_ref[...] = norm(x, 3 * n_layers)


# ---------------- positional encoding table ------------------------------------
def make_pe_table(max_len, d_model):
    pos = jnp.arange(max_len, dtype=jnp.float32)[:, None]
    i = jnp.arange(0, d_model, 2, dtype=jnp.float32)
    div = jnp.power(10000.0, i / d_model)
    pe = jnp.zeros((max_len, d_model), jnp.float32)
    pe = pe.at[:, 0::2].set(jnp.sin(pos / div))
    pe = pe.at[:, 1::2].set(jnp.cos(pos / div))
    return pe


PE_TABLE = make_pe_table(MAX_LEN, D_MODEL)


# ---------------- forward (thin JAX glue around the single kernel) -------------
def decoder_forward(trg, e_outputs, src_mask, trg_mask, pp):
    """trg: (B,S) int ids; e_outputs: (B,S_src,D); src_mask: (B,1,S_src);
    trg_mask: (B,S,S) or (B,1,S). Everything else happens inside one kernel."""
    B, S = trg.shape
    S_src = e_outputs.shape[1]

    # Only free reshapes / compile-time constants remain outside the kernel.
    tok = trg.reshape(B * S, 1).astype(jnp.int32)
    pe_bs = jnp.tile(PE_TABLE[:S], (B, 1))                    # constant-folded under jit
    tmask2d = jnp.broadcast_to(trg_mask, (B, S, S)).astype(jnp.float32).reshape(B * S, S)
    smask2d = src_mask.astype(jnp.float32).reshape(B, S_src)

    out2d = pl.pallas_call(
        _decoder_kernel,
        out_shape=jax.ShapeDtypeStruct((B * S, D_MODEL), jnp.float32),
    )(
        tok, pp["embed"], pe_bs,
        e_outputs.reshape(B * S_src, D_MODEL),
        tmask2d, smask2d,
        pp["norm_a"], pp["norm_b"],
        pp["wq1"], pp["bq1"], pp["wk1"], pp["bk1"], pp["wv1"], pp["bv1"], pp["wo1"], pp["bo1"],
        pp["wq2"], pp["bq2"], pp["wk2"], pp["bk2"], pp["wv2"], pp["bv2"], pp["wo2"], pp["bo2"],
        pp["ffw1"], pp["ffb1"], pp["ffw2"], pp["ffb2"],
    )
    return out2d.reshape(B, S, D_MODEL)


# ---------------- deterministic parameter init ---------------------------------
def init_params(key):
    keys = iter(jax.random.split(key, 64))

    def dense(shape, scale=0.02):
        return scale * jax.random.normal(next(keys), shape, dtype=jnp.float32)

    def attn_params():
        return {
            "wq": dense((D_MODEL, D_MODEL)), "bq": jnp.zeros((D_MODEL,), jnp.float32),
            "wk": dense((D_MODEL, D_MODEL)), "bk": jnp.zeros((D_MODEL,), jnp.float32),
            "wv": dense((D_MODEL, D_MODEL)), "bv": jnp.zeros((D_MODEL,), jnp.float32),
            "wo": dense((D_MODEL, D_MODEL)), "bo": jnp.zeros((D_MODEL,), jnp.float32),
        }

    ones_d = jnp.ones((D_MODEL,), jnp.float32)
    zeros_d = jnp.zeros((D_MODEL,), jnp.float32)
    # generate_multiple_layers deepcopies ONE layer -> all layers share identical init.
    layer = {
        "n1_a": ones_d, "n1_b": zeros_d,
        "n2_a": ones_d, "n2_b": zeros_d,
        "n3_a": ones_d, "n3_b": zeros_d,
        "attn1": attn_params(),
        "attn2": attn_params(),
        "ff_w1": dense((D_MODEL, D_FF)), "ff_b1": jnp.zeros((D_FF,), jnp.float32),
        "ff_w2": dense((D_FF, D_MODEL)), "ff_b2": jnp.zeros((D_MODEL,), jnp.float32),
    }
    return {
        "embed": dense((VOCAB, D_MODEL), scale=1.0),
        "layers": [layer for _ in range(N_LAYERS)],
        "norm_a": ones_d,
        "norm_b": zeros_d,
    }


def pack_params(params):
    """Pack per-layer params into stacked, head-major, kernel-friendly arrays."""
    layers = params["layers"]

    def stack(fn):
        return jnp.stack([fn(p) for p in layers], axis=0)

    def head_major_in(w):      # (D, D) -> (H, D, Dh): head h = columns h*Dh:(h+1)*Dh
        return jnp.transpose(w.reshape(D_MODEL, HEADS, D_HEAD), (1, 0, 2))

    def head_major_out(w):     # (D, D) -> (H, Dh, D): head h = rows h*Dh:(h+1)*Dh
        return w.reshape(HEADS, D_HEAD, D_MODEL)

    def head_bias(b):          # (D,) -> (H, 1, Dh)
        return b.reshape(HEADS, 1, D_HEAD)

    packed = {
        "embed": params["embed"],
        # Norm params: layer l uses rows 3l..3l+2, final norm is the last row.
        "norm_a": jnp.stack(
            [p[k] for p in layers for k in ("n1_a", "n2_a", "n3_a")]
            + [params["norm_a"]])[:, None, :],
        "norm_b": jnp.stack(
            [p[k] for p in layers for k in ("n1_b", "n2_b", "n3_b")]
            + [params["norm_b"]])[:, None, :],
        # Feed-forward.
        "ffw1": stack(lambda p: p["ff_w1"]),
        "ffb1": stack(lambda p: p["ff_b1"][None, :]),
        "ffw2": stack(lambda p: p["ff_w2"]),
        "ffb2": stack(lambda p: p["ff_b2"][None, :]),
    }
    for tag, src in (("1", "attn1"), ("2", "attn2")):
        packed[f"wq{tag}"] = stack(lambda p, s=src: head_major_in(p[s]["wq"]))
        packed[f"bq{tag}"] = stack(lambda p, s=src: head_bias(p[s]["bq"]))
        packed[f"wk{tag}"] = stack(lambda p, s=src: head_major_in(p[s]["wk"]))
        packed[f"bk{tag}"] = stack(lambda p, s=src: head_bias(p[s]["bk"]))
        packed[f"wv{tag}"] = stack(lambda p, s=src: head_major_in(p[s]["wv"]))
        packed[f"bv{tag}"] = stack(lambda p, s=src: head_bias(p[s]["bv"]))
        packed[f"wo{tag}"] = stack(lambda p, s=src: head_major_out(p[s]["wo"]))
        packed[f"bo{tag}"] = stack(lambda p, s=src: p[s]["bo"][None, :])
    return packed


# ---------------- main ----------------------------------------------------------
if __name__ == "__main__":
    B, S_TRG, S_SRC = 2, 8, 8
    key = jax.random.PRNGKey(0)
    k_trg, k_enc = jax.random.split(key)
    trg = jax.random.randint(k_trg, (B, S_TRG), 0, VOCAB, dtype=jnp.int32)
    e_outputs = jax.random.normal(k_enc, (B, S_SRC, D_MODEL), dtype=jnp.float32)
    src_mask = jnp.ones((B, 1, S_SRC), jnp.float32)                       # no padding
    trg_mask = jnp.broadcast_to(
        jnp.tril(jnp.ones((S_TRG, S_TRG), jnp.float32))[None], (B, S_TRG, S_TRG)
    )  # causal (no-peek) mask

    params = init_params(jax.random.PRNGKey(1234))
    packed = pack_params(params)

    out = jax.jit(decoder_forward)(trg, e_outputs, src_mask, trg_mask, packed)
    jax.block_until_ready(out)
    assert out.shape == (B, S_TRG, D_MODEL) and out.dtype == jnp.float32
    assert bool(jnp.all(jnp.isfinite(out)))
    print("KERNEL_OK")
</pallas_src>

<mosaic_0001>
module attributes {stable_mosaic.version = 11 : i64} {
  func.func @_decoder_kernel(%arg0: memref<16x1xi32, #tpu.memory_space<vmem>>, %arg1: memref<50x32xf32, #tpu.memory_space<vmem>>, %arg2: memref<16x32xf32, #tpu.memory_space<vmem>>, %arg3: memref<16x32xf32, #tpu.memory_space<vmem>>, %arg4: memref<16x8xf32, #tpu.memory_space<vmem>>, %arg5: memref<2x8xf32, #tpu.memory_space<vmem>>, %arg6: memref<7x1x32xf32, #tpu.memory_space<vmem>>, %arg7: memref<7x1x32xf32, #tpu.memory_space<vmem>>, %arg8: memref<2x4x32x8xf32, #tpu.memory_space<vmem>>, %arg9: memref<2x4x1x8xf32, #tpu.memory_space<vmem>>, %arg10: memref<2x4x32x8xf32, #tpu.memory_space<vmem>>, %arg11: memref<2x4x1x8xf32, #tpu.memory_space<vmem>>, %arg12: memref<2x4x32x8xf32, #tpu.memory_space<vmem>>, %arg13: memref<2x4x1x8xf32, #tpu.memory_space<vmem>>, %arg14: memref<2x4x8x32xf32, #tpu.memory_space<vmem>>, %arg15: memref<2x1x32xf32, #tpu.memory_space<vmem>>, %arg16: memref<2x4x32x8xf32, #tpu.memory_space<vmem>>, %arg17: memref<2x4x1x8xf32, #tpu.memory_space<vmem>>, %arg18: memref<2x4x32x8xf32, #tpu.memory_space<vmem>>, %arg19: memref<2x4x1x8xf32, #tpu.memory_space<vmem>>, %arg20: memref<2x4x32x8xf32, #tpu.memory_space<vmem>>, %arg21: memref<2x4x1x8xf32, #tpu.memory_space<vmem>>, %arg22: memref<2x4x8x32xf32, #tpu.memory_space<vmem>>, %arg23: memref<2x1x32xf32, #tpu.memory_space<vmem>>, %arg24: memref<2x32x128xf32, #tpu.memory_space<vmem>>, %arg25: memref<2x1x128xf32, #tpu.memory_space<vmem>>, %arg26: memref<2x128x32xf32, #tpu.memory_space<vmem>>, %arg27: memref<2x1x32xf32, #tpu.memory_space<vmem>>, %arg28: memref<16x32xf32, #tpu.memory_space<vmem>>) attributes {dimension_semantics = [], scalar_prefetch = 0 : i64, scratch_operands = 0 : i64, tpu.core_type = #tpu.core_type<tc>} {
    %c0 = arith.constant 0 : index
    %c0_0 = arith.constant 0 : index
    %0 = vector.load %arg0[%c0, %c0_0] : memref<16x1xi32, #tpu.memory_space<vmem>>, vector<16x1xi32>
    %1 = tpu.iota {dimensions = array<i32: 1>} : vector<16x50xi32>
    %2 = vector.broadcast %0 : vector<16x1xi32> to vector<16x50xi32>
    %3 = arith.cmpi eq, %1, %2 : vector<16x50xi32>
    %4 = arith.extui %3 : vector<16x50xi1> to vector<16x50xi32>
    %5 = arith.sitofp %4 : vector<16x50xi32> to vector<16x50xf32>
    %c0_1 = arith.constant 0 : index
    %c0_2 = arith.constant 0 : index
    %6 = vector.load %arg1[%c0_1, %c0_2] : memref<50x32xf32, #tpu.memory_space<vmem>>, vector<50x32xf32>
    %cst = arith.constant dense<0.000000e+00> : vector<16x32xf32>
    %7 = tpu.matmul %5, %6, %cst {dimension_numbers = #tpu.dot_dimension_numbers<[1], [0], [0], [1], [0, 0, 1, 1], [], []>} : vector<16x50xf32>, vector<50x32xf32>, vector<16x32xf32> -> vector<16x32xf32>
    %cst_3 = arith.constant 5.65685415 : f32
    %8 = vector.broadcast %cst_3 : f32 to vector<16x32xf32>
    %9 = arith.mulf %7, %8 : vector<16x32xf32>
    %c0_4 = arith.constant 0 : index
    %c0_5 = arith.constant 0 : index
    %10 = vector.load %arg2[%c0_4, %c0_5] : memref<16x32xf32, #tpu.memory_space<vmem>>, vector<16x32xf32>
    %11 = arith.addf %9, %10 : vector<16x32xf32>
    %c0_6 = arith.constant 0 : index
    %c0_7 = arith.constant 0 : index
    %12 = vector.load %arg3[%c0_6, %c0_7] : memref<16x32xf32, #tpu.memory_space<vmem>>, vector<16x32xf32>
    %c0_8 = arith.constant 0 : index
    %c0_9 = arith.constant 0 : index
    %13 = vector.load %arg4[%c0_8, %c0_9] : memref<16x8xf32, #tpu.memory_space<vmem>>, vector<16x8xf32>
    %cst_10 = arith.constant 1.000000e+00 : f32
    %14 = vector.broadcast %cst_10 : f32 to vector<16x8xf32>
    %15 = arith.subf %13, %14 : vector<16x8xf32>
    %cst_11 = arith.constant 1.000000e+09 : f32
    %16 = vector.broadcast %cst_11 : f32 to vector<16x8xf32>
    %17 = arith.mulf %15, %16 : vector<16x8xf32>
    %c0_12 = arith.constant 0 : index
    %c0_13 = arith.constant 0 : index
    %18 = vector.load %arg5[%c0_12, %c0_13] : memref<2x8xf32, #tpu.memory_space<vmem>>, vector<2x8xf32>
    %cst_14 = arith.constant 1.000000e+00 : f32
    %19 = vector.broadcast %cst_14 : f32 to vector<2x8xf32>
    %20 = arith.subf %18, %19 : vector<2x8xf32>
    %cst_15 = arith.constant 1.000000e+09 : f32
    %21 = vector.broadcast %cst_15 : f32 to vector<2x8xf32>
    %22 = arith.mulf %20, %21 : vector<2x8xf32>
    %23 = vector.extract_strided_slice %17 {offsets = [0, 0], sizes = [8, 8], strides = [1, 1]} : vector<16x8xf32> to vector<8x8xf32>
    %24 = vector.extract_strided_slice %17 {offsets = [8, 0], sizes = [8, 8], strides = [1, 1]} : vector<16x8xf32> to vector<8x8xf32>
    %25 = vector.extract_strided_slice %22 {offsets = [0, 0], sizes = [1, 8], strides = [1, 1]} : vector<2x8xf32> to vector<1x8xf32>
    %26 = vector.extract_strided_slice %22 {offsets = [1, 0], sizes = [1, 8], strides = [1, 1]} : vector<2x8xf32> to vector<1x8xf32>
    %c0_16 = arith.constant 0 : index
    %c0_17 = arith.constant 0 : index
    %c0_18 = arith.constant 0 : index
    %27 = vector.load %arg6[%c0_16, %c0_17, %c0_18] : memref<7x1x32xf32, #tpu.memory_space<vmem>>, vector<1x1x32xf32>
    %28 = vector.shape_cast %27 : vector<1x1x32xf32> to vector<1x32xf32>
    %c0_19 = arith.constant 0 : index
    %c0_20 = arith.constant 0 : index
    %c0_21 = arith.constant 0 : index
    %29 = vector.load %arg7[%c0_19, %c0_20, %c0_21] : memref<7x1x32xf32, #tpu.memory_space<vmem>>, vector<1x1x32xf32>
    %30 = vector.shape_cast %29 : vector<1x1x32xf32> to vector<1x32xf32>
    %cst_22 = arith.constant dense<0.000000e+00> : vector<16xf32>
    %31 = vector.multi_reduction <add>, %11, %cst_22 [1] : vector<16x32xf32> to vector<16xf32>
    %32 = vector.shape_cast %31 : vector<16xf32> to vector<16x1xf32>
    %cst_23 = arith.constant 3.200000e+01 : f32
    %33 = vector.broadcast %cst_23 : f32 to vector<16x1xf32>
    %34 = arith.divf %32, %33 : vector<16x1xf32>
    %35 = vector.broadcast %34 : vector<16x1xf32> to vector<16x32xf32>
    %36 = arith.subf %11, %35 : vector<16x32xf32>
    %37 = arith.mulf %36, %36 : vector<16x32xf32>
    %cst_24 = arith.constant dense<0.000000e+00> : vector<16xf32>
    %38 = vector.multi_reduction <add>, %37, %cst_24 [1] : vector<16x32xf32> to vector<16xf32>
    %39 = vector.shape_cast %38 : vector<16xf32> to vector<16x1xf32>
    %cst_25 = arith.constant 0.0322580636 : f32
    %40 = vector.broadcast %cst_25 : f32 to vector<16x1xf32>
    %41 = arith.mulf %39, %40 : vector<16x1xf32>
    %42 = math.sqrt %41 : vector<16x1xf32>
    %cst_26 = arith.constant 9.99999997E-7 : f32
    %43 = vector.broadcast %cst_26 : f32 to vector<16x1xf32>
    %44 = arith.addf %42, %43 : vector<16x1xf32>
    %cst_27 = arith.constant 1.000000e+00 : f32
    %45 = vector.broadcast %cst_27 : f32 to vector<16x1xf32>
    %46 = arith.divf %45, %44 : vector<16x1xf32>
    %47 = vector.broadcast %46 : vector<16x1xf32> to vector<16x32xf32>
    %48 = arith.mulf %36, %47 : vector<16x32xf32>
    %49 = vector.broadcast %28 : vector<1x32xf32> to vector<16x32xf32>
    %50 = arith.mulf %49, %48 : vector<16x32xf32>
    %51 = vector.broadcast %30 : vector<1x32xf32> to vector<16x32xf32>
    %52 = arith.addf %50, %51 : vector<16x32xf32>
    %c0_28 = arith.constant 0 : index
    %c0_29 = arith.constant 0 : index
    %c0_30 = arith.constant 0 : index
    %c0_31 = arith.constant 0 : index
    %53 = vector.load %arg8[%c0_28, %c0_29, %c0_30, %c0_31] : memref<2x4x32x8xf32, #tpu.memory_space<vmem>>, vector<1x4x32x8xf32>
    %54 = vector.shape_cast %53 : vector<1x4x32x8xf32> to vector<4x32x8xf32>
    %c0_32 = arith.constant 0 : index
    %c0_33 = arith.constant 0 : index
    %c0_34 = arith.constant 0 : index
    %c0_35 = arith.constant 0 : index
    %55 = vector.load %arg10[%c0_32, %c0_33, %c0_34, %c0_35] : memref<2x4x32x8xf32, #tpu.memory_space<vmem>>, vector<1x4x32x8xf32>
    %56 = vector.shape_cast %55 : vector<1x4x32x8xf32> to vector<4x32x8xf32>
    %c0_36 = arith.constant 0 : index
    %c0_37 = arith.constant 0 : index
    %c0_38 = arith.constant 0 : index
    %c0_39 = arith.constant 0 : index
    %57 = vector.load %arg12[%c0_36, %c0_37, %c0_38, %c0_39] : memref<2x4x32x8xf32, #tpu.memory_space<vmem>>, vector<1x4x32x8xf32>
    %58 = vector.shape_cast %57 : vector<1x4x32x8xf32> to vector<4x32x8xf32>
    %c0_40 = arith.constant 0 : index
    %c0_41 = arith.constant 0 : index
    %c0_42 = arith.constant 0 : index
    %c0_43 = arith.constant 0 : index
    %59 = vector.load %arg14[%c0_40, %c0_41, %c0_42, %c0_43] : memref<2x4x8x32xf32, #tpu.memory_space<vmem>>, vector<1x4x8x32xf32>
    %60 = vector.shape_cast %59 : vector<1x4x8x32xf32> to vector<4x8x32xf32>
    %c0_44 = arith.constant 0 : index
    %c0_45 = arith.constant 0 : index
    %c0_46 = arith.constant 0 : index
    %c0_47 = arith.constant 0 : index
    %61 = vector.load %arg9[%c0_44, %c0_45, %c0_46, %c0_47] : memref<2x4x1x8xf32, #tpu.memory_space<vmem>>, vector<1x4x1x8xf32>
    %62 = vector.shape_cast %61 : vector<1x4x1x8xf32> to vector<4x1x8xf32>
    %c0_48 = arith.constant 0 : index
    %c0_49 = arith.constant 0 : index
    %c0_50 = arith.constant 0 : index
    %c0_51 = arith.constant 0 : index
    %63 = vector.load %arg11[%c0_48, %c0_49, %c0_50, %c0_51] : memref<2x4x1x8xf32, #tpu.memory_space<vmem>>, vector<1x4x1x8xf32>
    %64 = vector.shape_cast %63 : vector<1x4x1x8xf32> to vector<4x1x8xf32>
    %c0_52 = arith.constant 0 : index
    %c0_53 = arith.constant 0 : index
    %c0_54 = arith.constant 0 : index
    %c0_55 = arith.constant 0 : index
    %65 = vector.load %arg13[%c0_52, %c0_53, %c0_54, %c0_55] : memref<2x4x1x8xf32, #tpu.memory_space<vmem>>, vector<1x4x1x8xf32>
    %66 = vector.shape_cast %65 : vector<1x4x1x8xf32> to vector<4x1x8xf32>
    %c0_56 = arith.constant 0 : index
    %c0_57 = arith.constant 0 : index
    %c0_58 = arith.constant 0 : index
    %67 = vector.load %arg15[%c0_56, %c0_57, %c0_58] : memref<2x1x32xf32, #tpu.memory_space<vmem>>, vector<1x1x32xf32>
    %68 = vector.shape_cast %67 : vector<1x1x32xf32> to vector<1x32xf32>
    %69 = vector.extract_strided_slice %54 {offsets = [0, 0, 0], sizes = [1, 32, 8], strides = [1, 1, 1]} : vector<4x32x8xf32> to vector<1x32x8xf32>
    %70 = vector.shape_cast %69 : vector<1x32x8xf32> to vector<32x8xf32>
    %cst_59 = arith.constant dense<0.000000e+00> : vector<16x8xf32>
    %71 = tpu.matmul %52, %70, %cst_59 {dimension_numbers = #tpu.dot_dimension_numbers<[1], [0], [0], [1], [0, 0, 1, 1], [], []>} : vector<16x32xf32>, vector<32x8xf32>, vector<16x8xf32> -> vector<16x8xf32>
    %72 = vector.extract_strided_slice %62 {offsets = [0, 0, 0], sizes = [1, 1, 8], strides = [1, 1, 1]} : vector<4x1x8xf32> to vector<1x1x8xf32>
    %73 = vector.shape_cast %72 : vector<1x1x8xf32> to vector<1x8xf32>
    %74 = vector.broadcast %73 : vector<1x8xf32> to vector<16x8xf32>
    %75 = arith.addf %71, %74 : vector<16x8xf32>
    %76 = vector.extract_strided_slice %54 {offsets = [1, 0, 0], sizes = [1, 32, 8], strides = [1, 1, 1]} : vector<4x32x8xf32> to vector<1x32x8xf32>
    %77 = vector.shape_cast %76 : vector<1x32x8xf32> to vector<32x8xf32>
    %cst_60 = arith.constant dense<0.000000e+00> : vector<16x8xf32>
    %78 = tpu.matmul %52, %77, %cst_60 {dimension_numbers = #tpu.dot_dimension_numbers<[1], [0], [0], [1], [0, 0, 1, 1], [], []>} : vector<16x32xf32>, vector<32x8xf32>, vector<16x8xf32> -> vector<16x8xf32>
    %79 = vector.extract_strided_slice %62 {offsets = [1, 0, 0], sizes = [1, 1, 8], strides = [1, 1, 1]} : vector<4x1x8xf32> to vector<1x1x8xf32>
    %80 = vector.shape_cast %79 : vector<1x1x8xf32> to vector<1x8xf32>
    %81 = vector.broadcast %80 : vector<1x8xf32> to vector<16x8xf32>
    %82 = arith.addf %78, %81 : vector<16x8xf32>
    %83 = vector.extract_strided_slice %54 {offsets = [2, 0, 0], sizes = [1, 32, 8], strides = [1, 1, 1]} : vector<4x32x8xf32> to vector<1x32x8xf32>
    %84 = vector.shape_cast %83 : vector<1x32x8xf32> to vector<32x8xf32>
    %cst_61 = arith.constant dense<0.000000e+00> : vector<16x8xf32>
    %85 = tpu.matmul %52, %84, %cst_61 {dimension_numbers = #tpu.dot_dimension_numbers<[1], [0], [0], [1], [0, 0, 1, 1], [], []>} : vector<16x32xf32>, vector<32x8xf32>, vector<16x8xf32> -> vector<16x8xf32>
    %86 = vector.extract_strided_slice %62 {offsets = [2, 0, 0], sizes = [1, 1, 8], strides = [1, 1, 1]} : vector<4x1x8xf32> to vector<1x1x8xf32>
    %87 = vector.shape_cast %86 : vector<1x1x8xf32> to vector<1x8xf32>
    %88 = vector.broadcast %87 : vector<1x8xf32> to vector<16x8xf32>
    %89 = arith.addf %85, %88 : vector<16x8xf32>
    %90 = vector.extract_strided_slice %54 {offsets = [3, 0, 0], sizes = [1, 32, 8], strides = [1, 1, 1]} : vector<4x32x8xf32> to vector<1x32x8xf32>
    %91 = vector.shape_cast %90 : vector<1x32x8xf32> to vector<32x8xf32>
    %cst_62 = arith.constant dense<0.000000e+00> : vector<16x8xf32>
    %92 = tpu.matmul %52, %91, %cst_62 {dimension_numbers = #tpu.dot_dimension_numbers<[1], [0], [0], [1], [0, 0, 1, 1], [], []>} : vector<16x32xf32>, vector<32x8xf32>, vector<16x8xf32> -> vector<16x8xf32>
    %93 = vector.extract_strided_slice %62 {offsets = [3, 0, 0], sizes = [1, 1, 8], strides = [1, 1, 1]} : vector<4x1x8xf32> to vector<1x1x8xf32>
    %94 = vector.shape_cast %93 : vector<1x1x8xf32> to vector<1x8xf32>
    %95 = vector.broadcast %94 : vector<1x8xf32> to vector<16x8xf32>
    %96 = arith.addf %92, %95 : vector<16x8xf32>
    %97 = vector.extract_strided_slice %56 {offsets = [0, 0, 0], sizes = [1, 32, 8], strides = [1, 1, 1]} : vector<4x32x8xf32> to vector<1x32x8xf32>
    %98 = vector.shape_cast %97 : vector<1x32x8xf32> to vector<32x8xf32>
    %cst_63 = arith.constant dense<0.000000e+00> : vector<16x8xf32>
    %99 = tpu.matmul %52, %98, %cst_63 {dimension_numbers = #tpu.dot_dimension_numbers<[1], [0], [0], [1], [0, 0, 1, 1], [], []>} : vector<16x32xf32>, vector<32x8xf32>, vector<16x8xf32> -> vector<16x8xf32>
    %100 = vector.extract_strided_slice %64 {offsets = [0, 0, 0], sizes = [1, 1, 8], strides = [1, 1, 1]} : vector<4x1x8xf32> to vector<1x1x8xf32>
    %101 = vector.shape_cast %100 : vector<1x1x8xf32> to vector<1x8xf32>
    %102 = vector.broadcast %101 : vector<1x8xf32> to vector<16x8xf32>
    %103 = arith.addf %99, %102 : vector<16x8xf32>
    %104 = vector.extract_strided_slice %56 {offsets = [1, 0, 0], sizes = [1, 32, 8], strides = [1, 1, 1]} : vector<4x32x8xf32> to vector<1x32x8xf32>
    %105 = vector.shape_cast %104 : vector<1x32x8xf32> to vector<32x8xf32>
    %cst_64 = arith.constant dense<0.000000e+00> : vector<16x8xf32>
    %106 = tpu.matmul %52, %105, %cst_64 {dimension_numbers = #tpu.dot_dimension_numbers<[1], [0], [0], [1], [0, 0, 1, 1], [], []>} : vector<16x32xf32>, vector<32x8xf32>, vector<16x8xf32> -> vector<16x8xf32>
    %107 = vector.extract_strided_slice %64 {offsets = [1, 0, 0], sizes = [1, 1, 8], strides = [1, 1, 1]} : vector<4x1x8xf32> to vector<1x1x8xf32>
    %108 = vector.shape_cast %107 : vector<1x1x8xf32> to vector<1x8xf32>
    %109 = vector.broadcast %108 : vector<1x8xf32> to vector<16x8xf32>
    %110 = arith.addf %106, %109 : vector<16x8xf32>
    %111 = vector.extract_strided_slice %56 {offsets = [2, 0, 0], sizes = [1, 32, 8], strides = [1, 1, 1]} : vector<4x32x8xf32> to vector<1x32x8xf32>
    %112 = vector.shape_cast %111 : vector<1x32x8xf32> to vector<32x8xf32>
    %cst_65 = arith.constant dense<0.000000e+00> : vector<16x8xf32>
    %113 = tpu.matmul %52, %112, %cst_65 {dimension_numbers = #tpu.dot_dimension_numbers<[1], [0], [0], [1], [0, 0, 1, 1], [], []>} : vector<16x32xf32>, vector<32x8xf32>, vector<16x8xf32> -> vector<16x8xf32>
    %114 = vector.extract_strided_slice %64 {offsets = [2, 0, 0], sizes = [1, 1, 8], strides = [1, 1, 1]} : vector<4x1x8xf32> to vector<1x1x8xf32>
    %115 = vector.shape_cast %114 : vector<1x1x8xf32> to vector<1x8xf32>
    %116 = vector.broadcast %115 : vector<1x8xf32> to vector<16x8xf32>
    %117 = arith.addf %113, %116 : vector<16x8xf32>
    %118 = vector.extract_strided_slice %56 {offsets = [3, 0, 0], sizes = [1, 32, 8], strides = [1, 1, 1]} : vector<4x32x8xf32> to vector<1x32x8xf32>
    %119 = vector.shape_cast %118 : vector<1x32x8xf32> to vector<32x8xf32>
    %cst_66 = arith.constant dense<0.000000e+00> : vector<16x8xf32>
    %120 = tpu.matmul %52, %119, %cst_66 {dimension_numbers = #tpu.dot_dimension_numbers<[1], [0], [0], [1], [0, 0, 1, 1], [], []>} : vector<16x32xf32>, vector<32x8xf32>, vector<16x8xf32> -> vector<16x8xf32>
    %121 = vector.extract_strided_slice %64 {offsets = [3, 0, 0], sizes = [1, 1, 8], strides = [1, 1, 1]} : vector<4x1x8xf32> to vector<1x1x8xf32>
    %122 = vector.shape_cast %121 : vector<1x1x8xf32> to vector<1x8xf32>
    %123 = vector.broadcast %122 : vector<1x8xf32> to vector<16x8xf32>
    %124 = arith.addf %120, %123 : vector<16x8xf32>
    %125 = vector.extract_strided_slice %58 {offsets = [0, 0, 0], sizes = [1, 32, 8], strides = [1, 1, 1]} : vector<4x32x8xf32> to vector<1x32x8xf32>
    %126 = vector.shape_cast %125 : vector<1x32x8xf32> to vector<32x8xf32>
    %cst_67 = arith.constant dense<0.000000e+00> : vector<16x8xf32>
    %127 = tpu.matmul %52, %126, %cst_67 {dimension_numbers = #tpu.dot_dimension_numbers<[1], [0], [0], [1], [0, 0, 1, 1], [], []>} : vector<16x32xf32>, vector<32x8xf32>, vector<16x8xf32> -> vector<16x8xf32>
    %128 = vector.extract_strided_slice %66 {offsets = [0, 0, 0], sizes = [1, 1, 8], strides = [1, 1, 1]} : vector<4x1x8xf32> to vector<1x1x8xf32>
    %129 = vector.shape_cast %128 : vector<1x1x8xf32> to vector<1x8xf32>
    %130 = vector.broadcast %129 : vector<1x8xf32> to vector<16x8xf32>
    %131 = arith.addf %127, %130 : vector<16x8xf32>
    %132 = vector.extract_strided_slice %58 {offsets = [1, 0, 0], sizes = [1, 32, 8], strides = [1, 1, 1]} : vector<4x32x8xf32> to vector<1x32x8xf32>
    %133 = vector.shape_cast %132 : vector<1x32x8xf32> to vector<32x8xf32>
    %cst_68 = arith.constant dense<0.000000e+00> : vector<16x8xf32>
    %134 = tpu.matmul %52, %133, %cst_68 {dimension_numbers = #tpu.dot_dimension_numbers<[1], [0], [0], [1], [0, 0, 1, 1], [], []>} : vector<16x32xf32>, vector<32x8xf32>, vector<16x8xf32> -> vector<16x8xf32>
    %135 = vector.extract_strided_slice %66 {offsets = [1, 0, 0], sizes = [1, 1, 8], strides = [1, 1, 1]} : vector<4x1x8xf32> to vector<1x1x8xf32>
    %136 = vector.shape_cast %135 : vector<1x1x8xf32> to vector<1x8xf32>
    %137 = vector.broadcast %136 : vector<1x8xf32> to vector<16x8xf32>
    %138 = arith.addf %134, %137 : vector<16x8xf32>
    %139 = vector.extract_strided_slice %58 {offsets = [2, 0, 0], sizes = [1, 32, 8], strides = [1, 1, 1]} : vector<4x32x8xf32> to vector<1x32x8xf32>
    %140 = vector.shape_cast %139 : vector<1x32x8xf32> to vector<32x8xf32>
    %cst_69 = arith.constant dense<0.000000e+00> : vector<16x8xf32>
    %141 = tpu.matmul %52, %140, %cst_69 {dimension_numbers = #tpu.dot_dimension_numbers<[1], [0], [0], [1], [0, 0, 1, 1], [], []>} : vector<16x32xf32>, vector<32x8xf32>, vector<16x8xf32> -> vector<16x8xf32>
    %142 = vector.extract_strided_slice %66 {offsets = [2, 0, 0], sizes = [1, 1, 8], strides = [1, 1, 1]} : vector<4x1x8xf32> to vector<1x1x8xf32>
    %143 = vector.shape_cast %142 : vector<1x1x8xf32> to vector<1x8xf32>
    %144 = vector.broadcast %143 : vector<1x8xf32> to vector<16x8xf32>
    %145 = arith.addf %141, %144 : vector<16x8xf32>
    %146 = vector.extract_strided_slice %58 {offsets = [3, 0, 0], sizes = [1, 32, 8], strides = [1, 1, 1]} : vector<4x32x8xf32> to vector<1x32x8xf32>
    %147 = vector.shape_cast %146 : vector<1x32x8xf32> to vector<32x8xf32>
    %cst_70 = arith.constant dense<0.000000e+00> : vector<16x8xf32>
    %148 = tpu.matmul %52, %147, %cst_70 {dimension_numbers = #tpu.dot_dimension_numbers<[1], [0], [0], [1], [0, 0, 1, 1], [], []>} : vector<16x32xf32>, vector<32x8xf32>, vector<16x8xf32> -> vector<16x8xf32>
    %149 = vector.extract_strided_slice %66 {offsets = [3, 0, 0], sizes = [1, 1, 8], strides = [1, 1, 1]} : vector<4x1x8xf32> to vector<1x1x8xf32>
    %150 = vector.shape_cast %149 : vector<1x1x8xf32> to vector<1x8xf32>
    %151 = vector.broadcast %150 : vector<1x8xf32> to vector<16x8xf32>
    %152 = arith.addf %148, %151 : vector<16x8xf32>
    %153 = vector.extract_strided_slice %75 {offsets = [0, 0], sizes = [8, 8], strides = [1, 1]} : vector<16x8xf32> to vector<8x8xf32>
    %154 = vector.extract_strided_slice %103 {offsets = [0, 0], sizes = [8, 8], strides = [1, 1]} : vector<16x8xf32> to vector<8x8xf32>
    %155 = vector.extract_strided_slice %131 {offsets = [0, 0], sizes = [8, 8], strides = [1, 1]} : vector<16x8xf32> to vector<8x8xf32>
    %cst_71 = arith.constant dense<0.000000e+00> : vector<8x8xf32>
    %156 = tpu.matmul %153, %154, %cst_71 {dimension_numbers = #tpu.dot_dimension_numbers<[1], [1], [0], [0], [0, 0, 1, 0], [], []>} : vector<8x8xf32>, vector<8x8xf32>, vector<8x8xf32> -> vector<8x8xf32>
    %cst_72 = arith.constant 0.353553385 : f32
    %157 = vector.broadcast %cst_72 : f32 to vector<8x8xf32>
    %158 = arith.mulf %156, %157 : vector<8x8xf32>
    %159 = arith.addf %158, %23 : vector<8x8xf32>
    %cst_73 = arith.constant dense<0xFF800000> : vector<8xf32>
    %160 = vector.multi_reduction <maximumf>, %159, %cst_73 [1] : vector<8x8xf32> to vector<8xf32>
    %161 = vector.shape_cast %160 : vector<8xf32> to vector<8x1xf32>
    %162 = vector.broadcast %161 : vector<8x1xf32> to vector<8x8xf32>
    %163 = arith.subf %159, %162 : vector<8x8xf32>
    %164 = math.exp %163 : vector<8x8xf32>
    %cst_74 = arith.constant dense<0.000000e+00> : vector<8xf32>
    %165 = vector.multi_reduction <add>, %164, %cst_74 [1] : vector<8x8xf32> to vector<8xf32>
    %166 = vector.shape_cast %165 : vector<8xf32> to vector<8x1xf32>
    %167 = vector.broadcast %166 : vector<8x1xf32> to vector<8x8xf32>
    %168 = arith.divf %164, %167 : vector<8x8xf32>
    %cst_75 = arith.constant dense<0.000000e+00> : vector<8x8xf32>
    %169 = tpu.matmul %168, %155, %cst_75 {dimension_numbers = #tpu.dot_dimension_numbers<[1], [0], [0], [1], [0, 0, 1, 1], [], []>} : vector<8x8xf32>, vector<8x8xf32>, vector<8x8xf32> -> vector<8x8xf32>
    %170 = vector.extract_strided_slice %60 {offsets = [0, 0, 0], sizes = [1, 8, 32], strides = [1, 1, 1]} : vector<4x8x32xf32> to vector<1x8x32xf32>
    %171 = vector.shape_cast %170 : vector<1x8x32xf32> to vector<8x32xf32>
    %cst_76 = arith.constant dense<0.000000e+00> : vector<8x32xf32>
    %172 = tpu.matmul %169, %171, %cst_76 {dimension_numbers = #tpu.dot_dimension_numbers<[1], [0], [0], [1], [0, 0, 1, 1], [], []>} : vector<8x8xf32>, vector<8x32xf32>, vector<8x32xf32> -> vector<8x32xf32>
    %173 = vector.extract_strided_slice %82 {offsets = [0, 0], sizes = [8, 8], strides = [1, 1]} : vector<16x8xf32> to vector<8x8xf32>
    %174 = vector.extract_strided_slice %110 {offsets = [0, 0], sizes = [8, 8], strides = [1, 1]} : vector<16x8xf32> to vector<8x8xf32>
    %175 = vector.extract_strided_slice %138 {offsets = [0, 0], sizes = [8, 8], strides = [1, 1]} : vector<16x8xf32> to vector<8x8xf32>
    %cst_77 = arith.constant dense<0.000000e+00> : vector<8x8xf32>
    %176 = tpu.matmul %173, %174, %cst_77 {dimension_numbers = #tpu.dot_dimension_numbers<[1], [1], [0], [0], [0, 0, 1, 0], [], []>} : vector<8x8xf32>, vector<8x8xf32>, vector<8x8xf32> -> vector<8x8xf32>
    %cst_78 = arith.constant 0.353553385 : f32
    %177 = vector.broadcast %cst_78 : f32 to vector<8x8xf32>
    %178 = arith.mulf %176, %177 : vector<8x8xf32>
    %179 = arith.addf %178, %23 : vector<8x8xf32>
    %cst_79 = arith.constant dense<0xFF800000> : vector<8xf32>
    %180 = vector.multi_reduction <maximumf>, %179, %cst_79 [1] : vector<8x8xf32> to vector<8xf32>
    %181 = vector.shape_cast %180 : vector<8xf32> to vector<8x1xf32>
    %182 = vector.broadcast %181 : vector<8x1xf32> to vector<8x8xf32>
    %183 = arith.subf %179, %182 : vector<8x8xf32>
    %184 = math.exp %183 : vector<8x8xf32>
    %cst_80 = arith.constant dense<0.000000e+00> : vector<8xf32>
    %185 = vector.multi_reduction <add>, %184, %cst_80 [1] : vector<8x8xf32> to vector<8xf32>
    %186 = vector.shape_cast %185 : vector<8xf32> to vector<8x1xf32>
    %187 = vector.broadcast %186 : vector<8x1xf32> to vector<8x8xf32>
    %188 = arith.divf %184, %187 : vector<8x8xf32>
    %cst_81 = arith.constant dense<0.000000e+00> : vector<8x8xf32>
    %189 = tpu.matmul %188, %175, %cst_81 {dimension_numbers = #tpu.dot_dimension_numbers<[1], [0], [0], [1], [0, 0, 1, 1], [], []>} : vector<8x8xf32>, vector<8x8xf32>, vector<8x8xf32> -> vector<8x8xf32>
    %190 = vector.extract_strided_slice %60 {offsets = [1, 0, 0], sizes = [1, 8, 32], strides = [1, 1, 1]} : vector<4x8x32xf32> to vector<1x8x32xf32>
    %191 = vector.shape_cast %190 : vector<1x8x32xf32> to vector<8x32xf32>
    %cst_82 = arith.constant dense<0.000000e+00> : vector<8x32xf32>
    %192 = tpu.matmul %189, %191, %cst_82 {dimension_numbers = #tpu.dot_dimension_numbers<[1], [0], [0], [1], [0, 0, 1, 1], [], []>} : vector<8x8xf32>, vector<8x32xf32>, vector<8x32xf32> -> vector<8x32xf32>
    %193 = vector.extract_strided_slice %89 {offsets = [0, 0], sizes = [8, 8], strides = [1, 1]} : vector<16x8xf32> to vector<8x8xf32>
    %194 = vector.extract_strided_slice %117 {offsets = [0, 0], sizes = [8, 8], strides = [1, 1]} : vector<16x8xf32> to vector<8x8xf32>
    %195 = vector.extract_strided_slice %145 {offsets = [0, 0], sizes = [8, 8], strides = [1, 1]} : vector<16x8xf32> to vector<8x8xf32>
    %cst_83 = arith.constant dense<0.000000e+00> : vector<8x8xf32>
    %196 = tpu.matmul %193, %194, %cst_83 {dimension_numbers = #tpu.dot_dimension_numbers<[1], [1], [0], [0], [0, 0, 1, 0], [], []>} : vector<8x8xf32>, vector<8x8xf32>, vector<8x8xf32> -> vector<8x8xf32>
    %cst_84 = arith.constant 0.353553385 : f32
    %197 = vector.broadcast %cst_84 : f32 to vector<8x8xf32>
    %198 = arith.mulf %196, %197 : vector<8x8xf32>
    %199 = arith.addf %198, %23 : vector<8x8xf32>
    %cst_85 = arith.constant dense<0xFF800000> : vector<8xf32>
    %200 = vector.multi_reduction <maximumf>, %199, %cst_85 [1] : vector<8x8xf32> to vector<8xf32>
    %201 = vector.shape_cast %200 : vector<8xf32> to vector<8x1xf32>
    %202 = vector.broadcast %201 : vector<8x1xf32> to vector<8x8xf32>
    %203 = arith.subf %199, %202 : vector<8x8xf32>
    %204 = math.exp %203 : vector<8x8xf32>
    %cst_86 = arith.constant dense<0.000000e+00> : vector<8xf32>
    %205 = vector.multi_reduction <add>, %204, %cst_86 [1] : vector<8x8xf32> to vector<8xf32>
    %206 = vector.shape_cast %205 : vector<8xf32> to vector<8x1xf32>
    %207 = vector.broadcast %206 : vector<8x1xf32> to vector<8x8xf32>
    %208 = arith.divf %204, %207 : vector<8x8xf32>
    %cst_87 = arith.constant dense<0.000000e+00> : vector<8x8xf32>
    %209 = tpu.matmul %208, %195, %cst_87 {dimension_numbers = #tpu.dot_dimension_numbers<[1], [0], [0], [1], [0, 0, 1, 1], [], []>} : vector<8x8xf32>, vector<8x8xf32>, vector<8x8xf32> -> vector<8x8xf32>
    %210 = vector.extract_strided_slice %60 {offsets = [2, 0, 0], sizes = [1, 8, 32], strides = [1, 1, 1]} : vector<4x8x32xf32> to vector<1x8x32xf32>
    %211 = vector.shape_cast %210 : vector<1x8x32xf32> to vector<8x32xf32>
    %cst_88 = arith.constant dense<0.000000e+00> : vector<8x32xf32>
    %212 = tpu.matmul %209, %211, %cst_88 {dimension_numbers = #tpu.dot_dimension_numbers<[1], [0], [0], [1], [0, 0, 1, 1], [], []>} : vector<8x8xf32>, vector<8x32xf32>, vector<8x32xf32> -> vector<8x32xf32>
    %213 = vector.extract_strided_slice %96 {offsets = [0, 0], sizes = [8, 8], strides = [1, 1]} : vector<16x8xf32> to vector<8x8xf32>
    %214 = vector.extract_strided_slice %124 {offsets = [0, 0], sizes = [8, 8], strides = [1, 1]} : vector<16x8xf32> to vector<8x8xf32>
    %215 = vector.extract_strided_slice %152 {offsets = [0, 0], sizes = [8, 8], strides = [1, 1]} : vector<16x8xf32> to vector<8x8xf32>
    %cst_89 = arith.constant dense<0.000000e+00> : vector<8x8xf32>
    %216 = tpu.matmul %213, %214, %cst_89 {dimension_numbers = #tpu.dot_dimension_numbers<[1], [1], [0], [0], [0, 0, 1, 0], [], []>} : vector<8x8xf32>, vector<8x8xf32>, vector<8x8xf32> -> vector<8x8xf32>
    %cst_90 = arith.constant 0.353553385 : f32
    %217 = vector.broadcast %cst_90 : f32 to vector<8x8xf32>
    %218 = arith.mulf %216, %217 : vector<8x8xf32>
    %219 = arith.addf %218, %23 : vector<8x8xf32>
    %cst_91 = arith.constant dense<0xFF800000> : vector<8xf32>
    %220 = vector.multi_reduction <maximumf>, %219, %cst_91 [1] : vector<8x8xf32> to vector<8xf32>
    %221 = vector.shape_cast %220 : vector<8xf32> to vector<8x1xf32>
    %222 = vector.broadcast %221 : vector<8x1xf32> to vector<8x8xf32>
    %223 = arith.subf %219, %222 : vector<8x8xf32>
    %224 = math.exp %223 : vector<8x8xf32>
    %cst_92 = arith.constant dense<0.000000e+00> : vector<8xf32>
    %225 = vector.multi_reduction <add>, %224, %cst_92 [1] : vector<8x8xf32> to vector<8xf32>
    %226 = vector.shape_cast %225 : vector<8xf32> to vector<8x1xf32>
    %227 = vector.broadcast %226 : vector<8x1xf32> to vector<8x8xf32>
    %228 = arith.divf %224, %227 : vector<8x8xf32>
    %cst_93 = arith.constant dense<0.000000e+00> : vector<8x8xf32>
    %229 = tpu.matmul %228, %215, %cst_93 {dimension_numbers = #tpu.dot_dimension_numbers<[1], [0], [0], [1], [0, 0, 1, 1], [], []>} : vector<8x8xf32>, vector<8x8xf32>, vector<8x8xf32> -> vector<8x8xf32>
    %230 = vector.extract_strided_slice %60 {offsets = [3, 0, 0], sizes = [1, 8, 32], strides = [1, 1, 1]} : vector<4x8x32xf32> to vector<1x8x32xf32>
    %231 = vector.shape_cast %230 : vector<1x8x32xf32> to vector<8x32xf32>
    %cst_94 = arith.constant dense<0.000000e+00> : vector<8x32xf32>
    %232 = tpu.matmul %229, %231, %cst_94 {dimension_numbers = #tpu.dot_dimension_numbers<[1], [0], [0], [1], [0, 0, 1, 1], [], []>} : vector<8x8xf32>, vector<8x32xf32>, vector<8x32xf32> -> vector<8x32xf32>
    %233 = arith.addf %172, %192 : vector<8x32xf32>
    %234 = arith.addf %212, %232 : vector<8x32xf32>
    %235 = arith.addf %233, %234 : vector<8x32xf32>
    %236 = vector.broadcast %68 : vector<1x32xf32> to vector<8x32xf32>
    %237 = arith.addf %235, %236 : vector<8x32xf32>
    %238 = vector.extract_strided_slice %75 {offsets = [8, 0], sizes = [8, 8], strides = [1, 1]} : vector<16x8xf32> to vector<8x8xf32>
    %239 = vector.extract_strided_slice %103 {offsets = [8, 0], sizes = [8, 8], strides = [1, 1]} : vector<16x8xf32> to vector<8x8xf32>
    %240 = vector.extract_strided_slice %131 {offsets = [8, 0], sizes = [8, 8], strides = [1, 1]} : vector<16x8xf32> to vector<8x8xf32>
    %cst_95 = arith.constant dense<0.000000e+00> : vector<8x8xf32>
    %241 = tpu.matmul %238, %239, %cst_95 {dimension_numbers = #tpu.dot_dimension_numbers<[1], [1], [0], [0], [0, 0, 1, 0], [], []>} : vector<8x8xf32>, vector<8x8xf32>, vector<8x8xf32> -> vector<8x8xf32>
    %cst_96 = arith.constant 0.353553385 : f32
    %242 = vector.broadcast %cst_96 : f32 to vector<8x8xf32>
    %243 = arith.mulf %241, %242 : vector<8x8xf32>
    %244 = arith.addf %243, %24 : vector<8x8xf32>
    %cst_97 = arith.constant dense<0xFF800000> : vector<8xf32>
    %245 = vector.multi_reduction <maximumf>, %244, %cst_97 [1] : vector<8x8xf32> to vector<8xf32>
    %246 = vector.shape_cast %245 : vector<8xf32> to vector<8x1xf32>
    %247 = vector.broadcast %246 : vector<8x1xf32> to vector<8x8xf32>
    %248 = arith.subf %244, %247 : vector<8x8xf32>
    %249 = math.exp %248 : vector<8x8xf32>
    %cst_98 = arith.constant dense<0.000000e+00> : vector<8xf32>
    %250 = vector.multi_reduction <add>, %249, %cst_98 [1] : vector<8x8xf32> to vector<8xf32>
    %251 = vector.shape_cast %250 : vector<8xf32> to vector<8x1xf32>
    %252 = vector.broadcast %251 : vector<8x1xf32> to vector<8x8xf32>
    %253 = arith.divf %249, %252 : vector<8x8xf32>
    %cst_99 = arith.constant dense<0.000000e+00> : vector<8x8xf32>
    %254 = tpu.matmul %253, %240, %cst_99 {dimension_numbers = #tpu.dot_dimension_numbers<[1], [0], [0], [1], [0, 0, 1, 1], [], []>} : vector<8x8xf32>, vector<8x8xf32>, vector<8x8xf32> -> vector<8x8xf32>
    %255 = vector.extract_strided_slice %60 {offsets = [0, 0, 0], sizes = [1, 8, 32], strides = [1, 1, 1]} : vector<4x8x32xf32> to vector<1x8x32xf32>
    %256 = vector.shape_cast %255 : vector<1x8x32xf32> to vector<8x32xf32>
    %cst_100 = arith.constant dense<0.000000e+00> : vector<8x32xf32>
    %257 = tpu.matmul %254, %256, %cst_100 {dimension_numbers = #tpu.dot_dimension_numbers<[1], [0], [0], [1], [0, 0, 1, 1], [], []>} : vector<8x8xf32>, vector<8x32xf32>, vector<8x32xf32> -> vector<8x32xf32>
    %258 = vector.extract_strided_slice %82 {offsets = [8, 0], sizes = [8, 8], strides = [1, 1]} : vector<16x8xf32> to vector<8x8xf32>
    %259 = vector.extract_strided_slice %110 {offsets = [8, 0], sizes = [8, 8], strides = [1, 1]} : vector<16x8xf32> to vector<8x8xf32>
    %260 = vector.extract_strided_slice %138 {offsets = [8, 0], sizes = [8, 8], strides = [1, 1]} : vector<16x8xf32> to vector<8x8xf32>
    %cst_101 = arith.constant dense<0.000000e+00> : vector<8x8xf32>
    %261 = tpu.matmul %258, %259, %cst_101 {dimension_numbers = #tpu.dot_dimension_numbers<[1], [1], [0], [0], [0, 0, 1, 0], [], []>} : vector<8x8xf32>, vector<8x8xf32>, vector<8x8xf32> -> vector<8x8xf32>
    %cst_102 = arith.constant 0.353553385 : f32
    %262 = vector.broadcast %cst_102 : f32 to vector<8x8xf32>
    %263 = arith.mulf %261, %262 : vector<8x8xf32>
    %264 = arith.addf %263, %24 : vector<8x8xf32>
    %cst_103 = arith.constant dense<0xFF800000> : vector<8xf32>
    %265 = vector.multi_reduction <maximumf>, %264, %cst_103 [1] : vector<8x8xf32> to vector<8xf32>
    %266 = vector.shape_cast %265 : vector<8xf32> to vector<8x1xf32>
    %267 = vector.broadcast %266 : vector<8x1xf32> to vector<8x8xf32>
    %268 = arith.subf %264, %267 : vector<8x8xf32>
    %269 = math.exp %268 : vector<8x8xf32>
    %cst_104 = arith.constant dense<0.000000e+00> : vector<8xf32>
    %270 = vector.multi_reduction <add>, %269, %cst_104 [1] : vector<8x8xf32> to vector<8xf32>
    %271 = vector.shape_cast %270 : vector<8xf32> to vector<8x1xf32>
    %272 = vector.broadcast %271 : vector<8x1xf32> to vector<8x8xf32>
    %273 = arith.divf %269, %272 : vector<8x8xf32>
    %cst_105 = arith.constant dense<0.000000e+00> : vector<8x8xf32>
    %274 = tpu.matmul %273, %260, %cst_105 {dimension_numbers = #tpu.dot_dimension_numbers<[1], [0], [0], [1], [0, 0, 1, 1], [], []>} : vector<8x8xf32>, vector<8x8xf32>, vector<8x8xf32> -> vector<8x8xf32>
    %275 = vector.extract_strided_slice %60 {offsets = [1, 0, 0], sizes = [1, 8, 32], strides = [1, 1, 1]} : vector<4x8x32xf32> to vector<1x8x32xf32>
    %276 = vector.shape_cast %275 : vector<1x8x32xf32> to vector<8x32xf32>
    %cst_106 = arith.constant dense<0.000000e+00> : vector<8x32xf32>
    %277 = tpu.matmul %274, %276, %cst_106 {dimension_numbers = #tpu.dot_dimension_numbers<[1], [0], [0], [1], [0, 0, 1, 1], [], []>} : vector<8x8xf32>, vector<8x32xf32>, vector<8x32xf32> -> vector<8x32xf32>
    %278 = vector.extract_strided_slice %89 {offsets = [8, 0], sizes = [8, 8], strides = [1, 1]} : vector<16x8xf32> to vector<8x8xf32>
    %279 = vector.extract_strided_slice %117 {offsets = [8, 0], sizes = [8, 8], strides = [1, 1]} : vector<16x8xf32> to vector<8x8xf32>
    %280 = vector.extract_strided_slice %145 {offsets = [8, 0], sizes = [8, 8], strides = [1, 1]} : vector<16x8xf32> to vector<8x8xf32>
    %cst_107 = arith.constant dense<0.000000e+00> : vector<8x8xf32>
    %281 = tpu.matmul %278, %279, %cst_107 {dimension_numbers = #tpu.dot_dimension_numbers<[1], [1], [0], [0], [0, 0, 1, 0], [], []>} : vector<8x8xf32>, vector<8x8xf32>, vector<8x8xf32> -> vector<8x8xf32>
    %cst_108 = arith.constant 0.353553385 : f32
    %282 = vector.broadcast %cst_108 : f32 to vector<8x8xf32>
    %283 = arith.mulf %281, %282 : vector<8x8xf32>
    %284 = arith.addf %283, %24 : vector<8x8xf32>
    %cst_109 = arith.constant dense<0xFF800000> : vector<8xf32>
    %285 = vector.multi_reduction <maximumf>, %284, %cst_109 [1] : vector<8x8xf32> to vector<8xf32>
    %286 = vector.shape_cast %285 : vector<8xf32> to vector<8x1xf32>
    %287 = vector.broadcast %286 : vector<8x1xf32> to vector<8x8xf32>
    %288 = arith.subf %284, %287 : vector<8x8xf32>
    %289 = math.exp %288 : vector<8x8xf32>
    %cst_110 = arith.constant dense<0.000000e+00> : vector<8xf32>
    %290 = vector.multi_reduction <add>, %289, %cst_110 [1] : vector<8x8xf32> to vector<8xf32>
    %291 = vector.shape_cast %290 : vector<8xf32> to vector<8x1xf32>
    %292 = vector.broadcast %291 : vector<8x1xf32> to vector<8x8xf32>
    %293 = arith.divf %289, %292 : vector<8x8xf32>
    %cst_111 = arith.constant dense<0.000000e+00> : vector<8x8xf32>
    %294 = tpu.matmul %293, %280, %cst_111 {dimension_numbers = #tpu.dot_dimension_numbers<[1], [0], [0], [1], [0, 0, 1, 1], [], []>} : vector<8x8xf32>, vector<8x8xf32>, vector<8x8xf32> -> vector<8x8xf32>
    %295 = vector.extract_strided_slice %60 {offsets = [2, 0, 0], sizes = [1, 8, 32], strides = [1, 1, 1]} : vector<4x8x32xf32> to vector<1x8x32xf32>
    %296 = vector.shape_cast %295 : vector<1x8x32xf32> to vector<8x32xf32>
    %cst_112 = arith.constant dense<0.000000e+00> : vector<8x32xf32>
    %297 = tpu.matmul %294, %296, %cst_112 {dimension_numbers = #tpu.dot_dimension_numbers<[1], [0], [0], [1], [0, 0, 1, 1], [], []>} : vector<8x8xf32>, vector<8x32xf32>, vector<8x32xf32> -> vector<8x32xf32>
    %298 = vector.extract_strided_slice %96 {offsets = [8, 0], sizes = [8, 8], strides = [1, 1]} : vector<16x8xf32> to vector<8x8xf32>
    %299 = vector.extract_strided_slice %124 {offsets = [8, 0], sizes = [8, 8], strides = [1, 1]} : vector<16x8xf32> to vector<8x8xf32>
    %300 = vector.extract_strided_slice %152 {offsets = [8, 0], sizes = [8, 8], strides = [1, 1]} : vector<16x8xf32> to vector<8x8xf32>
    %cst_113 = arith.constant dense<0.000000e+00> : vector<8x8xf32>
    %301 = tpu.matmul %298, %299, %cst_113 {dimension_numbers = #tpu.dot_dimension_numbers<[1], [1], [0], [0], [0, 0, 1, 0], [], []>} : vector<8x8xf32>, vector<8x8xf32>, vector<8x8xf32> -> vector<8x8xf32>
    %cst_114 = arith.constant 0.353553385 : f32
    %302 = vector.broadcast %cst_114 : f32 to vector<8x8xf32>
    %303 = arith.mulf %301, %302 : vector<8x8xf32>
    %304 = arith.addf %303, %24 : vector<8x8xf32>
    %cst_115 = arith.constant dense<0xFF800000> : vector<8xf32>
    %305 = vector.multi_reduction <maximumf>, %304, %cst_115 [1] : vector<8x8xf32> to vector<8xf32>
    %306 = vector.shape_cast %305 : vector<8xf32> to vector<8x1xf32>
    %307 = vector.broadcast %306 : vector<8x1xf32> to vector<8x8xf32>
    %308 = arith.subf %304, %307 : vector<8x8xf32>
    %309 = math.exp %308 : vector<8x8xf32>
    %cst_116 = arith.constant dense<0.000000e+00> : vector<8xf32>
    %310 = vector.multi_reduction <add>, %309, %cst_116 [1] : vector<8x8xf32> to vector<8xf32>
    %311 = vector.shape_cast %310 : vector<8xf32> to vector<8x1xf32>
    %312 = vector.broadcast %311 : vector<8x1xf32> to vector<8x8xf32>
    %313 = arith.divf %309, %312 : vector<8x8xf32>
    %cst_117 = arith.constant dense<0.000000e+00> : vector<8x8xf32>
    %314 = tpu.matmul %313, %300, %cst_117 {dimension_numbers = #tpu.dot_dimension_numbers<[1], [0], [0], [1], [0, 0, 1, 1], [], []>} : vector<8x8xf32>, vector<8x8xf32>, vector<8x8xf32> -> vector<8x8xf32>
    %315 = vector.extract_strided_slice %60 {offsets = [3, 0, 0], sizes = [1, 8, 32], strides = [1, 1, 1]} : vector<4x8x32xf32> to vector<1x8x32xf32>
    %316 = vector.shape_cast %315 : vector<1x8x32xf32> to vector<8x32xf32>
    %cst_118 = arith.constant dense<0.000000e+00> : vector<8x32xf32>
    %317 = tpu.matmul %314, %316, %cst_118 {dimension_numbers = #tpu.dot_dimension_numbers<[1], [0], [0], [1], [0, 0, 1, 1], [], []>} : vector<8x8xf32>, vector<8x32xf32>, vector<8x32xf32> -> vector<8x32xf32>
    %318 = arith.addf %257, %277 : vector<8x32xf32>
    %319 = arith.addf %297, %317 : vector<8x32xf32>
    %320 = arith.addf %318, %319 : vector<8x32xf32>
    %321 = vector.broadcast %68 : vector<1x32xf32> to vector<8x32xf32>
    %322 = arith.addf %320, %321 : vector<8x32xf32>
    %323 = tpu.concatenate %237, %322 in 0 : vector<8x32xf32>, vector<8x32xf32> -> vector<16x32xf32>
    %324 = arith.addf %11, %323 : vector<16x32xf32>
    %c1 = arith.constant 1 : index
    %c0_119 = arith.constant 0 : index
    %c0_120 = arith.constant 0 : index
    %325 = vector.load %arg6[%c1, %c0_119, %c0_120] : memref<7x1x32xf32, #tpu.memory_space<vmem>>, vector<1x1x32xf32>
    %326 = vector.shape_cast %325 : vector<1x1x32xf32> to vector<1x32xf32>
    %c1_121 = arith.constant 1 : index
    %c0_122 = arith.constant 0 : index
    %c0_123 = arith.constant 0 : index
    %327 = vector.load %arg7[%c1_121, %c0_122, %c0_123] : memref<7x1x32xf32, #tpu.memory_space<vmem>>, vector<1x1x32xf32>
    %328 = vector.shape_cast %327 : vector<1x1x32xf32> to vector<1x32xf32>
    %cst_124 = arith.constant dense<0.000000e+00> : vector<16xf32>
    %329 = vector.multi_reduction <add>, %324, %cst_124 [1] : vector<16x32xf32> to vector<16xf32>
    %330 = vector.shape_cast %329 : vector<16xf32> to vector<16x1xf32>
    %cst_125 = arith.constant 3.200000e+01 : f32
    %331 = vector.broadcast %cst_125 : f32 to vector<16x1xf32>
    %332 = arith.divf %330, %331 : vector<16x1xf32>
    %333 = vector.broadcast %332 : vector<16x1xf32> to vector<16x32xf32>
    %334 = arith.subf %324, %333 : vector<16x32xf32>
    %335 = arith.mulf %334, %334 : vector<16x32xf32>
    %cst_126 = arith.constant dense<0.000000e+00> : vector<16xf32>
    %336 = vector.multi_reduction <add>, %335, %cst_126 [1] : vector<16x32xf32> to vector<16xf32>
    %337 = vector.shape_cast %336 : vector<16xf32> to vector<16x1xf32>
    %cst_127 = arith.constant 0.0322580636 : f32
    %338 = vector.broadcast %cst_127 : f32 to vector<16x1xf32>
    %339 = arith.mulf %337, %338 : vector<16x1xf32>
    %340 = math.sqrt %339 : vector<16x1xf32>
    %cst_128 = arith.constant 9.99999997E-7 : f32
    %341 = vector.broadcast %cst_128 : f32 to vector<16x1xf32>
    %342 = arith.addf %340, %341 : vector<16x1xf32>
    %cst_129 = arith.constant 1.000000e+00 : f32
    %343 = vector.broadcast %cst_129 : f32 to vector<16x1xf32>
    %344 = arith.divf %343, %342 : vector<16x1xf32>
    %345 = vector.broadcast %344 : vector<16x1xf32> to vector<16x32xf32>
    %346 = arith.mulf %334, %345 : vector<16x32xf32>
    %347 = vector.broadcast %326 : vector<1x32xf32> to vector<16x32xf32>
    %348 = arith.mulf %347, %346 : vector<16x32xf32>
    %349 = vector.broadcast %328 : vector<1x32xf32> to vector<16x32xf32>
    %350 = arith.addf %348, %349 : vector<16x32xf32>
    %c0_130 = arith.constant 0 : index
    %c0_131 = arith.constant 0 : index
    %c0_132 = arith.constant 0 : index
    %c0_133 = arith.constant 0 : index
    %351 = vector.load %arg16[%c0_130, %c0_131, %c0_132, %c0_133] : memref<2x4x32x8xf32, #tpu.memory_space<vmem>>, vector<1x4x32x8xf32>
    %352 = vector.shape_cast %351 : vector<1x4x32x8xf32> to vector<4x32x8xf32>
    %c0_134 = arith.constant 0 : index
    %c0_135 = arith.constant 0 : index
    %c0_136 = arith.constant 0 : index
    %c0_137 = arith.constant 0 : index
    %353 = vector.load %arg18[%c0_134, %c0_135, %c0_136, %c0_137] : memref<2x4x32x8xf32, #tpu.memory_space<vmem>>, vector<1x4x32x8xf32>
    %354 = vector.shape_cast %353 : vector<1x4x32x8xf32> to vector<4x32x8xf32>
    %c0_138 = arith.constant 0 : index
    %c0_139 = arith.constant 0 : index
    %c0_140 = arith.constant 0 : index
    %c0_141 = arith.constant 0 : index
    %355 = vector.load %arg20[%c0_138, %c0_139, %c0_140, %c0_141] : memref<2x4x32x8xf32, #tpu.memory_space<vmem>>, vector<1x4x32x8xf32>
    %356 = vector.shape_cast %355 : vector<1x4x32x8xf32> to vector<4x32x8xf32>
    %c0_142 = arith.constant 0 : index
    %c0_143 = arith.constant 0 : index
    %c0_144 = arith.constant 0 : index
    %c0_145 = arith.constant 0 : index
    %357 = vector.load %arg22[%c0_142, %c0_143, %c0_144, %c0_145] : memref<2x4x8x32xf32, #tpu.memory_space<vmem>>, vector<1x4x8x32xf32>
    %358 = vector.shape_cast %357 : vector<1x4x8x32xf32> to vector<4x8x32xf32>
    %c0_146 = arith.constant 0 : index
    %c0_147 = arith.constant 0 : index
    %c0_148 = arith.constant 0 : index
    %c0_149 = arith.constant 0 : index
    %359 = vector.load %arg17[%c0_146, %c0_147, %c0_148, %c0_149] : memref<2x4x1x8xf32, #tpu.memory_space<vmem>>, vector<1x4x1x8xf32>
    %360 = vector.shape_cast %359 : vector<1x4x1x8xf32> to vector<4x1x8xf32>
    %c0_150 = arith.constant 0 : index
    %c0_151 = arith.constant 0 : index
    %c0_152 = arith.constant 0 : index
    %c0_153 = arith.constant 0 : index
    %361 = vector.load %arg19[%c0_150, %c0_151, %c0_152, %c0_153] : memref<2x4x1x8xf32, #tpu.memory_space<vmem>>, vector<1x4x1x8xf32>
    %362 = vector.shape_cast %361 : vector<1x4x1x8xf32> to vector<4x1x8xf32>
    %c0_154 = arith.constant 0 : index
    %c0_155 = arith.constant 0 : index
    %c0_156 = arith.constant 0 : index
    %c0_157 = arith.constant 0 : index
    %363 = vector.load %arg21[%c0_154, %c0_155, %c0_156, %c0_157] : memref<2x4x1x8xf32, #tpu.memory_space<vmem>>, vector<1x4x1x8xf32>
    %364 = vector.shape_cast %363 : vector<1x4x1x8xf32> to vector<4x1x8xf32>
    %c0_158 = arith.constant 0 : index
    %c0_159 = arith.constant 0 : index
    %c0_160 = arith.constant 0 : index
    %365 = vector.load %arg23[%c0_158, %c0_159, %c0_160] : memref<2x1x32xf32, #tpu.memory_space<vmem>>, vector<1x1x32xf32>
    %366 = vector.shape_cast %365 : vector<1x1x32xf32> to vector<1x32xf32>
    %367 = vector.extract_strided_slice %352 {offsets = [0, 0, 0], sizes = [1, 32, 8], strides = [1, 1, 1]} : vector<4x32x8xf32> to vector<1x32x8xf32>
    %368 = vector.shape_cast %367 : vector<1x32x8xf32> to vector<32x8xf32>
    %cst_161 = arith.constant dense<0.000000e+00> : vector<16x8xf32>
    %369 = tpu.matmul %350, %368, %cst_161 {dimension_numbers = #tpu.dot_dimension_numbers<[1], [0], [0], [1], [0, 0, 1, 1], [], []>} : vector<16x32xf32>, vector<32x8xf32>, vector<16x8xf32> -> vector<16x8xf32>
    %370 = vector.extract_strided_slice %360 {offsets = [0, 0, 0], sizes = [1, 1, 8], strides = [1, 1, 1]} : vector<4x1x8xf32> to vector<1x1x8xf32>
    %371 = vector.shape_cast %370 : vector<1x1x8xf32> to vector<1x8xf32>
    %372 = vector.broadcast %371 : vector<1x8xf32> to vector<16x8xf32>
    %373 = arith.addf %369, %372 : vector<16x8xf32>
    %374 = vector.extract_strided_slice %352 {offsets = [1, 0, 0], sizes = [1, 32, 8], strides = [1, 1, 1]} : vector<4x32x8xf32> to vector<1x32x8xf32>
    %375 = vector.shape_cast %374 : vector<1x32x8xf32> to vector<32x8xf32>
    %cst_162 = arith.constant dense<0.000000e+00> : vector<16x8xf32>
    %376 = tpu.matmul %350, %375, %cst_162 {dimension_numbers = #tpu.dot_dimension_numbers<[1], [0], [0], [1], [0, 0, 1, 1], [], []>} : vector<16x32xf32>, vector<32x8xf32>, vector<16x8xf32> -> vector<16x8xf32>
    %377 = vector.extract_strided_slice %360 {offsets = [1, 0, 0], sizes = [1, 1, 8], strides = [1, 1, 1]} : vector<4x1x8xf32> to vector<1x1x8xf32>
    %378 = vector.shape_cast %377 : vector<1x1x8xf32> to vector<1x8xf32>
    %379 = vector.broadcast %378 : vector<1x8xf32> to vector<16x8xf32>
    %380 = arith.addf %376, %379 : vector<16x8xf32>
    %381 = vector.extract_strided_slice %352 {offsets = [2, 0, 0], sizes = [1, 32, 8], strides = [1, 1, 1]} : vector<4x32x8xf32> to vector<1x32x8xf32>
    %382 = vector.shape_cast %381 : vector<1x32x8xf32> to vector<32x8xf32>
    %cst_163 = arith.constant dense<0.000000e+00> : vector<16x8xf32>
    %383 = tpu.matmul %350, %382, %cst_163 {dimension_numbers = #tpu.dot_dimension_numbers<[1], [0], [0], [1], [0, 0, 1, 1], [], []>} : vector<16x32xf32>, vector<32x8xf32>, vector<16x8xf32> -> vector<16x8xf32>
    %384 = vector.extract_strided_slice %360 {offsets = [2, 0, 0], sizes = [1, 1, 8], strides = [1, 1, 1]} : vector<4x1x8xf32> to vector<1x1x8xf32>
    %385 = vector.shape_cast %384 : vector<1x1x8xf32> to vector<1x8xf32>
    %386 = vector.broadcast %385 : vector<1x8xf32> to vector<16x8xf32>
    %387 = arith.addf %383, %386 : vector<16x8xf32>
    %388 = vector.extract_strided_slice %352 {offsets = [3, 0, 0], sizes = [1, 32, 8], strides = [1, 1, 1]} : vector<4x32x8xf32> to vector<1x32x8xf32>
    %389 = vector.shape_cast %388 : vector<1x32x8xf32> to vector<32x8xf32>
    %cst_164 = arith.constant dense<0.000000e+00> : vector<16x8xf32>
    %390 = tpu.matmul %350, %389, %cst_164 {dimension_numbers = #tpu.dot_dimension_numbers<[1], [0], [0], [1], [0, 0, 1, 1], [], []>} : vector<16x32xf32>, vector<32x8xf32>, vector<16x8xf32> -> vector<16x8xf32>
    %391 = vector.extract_strided_slice %360 {offsets = [3, 0, 0], sizes = [1, 1, 8], strides = [1, 1, 1]} : vector<4x1x8xf32> to vector<1x1x8xf32>
    %392 = vector.shape_cast %391 : vector<1x1x8xf32> to vector<1x8xf32>
    %393 = vector.broadcast %392 : vector<1x8xf32> to vector<16x8xf32>
    %394 = arith.addf %390, %393 : vector<16x8xf32>
    %395 = vector.extract_strided_slice %354 {offsets = [0, 0, 0], sizes = [1, 32, 8], strides = [1, 1, 1]} : vector<4x32x8xf32> to vector<1x32x8xf32>
    %396 = vector.shape_cast %395 : vector<1x32x8xf32> to vector<32x8xf32>
    %cst_165 = arith.constant dense<0.000000e+00> : vector<16x8xf32>
    %397 = tpu.matmul %12, %396, %cst_165 {dimension_numbers = #tpu.dot_dimension_numbers<[1], [0], [0], [1], [0, 0, 1, 1], [], []>} : vector<16x32xf32>, vector<32x8xf32>, vector<16x8xf32> -> vector<16x8xf32>
    %398 = vector.extract_strided_slice %362 {offsets = [0, 0, 0], sizes = [1, 1, 8], strides = [1, 1, 1]} : vector<4x1x8xf32> to vector<1x1x8xf32>
    %399 = vector.shape_cast %398 : vector<1x1x8xf32> to vector<1x8xf32>
    %400 = vector.broadcast %399 : vector<1x8xf32> to vector<16x8xf32>
    %401 = arith.addf %397, %400 : vector<16x8xf32>
    %402 = vector.extract_strided_slice %354 {offsets = [1, 0, 0], sizes = [1, 32, 8], strides = [1, 1, 1]} : vector<4x32x8xf32> to vector<1x32x8xf32>
    %403 = vector.shape_cast %402 : vector<1x32x8xf32> to vector<32x8xf32>
    %cst_166 = arith.constant dense<0.000000e+00> : vector<16x8xf32>
    %404 = tpu.matmul %12, %403, %cst_166 {dimension_numbers = #tpu.dot_dimension_numbers<[1], [0], [0], [1], [0, 0, 1, 1], [], []>} : vector<16x32xf32>, vector<32x8xf32>, vector<16x8xf32> -> vector<16x8xf32>
    %405 = vector.extract_strided_slice %362 {offsets = [1, 0, 0], sizes = [1, 1, 8], strides = [1, 1, 1]} : vector<4x1x8xf32> to vector<1x1x8xf32>
    %406 = vector.shape_cast %405 : vector<1x1x8xf32> to vector<1x8xf32>
    %407 = vector.broadcast %406 : vector<1x8xf32> to vector<16x8xf32>
    %408 = arith.addf %404, %407 : vector<16x8xf32>
    %409 = vector.extract_strided_slice %354 {offsets = [2, 0, 0], sizes = [1, 32, 8], strides = [1, 1, 1]} : vector<4x32x8xf32> to vector<1x32x8xf32>
    %410 = vector.shape_cast %409 : vector<1x32x8xf32> to vector<32x8xf32>
    %cst_167 = arith.constant dense<0.000000e+00> : vector<16x8xf32>
    %411 = tpu.matmul %12, %410, %cst_167 {dimension_numbers = #tpu.dot_dimension_numbers<[1], [0], [0], [1], [0, 0, 1, 1], [], []>} : vector<16x32xf32>, vector<32x8xf32>, vector<16x8xf32> -> vector<16x8xf32>
    %412 = vector.extract_strided_slice %362 {offsets = [2, 0, 0], sizes = [1, 1, 8], strides = [1, 1, 1]} : vector<4x1x8xf32> to vector<1x1x8xf32>
    %413 = vector.shape_cast %412 : vector<1x1x8xf32> to vector<1x8xf32>
    %414 = vector.broadcast %413 : vector<1x8xf32> to vector<16x8xf32>
    %415 = arith.addf %411, %414 : vector<16x8xf32>
    %416 = vector.extract_strided_slice %354 {offsets = [3, 0, 0], sizes = [1, 32, 8], strides = [1, 1, 1]} : vector<4x32x8xf32> to vector<1x32x8xf32>
    %417 = vector.shape_cast %416 : vector<1x32x8xf32> to vector<32x8xf32>
    %cst_168 = arith.constant dense<0.000000e+00> : vector<16x8xf32>
    %418 = tpu.matmul %12, %417, %cst_168 {dimension_numbers = #tpu.dot_dimension_numbers<[1], [0], [0], [1], [0, 0, 1, 1], [], []>} : vector<16x32xf32>, vector<32x8xf32>, vector<16x8xf32> -> vector<16x8xf32>
    %419 = vector.extract_strided_slice %362 {offsets = [3, 0, 0], sizes = [1, 1, 8], strides = [1, 1, 1]} : vector<4x1x8xf32> to vector<1x1x8xf32>
    %420 = vector.shape_cast %419 : vector<1x1x8xf32> to vector<1x8xf32>
    %421 = vector.broadcast %420 : vector<1x8xf32> to vector<16x8xf32>
    %422 = arith.addf %418, %421 : vector<16x8xf32>
    %423 = vector.extract_strided_slice %356 {offsets = [0, 0, 0], sizes = [1, 32, 8], strides = [1, 1, 1]} : vector<4x32x8xf32> to vector<1x32x8xf32>
    %424 = vector.shape_cast %423 : vector<1x32x8xf32> to vector<32x8xf32>
    %cst_169 = arith.constant dense<0.000000e+00> : vector<16x8xf32>
    %425 = tpu.matmul %12, %424, %cst_169 {dimension_numbers = #tpu.dot_dimension_numbers<[1], [0], [0], [1], [0, 0, 1, 1], [], []>} : vector<16x32xf32>, vector<32x8xf32>, vector<16x8xf32> -> vector<16x8xf32>
    %426 = vector.extract_strided_slice %364 {offsets = [0, 0, 0], sizes = [1, 1, 8], strides = [1, 1, 1]} : vector<4x1x8xf32> to vector<1x1x8xf32>
    %427 = vector.shape_cast %426 : vector<1x1x8xf32> to vector<1x8xf32>
    %428 = vector.broadcast %427 : vector<1x8xf32> to vector<16x8xf32>
    %429 = arith.addf %425, %428 : vector<16x8xf32>
    %430 = vector.extract_strided_slice %356 {offsets = [1, 0, 0], sizes = [1, 32, 8], strides = [1, 1, 1]} : vector<4x32x8xf32> to vector<1x32x8xf32>
    %431 = vector.shape_cast %430 : vector<1x32x8xf32> to vector<32x8xf32>
    %cst_170 = arith.constant dense<0.000000e+00> : vector<16x8xf32>
    %432 = tpu.matmul %12, %431, %cst_170 {dimension_numbers = #tpu.dot_dimension_numbers<[1], [0], [0], [1], [0, 0, 1, 1], [], []>} : vector<16x32xf32>, vector<32x8xf32>, vector<16x8xf32> -> vector<16x8xf32>
    %433 = vector.extract_strided_slice %364 {offsets = [1, 0, 0], sizes = [1, 1, 8], strides = [1, 1, 1]} : vector<4x1x8xf32> to vector<1x1x8xf32>
    %434 = vector.shape_cast %433 : vector<1x1x8xf32> to vector<1x8xf32>
    %435 = vector.broadcast %434 : vector<1x8xf32> to vector<16x8xf32>
    %436 = arith.addf %432, %435 : vector<16x8xf32>
    %437 = vector.extract_strided_slice %356 {offsets = [2, 0, 0], sizes = [1, 32, 8], strides = [1, 1, 1]} : vector<4x32x8xf32> to vector<1x32x8xf32>
    %438 = vector.shape_cast %437 : vector<1x32x8xf32> to vector<32x8xf32>
    %cst_171 = arith.constant dense<0.000000e+00> : vector<16x8xf32>
    %439 = tpu.matmul %12, %438, %cst_171 {dimension_numbers = #tpu.dot_dimension_numbers<[1], [0], [0], [1], [0, 0, 1, 1], [], []>} : vector<16x32xf32>, vector<32x8xf32>, vector<16x8xf32> -> vector<16x8xf32>
    %440 = vector.extract_strided_slice %364 {offsets = [2, 0, 0], sizes = [1, 1, 8], strides = [1, 1, 1]} : vector<4x1x8xf32> to vector<1x1x8xf32>
    %441 = vector.shape_cast %440 : vector<1x1x8xf32> to vector<1x8xf32>
    %442 = vector.broadcast %441 : vector<1x8xf32> to vector<16x8xf32>
    %443 = arith.addf %439, %442 : vector<16x8xf32>
    %444 = vector.extract_strided_slice %356 {offsets = [3, 0, 0], sizes = [1, 32, 8], strides = [1, 1, 1]} : vector<4x32x8xf32> to vector<1x32x8xf32>
    %445 = vector.shape_cast %444 : vector<1x32x8xf32> to vector<32x8xf32>
    %cst_172 = arith.constant dense<0.000000e+00> : vector<16x8xf32>
    %446 = tpu.matmul %12, %445, %cst_172 {dimension_numbers = #tpu.dot_dimension_numbers<[1], [0], [0], [1], [0, 0, 1, 1], [], []>} : vector<16x32xf32>, vector<32x8xf32>, vector<16x8xf32> -> vector<16x8xf32>
    %447 = vector.extract_strided_slice %364 {offsets = [3, 0, 0], sizes = [1, 1, 8], strides = [1, 1, 1]} : vector<4x1x8xf32> to vector<1x1x8xf32>
    %448 = vector.shape_cast %447 : vector<1x1x8xf32> to vector<1x8xf32>
    %449 = vector.broadcast %448 : vector<1x8xf32> to vector<16x8xf32>
    %450 = arith.addf %446, %449 : vector<16x8xf32>
    %451 = vector.extract_strided_slice %373 {offsets = [0, 0], sizes = [8, 8], strides = [1, 1]} : vector<16x8xf32> to vector<8x8xf32>
    %452 = vector.extract_strided_slice %401 {offsets = [0, 0], sizes = [8, 8], strides = [1, 1]} : vector<16x8xf32> to vector<8x8xf32>
    %453 = vector.extract_strided_slice %429 {offsets = [0, 0], sizes = [8, 8], strides = [1, 1]} : vector<16x8xf32> to vector<8x8xf32>
    %cst_173 = arith.constant dense<0.000000e+00> : vector<8x8xf32>
    %454 = tpu.matmul %451, %452, %cst_173 {dimension_numbers = #tpu.dot_dimension_numbers<[1], [1], [0], [0], [0, 0, 1, 0], [], []>} : vector<8x8xf32>, vector<8x8xf32>, vector<8x8xf32> -> vector<8x8xf32>
    %cst_174 = arith.constant 0.353553385 : f32
    %455 = vector.broadcast %cst_174 : f32 to vector<8x8xf32>
    %456 = arith.mulf %454, %455 : vector<8x8xf32>
    %457 = vector.broadcast %25 : vector<1x8xf32> to vector<8x8xf32>
    %458 = arith.addf %456, %457 : vector<8x8xf32>
    %cst_175 = arith.constant dense<0xFF800000> : vector<8xf32>
    %459 = vector.multi_reduction <maximumf>, %458, %cst_175 [1] : vector<8x8xf32> to vector<8xf32>
    %460 = vector.shape_cast %459 : vector<8xf32> to vector<8x1xf32>
    %461 = vector.broadcast %460 : vector<8x1xf32> to vector<8x8xf32>
    %462 = arith.subf %458, %461 : vector<8x8xf32>
    %463 = math.exp %462 : vector<8x8xf32>
    %cst_176 = arith.constant dense<0.000000e+00> : vector<8xf32>
    %464 = vector.multi_reduction <add>, %463, %cst_176 [1] : vector<8x8xf32> to vector<8xf32>
    %465 = vector.shape_cast %464 : vector<8xf32> to vector<8x1xf32>
    %466 = vector.broadcast %465 : vector<8x1xf32> to vector<8x8xf32>
    %467 = arith.divf %463, %466 : vector<8x8xf32>
    %cst_177 = arith.constant dense<0.000000e+00> : vector<8x8xf32>
    %468 = tpu.matmul %467, %453, %cst_177 {dimension_numbers = #tpu.dot_dimension_numbers<[1], [0], [0], [1], [0, 0, 1, 1], [], []>} : vector<8x8xf32>, vector<8x8xf32>, vector<8x8xf32> -> vector<8x8xf32>
    %469 = vector.extract_strided_slice %358 {offsets = [0, 0, 0], sizes = [1, 8, 32], strides = [1, 1, 1]} : vector<4x8x32xf32> to vector<1x8x32xf32>
    %470 = vector.shape_cast %469 : vector<1x8x32xf32> to vector<8x32xf32>
    %cst_178 = arith.constant dense<0.000000e+00> : vector<8x32xf32>
    %471 = tpu.matmul %468, %470, %cst_178 {dimension_numbers = #tpu.dot_dimension_numbers<[1], [0], [0], [1], [0, 0, 1, 1], [], []>} : vector<8x8xf32>, vector<8x32xf32>, vector<8x32xf32> -> vector<8x32xf32>
    %472 = vector.extract_strided_slice %380 {offsets = [0, 0], sizes = [8, 8], strides = [1, 1]} : vector<16x8xf32> to vector<8x8xf32>
    %473 = vector.extract_strided_slice %408 {offsets = [0, 0], sizes = [8, 8], strides = [1, 1]} : vector<16x8xf32> to vector<8x8xf32>
    %474 = vector.extract_strided_slice %436 {offsets = [0, 0], sizes = [8, 8], strides = [1, 1]} : vector<16x8xf32> to vector<8x8xf32>
    %cst_179 = arith.constant dense<0.000000e+00> : vector<8x8xf32>
    %475 = tpu.matmul %472, %473, %cst_179 {dimension_numbers = #tpu.dot_dimension_numbers<[1], [1], [0], [0], [0, 0, 1, 0], [], []>} : vector<8x8xf32>, vector<8x8xf32>, vector<8x8xf32> -> vector<8x8xf32>
    %cst_180 = arith.constant 0.353553385 : f32
    %476 = vector.broadcast %cst_180 : f32 to vector<8x8xf32>
    %477 = arith.mulf %475, %476 : vector<8x8xf32>
    %478 = vector.broadcast %25 : vector<1x8xf32> to vector<8x8xf32>
    %479 = arith.addf %477, %478 : vector<8x8xf32>
    %cst_181 = arith.constant dense<0xFF800000> : vector<8xf32>
    %480 = vector.multi_reduction <maximumf>, %479, %cst_181 [1] : vector<8x8xf32> to vector<8xf32>
    %481 = vector.shape_cast %480 : vector<8xf32> to vector<8x1xf32>
    %482 = vector.broadcast %481 : vector<8x1xf32> to vector<8x8xf32>
    %483 = arith.subf %479, %482 : vector<8x8xf32>
    %484 = math.exp %483 : vector<8x8xf32>
    %cst_182 = arith.constant dense<0.000000e+00> : vector<8xf32>
    %485 = vector.multi_reduction <add>, %484, %cst_182 [1] : vector<8x8xf32> to vector<8xf32>
    %486 = vector.shape_cast %485 : vector<8xf32> to vector<8x1xf32>
    %487 = vector.broadcast %486 : vector<8x1xf32> to vector<8x8xf32>
    %488 = arith.divf %484, %487 : vector<8x8xf32>
    %cst_183 = arith.constant dense<0.000000e+00> : vector<8x8xf32>
    %489 = tpu.matmul %488, %474, %cst_183 {dimension_numbers = #tpu.dot_dimension_numbers<[1], [0], [0], [1], [0, 0, 1, 1], [], []>} : vector<8x8xf32>, vector<8x8xf32>, vector<8x8xf32> -> vector<8x8xf32>
    %490 = vector.extract_strided_slice %358 {offsets = [1, 0, 0], sizes = [1, 8, 32], strides = [1, 1, 1]} : vector<4x8x32xf32> to vector<1x8x32xf32>
    %491 = vector.shape_cast %490 : vector<1x8x32xf32> to vector<8x32xf32>
    %cst_184 = arith.constant dense<0.000000e+00> : vector<8x32xf32>
    %492 = tpu.matmul %489, %491, %cst_184 {dimension_numbers = #tpu.dot_dimension_numbers<[1], [0], [0], [1], [0, 0, 1, 1], [], []>} : vector<8x8xf32>, vector<8x32xf32>, vector<8x32xf32> -> vector<8x32xf32>
    %493 = vector.extract_strided_slice %387 {offsets = [0, 0], sizes = [8, 8], strides = [1, 1]} : vector<16x8xf32> to vector<8x8xf32>
    %494 = vector.extract_strided_slice %415 {offsets = [0, 0], sizes = [8, 8], strides = [1, 1]} : vector<16x8xf32> to vector<8x8xf32>
    %495 = vector.extract_strided_slice %443 {offsets = [0, 0], sizes = [8, 8], strides = [1, 1]} : vector<16x8xf32> to vector<8x8xf32>
    %cst_185 = arith.constant dense<0.000000e+00> : vector<8x8xf32>
    %496 = tpu.matmul %493, %494, %cst_185 {dimension_numbers = #tpu.dot_dimension_numbers<[1], [1], [0], [0], [0, 0, 1, 0], [], []>} : vector<8x8xf32>, vector<8x8xf32>, vector<8x8xf32> -> vector<8x8xf32>
    %cst_186 = arith.constant 0.353553385 : f32
    %497 = vector.broadcast %cst_186 : f32 to vector<8x8xf32>
    %498 = arith.mulf %496, %497 : vector<8x8xf32>
    %499 = vector.broadcast %25 : vector<1x8xf32> to vector<8x8xf32>
    %500 = arith.addf %498, %499 : vector<8x8xf32>
    %cst_187 = arith.constant dense<0xFF800000> : vector<8xf32>
    %501 = vector.multi_reduction <maximumf>, %500, %cst_187 [1] : vector<8x8xf32> to vector<8xf32>
    %502 = vector.shape_cast %501 : vector<8xf32> to vector<8x1xf32>
    %503 = vector.broadcast %502 : vector<8x1xf32> to vector<8x8xf32>
    %504 = arith.subf %500, %503 : vector<8x8xf32>
    %505 = math.exp %504 : vector<8x8xf32>
    %cst_188 = arith.constant dense<0.000000e+00> : vector<8xf32>
    %506 = vector.multi_reduction <add>, %505, %cst_188 [1] : vector<8x8xf32> to vector<8xf32>
    %507 = vector.shape_cast %506 : vector<8xf32> to vector<8x1xf32>
    %508 = vector.broadcast %507 : vector<8x1xf32> to vector<8x8xf32>
    %509 = arith.divf %505, %508 : vector<8x8xf32>
    %cst_189 = arith.constant dense<0.000000e+00> : vector<8x8xf32>
    %510 = tpu.matmul %509, %495, %cst_189 {dimension_numbers = #tpu.dot_dimension_numbers<[1], [0], [0], [1], [0, 0, 1, 1], [], []>} : vector<8x8xf32>, vector<8x8xf32>, vector<8x8xf32> -> vector<8x8xf32>
    %511 = vector.extract_strided_slice %358 {offsets = [2, 0, 0], sizes = [1, 8, 32], strides = [1, 1, 1]} : vector<4x8x32xf32> to vector<1x8x32xf32>
    %512 = vector.shape_cast %511 : vector<1x8x32xf32> to vector<8x32xf32>
    %cst_190 = arith.constant dense<0.000000e+00> : vector<8x32xf32>
    %513 = tpu.matmul %510, %512, %cst_190 {dimension_numbers = #tpu.dot_dimension_numbers<[1], [0], [0], [1], [0, 0, 1, 1], [], []>} : vector<8x8xf32>, vector<8x32xf32>, vector<8x32xf32> -> vector<8x32xf32>
    %514 = vector.extract_strided_slice %394 {offsets = [0, 0], sizes = [8, 8], strides = [1, 1]} : vector<16x8xf32> to vector<8x8xf32>
    %515 = vector.extract_strided_slice %422 {offsets = [0, 0], sizes = [8, 8], strides = [1, 1]} : vector<16x8xf32> to vector<8x8xf32>
    %516 = vector.extract_strided_slice %450 {offsets = [0, 0], sizes = [8, 8], strides = [1, 1]} : vector<16x8xf32> to vector<8x8xf32>
    %cst_191 = arith.constant dense<0.000000e+00> : vector<8x8xf32>
    %517 = tpu.matmul %514, %515, %cst_191 {dimension_numbers = #tpu.dot_dimension_numbers<[1], [1], [0], [0], [0, 0, 1, 0], [], []>} : vector<8x8xf32>, vector<8x8xf32>, vector<8x8xf32> -> vector<8x8xf32>
    %cst_192 = arith.constant 0.353553385 : f32
    %518 = vector.broadcast %cst_192 : f32 to vector<8x8xf32>
    %519 = arith.mulf %517, %518 : vector<8x8xf32>
    %520 = vector.broadcast %25 : vector<1x8xf32> to vector<8x8xf32>
    %521 = arith.addf %519, %520 : vector<8x8xf32>
    %cst_193 = arith.constant dense<0xFF800000> : vector<8xf32>
    %522 = vector.multi_reduction <maximumf>, %521, %cst_193 [1] : vector<8x8xf32> to vector<8xf32>
    %523 = vector.shape_cast %522 : vector<8xf32> to vector<8x1xf32>
    %524 = vector.broadcast %523 : vector<8x1xf32> to vector<8x8xf32>
    %525 = arith.subf %521, %524 : vector<8x8xf32>
    %526 = math.exp %525 : vector<8x8xf32>
    %cst_194 = arith.constant dense<0.000000e+00> : vector<8xf32>
    %527 = vector.multi_reduction <add>, %526, %cst_194 [1] : vector<8x8xf32> to vector<8xf32>
    %528 = vector.shape_cast %527 : vector<8xf32> to vector<8x1xf32>
    %529 = vector.broadcast %528 : vector<8x1xf32> to vector<8x8xf32>
    %530 = arith.divf %526, %529 : vector<8x8xf32>
    %cst_195 = arith.constant dense<0.000000e+00> : vector<8x8xf32>
    %531 = tpu.matmul %530, %516, %cst_195 {dimension_numbers = #tpu.dot_dimension_numbers<[1], [0], [0], [1], [0, 0, 1, 1], [], []>} : vector<8x8xf32>, vector<8x8xf32>, vector<8x8xf32> -> vector<8x8xf32>
    %532 = vector.extract_strided_slice %358 {offsets = [3, 0, 0], sizes = [1, 8, 32], strides = [1, 1, 1]} : vector<4x8x32xf32> to vector<1x8x32xf32>
    %533 = vector.shape_cast %532 : vector<1x8x32xf32> to vector<8x32xf32>
    %cst_196 = arith.constant dense<0.000000e+00> : vector<8x32xf32>
    %534 = tpu.matmul %531, %533, %cst_196 {dimension_numbers = #tpu.dot_dimension_numbers<[1], [0], [0], [1], [0, 0, 1, 1], [], []>} : vector<8x8xf32>, vector<8x32xf32>, vector<8x32xf32> -> vector<8x32xf32>
    %535 = arith.addf %471, %492 : vector<8x32xf32>
    %536 = arith.addf %513, %534 : vector<8x32xf32>
    %537 = arith.addf %535, %536 : vector<8x32xf32>
    %538 = vector.broadcast %366 : vector<1x32xf32> to vector<8x32xf32>
    %539 = arith.addf %537, %538 : vector<8x32xf32>
    %540 = vector.extract_strided_slice %373 {offsets = [8, 0], sizes = [8, 8], strides = [1, 1]} : vector<16x8xf32> to vector<8x8xf32>
    %541 = vector.extract_strided_slice %401 {offsets = [8, 0], sizes = [8, 8], strides = [1, 1]} : vector<16x8xf32> to vector<8x8xf32>
    %542 = vector.extract_strided_slice %429 {offsets = [8, 0], sizes = [8, 8], strides = [1, 1]} : vector<16x8xf32> to vector<8x8xf32>
    %cst_197 = arith.constant dense<0.000000e+00> : vector<8x8xf32>
    %543 = tpu.matmul %540, %541, %cst_197 {dimension_numbers = #tpu.dot_dimension_numbers<[1], [1], [0], [0], [0, 0, 1, 0], [], []>} : vector<8x8xf32>, vector<8x8xf32>, vector<8x8xf32> -> vector<8x8xf32>
    %cst_198 = arith.constant 0.353553385 : f32
    %544 = vector.broadcast %cst_198 : f32 to vector<8x8xf32>
    %545 = arith.mulf %543, %544 : vector<8x8xf32>
    %546 = vector.broadcast %26 : vector<1x8xf32> to vector<8x8xf32>
    %547 = arith.addf %545, %546 : vector<8x8xf32>
    %cst_199 = arith.constant dense<0xFF800000> : vector<8xf32>
    %548 = vector.multi_reduction <maximumf>, %547, %cst_199 [1] : vector<8x8xf32> to vector<8xf32>
    %549 = vector.shape_cast %548 : vector<8xf32> to vector<8x1xf32>
    %550 = vector.broadcast %549 : vector<8x1xf32> to vector<8x8xf32>
    %551 = arith.subf %547, %550 : vector<8x8xf32>
    %552 = math.exp %551 : vector<8x8xf32>
    %cst_200 = arith.constant dense<0.000000e+00> : vector<8xf32>
    %553 = vector.multi_reduction <add>, %552, %cst_200 [1] : vector<8x8xf32> to vector<8xf32>
    %554 = vector.shape_cast %553 : vector<8xf32> to vector<8x1xf32>
    %555 = vector.broadcast %554 : vector<8x1xf32> to vector<8x8xf32>
    %556 = arith.divf %552, %555 : vector<8x8xf32>
    %cst_201 = arith.constant dense<0.000000e+00> : vector<8x8xf32>
    %557 = tpu.matmul %556, %542, %cst_201 {dimension_numbers = #tpu.dot_dimension_numbers<[1], [0], [0], [1], [0, 0, 1, 1], [], []>} : vector<8x8xf32>, vector<8x8xf32>, vector<8x8xf32> -> vector<8x8xf32>
    %558 = vector.extract_strided_slice %358 {offsets = [0, 0, 0], sizes = [1, 8, 32], strides = [1, 1, 1]} : vector<4x8x32xf32> to vector<1x8x32xf32>
    %559 = vector.shape_cast %558 : vector<1x8x32xf32> to vector<8x32xf32>
    %cst_202 = arith.constant dense<0.000000e+00> : vector<8x32xf32>
    %560 = tpu.matmul %557, %559, %cst_202 {dimension_numbers = #tpu.dot_dimension_numbers<[1], [0], [0], [1], [0, 0, 1, 1], [], []>} : vector<8x8xf32>, vector<8x32xf32>, vector<8x32xf32> -> vector<8x32xf32>
    %561 = vector.extract_strided_slice %380 {offsets = [8, 0], sizes = [8, 8], strides = [1, 1]} : vector<16x8xf32> to vector<8x8xf32>
    %562 = vector.extract_strided_slice %408 {offsets = [8, 0], sizes = [8, 8], strides = [1, 1]} : vector<16x8xf32> to vector<8x8xf32>
    %563 = vector.extract_strided_slice %436 {offsets = [8, 0], sizes = [8, 8], strides = [1, 1]} : vector<16x8xf32> to vector<8x8xf32>
    %cst_203 = arith.constant dense<0.000000e+00> : vector<8x8xf32>
    %564 = tpu.matmul %561, %562, %cst_203 {dimension_numbers = #tpu.dot_dimension_numbers<[1], [1], [0], [0], [0, 0, 1, 0], [], []>} : vector<8x8xf32>, vector<8x8xf32>, vector<8x8xf32> -> vector<8x8xf32>
    %cst_204 = arith.constant 0.353553385 : f32
    %565 = vector.broadcast %cst_204 : f32 to vector<8x8xf32>
    %566 = arith.mulf %564, %565 : vector<8x8xf32>
    %567 = vector.broadcast %26 : vector<1x8xf32> to vector<8x8xf32>
    %568 = arith.addf %566, %567 : vector<8x8xf32>
    %cst_205 = arith.constant dense<0xFF800000> : vector<8xf32>
    %569 = vector.multi_reduction <maximumf>, %568, %cst_205 [1] : vector<8x8xf32> to vector<8xf32>
    %570 = vector.shape_cast %569 : vector<8xf32> to vector<8x1xf32>
    %571 = vector.broadcast %570 : vector<8x1xf32> to vector<8x8xf32>
    %572 = arith.subf %568, %571 : vector<8x8xf32>
    %573 = math.exp %572 : vector<8x8xf32>
    %cst_206 = arith.constant dense<0.000000e+00> : vector<8xf32>
    %574 = vector.multi_reduction <add>, %573, %cst_206 [1] : vector<8x8xf32> to vector<8xf32>
    %575 = vector.shape_cast %574 : vector<8xf32> to vector<8x1xf32>
    %576 = vector.broadcast %575 : vector<8x1xf32> to vector<8x8xf32>
    %577 = arith.divf %573, %576 : vector<8x8xf32>
    %cst_207 = arith.constant dense<0.000000e+00> : vector<8x8xf32>
    %578 = tpu.matmul %577, %563, %cst_207 {dimension_numbers = #tpu.dot_dimension_numbers<[1], [0], [0], [1], [0, 0, 1, 1], [], []>} : vector<8x8xf32>, vector<8x8xf32>, vector<8x8xf32> -> vector<8x8xf32>
    %579 = vector.extract_strided_slice %358 {offsets = [1, 0, 0], sizes = [1, 8, 32], strides = [1, 1, 1]} : vector<4x8x32xf32> to vector<1x8x32xf32>
    %580 = vector.shape_cast %579 : vector<1x8x32xf32> to vector<8x32xf32>
    %cst_208 = arith.constant dense<0.000000e+00> : vector<8x32xf32>
    %581 = tpu.matmul %578, %580, %cst_208 {dimension_numbers = #tpu.dot_dimension_numbers<[1], [0], [0], [1], [0, 0, 1, 1], [], []>} : vector<8x8xf32>, vector<8x32xf32>, vector<8x32xf32> -> vector<8x32xf32>
    %582 = vector.extract_strided_slice %387 {offsets = [8, 0], sizes = [8, 8], strides = [1, 1]} : vector<16x8xf32> to vector<8x8xf32>
    %583 = vector.extract_strided_slice %415 {offsets = [8, 0], sizes = [8, 8], strides = [1, 1]} : vector<16x8xf32> to vector<8x8xf32>
    %584 = vector.extract_strided_slice %443 {offsets = [8, 0], sizes = [8, 8], strides = [1, 1]} : vector<16x8xf32> to vector<8x8xf32>
    %cst_209 = arith.constant dense<0.000000e+00> : vector<8x8xf32>
    %585 = tpu.matmul %582, %583, %cst_209 {dimension_numbers = #tpu.dot_dimension_numbers<[1], [1], [0], [0], [0, 0, 1, 0], [], []>} : vector<8x8xf32>, vector<8x8xf32>, vector<8x8xf32> -> vector<8x8xf32>
    %cst_210 = arith.constant 0.353553385 : f32
    %586 = vector.broadcast %cst_210 : f32 to vector<8x8xf32>
    %587 = arith.mulf %585, %586 : vector<8x8xf32>
    %588 = vector.broadcast %26 : vector<1x8xf32> to vector<8x8xf32>
    %589 = arith.addf %587, %588 : vector<8x8xf32>
    %cst_211 = arith.constant dense<0xFF800000> : vector<8xf32>
    %590 = vector.multi_reduction <maximumf>, %589, %cst_211 [1] : vector<8x8xf32> to vector<8xf32>
    %591 = vector.shape_cast %590 : vector<8xf32> to vector<8x1xf32>
    %592 = vector.broadcast %591 : vector<8x1xf32> to vector<8x8xf32>
    %593 = arith.subf %589, %592 : vector<8x8xf32>
    %594 = math.exp %593 : vector<8x8xf32>
    %cst_212 = arith.constant dense<0.000000e+00> : vector<8xf32>
    %595 = vector.multi_reduction <add>, %594, %cst_212 [1] : vector<8x8xf32> to vector<8xf32>
    %596 = vector.shape_cast %595 : vector<8xf32> to vector<8x1xf32>
    %597 = vector.broadcast %596 : vector<8x1xf32> to vector<8x8xf32>
    %598 = arith.divf %594, %597 : vector<8x8xf32>
    %cst_213 = arith.constant dense<0.000000e+00> : vector<8x8xf32>
    %599 = tpu.matmul %598, %584, %cst_213 {dimension_numbers = #tpu.dot_dimension_numbers<[1], [0], [0], [1], [0, 0, 1, 1], [], []>} : vector<8x8xf32>, vector<8x8xf32>, vector<8x8xf32> -> vector<8x8xf32>
    %600 = vector.extract_strided_slice %358 {offsets = [2, 0, 0], sizes = [1, 8, 32], strides = [1, 1, 1]} : vector<4x8x32xf32> to vector<1x8x32xf32>
    %601 = vector.shape_cast %600 : vector<1x8x32xf32> to vector<8x32xf32>
    %cst_214 = arith.constant dense<0.000000e+00> : vector<8x32xf32>
    %602 = tpu.matmul %599, %601, %cst_214 {dimension_numbers = #tpu.dot_dimension_numbers<[1], [0], [0], [1], [0, 0, 1, 1], [], []>} : vector<8x8xf32>, vector<8x32xf32>, vector<8x32xf32> -> vector<8x32xf32>
    %603 = vector.extract_strided_slice %394 {offsets = [8, 0], sizes = [8, 8], strides = [1, 1]} : vector<16x8xf32> to vector<8x8xf32>
    %604 = vector.extract_strided_slice %422 {offsets = [8, 0], sizes = [8, 8], strides = [1, 1]} : vector<16x8xf32> to vector<8x8xf32>
    %605 = vector.extract_strided_slice %450 {offsets = [8, 0], sizes = [8, 8], strides = [1, 1]} : vector<16x8xf32> to vector<8x8xf32>
    %cst_215 = arith.constant dense<0.000000e+00> : vector<8x8xf32>
    %606 = tpu.matmul %603, %604, %cst_215 {dimension_numbers = #tpu.dot_dimension_numbers<[1], [1], [0], [0], [0, 0, 1, 0], [], []>} : vector<8x8xf32>, vector<8x8xf32>, vector<8x8xf32> -> vector<8x8xf32>
    %cst_216 = arith.constant 0.353553385 : f32
    %607 = vector.broadcast %cst_216 : f32 to vector<8x8xf32>
    %608 = arith.mulf %606, %607 : vector<8x8xf32>
    %609 = vector.broadcast %26 : vector<1x8xf32> to vector<8x8xf32>
    %610 = arith.addf %608, %609 : vector<8x8xf32>
    %cst_217 = arith.constant dense<0xFF800000> : vector<8xf32>
    %611 = vector.multi_reduction <maximumf>, %610, %cst_217 [1] : vector<8x8xf32> to vector<8xf32>
    %612 = vector.shape_cast %611 : vector<8xf32> to vector<8x1xf32>
    %613 = vector.broadcast %612 : vector<8x1xf32> to vector<8x8xf32>
    %614 = arith.subf %610, %613 : vector<8x8xf32>
    %615 = math.exp %614 : vector<8x8xf32>
    %cst_218 = arith.constant dense<0.000000e+00> : vector<8xf32>
    %616 = vector.multi_reduction <add>, %615, %cst_218 [1] : vector<8x8xf32> to vector<8xf32>
    %617 = vector.shape_cast %616 : vector<8xf32> to vector<8x1xf32>
    %618 = vector.broadcast %617 : vector<8x1xf32> to vector<8x8xf32>
    %619 = arith.divf %615, %618 : vector<8x8xf32>
    %cst_219 = arith.constant dense<0.000000e+00> : vector<8x8xf32>
    %620 = tpu.matmul %619, %605, %cst_219 {dimension_numbers = #tpu.dot_dimension_numbers<[1], [0], [0], [1], [0, 0, 1, 1], [], []>} : vector<8x8xf32>, vector<8x8xf32>, vector<8x8xf32> -> vector<8x8xf32>
    %621 = vector.extract_strided_slice %358 {offsets = [3, 0, 0], sizes = [1, 8, 32], strides = [1, 1, 1]} : vector<4x8x32xf32> to vector<1x8x32xf32>
    %622 = vector.shape_cast %621 : vector<1x8x32xf32> to vector<8x32xf32>
    %cst_220 = arith.constant dense<0.000000e+00> : vector<8x32xf32>
    %623 = tpu.matmul %620, %622, %cst_220 {dimension_numbers = #tpu.dot_dimension_numbers<[1], [0], [0], [1], [0, 0, 1, 1], [], []>} : vector<8x8xf32>, vector<8x32xf32>, vector<8x32xf32> -> vector<8x32xf32>
    %624 = arith.addf %560, %581 : vector<8x32xf32>
    %625 = arith.addf %602, %623 : vector<8x32xf32>
    %626 = arith.addf %624, %625 : vector<8x32xf32>
    %627 = vector.broadcast %366 : vector<1x32xf32> to vector<8x32xf32>
    %628 = arith.addf %626, %627 : vector<8x32xf32>
    %629 = tpu.concatenate %539, %628 in 0 : vector<8x32xf32>, vector<8x32xf32> -> vector<16x32xf32>
    %630 = arith.addf %324, %629 : vector<16x32xf32>
    %c2 = arith.constant 2 : index
    %c0_221 = arith.constant 0 : index
    %c0_222 = arith.constant 0 : index
    %631 = vector.load %arg6[%c2, %c0_221, %c0_222] : memref<7x1x32xf32, #tpu.memory_space<vmem>>, vector<1x1x32xf32>
    %632 = vector.shape_cast %631 : vector<1x1x32xf32> to vector<1x32xf32>
    %c2_223 = arith.constant 2 : index
    %c0_224 = arith.constant 0 : index
    %c0_225 = arith.constant 0 : index
    %633 = vector.load %arg7[%c2_223, %c0_224, %c0_225] : memref<7x1x32xf32, #tpu.memory_space<vmem>>, vector<1x1x32xf32>
    %634 = vector.shape_cast %633 : vector<1x1x32xf32> to vector<1x32xf32>
    %cst_226 = arith.constant dense<0.000000e+00> : vector<16xf32>
    %635 = vector.multi_reduction <add>, %630, %cst_226 [1] : vector<16x32xf32> to vector<16xf32>
    %636 = vector.shape_cast %635 : vector<16xf32> to vector<16x1xf32>
    %cst_227 = arith.constant 3.200000e+01 : f32
    %637 = vector.broadcast %cst_227 : f32 to vector<16x1xf32>
    %638 = arith.divf %636, %637 : vector<16x1xf32>
    %639 = vector.broadcast %638 : vector<16x1xf32> to vector<16x32xf32>
    %640 = arith.subf %630, %639 : vector<16x32xf32>
    %641 = arith.mulf %640, %640 : vector<16x32xf32>
    %cst_228 = arith.constant dense<0.000000e+00> : vector<16xf32>
    %642 = vector.multi_reduction <add>, %641, %cst_228 [1] : vector<16x32xf32> to vector<16xf32>
    %643 = vector.shape_cast %642 : vector<16xf32> to vector<16x1xf32>
    %cst_229 = arith.constant 0.0322580636 : f32
    %644 = vector.broadcast %cst_229 : f32 to vector<16x1xf32>
    %645 = arith.mulf %643, %644 : vector<16x1xf32>
    %646 = math.sqrt %645 : vector<16x1xf32>
    %cst_230 = arith.constant 9.99999997E-7 : f32
    %647 = vector.broadcast %cst_230 : f32 to vector<16x1xf32>
    %648 = arith.addf %646, %647 : vector<16x1xf32>
    %cst_231 = arith.constant 1.000000e+00 : f32
    %649 = vector.broadcast %cst_231 : f32 to vector<16x1xf32>
    %650 = arith.divf %649, %648 : vector<16x1xf32>
    %651 = vector.broadcast %650 : vector<16x1xf32> to vector<16x32xf32>
    %652 = arith.mulf %640, %651 : vector<16x32xf32>
    %653 = vector.broadcast %632 : vector<1x32xf32> to vector<16x32xf32>
    %654 = arith.mulf %653, %652 : vector<16x32xf32>
    %655 = vector.broadcast %634 : vector<1x32xf32> to vector<16x32xf32>
    %656 = arith.addf %654, %655 : vector<16x32xf32>
    %c0_232 = arith.constant 0 : index
    %c0_233 = arith.constant 0 : index
    %c0_234 = arith.constant 0 : index
    %657 = vector.load %arg24[%c0_232, %c0_233, %c0_234] : memref<2x32x128xf32, #tpu.memory_space<vmem>>, vector<1x32x128xf32>
    %658 = vector.shape_cast %657 : vector<1x32x128xf32> to vector<32x128xf32>
    %cst_235 = arith.constant dense<0.000000e+00> : vector<16x128xf32>
    %659 = tpu.matmul %656, %658, %cst_235 {dimension_numbers = #tpu.dot_dimension_numbers<[1], [0], [0], [1], [0, 0, 1, 1], [], []>} : vector<16x32xf32>, vector<32x128xf32>, vector<16x128xf32> -> vector<16x128xf32>
    %c0_236 = arith.constant 0 : index
    %c0_237 = arith.constant 0 : index
    %c0_238 = arith.constant 0 : index
    %660 = vector.load %arg25[%c0_236, %c0_237, %c0_238] : memref<2x1x128xf32, #tpu.memory_space<vmem>>, vector<1x1x128xf32>
    %661 = vector.shape_cast %660 : vector<1x1x128xf32> to vector<1x128xf32>
    %662 = vector.broadcast %661 : vector<1x128xf32> to vector<16x128xf32>
    %663 = arith.addf %659, %662 : vector<16x128xf32>
    %cst_239 = arith.constant 0.000000e+00 : f32
    %664 = vector.broadcast %cst_239 : f32 to vector<16x128xf32>
    %665 = arith.maximumf %663, %664 : vector<16x128xf32>
    %c0_240 = arith.constant 0 : index
    %c0_241 = arith.constant 0 : index
    %c0_242 = arith.constant 0 : index
    %666 = vector.load %arg26[%c0_240, %c0_241, %c0_242] : memref<2x128x32xf32, #tpu.memory_space<vmem>>, vector<1x128x32xf32>
    %667 = vector.shape_cast %666 : vector<1x128x32xf32> to vector<128x32xf32>
    %cst_243 = arith.constant dense<0.000000e+00> : vector<16x32xf32>
    %668 = tpu.matmul %665, %667, %cst_243 {dimension_numbers = #tpu.dot_dimension_numbers<[1], [0], [0], [1], [0, 0, 1, 1], [], []>} : vector<16x128xf32>, vector<128x32xf32>, vector<16x32xf32> -> vector<16x32xf32>
    %669 = arith.addf %630, %668 : vector<16x32xf32>
    %c0_244 = arith.constant 0 : index
    %c0_245 = arith.constant 0 : index
    %c0_246 = arith.constant 0 : index
    %670 = vector.load %arg27[%c0_244, %c0_245, %c0_246] : memref<2x1x32xf32, #tpu.memory_space<vmem>>, vector<1x1x32xf32>
    %671 = vector.shape_cast %670 : vector<1x1x32xf32> to vector<1x32xf32>
    %672 = vector.broadcast %671 : vector<1x32xf32> to vector<16x32xf32>
    %673 = arith.addf %669, %672 : vector<16x32xf32>
    %c3 = arith.constant 3 : index
    %c0_247 = arith.constant 0 : index
    %c0_248 = arith.constant 0 : index
    %674 = vector.load %arg6[%c3, %c0_247, %c0_248] : memref<7x1x32xf32, #tpu.memory_space<vmem>>, vector<1x1x32xf32>
    %675 = vector.shape_cast %674 : vector<1x1x32xf32> to vector<1x32xf32>
    %c3_249 = arith.constant 3 : index
    %c0_250 = arith.constant 0 : index
    %c0_251 = arith.constant 0 : index
    %676 = vector.load %arg7[%c3_249, %c0_250, %c0_251] : memref<7x1x32xf32, #tpu.memory_space<vmem>>, vector<1x1x32xf32>
    %677 = vector.shape_cast %676 : vector<1x1x32xf32> to vector<1x32xf32>
    %cst_252 = arith.constant dense<0.000000e+00> : vector<16xf32>
    %678 = vector.multi_reduction <add>, %673, %cst_252 [1] : vector<16x32xf32> to vector<16xf32>
    %679 = vector.shape_cast %678 : vector<16xf32> to vector<16x1xf32>
    %cst_253 = arith.constant 3.200000e+01 : f32
    %680 = vector.broadcast %cst_253 : f32 to vector<16x1xf32>
    %681 = arith.divf %679, %680 : vector<16x1xf32>
    %682 = vector.broadcast %681 : vector<16x1xf32> to vector<16x32xf32>
    %683 = arith.subf %673, %682 : vector<16x32xf32>
    %684 = arith.mulf %683, %683 : vector<16x32xf32>
    %cst_254 = arith.constant dense<0.000000e+00> : vector<16xf32>
    %685 = vector.multi_reduction <add>, %684, %cst_254 [1] : vector<16x32xf32> to vector<16xf32>
    %686 = vector.shape_cast %685 : vector<16xf32> to vector<16x1xf32>
    %cst_255 = arith.constant 0.0322580636 : f32
    %687 = vector.broadcast %cst_255 : f32 to vector<16x1xf32>
    %688 = arith.mulf %686, %687 : vector<16x1xf32>
    %689 = math.sqrt %688 : vector<16x1xf32>
    %cst_256 = arith.constant 9.99999997E-7 : f32
    %690 = vector.broadcast %cst_256 : f32 to vector<16x1xf32>
    %691 = arith.addf %689, %690 : vector<16x1xf32>
    %cst_257 = arith.constant 1.000000e+00 : f32
    %692 = vector.broadcast %cst_257 : f32 to vector<16x1xf32>
    %693 = arith.divf %692, %691 : vector<16x1xf32>
    %694 = vector.broadcast %693 : vector<16x1xf32> to vector<16x32xf32>
    %695 = arith.mulf %683, %694 : vector<16x32xf32>
    %696 = vector.broadcast %675 : vector<1x32xf32> to vector<16x32xf32>
    %697 = arith.mulf %696, %695 : vector<16x32xf32>
    %698 = vector.broadcast %677 : vector<1x32xf32> to vector<16x32xf32>
    %699 = arith.addf %697, %698 : vector<16x32xf32>
    %c1_258 = arith.constant 1 : index
    %c0_259 = arith.constant 0 : index
    %c0_260 = arith.constant 0 : index
    %c0_261 = arith.constant 0 : index
    %700 = vector.load %arg8[%c1_258, %c0_259, %c0_260, %c0_261] : memref<2x4x32x8xf32, #tpu.memory_space<vmem>>, vector<1x4x32x8xf32>
    %701 = vector.shape_cast %700 : vector<1x4x32x8xf32> to vector<4x32x8xf32>
    %c1_262 = arith.constant 1 : index
    %c0_263 = arith.constant 0 : index
    %c0_264 = arith.constant 0 : index
    %c0_265 = arith.constant 0 : index
    %702 = vector.load %arg10[%c1_262, %c0_263, %c0_264, %c0_265] : memref<2x4x32x8xf32, #tpu.memory_space<vmem>>, vector<1x4x32x8xf32>
    %703 = vector.shape_cast %702 : vector<1x4x32x8xf32> to vector<4x32x8xf32>
    %c1_266 = arith.constant 1 : index
    %c0_267 = arith.constant 0 : index
    %c0_268 = arith.constant 0 : index
    %c0_269 = arith.constant 0 : index
    %704 = vector.load %arg12[%c1_266, %c0_267, %c0_268, %c0_269] : memref<2x4x32x8xf32, #tpu.memory_space<vmem>>, vector<1x4x32x8xf32>
    %705 = vector.shape_cast %704 : vector<1x4x32x8xf32> to vector<4x32x8xf32>
    %c1_270 = arith.constant 1 : index
    %c0_271 = arith.constant 0 : index
    %c0_272 = arith.constant 0 : index
    %c0_273 = arith.constant 0 : index
    %706 = vector.load %arg14[%c1_270, %c0_271, %c0_272, %c0_273] : memref<2x4x8x32xf32, #tpu.memory_space<vmem>>, vector<1x4x8x32xf32>
    %707 = vector.shape_cast %706 : vector<1x4x8x32xf32> to vector<4x8x32xf32>
    %c1_274 = arith.constant 1 : index
    %c0_275 = arith.constant 0 : index
    %c0_276 = arith.constant 0 : index
    %c0_277 = arith.constant 0 : index
    %708 = vector.load %arg9[%c1_274, %c0_275, %c0_276, %c0_277] : memref<2x4x1x8xf32, #tpu.memory_space<vmem>>, vector<1x4x1x8xf32>
    %709 = vector.shape_cast %708 : vector<1x4x1x8xf32> to vector<4x1x8xf32>
    %c1_278 = arith.constant 1 : index
    %c0_279 = arith.constant 0 : index
    %c0_280 = arith.constant 0 : index
    %c0_281 = arith.constant 0 : index
    %710 = vector.load %arg11[%c1_278, %c0_279, %c0_280, %c0_281] : memref<2x4x1x8xf32, #tpu.memory_space<vmem>>, vector<1x4x1x8xf32>
    %711 = vector.shape_cast %710 : vector<1x4x1x8xf32> to vector<4x1x8xf32>
    %c1_282 = arith.constant 1 : index
    %c0_283 = arith.constant 0 : index
    %c0_284 = arith.constant 0 : index
    %c0_285 = arith.constant 0 : index
    %712 = vector.load %arg13[%c1_282, %c0_283, %c0_284, %c0_285] : memref<2x4x1x8xf32, #tpu.memory_space<vmem>>, vector<1x4x1x8xf32>
    %713 = vector.shape_cast %712 : vector<1x4x1x8xf32> to vector<4x1x8xf32>
    %c1_286 = arith.constant 1 : index
    %c0_287 = arith.constant 0 : index
    %c0_288 = arith.constant 0 : index
    %714 = vector.load %arg15[%c1_286, %c0_287, %c0_288] : memref<2x1x32xf32, #tpu.memory_space<vmem>>, vector<1x1x32xf32>
    %715 = vector.shape_cast %714 : vector<1x1x32xf32> to vector<1x32xf32>
    %716 = vector.extract_strided_slice %701 {offsets = [0, 0, 0], sizes = [1, 32, 8], strides = [1, 1, 1]} : vector<4x32x8xf32> to vector<1x32x8xf32>
    %717 = vector.shape_cast %716 : vector<1x32x8xf32> to vector<32x8xf32>
    %cst_289 = arith.constant dense<0.000000e+00> : vector<16x8xf32>
    %718 = tpu.matmul %699, %717, %cst_289 {dimension_numbers = #tpu.dot_dimension_numbers<[1], [0], [0], [1], [0, 0, 1, 1], [], []>} : vector<16x32xf32>, vector<32x8xf32>, vector<16x8xf32> -> vector<16x8xf32>
    %719 = vector.extract_strided_slice %709 {offsets = [0, 0, 0], sizes = [1, 1, 8], strides = [1, 1, 1]} : vector<4x1x8xf32> to vector<1x1x8xf32>
    %720 = vector.shape_cast %719 : vector<1x1x8xf32> to vector<1x8xf32>
    %721 = vector.broadcast %720 : vector<1x8xf32> to vector<16x8xf32>
    %722 = arith.addf %718, %721 : vector<16x8xf32>
    %723 = vector.extract_strided_slice %701 {offsets = [1, 0, 0], sizes = [1, 32, 8], strides = [1, 1, 1]} : vector<4x32x8xf32> to vector<1x32x8xf32>
    %724 = vector.shape_cast %723 : vector<1x32x8xf32> to vector<32x8xf32>
    %cst_290 = arith.constant dense<0.000000e+00> : vector<16x8xf32>
    %725 = tpu.matmul %699, %724, %cst_290 {dimension_numbers = #tpu.dot_dimension_numbers<[1], [0], [0], [1], [0, 0, 1, 1], [], []>} : vector<16x32xf32>, vector<32x8xf32>, vector<16x8xf32> -> vector<16x8xf32>
    %726 = vector.extract_strided_slice %709 {offsets = [1, 0, 0], sizes = [1, 1, 8], strides = [1, 1, 1]} : vector<4x1x8xf32> to vector<1x1x8xf32>
    %727 = vector.shape_cast %726 : vector<1x1x8xf32> to vector<1x8xf32>
    %728 = vector.broadcast %727 : vector<1x8xf32> to vector<16x8xf32>
    %729 = arith.addf %725, %728 : vector<16x8xf32>
    %730 = vector.extract_strided_slice %701 {offsets = [2, 0, 0], sizes = [1, 32, 8], strides = [1, 1, 1]} : vector<4x32x8xf32> to vector<1x32x8xf32>
    %731 = vector.shape_cast %730 : vector<1x32x8xf32> to vector<32x8xf32>
    %cst_291 = arith.constant dense<0.000000e+00> : vector<16x8xf32>
    %732 = tpu.matmul %699, %731, %cst_291 {dimension_numbers = #tpu.dot_dimension_numbers<[1], [0], [0], [1], [0, 0, 1, 1], [], []>} : vector<16x32xf32>, vector<32x8xf32>, vector<16x8xf32> -> vector<16x8xf32>
    %733 = vector.extract_strided_slice %709 {offsets = [2, 0, 0], sizes = [1, 1, 8], strides = [1, 1, 1]} : vector<4x1x8xf32> to vector<1x1x8xf32>
    %734 = vector.shape_cast %733 : vector<1x1x8xf32> to vector<1x8xf32>
    %735 = vector.broadcast %734 : vector<1x8xf32> to vector<16x8xf32>
    %736 = arith.addf %732, %735 : vector<16x8xf32>
    %737 = vector.extract_strided_slice %701 {offsets = [3, 0, 0], sizes = [1, 32, 8], strides = [1, 1, 1]} : vector<4x32x8xf32> to vector<1x32x8xf32>
    %738 = vector.shape_cast %737 : vector<1x32x8xf32> to vector<32x8xf32>
    %cst_292 = arith.constant dense<0.000000e+00> : vector<16x8xf32>
    %739 = tpu.matmul %699, %738, %cst_292 {dimension_numbers = #tpu.dot_dimension_numbers<[1], [0], [0], [1], [0, 0, 1, 1], [], []>} : vector<16x32xf32>, vector<32x8xf32>, vector<16x8xf32> -> vector<16x8xf32>
    %740 = vector.extract_strided_slice %709 {offsets = [3, 0, 0], sizes = [1, 1, 8], strides = [1, 1, 1]} : vector<4x1x8xf32> to vector<1x1x8xf32>
    %741 = vector.shape_cast %740 : vector<1x1x8xf32> to vector<1x8xf32>
    %742 = vector.broadcast %741 : vector<1x8xf32> to vector<16x8xf32>
    %743 = arith.addf %739, %742 : vector<16x8xf32>
    %744 = vector.extract_strided_slice %703 {offsets = [0, 0, 0], sizes = [1, 32, 8], strides = [1, 1, 1]} : vector<4x32x8xf32> to vector<1x32x8xf32>
    %745 = vector.shape_cast %744 : vector<1x32x8xf32> to vector<32x8xf32>
    %cst_293 = arith.constant dense<0.000000e+00> : vector<16x8xf32>
    %746 = tpu.matmul %699, %745, %cst_293 {dimension_numbers = #tpu.dot_dimension_numbers<[1], [0], [0], [1], [0, 0, 1, 1], [], []>} : vector<16x32xf32>, vector<32x8xf32>, vector<16x8xf32> -> vector<16x8xf32>
    %747 = vector.extract_strided_slice %711 {offsets = [0, 0, 0], sizes = [1, 1, 8], strides = [1, 1, 1]} : vector<4x1x8xf32> to vector<1x1x8xf32>
    %748 = vector.shape_cast %747 : vector<1x1x8xf32> to vector<1x8xf32>
    %749 = vector.broadcast %748 : vector<1x8xf32> to vector<16x8xf32>
    %750 = arith.addf %746, %749 : vector<16x8xf32>
    %751 = vector.extract_strided_slice %703 {offsets = [1, 0, 0], sizes = [1, 32, 8], strides = [1, 1, 1]} : vector<4x32x8xf32> to vector<1x32x8xf32>
    %752 = vector.shape_cast %751 : vector<1x32x8xf32> to vector<32x8xf32>
    %cst_294 = arith.constant dense<0.000000e+00> : vector<16x8xf32>
    %753 = tpu.matmul %699, %752, %cst_294 {dimension_numbers = #tpu.dot_dimension_numbers<[1], [0], [0], [1], [0, 0, 1, 1], [], []>} : vector<16x32xf32>, vector<32x8xf32>, vector<16x8xf32> -> vector<16x8xf32>
    %754 = vector.extract_strided_slice %711 {offsets = [1, 0, 0], sizes = [1, 1, 8], strides = [1, 1, 1]} : vector<4x1x8xf32> to vector<1x1x8xf32>
    %755 = vector.shape_cast %754 : vector<1x1x8xf32> to vector<1x8xf32>
    %756 = vector.broadcast %755 : vector<1x8xf32> to vector<16x8xf32>
    %757 = arith.addf %753, %756 : vector<16x8xf32>
    %758 = vector.extract_strided_slice %703 {offsets = [2, 0, 0], sizes = [1, 32, 8], strides = [1, 1, 1]} : vector<4x32x8xf32> to vector<1x32x8xf32>
    %759 = vector.shape_cast %758 : vector<1x32x8xf32> to vector<32x8xf32>
    %cst_295 = arith.constant dense<0.000000e+00> : vector<16x8xf32>
    %760 = tpu.matmul %699, %759, %cst_295 {dimension_numbers = #tpu.dot_dimension_numbers<[1], [0], [0], [1], [0, 0, 1, 1], [], []>} : vector<16x32xf32>, vector<32x8xf32>, vector<16x8xf32> -> vector<16x8xf32>
    %761 = vector.extract_strided_slice %711 {offsets = [2, 0, 0], sizes = [1, 1, 8], strides = [1, 1, 1]} : vector<4x1x8xf32> to vector<1x1x8xf32>
    %762 = vector.shape_cast %761 : vector<1x1x8xf32> to vector<1x8xf32>
    %763 = vector.broadcast %762 : vector<1x8xf32> to vector<16x8xf32>
    %764 = arith.addf %760, %763 : vector<16x8xf32>
    %765 = vector.extract_strided_slice %703 {offsets = [3, 0, 0], sizes = [1, 32, 8], strides = [1, 1, 1]} : vector<4x32x8xf32> to vector<1x32x8xf32>
    %766 = vector.shape_cast %765 : vector<1x32x8xf32> to vector<32x8xf32>
    %cst_296 = arith.constant dense<0.000000e+00> : vector<16x8xf32>
    %767 = tpu.matmul %699, %766, %cst_296 {dimension_numbers = #tpu.dot_dimension_numbers<[1], [0], [0], [1], [0, 0, 1, 1], [], []>} : vector<16x32xf32>, vector<32x8xf32>, vector<16x8xf32> -> vector<16x8xf32>
    %768 = vector.extract_strided_slice %711 {offsets = [3, 0, 0], sizes = [1, 1, 8], strides = [1, 1, 1]} : vector<4x1x8xf32> to vector<1x1x8xf32>
    %769 = vector.shape_cast %768 : vector<1x1x8xf32> to vector<1x8xf32>
    %770 = vector.broadcast %769 : vector<1x8xf32> to vector<16x8xf32>
    %771 = arith.addf %767, %770 : vector<16x8xf32>
    %772 = vector.extract_strided_slice %705 {offsets = [0, 0, 0], sizes = [1, 32, 8], strides = [1, 1, 1]} : vector<4x32x8xf32> to vector<1x32x8xf32>
    %773 = vector.shape_cast %772 : vector<1x32x8xf32> to vector<32x8xf32>
    %cst_297 = arith.constant dense<0.000000e+00> : vector<16x8xf32>
    %774 = tpu.matmul %699, %773, %cst_297 {dimension_numbers = #tpu.dot_dimension_numbers<[1], [0], [0], [1], [0, 0, 1, 1], [], []>} : vector<16x32xf32>, vector<32x8xf32>, vector<16x8xf32> -> vector<16x8xf32>
    %775 = vector.extract_strided_slice %713 {offsets = [0, 0, 0], sizes = [1, 1, 8], strides = [1, 1, 1]} : vector<4x1x8xf32> to vector<1x1x8xf32>
    %776 = vector.shape_cast %775 : vector<1x1x8xf32> to vector<1x8xf32>
    %777 = vector.broadcast %776 : vector<1x8xf32> to vector<16x8xf32>
    %778 = arith.addf %774, %777 : vector<16x8xf32>
    %779 = vector.extract_strided_slice %705 {offsets = [1, 0, 0], sizes = [1, 32, 8], strides = [1, 1, 1]} : vector<4x32x8xf32> to vector<1x32x8xf32>
    %780 = vector.shape_cast %779 : vector<1x32x8xf32> to vector<32x8xf32>
    %cst_298 = arith.constant dense<0.000000e+00> : vector<16x8xf32>
    %781 = tpu.matmul %699, %780, %cst_298 {dimension_numbers = #tpu.dot_dimension_numbers<[1], [0], [0], [1], [0, 0, 1, 1], [], []>} : vector<16x32xf32>, vector<32x8xf32>, vector<16x8xf32> -> vector<16x8xf32>
    %782 = vector.extract_strided_slice %713 {offsets = [1, 0, 0], sizes = [1, 1, 8], strides = [1, 1, 1]} : vector<4x1x8xf32> to vector<1x1x8xf32>
    %783 = vector.shape_cast %782 : vector<1x1x8xf32> to vector<1x8xf32>
    %784 = vector.broadcast %783 : vector<1x8xf32> to vector<16x8xf32>
    %785 = arith.addf %781, %784 : vector<16x8xf32>
    %786 = vector.extract_strided_slice %705 {offsets = [2, 0, 0], sizes = [1, 32, 8], strides = [1, 1, 1]} : vector<4x32x8xf32> to vector<1x32x8xf32>
    %787 = vector.shape_cast %786 : vector<1x32x8xf32> to vector<32x8xf32>
    %cst_299 = arith.constant dense<0.000000e+00> : vector<16x8xf32>
    %788 = tpu.matmul %699, %787, %cst_299 {dimension_numbers = #tpu.dot_dimension_numbers<[1], [0], [0], [1], [0, 0, 1, 1], [], []>} : vector<16x32xf32>, vector<32x8xf32>, vector<16x8xf32> -> vector<16x8xf32>
    %789 = vector.extract_strided_slice %713 {offsets = [2, 0, 0], sizes = [1, 1, 8], strides = [1, 1, 1]} : vector<4x1x8xf32> to vector<1x1x8xf32>
    %790 = vector.shape_cast %789 : vector<1x1x8xf32> to vector<1x8xf32>
    %791 = vector.broadcast %790 : vector<1x8xf32> to vector<16x8xf32>
    %792 = arith.addf %788, %791 : vector<16x8xf32>
    %793 = vector.extract_strided_slice %705 {offsets = [3, 0, 0], sizes = [1, 32, 8], strides = [1, 1, 1]} : vector<4x32x8xf32> to vector<1x32x8xf32>
    %794 = vector.shape_cast %793 : vector<1x32x8xf32> to vector<32x8xf32>
    %cst_300 = arith.constant dense<0.000000e+00> : vector<16x8xf32>
    %795 = tpu.matmul %699, %794, %cst_300 {dimension_numbers = #tpu.dot_dimension_numbers<[1], [0], [0], [1], [0, 0, 1, 1], [], []>} : vector<16x32xf32>, vector<32x8xf32>, vector<16x8xf32> -> vector<16x8xf32>
    %796 = vector.extract_strided_slice %713 {offsets = [3, 0, 0], sizes = [1, 1, 8], strides = [1, 1, 1]} : vector<4x1x8xf32> to vector<1x1x8xf32>
    %797 = vector.shape_cast %796 : vector<1x1x8xf32> to vector<1x8xf32>
    %798 = vector.broadcast %797 : vector<1x8xf32> to vector<16x8xf32>
    %799 = arith.addf %795, %798 : vector<16x8xf32>
    %800 = vector.extract_strided_slice %722 {offsets = [0, 0], sizes = [8, 8], strides = [1, 1]} : vector<16x8xf32> to vector<8x8xf32>
    %801 = vector.extract_strided_slice %750 {offsets = [0, 0], sizes = [8, 8], strides = [1, 1]} : vector<16x8xf32> to vector<8x8xf32>
    %802 = vector.extract_strided_slice %778 {offsets = [0, 0], sizes = [8, 8], strides = [1, 1]} : vector<16x8xf32> to vector<8x8xf32>
    %cst_301 = arith.constant dense<0.000000e+00> : vector<8x8xf32>
    %803 = tpu.matmul %800, %801, %cst_301 {dimension_numbers = #tpu.dot_dimension_numbers<[1], [1], [0], [0], [0, 0, 1, 0], [], []>} : vector<8x8xf32>, vector<8x8xf32>, vector<8x8xf32> -> vector<8x8xf32>
    %cst_302 = arith.constant 0.353553385 : f32
    %804 = vector.broadcast %cst_302 : f32 to vector<8x8xf32>
    %805 = arith.mulf %803, %804 : vector<8x8xf32>
    %806 = arith.addf %805, %23 : vector<8x8xf32>
    %cst_303 = arith.constant dense<0xFF800000> : vector<8xf32>
    %807 = vector.multi_reduction <maximumf>, %806, %cst_303 [1] : vector<8x8xf32> to vector<8xf32>
    %808 = vector.shape_cast %807 : vector<8xf32> to vector<8x1xf32>
    %809 = vector.broadcast %808 : vector<8x1xf32> to vector<8x8xf32>
    %810 = arith.subf %806, %809 : vector<8x8xf32>
    %811 = math.exp %810 : vector<8x8xf32>
    %cst_304 = arith.constant dense<0.000000e+00> : vector<8xf32>
    %812 = vector.multi_reduction <add>, %811, %cst_304 [1] : vector<8x8xf32> to vector<8xf32>
    %813 = vector.shape_cast %812 : vector<8xf32> to vector<8x1xf32>
    %814 = vector.broadcast %813 : vector<8x1xf32> to vector<8x8xf32>
    %815 = arith.divf %811, %814 : vector<8x8xf32>
    %cst_305 = arith.constant dense<0.000000e+00> : vector<8x8xf32>
    %816 = tpu.matmul %815, %802, %cst_305 {dimension_numbers = #tpu.dot_dimension_numbers<[1], [0], [0], [1], [0, 0, 1, 1], [], []>} : vector<8x8xf32>, vector<8x8xf32>, vector<8x8xf32> -> vector<8x8xf32>
    %817 = vector.extract_strided_slice %707 {offsets = [0, 0, 0], sizes = [1, 8, 32], strides = [1, 1, 1]} : vector<4x8x32xf32> to vector<1x8x32xf32>
    %818 = vector.shape_cast %817 : vector<1x8x32xf32> to vector<8x32xf32>
    %cst_306 = arith.constant dense<0.000000e+00> : vector<8x32xf32>
    %819 = tpu.matmul %816, %818, %cst_306 {dimension_numbers = #tpu.dot_dimension_numbers<[1], [0], [0], [1], [0, 0, 1, 1], [], []>} : vector<8x8xf32>, vector<8x32xf32>, vector<8x32xf32> -> vector<8x32xf32>
    %820 = vector.extract_strided_slice %729 {offsets = [0, 0], sizes = [8, 8], strides = [1, 1]} : vector<16x8xf32> to vector<8x8xf32>
    %821 = vector.extract_strided_slice %757 {offsets = [0, 0], sizes = [8, 8], strides = [1, 1]} : vector<16x8xf32> to vector<8x8xf32>
    %822 = vector.extract_strided_slice %785 {offsets = [0, 0], sizes = [8, 8], strides = [1, 1]} : vector<16x8xf32> to vector<8x8xf32>
    %cst_307 = arith.constant dense<0.000000e+00> : vector<8x8xf32>
    %823 = tpu.matmul %820, %821, %cst_307 {dimension_numbers = #tpu.dot_dimension_numbers<[1], [1], [0], [0], [0, 0, 1, 0], [], []>} : vector<8x8xf32>, vector<8x8xf32>, vector<8x8xf32> -> vector<8x8xf32>
    %cst_308 = arith.constant 0.353553385 : f32
    %824 = vector.broadcast %cst_308 : f32 to vector<8x8xf32>
    %825 = arith.mulf %823, %824 : vector<8x8xf32>
    %826 = arith.addf %825, %23 : vector<8x8xf32>
    %cst_309 = arith.constant dense<0xFF800000> : vector<8xf32>
    %827 = vector.multi_reduction <maximumf>, %826, %cst_309 [1] : vector<8x8xf32> to vector<8xf32>
    %828 = vector.shape_cast %827 : vector<8xf32> to vector<8x1xf32>
    %829 = vector.broadcast %828 : vector<8x1xf32> to vector<8x8xf32>
    %830 = arith.subf %826, %829 : vector<8x8xf32>
    %831 = math.exp %830 : vector<8x8xf32>
    %cst_310 = arith.constant dense<0.000000e+00> : vector<8xf32>
    %832 = vector.multi_reduction <add>, %831, %cst_310 [1] : vector<8x8xf32> to vector<8xf32>
    %833 = vector.shape_cast %832 : vector<8xf32> to vector<8x1xf32>
    %834 = vector.broadcast %833 : vector<8x1xf32> to vector<8x8xf32>
    %835 = arith.divf %831, %834 : vector<8x8xf32>
    %cst_311 = arith.constant dense<0.000000e+00> : vector<8x8xf32>
    %836 = tpu.matmul %835, %822, %cst_311 {dimension_numbers = #tpu.dot_dimension_numbers<[1], [0], [0], [1], [0, 0, 1, 1], [], []>} : vector<8x8xf32>, vector<8x8xf32>, vector<8x8xf32> -> vector<8x8xf32>
    %837 = vector.extract_strided_slice %707 {offsets = [1, 0, 0], sizes = [1, 8, 32], strides = [1, 1, 1]} : vector<4x8x32xf32> to vector<1x8x32xf32>
    %838 = vector.shape_cast %837 : vector<1x8x32xf32> to vector<8x32xf32>
    %cst_312 = arith.constant dense<0.000000e+00> : vector<8x32xf32>
    %839 = tpu.matmul %836, %838, %cst_312 {dimension_numbers = #tpu.dot_dimension_numbers<[1], [0], [0], [1], [0, 0, 1, 1], [], []>} : vector<8x8xf32>, vector<8x32xf32>, vector<8x32xf32> -> vector<8x32xf32>
    %840 = vector.extract_strided_slice %736 {offsets = [0, 0], sizes = [8, 8], strides = [1, 1]} : vector<16x8xf32> to vector<8x8xf32>
    %841 = vector.extract_strided_slice %764 {offsets = [0, 0], sizes = [8, 8], strides = [1, 1]} : vector<16x8xf32> to vector<8x8xf32>
    %842 = vector.extract_strided_slice %792 {offsets = [0, 0], sizes = [8, 8], strides = [1, 1]} : vector<16x8xf32> to vector<8x8xf32>
    %cst_313 = arith.constant dense<0.000000e+00> : vector<8x8xf32>
    %843 = tpu.matmul %840, %841, %cst_313 {dimension_numbers = #tpu.dot_dimension_numbers<[1], [1], [0], [0], [0, 0, 1, 0], [], []>} : vector<8x8xf32>, vector<8x8xf32>, vector<8x8xf32> -> vector<8x8xf32>
    %cst_314 = arith.constant 0.353553385 : f32
    %844 = vector.broadcast %cst_314 : f32 to vector<8x8xf32>
    %845 = arith.mulf %843, %844 : vector<8x8xf32>
    %846 = arith.addf %845, %23 : vector<8x8xf32>
    %cst_315 = arith.constant dense<0xFF800000> : vector<8xf32>
    %847 = vector.multi_reduction <maximumf>, %846, %cst_315 [1] : vector<8x8xf32> to vector<8xf32>
    %848 = vector.shape_cast %847 : vector<8xf32> to vector<8x1xf32>
    %849 = vector.broadcast %848 : vector<8x1xf32> to vector<8x8xf32>
    %850 = arith.subf %846, %849 : vector<8x8xf32>
    %851 = math.exp %850 : vector<8x8xf32>
    %cst_316 = arith.constant dense<0.000000e+00> : vector<8xf32>
    %852 = vector.multi_reduction <add>, %851, %cst_316 [1] : vector<8x8xf32> to vector<8xf32>
    %853 = vector.shape_cast %852 : vector<8xf32> to vector<8x1xf32>
    %854 = vector.broadcast %853 : vector<8x1xf32> to vector<8x8xf32>
    %855 = arith.divf %851, %854 : vector<8x8xf32>
    %cst_317 = arith.constant dense<0.000000e+00> : vector<8x8xf32>
    %856 = tpu.matmul %855, %842, %cst_317 {dimension_numbers = #tpu.dot_dimension_numbers<[1], [0], [0], [1], [0, 0, 1, 1], [], []>} : vector<8x8xf32>, vector<8x8xf32>, vector<8x8xf32> -> vector<8x8xf32>
    %857 = vector.extract_strided_slice %707 {offsets = [2, 0, 0], sizes = [1, 8, 32], strides = [1, 1, 1]} : vector<4x8x32xf32> to vector<1x8x32xf32>
    %858 = vector.shape_cast %857 : vector<1x8x32xf32> to vector<8x32xf32>
    %cst_318 = arith.constant dense<0.000000e+00> : vector<8x32xf32>
    %859 = tpu.matmul %856, %858, %cst_318 {dimension_numbers = #tpu.dot_dimension_numbers<[1], [0], [0], [1], [0, 0, 1, 1], [], []>} : vector<8x8xf32>, vector<8x32xf32>, vector<8x32xf32> -> vector<8x32xf32>
    %860 = vector.extract_strided_slice %743 {offsets = [0, 0], sizes = [8, 8], strides = [1, 1]} : vector<16x8xf32> to vector<8x8xf32>
    %861 = vector.extract_strided_slice %771 {offsets = [0, 0], sizes = [8, 8], strides = [1, 1]} : vector<16x8xf32> to vector<8x8xf32>
    %862 = vector.extract_strided_slice %799 {offsets = [0, 0], sizes = [8, 8], strides = [1, 1]} : vector<16x8xf32> to vector<8x8xf32>
    %cst_319 = arith.constant dense<0.000000e+00> : vector<8x8xf32>
    %863 = tpu.matmul %860, %861, %cst_319 {dimension_numbers = #tpu.dot_dimension_numbers<[1], [1], [0], [0], [0, 0, 1, 0], [], []>} : vector<8x8xf32>, vector<8x8xf32>, vector<8x8xf32> -> vector<8x8xf32>
    %cst_320 = arith.constant 0.353553385 : f32
    %864 = vector.broadcast %cst_320 : f32 to vector<8x8xf32>
    %865 = arith.mulf %863, %864 : vector<8x8xf32>
    %866 = arith.addf %865, %23 : vector<8x8xf32>
    %cst_321 = arith.constant dense<0xFF800000> : vector<8xf32>
    %867 = vector.multi_reduction <maximumf>, %866, %cst_321 [1] : vector<8x8xf32> to vector<8xf32>
    %868 = vector.shape_cast %867 : vector<8xf32> to vector<8x1xf32>
    %869 = vector.broadcast %868 : vector<8x1xf32> to vector<8x8xf32>
    %870 = arith.subf %866, %869 : vector<8x8xf32>
    %871 = math.exp %870 : vector<8x8xf32>
    %cst_322 = arith.constant dense<0.000000e+00> : vector<8xf32>
    %872 = vector.multi_reduction <add>, %871, %cst_322 [1] : vector<8x8xf32> to vector<8xf32>
    %873 = vector.shape_cast %872 : vector<8xf32> to vector<8x1xf32>
    %874 = vector.broadcast %873 : vector<8x1xf32> to vector<8x8xf32>
    %875 = arith.divf %871, %874 : vector<8x8xf32>
    %cst_323 = arith.constant dense<0.000000e+00> : vector<8x8xf32>
    %876 = tpu.matmul %875, %862, %cst_323 {dimension_numbers = #tpu.dot_dimension_numbers<[1], [0], [0], [1], [0, 0, 1, 1], [], []>} : vector<8x8xf32>, vector<8x8xf32>, vector<8x8xf32> -> vector<8x8xf32>
    %877 = vector.extract_strided_slice %707 {offsets = [3, 0, 0], sizes = [1, 8, 32], strides = [1, 1, 1]} : vector<4x8x32xf32> to vector<1x8x32xf32>
    %878 = vector.shape_cast %877 : vector<1x8x32xf32> to vector<8x32xf32>
    %cst_324 = arith.constant dense<0.000000e+00> : vector<8x32xf32>
    %879 = tpu.matmul %876, %878, %cst_324 {dimension_numbers = #tpu.dot_dimension_numbers<[1], [0], [0], [1], [0, 0, 1, 1], [], []>} : vector<8x8xf32>, vector<8x32xf32>, vector<8x32xf32> -> vector<8x32xf32>
    %880 = arith.addf %819, %839 : vector<8x32xf32>
    %881 = arith.addf %859, %879 : vector<8x32xf32>
    %882 = arith.addf %880, %881 : vector<8x32xf32>
    %883 = vector.broadcast %715 : vector<1x32xf32> to vector<8x32xf32>
    %884 = arith.addf %882, %883 : vector<8x32xf32>
    %885 = vector.extract_strided_slice %722 {offsets = [8, 0], sizes = [8, 8], strides = [1, 1]} : vector<16x8xf32> to vector<8x8xf32>
    %886 = vector.extract_strided_slice %750 {offsets = [8, 0], sizes = [8, 8], strides = [1, 1]} : vector<16x8xf32> to vector<8x8xf32>
    %887 = vector.extract_strided_slice %778 {offsets = [8, 0], sizes = [8, 8], strides = [1, 1]} : vector<16x8xf32> to vector<8x8xf32>
    %cst_325 = arith.constant dense<0.000000e+00> : vector<8x8xf32>
    %888 = tpu.matmul %885, %886, %cst_325 {dimension_numbers = #tpu.dot_dimension_numbers<[1], [1], [0], [0], [0, 0, 1, 0], [], []>} : vector<8x8xf32>, vector<8x8xf32>, vector<8x8xf32> -> vector<8x8xf32>
    %cst_326 = arith.constant 0.353553385 : f32
    %889 = vector.broadcast %cst_326 : f32 to vector<8x8xf32>
    %890 = arith.mulf %888, %889 : vector<8x8xf32>
    %891 = arith.addf %890, %24 : vector<8x8xf32>
    %cst_327 = arith.constant dense<0xFF800000> : vector<8xf32>
    %892 = vector.multi_reduction <maximumf>, %891, %cst_327 [1] : vector<8x8xf32> to vector<8xf32>
    %893 = vector.shape_cast %892 : vector<8xf32> to vector<8x1xf32>
    %894 = vector.broadcast %893 : vector<8x1xf32> to vector<8x8xf32>
    %895 = arith.subf %891, %894 : vector<8x8xf32>
    %896 = math.exp %895 : vector<8x8xf32>
    %cst_328 = arith.constant dense<0.000000e+00> : vector<8xf32>
    %897 = vector.multi_reduction <add>, %896, %cst_328 [1] : vector<8x8xf32> to vector<8xf32>
    %898 = vector.shape_cast %897 : vector<8xf32> to vector<8x1xf32>
    %899 = vector.broadcast %898 : vector<8x1xf32> to vector<8x8xf32>
    %900 = arith.divf %896, %899 : vector<8x8xf32>
    %cst_329 = arith.constant dense<0.000000e+00> : vector<8x8xf32>
    %901 = tpu.matmul %900, %887, %cst_329 {dimension_numbers = #tpu.dot_dimension_numbers<[1], [0], [0], [1], [0, 0, 1, 1], [], []>} : vector<8x8xf32>, vector<8x8xf32>, vector<8x8xf32> -> vector<8x8xf32>
    %902 = vector.extract_strided_slice %707 {offsets = [0, 0, 0], sizes = [1, 8, 32], strides = [1, 1, 1]} : vector<4x8x32xf32> to vector<1x8x32xf32>
    %903 = vector.shape_cast %902 : vector<1x8x32xf32> to vector<8x32xf32>
    %cst_330 = arith.constant dense<0.000000e+00> : vector<8x32xf32>
    %904 = tpu.matmul %901, %903, %cst_330 {dimension_numbers = #tpu.dot_dimension_numbers<[1], [0], [0], [1], [0, 0, 1, 1], [], []>} : vector<8x8xf32>, vector<8x32xf32>, vector<8x32xf32> -> vector<8x32xf32>
    %905 = vector.extract_strided_slice %729 {offsets = [8, 0], sizes = [8, 8], strides = [1, 1]} : vector<16x8xf32> to vector<8x8xf32>
    %906 = vector.extract_strided_slice %757 {offsets = [8, 0], sizes = [8, 8], strides = [1, 1]} : vector<16x8xf32> to vector<8x8xf32>
    %907 = vector.extract_strided_slice %785 {offsets = [8, 0], sizes = [8, 8], strides = [1, 1]} : vector<16x8xf32> to vector<8x8xf32>
    %cst_331 = arith.constant dense<0.000000e+00> : vector<8x8xf32>
    %908 = tpu.matmul %905, %906, %cst_331 {dimension_numbers = #tpu.dot_dimension_numbers<[1], [1], [0], [0], [0, 0, 1, 0], [], []>} : vector<8x8xf32>, vector<8x8xf32>, vector<8x8xf32> -> vector<8x8xf32>
    %cst_332 = arith.constant 0.353553385 : f32
    %909 = vector.broadcast %cst_332 : f32 to vector<8x8xf32>
    %910 = arith.mulf %908, %909 : vector<8x8xf32>
    %911 = arith.addf %910, %24 : vector<8x8xf32>
    %cst_333 = arith.constant dense<0xFF800000> : vector<8xf32>
    %912 = vector.multi_reduction <maximumf>, %911, %cst_333 [1] : vector<8x8xf32> to vector<8xf32>
    %913 = vector.shape_cast %912 : vector<8xf32> to vector<8x1xf32>
    %914 = vector.broadcast %913 : vector<8x1xf32> to vector<8x8xf32>
    %915 = arith.subf %911, %914 : vector<8x8xf32>
    %916 = math.exp %915 : vector<8x8xf32>
    %cst_334 = arith.constant dense<0.000000e+00> : vector<8xf32>
    %917 = vector.multi_reduction <add>, %916, %cst_334 [1] : vector<8x8xf32> to vector<8xf32>
    %918 = vector.shape_cast %917 : vector<8xf32> to vector<8x1xf32>
    %919 = vector.broadcast %918 : vector<8x1xf32> to vector<8x8xf32>
    %920 = arith.divf %916, %919 : vector<8x8xf32>
    %cst_335 = arith.constant dense<0.000000e+00> : vector<8x8xf32>
    %921 = tpu.matmul %920, %907, %cst_335 {dimension_numbers = #tpu.dot_dimension_numbers<[1], [0], [0], [1], [0, 0, 1, 1], [], []>} : vector<8x8xf32>, vector<8x8xf32>, vector<8x8xf32> -> vector<8x8xf32>
    %922 = vector.extract_strided_slice %707 {offsets = [1, 0, 0], sizes = [1, 8, 32], strides = [1, 1, 1]} : vector<4x8x32xf32> to vector<1x8x32xf32>
    %923 = vector.shape_cast %922 : vector<1x8x32xf32> to vector<8x32xf32>
    %cst_336 = arith.constant dense<0.000000e+00> : vector<8x32xf32>
    %924 = tpu.matmul %921, %923, %cst_336 {dimension_numbers = #tpu.dot_dimension_numbers<[1], [0], [0], [1], [0, 0, 1, 1], [], []>} : vector<8x8xf32>, vector<8x32xf32>, vector<8x32xf32> -> vector<8x32xf32>
    %925 = vector.extract_strided_slice %736 {offsets = [8, 0], sizes = [8, 8], strides = [1, 1]} : vector<16x8xf32> to vector<8x8xf32>
    %926 = vector.extract_strided_slice %764 {offsets = [8, 0], sizes = [8, 8], strides = [1, 1]} : vector<16x8xf32> to vector<8x8xf32>
    %927 = vector.extract_strided_slice %792 {offsets = [8, 0], sizes = [8, 8], strides = [1, 1]} : vector<16x8xf32> to vector<8x8xf32>
    %cst_337 = arith.constant dense<0.000000e+00> : vector<8x8xf32>
    %928 = tpu.matmul %925, %926, %cst_337 {dimension_numbers = #tpu.dot_dimension_numbers<[1], [1], [0], [0], [0, 0, 1, 0], [], []>} : vector<8x8xf32>, vector<8x8xf32>, vector<8x8xf32> -> vector<8x8xf32>
    %cst_338 = arith.constant 0.353553385 : f32
    %929 = vector.broadcast %cst_338 : f32 to vector<8x8xf32>
    %930 = arith.mulf %928, %929 : vector<8x8xf32>
    %931 = arith.addf %930, %24 : vector<8x8xf32>
    %cst_339 = arith.constant dense<0xFF800000> : vector<8xf32>
    %932 = vector.multi_reduction <maximumf>, %931, %cst_339 [1] : vector<8x8xf32> to vector<8xf32>
    %933 = vector.shape_cast %932 : vector<8xf32> to vector<8x1xf32>
    %934 = vector.broadcast %933 : vector<8x1xf32> to vector<8x8xf32>
    %935 = arith.subf %931, %934 : vector<8x8xf32>
    %936 = math.exp %935 : vector<8x8xf32>
    %cst_340 = arith.constant dense<0.000000e+00> : vector<8xf32>
    %937 = vector.multi_reduction <add>, %936, %cst_340 [1] : vector<8x8xf32> to vector<8xf32>
    %938 = vector.shape_cast %937 : vector<8xf32> to vector<8x1xf32>
    %939 = vector.broadcast %938 : vector<8x1xf32> to vector<8x8xf32>
    %940 = arith.divf %936, %939 : vector<8x8xf32>
    %cst_341 = arith.constant dense<0.000000e+00> : vector<8x8xf32>
    %941 = tpu.matmul %940, %927, %cst_341 {dimension_numbers = #tpu.dot_dimension_numbers<[1], [0], [0], [1], [0, 0, 1, 1], [], []>} : vector<8x8xf32>, vector<8x8xf32>, vector<8x8xf32> -> vector<8x8xf32>
    %942 = vector.extract_strided_slice %707 {offsets = [2, 0, 0], sizes = [1, 8, 32], strides = [1, 1, 1]} : vector<4x8x32xf32> to vector<1x8x32xf32>
    %943 = vector.shape_cast %942 : vector<1x8x32xf32> to vector<8x32xf32>
    %cst_342 = arith.constant dense<0.000000e+00> : vector<8x32xf32>
    %944 = tpu.matmul %941, %943, %cst_342 {dimension_numbers = #tpu.dot_dimension_numbers<[1], [0], [0], [1], [0, 0, 1, 1], [], []>} : vector<8x8xf32>, vector<8x32xf32>, vector<8x32xf32> -> vector<8x32xf32>
    %945 = vector.extract_strided_slice %743 {offsets = [8, 0], sizes = [8, 8], strides = [1, 1]} : vector<16x8xf32> to vector<8x8xf32>
    %946 = vector.extract_strided_slice %771 {offsets = [8, 0], sizes = [8, 8], strides = [1, 1]} : vector<16x8xf32> to vector<8x8xf32>
    %947 = vector.extract_strided_slice %799 {offsets = [8, 0], sizes = [8, 8], strides = [1, 1]} : vector<16x8xf32> to vector<8x8xf32>
    %cst_343 = arith.constant dense<0.000000e+00> : vector<8x8xf32>
    %948 = tpu.matmul %945, %946, %cst_343 {dimension_numbers = #tpu.dot_dimension_numbers<[1], [1], [0], [0], [0, 0, 1, 0], [], []>} : vector<8x8xf32>, vector<8x8xf32>, vector<8x8xf32> -> vector<8x8xf32>
    %cst_344 = arith.constant 0.353553385 : f32
    %949 = vector.broadcast %cst_344 : f32 to vector<8x8xf32>
    %950 = arith.mulf %948, %949 : vector<8x8xf32>
    %951 = arith.addf %950, %24 : vector<8x8xf32>
    %cst_345 = arith.constant dense<0xFF800000> : vector<8xf32>
    %952 = vector.multi_reduction <maximumf>, %951, %cst_345 [1] : vector<8x8xf32> to vector<8xf32>
    %953 = vector.shape_cast %952 : vector<8xf32> to vector<8x1xf32>
    %954 = vector.broadcast %953 : vector<8x1xf32> to vector<8x8xf32>
    %955 = arith.subf %951, %954 : vector<8x8xf32>
    %956 = math.exp %955 : vector<8x8xf32>
    %cst_346 = arith.constant dense<0.000000e+00> : vector<8xf32>
    %957 = vector.multi_reduction <add>, %956, %cst_346 [1] : vector<8x8xf32> to vector<8xf32>
    %958 = vector.shape_cast %957 : vector<8xf32> to vector<8x1xf32>
    %959 = vector.broadcast %958 : vector<8x1xf32> to vector<8x8xf32>
    %960 = arith.divf %956, %959 : vector<8x8xf32>
    %cst_347 = arith.constant dense<0.000000e+00> : vector<8x8xf32>
    %961 = tpu.matmul %960, %947, %cst_347 {dimension_numbers = #tpu.dot_dimension_numbers<[1], [0], [0], [1], [0, 0, 1, 1], [], []>} : vector<8x8xf32>, vector<8x8xf32>, vector<8x8xf32> -> vector<8x8xf32>
    %962 = vector.extract_strided_slice %707 {offsets = [3, 0, 0], sizes = [1, 8, 32], strides = [1, 1, 1]} : vector<4x8x32xf32> to vector<1x8x32xf32>
    %963 = vector.shape_cast %962 : vector<1x8x32xf32> to vector<8x32xf32>
    %cst_348 = arith.constant dense<0.000000e+00> : vector<8x32xf32>
    %964 = tpu.matmul %961, %963, %cst_348 {dimension_numbers = #tpu.dot_dimension_numbers<[1], [0], [0], [1], [0, 0, 1, 1], [], []>} : vector<8x8xf32>, vector<8x32xf32>, vector<8x32xf32> -> vector<8x32xf32>
    %965 = arith.addf %904, %924 : vector<8x32xf32>
    %966 = arith.addf %944, %964 : vector<8x32xf32>
    %967 = arith.addf %965, %966 : vector<8x32xf32>
    %968 = vector.broadcast %715 : vector<1x32xf32> to vector<8x32xf32>
    %969 = arith.addf %967, %968 : vector<8x32xf32>
    %970 = tpu.concatenate %884, %969 in 0 : vector<8x32xf32>, vector<8x32xf32> -> vector<16x32xf32>
    %971 = arith.addf %673, %970 : vector<16x32xf32>
    %c4 = arith.constant 4 : index
    %c0_349 = arith.constant 0 : index
    %c0_350 = arith.constant 0 : index
    %972 = vector.load %arg6[%c4, %c0_349, %c0_350] : memref<7x1x32xf32, #tpu.memory_space<vmem>>, vector<1x1x32xf32>
    %973 = vector.shape_cast %972 : vector<1x1x32xf32> to vector<1x32xf32>
    %c4_351 = arith.constant 4 : index
    %c0_352 = arith.constant 0 : index
    %c0_353 = arith.constant 0 : index
    %974 = vector.load %arg7[%c4_351, %c0_352, %c0_353] : memref<7x1x32xf32, #tpu.memory_space<vmem>>, vector<1x1x32xf32>
    %975 = vector.shape_cast %974 : vector<1x1x32xf32> to vector<1x32xf32>
    %cst_354 = arith.constant dense<0.000000e+00> : vector<16xf32>
    %976 = vector.multi_reduction <add>, %971, %cst_354 [1] : vector<16x32xf32> to vector<16xf32>
    %977 = vector.shape_cast %976 : vector<16xf32> to vector<16x1xf32>
    %cst_355 = arith.constant 3.200000e+01 : f32
    %978 = vector.broadcast %cst_355 : f32 to vector<16x1xf32>
    %979 = arith.divf %977, %978 : vector<16x1xf32>
    %980 = vector.broadcast %979 : vector<16x1xf32> to vector<16x32xf32>
    %981 = arith.subf %971, %980 : vector<16x32xf32>
    %982 = arith.mulf %981, %981 : vector<16x32xf32>
    %cst_356 = arith.constant dense<0.000000e+00> : vector<16xf32>
    %983 = vector.multi_reduction <add>, %982, %cst_356 [1] : vector<16x32xf32> to vector<16xf32>
    %984 = vector.shape_cast %983 : vector<16xf32> to vector<16x1xf32>
    %cst_357 = arith.constant 0.0322580636 : f32
    %985 = vector.broadcast %cst_357 : f32 to vector<16x1xf32>
    %986 = arith.mulf %984, %985 : vector<16x1xf32>
    %987 = math.sqrt %986 : vector<16x1xf32>
    %cst_358 = arith.constant 9.99999997E-7 : f32
    %988 = vector.broadcast %cst_358 : f32 to vector<16x1xf32>
    %989 = arith.addf %987, %988 : vector<16x1xf32>
    %cst_359 = arith.constant 1.000000e+00 : f32
    %990 = vector.broadcast %cst_359 : f32 to vector<16x1xf32>
    %991 = arith.divf %990, %989 : vector<16x1xf32>
    %992 = vector.broadcast %991 : vector<16x1xf32> to vector<16x32xf32>
    %993 = arith.mulf %981, %992 : vector<16x32xf32>
    %994 = vector.broadcast %973 : vector<1x32xf32> to vector<16x32xf32>
    %995 = arith.mulf %994, %993 : vector<16x32xf32>
    %996 = vector.broadcast %975 : vector<1x32xf32> to vector<16x32xf32>
    %997 = arith.addf %995, %996 : vector<16x32xf32>
    %c1_360 = arith.constant 1 : index
    %c0_361 = arith.constant 0 : index
    %c0_362 = arith.constant 0 : index
    %c0_363 = arith.constant 0 : index
    %998 = vector.load %arg16[%c1_360, %c0_361, %c0_362, %c0_363] : memref<2x4x32x8xf32, #tpu.memory_space<vmem>>, vector<1x4x32x8xf32>
    %999 = vector.shape_cast %998 : vector<1x4x32x8xf32> to vector<4x32x8xf32>
    %c1_364 = arith.constant 1 : index
    %c0_365 = arith.constant 0 : index
    %c0_366 = arith.constant 0 : index
    %c0_367 = arith.constant 0 : index
    %1000 = vector.load %arg18[%c1_364, %c0_365, %c0_366, %c0_367] : memref<2x4x32x8xf32, #tpu.memory_space<vmem>>, vector<1x4x32x8xf32>
    %1001 = vector.shape_cast %1000 : vector<1x4x32x8xf32> to vector<4x32x8xf32>
    %c1_368 = arith.constant 1 : index
    %c0_369 = arith.constant 0 : index
    %c0_370 = arith.constant 0 : index
    %c0_371 = arith.constant 0 : index
    %1002 = vector.load %arg20[%c1_368, %c0_369, %c0_370, %c0_371] : memref<2x4x32x8xf32, #tpu.memory_space<vmem>>, vector<1x4x32x8xf32>
    %1003 = vector.shape_cast %1002 : vector<1x4x32x8xf32> to vector<4x32x8xf32>
    %c1_372 = arith.constant 1 : index
    %c0_373 = arith.constant 0 : index
    %c0_374 = arith.constant 0 : index
    %c0_375 = arith.constant 0 : index
    %1004 = vector.load %arg22[%c1_372, %c0_373, %c0_374, %c0_375] : memref<2x4x8x32xf32, #tpu.memory_space<vmem>>, vector<1x4x8x32xf32>
    %1005 = vector.shape_cast %1004 : vector<1x4x8x32xf32> to vector<4x8x32xf32>
    %c1_376 = arith.constant 1 : index
    %c0_377 = arith.constant 0 : index
    %c0_378 = arith.constant 0 : index
    %c0_379 = arith.constant 0 : index
    %1006 = vector.load %arg17[%c1_376, %c0_377, %c0_378, %c0_379] : memref<2x4x1x8xf32, #tpu.memory_space<vmem>>, vector<1x4x1x8xf32>
    %1007 = vector.shape_cast %1006 : vector<1x4x1x8xf32> to vector<4x1x8xf32>
    %c1_380 = arith.constant 1 : index
    %c0_381 = arith.constant 0 : index
    %c0_382 = arith.constant 0 : index
    %c0_383 = arith.constant 0 : index
    %1008 = vector.load %arg19[%c1_380, %c0_381, %c0_382, %c0_383] : memref<2x4x1x8xf32, #tpu.memory_space<vmem>>, vector<1x4x1x8xf32>
    %1009 = vector.shape_cast %1008 : vector<1x4x1x8xf32> to vector<4x1x8xf32>
    %c1_384 = arith.constant 1 : index
    %c0_385 = arith.constant 0 : index
    %c0_386 = arith.constant 0 : index
    %c0_387 = arith.constant 0 : index
    %1010 = vector.load %arg21[%c1_384, %c0_385, %c0_386, %c0_387] : memref<2x4x1x8xf32, #tpu.memory_space<vmem>>, vector<1x4x1x8xf32>
    %1011 = vector.shape_cast %1010 : vector<1x4x1x8xf32> to vector<4x1x8xf32>
    %c1_388 = arith.constant 1 : index
    %c0_389 = arith.constant 0 : index
    %c0_390 = arith.constant 0 : index
    %1012 = vector.load %arg23[%c1_388, %c0_389, %c0_390] : memref<2x1x32xf32, #tpu.memory_space<vmem>>, vector<1x1x32xf32>
    %1013 = vector.shape_cast %1012 : vector<1x1x32xf32> to vector<1x32xf32>
    %1014 = vector.extract_strided_slice %999 {offsets = [0, 0, 0], sizes = [1, 32, 8], strides = [1, 1, 1]} : vector<4x32x8xf32> to vector<1x32x8xf32>
    %1015 = vector.shape_cast %1014 : vector<1x32x8xf32> to vector<32x8xf32>
    %cst_391 = arith.constant dense<0.000000e+00> : vector<16x8xf32>
    %1016 = tpu.matmul %997, %1015, %cst_391 {dimension_numbers = #tpu.dot_dimension_numbers<[1], [0], [0], [1], [0, 0, 1, 1], [], []>} : vector<16x32xf32>, vector<32x8xf32>, vector<16x8xf32> -> vector<16x8xf32>
    %1017 = vector.extract_strided_slice %1007 {offsets = [0, 0, 0], sizes = [1, 1, 8], strides = [1, 1, 1]} : vector<4x1x8xf32> to vector<1x1x8xf32>
    %1018 = vector.shape_cast %1017 : vector<1x1x8xf32> to vector<1x8xf32>
    %1019 = vector.broadcast %1018 : vector<1x8xf32> to vector<16x8xf32>
    %1020 = arith.addf %1016, %1019 : vector<16x8xf32>
    %1021 = vector.extract_strided_slice %999 {offsets = [1, 0, 0], sizes = [1, 32, 8], strides = [1, 1, 1]} : vector<4x32x8xf32> to vector<1x32x8xf32>
    %1022 = vector.shape_cast %1021 : vector<1x32x8xf32> to vector<32x8xf32>
    %cst_392 = arith.constant dense<0.000000e+00> : vector<16x8xf32>
    %1023 = tpu.matmul %997, %1022, %cst_392 {dimension_numbers = #tpu.dot_dimension_numbers<[1], [0], [0], [1], [0, 0, 1, 1], [], []>} : vector<16x32xf32>, vector<32x8xf32>, vector<16x8xf32> -> vector<16x8xf32>
    %1024 = vector.extract_strided_slice %1007 {offsets = [1, 0, 0], sizes = [1, 1, 8], strides = [1, 1, 1]} : vector<4x1x8xf32> to vector<1x1x8xf32>
    %1025 = vector.shape_cast %1024 : vector<1x1x8xf32> to vector<1x8xf32>
    %1026 = vector.broadcast %1025 : vector<1x8xf32> to vector<16x8xf32>
    %1027 = arith.addf %1023, %1026 : vector<16x8xf32>
    %1028 = vector.extract_strided_slice %999 {offsets = [2, 0, 0], sizes = [1, 32, 8], strides = [1, 1, 1]} : vector<4x32x8xf32> to vector<1x32x8xf32>
    %1029 = vector.shape_cast %1028 : vector<1x32x8xf32> to vector<32x8xf32>
    %cst_393 = arith.constant dense<0.000000e+00> : vector<16x8xf32>
    %1030 = tpu.matmul %997, %1029, %cst_393 {dimension_numbers = #tpu.dot_dimension_numbers<[1], [0], [0], [1], [0, 0, 1, 1], [], []>} : vector<16x32xf32>, vector<32x8xf32>, vector<16x8xf32> -> vector<16x8xf32>
    %1031 = vector.extract_strided_slice %1007 {offsets = [2, 0, 0], sizes = [1, 1, 8], strides = [1, 1, 1]} : vector<4x1x8xf32> to vector<1x1x8xf32>
    %1032 = vector.shape_cast %1031 : vector<1x1x8xf32> to vector<1x8xf32>
    %1033 = vector.broadcast %1032 : vector<1x8xf32> to vector<16x8xf32>
    %1034 = arith.addf %1030, %1033 : vector<16x8xf32>
    %1035 = vector.extract_strided_slice %999 {offsets = [3, 0, 0], sizes = [1, 32, 8], strides = [1, 1, 1]} : vector<4x32x8xf32> to vector<1x32x8xf32>
    %1036 = vector.shape_cast %1035 : vector<1x32x8xf32> to vector<32x8xf32>
    %cst_394 = arith.constant dense<0.000000e+00> : vector<16x8xf32>
    %1037 = tpu.matmul %997, %1036, %cst_394 {dimension_numbers = #tpu.dot_dimension_numbers<[1], [0], [0], [1], [0, 0, 1, 1], [], []>} : vector<16x32xf32>, vector<32x8xf32>, vector<16x8xf32> -> vector<16x8xf32>
    %1038 = vector.extract_strided_slice %1007 {offsets = [3, 0, 0], sizes = [1, 1, 8], strides = [1, 1, 1]} : vector<4x1x8xf32> to vector<1x1x8xf32>
    %1039 = vector.shape_cast %1038 : vector<1x1x8xf32> to vector<1x8xf32>
    %1040 = vector.broadcast %1039 : vector<1x8xf32> to vector<16x8xf32>
    %1041 = arith.addf %1037, %1040 : vector<16x8xf32>
    %1042 = vector.extract_strided_slice %1001 {offsets = [0, 0, 0], sizes = [1, 32, 8], strides = [1, 1, 1]} : vector<4x32x8xf32> to vector<1x32x8xf32>
    %1043 = vector.shape_cast %1042 : vector<1x32x8xf32> to vector<32x8xf32>
    %cst_395 = arith.constant dense<0.000000e+00> : vector<16x8xf32>
    %1044 = tpu.matmul %12, %1043, %cst_395 {dimension_numbers = #tpu.dot_dimension_numbers<[1], [0], [0], [1], [0, 0, 1, 1], [], []>} : vector<16x32xf32>, vector<32x8xf32>, vector<16x8xf32> -> vector<16x8xf32>
    %1045 = vector.extract_strided_slice %1009 {offsets = [0, 0, 0], sizes = [1, 1, 8], strides = [1, 1, 1]} : vector<4x1x8xf32> to vector<1x1x8xf32>
    %1046 = vector.shape_cast %1045 : vector<1x1x8xf32> to vector<1x8xf32>
    %1047 = vector.broadcast %1046 : vector<1x8xf32> to vector<16x8xf32>
    %1048 = arith.addf %1044, %1047 : vector<16x8xf32>
    %1049 = vector.extract_strided_slice %1001 {offsets = [1, 0, 0], sizes = [1, 32, 8], strides = [1, 1, 1]} : vector<4x32x8xf32> to vector<1x32x8xf32>
    %1050 = vector.shape_cast %1049 : vector<1x32x8xf32> to vector<32x8xf32>
    %cst_396 = arith.constant dense<0.000000e+00> : vector<16x8xf32>
    %1051 = tpu.matmul %12, %1050, %cst_396 {dimension_numbers = #tpu.dot_dimension_numbers<[1], [0], [0], [1], [0, 0, 1, 1], [], []>} : vector<16x32xf32>, vector<32x8xf32>, vector<16x8xf32> -> vector<16x8xf32>
    %1052 = vector.extract_strided_slice %1009 {offsets = [1, 0, 0], sizes = [1, 1, 8], strides = [1, 1, 1]} : vector<4x1x8xf32> to vector<1x1x8xf32>
    %1053 = vector.shape_cast %1052 : vector<1x1x8xf32> to vector<1x8xf32>
    %1054 = vector.broadcast %1053 : vector<1x8xf32> to vector<16x8xf32>
    %1055 = arith.addf %1051, %1054 : vector<16x8xf32>
    %1056 = vector.extract_strided_slice %1001 {offsets = [2, 0, 0], sizes = [1, 32, 8], strides = [1, 1, 1]} : vector<4x32x8xf32> to vector<1x32x8xf32>
    %1057 = vector.shape_cast %1056 : vector<1x32x8xf32> to vector<32x8xf32>
    %cst_397 = arith.constant dense<0.000000e+00> : vector<16x8xf32>
    %1058 = tpu.matmul %12, %1057, %cst_397 {dimension_numbers = #tpu.dot_dimension_numbers<[1], [0], [0], [1], [0, 0, 1, 1], [], []>} : vector<16x32xf32>, vector<32x8xf32>, vector<16x8xf32> -> vector<16x8xf32>
    %1059 = vector.extract_strided_slice %1009 {offsets = [2, 0, 0], sizes = [1, 1, 8], strides = [1, 1, 1]} : vector<4x1x8xf32> to vector<1x1x8xf32>
    %1060 = vector.shape_cast %1059 : vector<1x1x8xf32> to vector<1x8xf32>
    %1061 = vector.broadcast %1060 : vector<1x8xf32> to vector<16x8xf32>
    %1062 = arith.addf %1058, %1061 : vector<16x8xf32>
    %1063 = vector.extract_strided_slice %1001 {offsets = [3, 0, 0], sizes = [1, 32, 8], strides = [1, 1, 1]} : vector<4x32x8xf32> to vector<1x32x8xf32>
    %1064 = vector.shape_cast %1063 : vector<1x32x8xf32> to vector<32x8xf32>
    %cst_398 = arith.constant dense<0.000000e+00> : vector<16x8xf32>
    %1065 = tpu.matmul %12, %1064, %cst_398 {dimension_numbers = #tpu.dot_dimension_numbers<[1], [0], [0], [1], [0, 0, 1, 1], [], []>} : vector<16x32xf32>, vector<32x8xf32>, vector<16x8xf32> -> vector<16x8xf32>
    %1066 = vector.extract_strided_slice %1009 {offsets = [3, 0, 0], sizes = [1, 1, 8], strides = [1, 1, 1]} : vector<4x1x8xf32> to vector<1x1x8xf32>
    %1067 = vector.shape_cast %1066 : vector<1x1x8xf32> to vector<1x8xf32>
    %1068 = vector.broadcast %1067 : vector<1x8xf32> to vector<16x8xf32>
    %1069 = arith.addf %1065, %1068 : vector<16x8xf32>
    %1070 = vector.extract_strided_slice %1003 {offsets = [0, 0, 0], sizes = [1, 32, 8], strides = [1, 1, 1]} : vector<4x32x8xf32> to vector<1x32x8xf32>
    %1071 = vector.shape_cast %1070 : vector<1x32x8xf32> to vector<32x8xf32>
    %cst_399 = arith.constant dense<0.000000e+00> : vector<16x8xf32>
    %1072 = tpu.matmul %12, %1071, %cst_399 {dimension_numbers = #tpu.dot_dimension_numbers<[1], [0], [0], [1], [0, 0, 1, 1], [], []>} : vector<16x32xf32>, vector<32x8xf32>, vector<16x8xf32> -> vector<16x8xf32>
    %1073 = vector.extract_strided_slice %1011 {offsets = [0, 0, 0], sizes = [1, 1, 8], strides = [1, 1, 1]} : vector<4x1x8xf32> to vector<1x1x8xf32>
    %1074 = vector.shape_cast %1073 : vector<1x1x8xf32> to vector<1x8xf32>
    %1075 = vector.broadcast %1074 : vector<1x8xf32> to vector<16x8xf32>
    %1076 = arith.addf %1072, %1075 : vector<16x8xf32>
    %1077 = vector.extract_strided_slice %1003 {offsets = [1, 0, 0], sizes = [1, 32, 8], strides = [1, 1, 1]} : vector<4x32x8xf32> to vector<1x32x8xf32>
    %1078 = vector.shape_cast %1077 : vector<1x32x8xf32> to vector<32x8xf32>
    %cst_400 = arith.constant dense<0.000000e+00> : vector<16x8xf32>
    %1079 = tpu.matmul %12, %1078, %cst_400 {dimension_numbers = #tpu.dot_dimension_numbers<[1], [0], [0], [1], [0, 0, 1, 1], [], []>} : vector<16x32xf32>, vector<32x8xf32>, vector<16x8xf32> -> vector<16x8xf32>
    %1080 = vector.extract_strided_slice %1011 {offsets = [1, 0, 0], sizes = [1, 1, 8], strides = [1, 1, 1]} : vector<4x1x8xf32> to vector<1x1x8xf32>
    %1081 = vector.shape_cast %1080 : vector<1x1x8xf32> to vector<1x8xf32>
    %1082 = vector.broadcast %1081 : vector<1x8xf32> to vector<16x8xf32>
    %1083 = arith.addf %1079, %1082 : vector<16x8xf32>
    %1084 = vector.extract_strided_slice %1003 {offsets = [2, 0, 0], sizes = [1, 32, 8], strides = [1, 1, 1]} : vector<4x32x8xf32> to vector<1x32x8xf32>
    %1085 = vector.shape_cast %1084 : vector<1x32x8xf32> to vector<32x8xf32>
    %cst_401 = arith.constant dense<0.000000e+00> : vector<16x8xf32>
    %1086 = tpu.matmul %12, %1085, %cst_401 {dimension_numbers = #tpu.dot_dimension_numbers<[1], [0], [0], [1], [0, 0, 1, 1], [], []>} : vector<16x32xf32>, vector<32x8xf32>, vector<16x8xf32> -> vector<16x8xf32>
    %1087 = vector.extract_strided_slice %1011 {offsets = [2, 0, 0], sizes = [1, 1, 8], strides = [1, 1, 1]} : vector<4x1x8xf32> to vector<1x1x8xf32>
    %1088 = vector.shape_cast %1087 : vector<1x1x8xf32> to vector<1x8xf32>
    %1089 = vector.broadcast %1088 : vector<1x8xf32> to vector<16x8xf32>
    %1090 = arith.addf %1086, %1089 : vector<16x8xf32>
    %1091 = vector.extract_strided_slice %1003 {offsets = [3, 0, 0], sizes = [1, 32, 8], strides = [1, 1, 1]} : vector<4x32x8xf32> to vector<1x32x8xf32>
    %1092 = vector.shape_cast %1091 : vector<1x32x8xf32> to vector<32x8xf32>
    %cst_402 = arith.constant dense<0.000000e+00> : vector<16x8xf32>
    %1093 = tpu.matmul %12, %1092, %cst_402 {dimension_numbers = #tpu.dot_dimension_numbers<[1], [0], [0], [1], [0, 0, 1, 1], [], []>} : vector<16x32xf32>, vector<32x8xf32>, vector<16x8xf32> -> vector<16x8xf32>
    %1094 = vector.extract_strided_slice %1011 {offsets = [3, 0, 0], sizes = [1, 1, 8], strides = [1, 1, 1]} : vector<4x1x8xf32> to vector<1x1x8xf32>
    %1095 = vector.shape_cast %1094 : vector<1x1x8xf32> to vector<1x8xf32>
    %1096 = vector.broadcast %1095 : vector<1x8xf32> to vector<16x8xf32>
    %1097 = arith.addf %1093, %1096 : vector<16x8xf32>
    %1098 = vector.extract_strided_slice %1020 {offsets = [0, 0], sizes = [8, 8], strides = [1, 1]} : vector<16x8xf32> to vector<8x8xf32>
    %1099 = vector.extract_strided_slice %1048 {offsets = [0, 0], sizes = [8, 8], strides = [1, 1]} : vector<16x8xf32> to vector<8x8xf32>
    %1100 = vector.extract_strided_slice %1076 {offsets = [0, 0], sizes = [8, 8], strides = [1, 1]} : vector<16x8xf32> to vector<8x8xf32>
    %cst_403 = arith.constant dense<0.000000e+00> : vector<8x8xf32>
    %1101 = tpu.matmul %1098, %1099, %cst_403 {dimension_numbers = #tpu.dot_dimension_numbers<[1], [1], [0], [0], [0, 0, 1, 0], [], []>} : vector<8x8xf32>, vector<8x8xf32>, vector<8x8xf32> -> vector<8x8xf32>
    %cst_404 = arith.constant 0.353553385 : f32
    %1102 = vector.broadcast %cst_404 : f32 to vector<8x8xf32>
    %1103 = arith.mulf %1101, %1102 : vector<8x8xf32>
    %1104 = vector.broadcast %25 : vector<1x8xf32> to vector<8x8xf32>
    %1105 = arith.addf %1103, %1104 : vector<8x8xf32>
    %cst_405 = arith.constant dense<0xFF800000> : vector<8xf32>
    %1106 = vector.multi_reduction <maximumf>, %1105, %cst_405 [1] : vector<8x8xf32> to vector<8xf32>
    %1107 = vector.shape_cast %1106 : vector<8xf32> to vector<8x1xf32>
    %1108 = vector.broadcast %1107 : vector<8x1xf32> to vector<8x8xf32>
    %1109 = arith.subf %1105, %1108 : vector<8x8xf32>
    %1110 = math.exp %1109 : vector<8x8xf32>
    %cst_406 = arith.constant dense<0.000000e+00> : vector<8xf32>
    %1111 = vector.multi_reduction <add>, %1110, %cst_406 [1] : vector<8x8xf32> to vector<8xf32>
    %1112 = vector.shape_cast %1111 : vector<8xf32> to vector<8x1xf32>
    %1113 = vector.broadcast %1112 : vector<8x1xf32> to vector<8x8xf32>
    %1114 = arith.divf %1110, %1113 : vector<8x8xf32>
    %cst_407 = arith.constant dense<0.000000e+00> : vector<8x8xf32>
    %1115 = tpu.matmul %1114, %1100, %cst_407 {dimension_numbers = #tpu.dot_dimension_numbers<[1], [0], [0], [1], [0, 0, 1, 1], [], []>} : vector<8x8xf32>, vector<8x8xf32>, vector<8x8xf32> -> vector<8x8xf32>
    %1116 = vector.extract_strided_slice %1005 {offsets = [0, 0, 0], sizes = [1, 8, 32], strides = [1, 1, 1]} : vector<4x8x32xf32> to vector<1x8x32xf32>
    %1117 = vector.shape_cast %1116 : vector<1x8x32xf32> to vector<8x32xf32>
    %cst_408 = arith.constant dense<0.000000e+00> : vector<8x32xf32>
    %1118 = tpu.matmul %1115, %1117, %cst_408 {dimension_numbers = #tpu.dot_dimension_numbers<[1], [0], [0], [1], [0, 0, 1, 1], [], []>} : vector<8x8xf32>, vector<8x32xf32>, vector<8x32xf32> -> vector<8x32xf32>
    %1119 = vector.extract_strided_slice %1027 {offsets = [0, 0], sizes = [8, 8], strides = [1, 1]} : vector<16x8xf32> to vector<8x8xf32>
    %1120 = vector.extract_strided_slice %1055 {offsets = [0, 0], sizes = [8, 8], strides = [1, 1]} : vector<16x8xf32> to vector<8x8xf32>
    %1121 = vector.extract_strided_slice %1083 {offsets = [0, 0], sizes = [8, 8], strides = [1, 1]} : vector<16x8xf32> to vector<8x8xf32>
    %cst_409 = arith.constant dense<0.000000e+00> : vector<8x8xf32>
    %1122 = tpu.matmul %1119, %1120, %cst_409 {dimension_numbers = #tpu.dot_dimension_numbers<[1], [1], [0], [0], [0, 0, 1, 0], [], []>} : vector<8x8xf32>, vector<8x8xf32>, vector<8x8xf32> -> vector<8x8xf32>
    %cst_410 = arith.constant 0.353553385 : f32
    %1123 = vector.broadcast %cst_410 : f32 to vector<8x8xf32>
    %1124 = arith.mulf %1122, %1123 : vector<8x8xf32>
    %1125 = vector.broadcast %25 : vector<1x8xf32> to vector<8x8xf32>
    %1126 = arith.addf %1124, %1125 : vector<8x8xf32>
    %cst_411 = arith.constant dense<0xFF800000> : vector<8xf32>
    %1127 = vector.multi_reduction <maximumf>, %1126, %cst_411 [1] : vector<8x8xf32> to vector<8xf32>
    %1128 = vector.shape_cast %1127 : vector<8xf32> to vector<8x1xf32>
    %1129 = vector.broadcast %1128 : vector<8x1xf32> to vector<8x8xf32>
    %1130 = arith.subf %1126, %1129 : vector<8x8xf32>
    %1131 = math.exp %1130 : vector<8x8xf32>
    %cst_412 = arith.constant dense<0.000000e+00> : vector<8xf32>
    %1132 = vector.multi_reduction <add>, %1131, %cst_412 [1] : vector<8x8xf32> to vector<8xf32>
    %1133 = vector.shape_cast %1132 : vector<8xf32> to vector<8x1xf32>
    %1134 = vector.broadcast %1133 : vector<8x1xf32> to vector<8x8xf32>
    %1135 = arith.divf %1131, %1134 : vector<8x8xf32>
    %cst_413 = arith.constant dense<0.000000e+00> : vector<8x8xf32>
    %1136 = tpu.matmul %1135, %1121, %cst_413 {dimension_numbers = #tpu.dot_dimension_numbers<[1], [0], [0], [1], [0, 0, 1, 1], [], []>} : vector<8x8xf32>, vector<8x8xf32>, vector<8x8xf32> -> vector<8x8xf32>
    %1137 = vector.extract_strided_slice %1005 {offsets = [1, 0, 0], sizes = [1, 8, 32], strides = [1, 1, 1]} : vector<4x8x32xf32> to vector<1x8x32xf32>
    %1138 = vector.shape_cast %1137 : vector<1x8x32xf32> to vector<8x32xf32>
    %cst_414 = arith.constant dense<0.000000e+00> : vector<8x32xf32>
    %1139 = tpu.matmul %1136, %1138, %cst_414 {dimension_numbers = #tpu.dot_dimension_numbers<[1], [0], [0], [1], [0, 0, 1, 1], [], []>} : vector<8x8xf32>, vector<8x32xf32>, vector<8x32xf32> -> vector<8x32xf32>
    %1140 = vector.extract_strided_slice %1034 {offsets = [0, 0], sizes = [8, 8], strides = [1, 1]} : vector<16x8xf32> to vector<8x8xf32>
    %1141 = vector.extract_strided_slice %1062 {offsets = [0, 0], sizes = [8, 8], strides = [1, 1]} : vector<16x8xf32> to vector<8x8xf32>
    %1142 = vector.extract_strided_slice %1090 {offsets = [0, 0], sizes = [8, 8], strides = [1, 1]} : vector<16x8xf32> to vector<8x8xf32>
    %cst_415 = arith.constant dense<0.000000e+00> : vector<8x8xf32>
    %1143 = tpu.matmul %1140, %1141, %cst_415 {dimension_numbers = #tpu.dot_dimension_numbers<[1], [1], [0], [0], [0, 0, 1, 0], [], []>} : vector<8x8xf32>, vector<8x8xf32>, vector<8x8xf32> -> vector<8x8xf32>
    %cst_416 = arith.constant 0.353553385 : f32
    %1144 = vector.broadcast %cst_416 : f32 to vector<8x8xf32>
    %1145 = arith.mulf %1143, %1144 : vector<8x8xf32>
    %1146 = vector.broadcast %25 : vector<1x8xf32> to vector<8x8xf32>
    %1147 = arith.addf %1145, %1146 : vector<8x8xf32>
    %cst_417 = arith.constant dense<0xFF800000> : vector<8xf32>
    %1148 = vector.multi_reduction <maximumf>, %1147, %cst_417 [1] : vector<8x8xf32> to vector<8xf32>
    %1149 = vector.shape_cast %1148 : vector<8xf32> to vector<8x1xf32>
    %1150 = vector.broadcast %1149 : vector<8x1xf32> to vector<8x8xf32>
    %1151 = arith.subf %1147, %1150 : vector<8x8xf32>
    %1152 = math.exp %1151 : vector<8x8xf32>
    %cst_418 = arith.constant dense<0.000000e+00> : vector<8xf32>
    %1153 = vector.multi_reduction <add>, %1152, %cst_418 [1] : vector<8x8xf32> to vector<8xf32>
    %1154 = vector.shape_cast %1153 : vector<8xf32> to vector<8x1xf32>
    %1155 = vector.broadcast %1154 : vector<8x1xf32> to vector<8x8xf32>
    %1156 = arith.divf %1152, %1155 : vector<8x8xf32>
    %cst_419 = arith.constant dense<0.000000e+00> : vector<8x8xf32>
    %1157 = tpu.matmul %1156, %1142, %cst_419 {dimension_numbers = #tpu.dot_dimension_numbers<[1], [0], [0], [1], [0, 0, 1, 1], [], []>} : vector<8x8xf32>, vector<8x8xf32>, vector<8x8xf32> -> vector<8x8xf32>
    %1158 = vector.extract_strided_slice %1005 {offsets = [2, 0, 0], sizes = [1, 8, 32], strides = [1, 1, 1]} : vector<4x8x32xf32> to vector<1x8x32xf32>
    %1159 = vector.shape_cast %1158 : vector<1x8x32xf32> to vector<8x32xf32>
    %cst_420 = arith.constant dense<0.000000e+00> : vector<8x32xf32>
    %1160 = tpu.matmul %1157, %1159, %cst_420 {dimension_numbers = #tpu.dot_dimension_numbers<[1], [0], [0], [1], [0, 0, 1, 1], [], []>} : vector<8x8xf32>, vector<8x32xf32>, vector<8x32xf32> -> vector<8x32xf32>
    %1161 = vector.extract_strided_slice %1041 {offsets = [0, 0], sizes = [8, 8], strides = [1, 1]} : vector<16x8xf32> to vector<8x8xf32>
    %1162 = vector.extract_strided_slice %1069 {offsets = [0, 0], sizes = [8, 8], strides = [1, 1]} : vector<16x8xf32> to vector<8x8xf32>
    %1163 = vector.extract_strided_slice %1097 {offsets = [0, 0], sizes = [8, 8], strides = [1, 1]} : vector<16x8xf32> to vector<8x8xf32>
    %cst_421 = arith.constant dense<0.000000e+00> : vector<8x8xf32>
    %1164 = tpu.matmul %1161, %1162, %cst_421 {dimension_numbers = #tpu.dot_dimension_numbers<[1], [1], [0], [0], [0, 0, 1, 0], [], []>} : vector<8x8xf32>, vector<8x8xf32>, vector<8x8xf32> -> vector<8x8xf32>
    %cst_422 = arith.constant 0.353553385 : f32
    %1165 = vector.broadcast %cst_422 : f32 to vector<8x8xf32>
    %1166 = arith.mulf %1164, %1165 : vector<8x8xf32>
    %1167 = vector.broadcast %25 : vector<1x8xf32> to vector<8x8xf32>
    %1168 = arith.addf %1166, %1167 : vector<8x8xf32>
    %cst_423 = arith.constant dense<0xFF800000> : vector<8xf32>
    %1169 = vector.multi_reduction <maximumf>, %1168, %cst_423 [1] : vector<8x8xf32> to vector<8xf32>
    %1170 = vector.shape_cast %1169 : vector<8xf32> to vector<8x1xf32>
    %1171 = vector.broadcast %1170 : vector<8x1xf32> to vector<8x8xf32>
    %1172 = arith.subf %1168, %1171 : vector<8x8xf32>
    %1173 = math.exp %1172 : vector<8x8xf32>
    %cst_424 = arith.constant dense<0.000000e+00> : vector<8xf32>
    %1174 = vector.multi_reduction <add>, %1173, %cst_424 [1] : vector<8x8xf32> to vector<8xf32>
    %1175 = vector.shape_cast %1174 : vector<8xf32> to vector<8x1xf32>
    %1176 = vector.broadcast %1175 : vector<8x1xf32> to vector<8x8xf32>
    %1177 = arith.divf %1173, %1176 : vector<8x8xf32>
    %cst_425 = arith.constant dense<0.000000e+00> : vector<8x8xf32>
    %1178 = tpu.matmul %1177, %1163, %cst_425 {dimension_numbers = #tpu.dot_dimension_numbers<[1], [0], [0], [1], [0, 0, 1, 1], [], []>} : vector<8x8xf32>, vector<8x8xf32>, vector<8x8xf32> -> vector<8x8xf32>
    %1179 = vector.extract_strided_slice %1005 {offsets = [3, 0, 0], sizes = [1, 8, 32], strides = [1, 1, 1]} : vector<4x8x32xf32> to vector<1x8x32xf32>
    %1180 = vector.shape_cast %1179 : vector<1x8x32xf32> to vector<8x32xf32>
    %cst_426 = arith.constant dense<0.000000e+00> : vector<8x32xf32>
    %1181 = tpu.matmul %1178, %1180, %cst_426 {dimension_numbers = #tpu.dot_dimension_numbers<[1], [0], [0], [1], [0, 0, 1, 1], [], []>} : vector<8x8xf32>, vector<8x32xf32>, vector<8x32xf32> -> vector<8x32xf32>
    %1182 = arith.addf %1118, %1139 : vector<8x32xf32>
    %1183 = arith.addf %1160, %1181 : vector<8x32xf32>
    %1184 = arith.addf %1182, %1183 : vector<8x32xf32>
    %1185 = vector.broadcast %1013 : vector<1x32xf32> to vector<8x32xf32>
    %1186 = arith.addf %1184, %1185 : vector<8x32xf32>
    %1187 = vector.extract_strided_slice %1020 {offsets = [8, 0], sizes = [8, 8], strides = [1, 1]} : vector<16x8xf32> to vector<8x8xf32>
    %1188 = vector.extract_strided_slice %1048 {offsets = [8, 0], sizes = [8, 8], strides = [1, 1]} : vector<16x8xf32> to vector<8x8xf32>
    %1189 = vector.extract_strided_slice %1076 {offsets = [8, 0], sizes = [8, 8], strides = [1, 1]} : vector<16x8xf32> to vector<8x8xf32>
    %cst_427 = arith.constant dense<0.000000e+00> : vector<8x8xf32>
    %1190 = tpu.matmul %1187, %1188, %cst_427 {dimension_numbers = #tpu.dot_dimension_numbers<[1], [1], [0], [0], [0, 0, 1, 0], [], []>} : vector<8x8xf32>, vector<8x8xf32>, vector<8x8xf32> -> vector<8x8xf32>
    %cst_428 = arith.constant 0.353553385 : f32
    %1191 = vector.broadcast %cst_428 : f32 to vector<8x8xf32>
    %1192 = arith.mulf %1190, %1191 : vector<8x8xf32>
    %1193 = vector.broadcast %26 : vector<1x8xf32> to vector<8x8xf32>
    %1194 = arith.addf %1192, %1193 : vector<8x8xf32>
    %cst_429 = arith.constant dense<0xFF800000> : vector<8xf32>
    %1195 = vector.multi_reduction <maximumf>, %1194, %cst_429 [1] : vector<8x8xf32> to vector<8xf32>
    %1196 = vector.shape_cast %1195 : vector<8xf32> to vector<8x1xf32>
    %1197 = vector.broadcast %1196 : vector<8x1xf32> to vector<8x8xf32>
    %1198 = arith.subf %1194, %1197 : vector<8x8xf32>
    %1199 = math.exp %1198 : vector<8x8xf32>
    %cst_430 = arith.constant dense<0.000000e+00> : vector<8xf32>
    %1200 = vector.multi_reduction <add>, %1199, %cst_430 [1] : vector<8x8xf32> to vector<8xf32>
    %1201 = vector.shape_cast %1200 : vector<8xf32> to vector<8x1xf32>
    %1202 = vector.broadcast %1201 : vector<8x1xf32> to vector<8x8xf32>
    %1203 = arith.divf %1199, %1202 : vector<8x8xf32>
    %cst_431 = arith.constant dense<0.000000e+00> : vector<8x8xf32>
    %1204 = tpu.matmul %1203, %1189, %cst_431 {dimension_numbers = #tpu.dot_dimension_numbers<[1], [0], [0], [1], [0, 0, 1, 1], [], []>} : vector<8x8xf32>, vector<8x8xf32>, vector<8x8xf32> -> vector<8x8xf32>
    %1205 = vector.extract_strided_slice %1005 {offsets = [0, 0, 0], sizes = [1, 8, 32], strides = [1, 1, 1]} : vector<4x8x32xf32> to vector<1x8x32xf32>
    %1206 = vector.shape_cast %1205 : vector<1x8x32xf32> to vector<8x32xf32>
    %cst_432 = arith.constant dense<0.000000e+00> : vector<8x32xf32>
    %1207 = tpu.matmul %1204, %1206, %cst_432 {dimension_numbers = #tpu.dot_dimension_numbers<[1], [0], [0], [1], [0, 0, 1, 1], [], []>} : vector<8x8xf32>, vector<8x32xf32>, vector<8x32xf32> -> vector<8x32xf32>
    %1208 = vector.extract_strided_slice %1027 {offsets = [8, 0], sizes = [8, 8], strides = [1, 1]} : vector<16x8xf32> to vector<8x8xf32>
    %1209 = vector.extract_strided_slice %1055 {offsets = [8, 0], sizes = [8, 8], strides = [1, 1]} : vector<16x8xf32> to vector<8x8xf32>
    %1210 = vector.extract_strided_slice %1083 {offsets = [8, 0], sizes = [8, 8], strides = [1, 1]} : vector<16x8xf32> to vector<8x8xf32>
    %cst_433 = arith.constant dense<0.000000e+00> : vector<8x8xf32>
    %1211 = tpu.matmul %1208, %1209, %cst_433 {dimension_numbers = #tpu.dot_dimension_numbers<[1], [1], [0], [0], [0, 0, 1, 0], [], []>} : vector<8x8xf32>, vector<8x8xf32>, vector<8x8xf32> -> vector<8x8xf32>
    %cst_434 = arith.constant 0.353553385 : f32
    %1212 = vector.broadcast %cst_434 : f32 to vector<8x8xf32>
    %1213 = arith.mulf %1211, %1212 : vector<8x8xf32>
    %1214 = vector.broadcast %26 : vector<1x8xf32> to vector<8x8xf32>
    %1215 = arith.addf %1213, %1214 : vector<8x8xf32>
    %cst_435 = arith.constant dense<0xFF800000> : vector<8xf32>
    %1216 = vector.multi_reduction <maximumf>, %1215, %cst_435 [1] : vector<8x8xf32> to vector<8xf32>
    %1217 = vector.shape_cast %1216 : vector<8xf32> to vector<8x1xf32>
    %1218 = vector.broadcast %1217 : vector<8x1xf32> to vector<8x8xf32>
    %1219 = arith.subf %1215, %1218 : vector<8x8xf32>
    %1220 = math.exp %1219 : vector<8x8xf32>
    %cst_436 = arith.constant dense<0.000000e+00> : vector<8xf32>
    %1221 = vector.multi_reduction <add>, %1220, %cst_436 [1] : vector<8x8xf32> to vector<8xf32>
    %1222 = vector.shape_cast %1221 : vector<8xf32> to vector<8x1xf32>
    %1223 = vector.broadcast %1222 : vector<8x1xf32> to vector<8x8xf32>
    %1224 = arith.divf %1220, %1223 : vector<8x8xf32>
    %cst_437 = arith.constant dense<0.000000e+00> : vector<8x8xf32>
    %1225 = tpu.matmul %1224, %1210, %cst_437 {dimension_numbers = #tpu.dot_dimension_numbers<[1], [0], [0], [1], [0, 0, 1, 1], [], []>} : vector<8x8xf32>, vector<8x8xf32>, vector<8x8xf32> -> vector<8x8xf32>
    %1226 = vector.extract_strided_slice %1005 {offsets = [1, 0, 0], sizes = [1, 8, 32], strides = [1, 1, 1]} : vector<4x8x32xf32> to vector<1x8x32xf32>
    %1227 = vector.shape_cast %1226 : vector<1x8x32xf32> to vector<8x32xf32>
    %cst_438 = arith.constant dense<0.000000e+00> : vector<8x32xf32>
    %1228 = tpu.matmul %1225, %1227, %cst_438 {dimension_numbers = #tpu.dot_dimension_numbers<[1], [0], [0], [1], [0, 0, 1, 1], [], []>} : vector<8x8xf32>, vector<8x32xf32>, vector<8x32xf32> -> vector<8x32xf32>
    %1229 = vector.extract_strided_slice %1034 {offsets = [8, 0], sizes = [8, 8], strides = [1, 1]} : vector<16x8xf32> to vector<8x8xf32>
    %1230 = vector.extract_strided_slice %1062 {offsets = [8, 0], sizes = [8, 8], strides = [1, 1]} : vector<16x8xf32> to vector<8x8xf32>
    %1231 = vector.extract_strided_slice %1090 {offsets = [8, 0], sizes = [8, 8], strides = [1, 1]} : vector<16x8xf32> to vector<8x8xf32>
    %cst_439 = arith.constant dense<0.000000e+00> : vector<8x8xf32>
    %1232 = tpu.matmul %1229, %1230, %cst_439 {dimension_numbers = #tpu.dot_dimension_numbers<[1], [1], [0], [0], [0, 0, 1, 0], [], []>} : vector<8x8xf32>, vector<8x8xf32>, vector<8x8xf32> -> vector<8x8xf32>
    %cst_440 = arith.constant 0.353553385 : f32
    %1233 = vector.broadcast %cst_440 : f32 to vector<8x8xf32>
    %1234 = arith.mulf %1232, %1233 : vector<8x8xf32>
    %1235 = vector.broadcast %26 : vector<1x8xf32> to vector<8x8xf32>
    %1236 = arith.addf %1234, %1235 : vector<8x8xf32>
    %cst_441 = arith.constant dense<0xFF800000> : vector<8xf32>
    %1237 = vector.multi_reduction <maximumf>, %1236, %cst_441 [1] : vector<8x8xf32> to vector<8xf32>
    %1238 = vector.shape_cast %1237 : vector<8xf32> to vector<8x1xf32>
    %1239 = vector.broadcast %1238 : vector<8x1xf32> to vector<8x8xf32>
    %1240 = arith.subf %1236, %1239 : vector<8x8xf32>
    %1241 = math.exp %1240 : vector<8x8xf32>
    %cst_442 = arith.constant dense<0.000000e+00> : vector<8xf32>
    %1242 = vector.multi_reduction <add>, %1241, %cst_442 [1] : vector<8x8xf32> to vector<8xf32>
    %1243 = vector.shape_cast %1242 : vector<8xf32> to vector<8x1xf32>
    %1244 = vector.broadcast %1243 : vector<8x1xf32> to vector<8x8xf32>
    %1245 = arith.divf %1241, %1244 : vector<8x8xf32>
    %cst_443 = arith.constant dense<0.000000e+00> : vector<8x8xf32>
    %1246 = tpu.matmul %1245, %1231, %cst_443 {dimension_numbers = #tpu.dot_dimension_numbers<[1], [0], [0], [1], [0, 0, 1, 1], [], []>} : vector<8x8xf32>, vector<8x8xf32>, vector<8x8xf32> -> vector<8x8xf32>
    %1247 = vector.extract_strided_slice %1005 {offsets = [2, 0, 0], sizes = [1, 8, 32], strides = [1, 1, 1]} : vector<4x8x32xf32> to vector<1x8x32xf32>
    %1248 = vector.shape_cast %1247 : vector<1x8x32xf32> to vector<8x32xf32>
    %cst_444 = arith.constant dense<0.000000e+00> : vector<8x32xf32>
    %1249 = tpu.matmul %1246, %1248, %cst_444 {dimension_numbers = #tpu.dot_dimension_numbers<[1], [0], [0], [1], [0, 0, 1, 1], [], []>} : vector<8x8xf32>, vector<8x32xf32>, vector<8x32xf32> -> vector<8x32xf32>
    %1250 = vector.extract_strided_slice %1041 {offsets = [8, 0], sizes = [8, 8], strides = [1, 1]} : vector<16x8xf32> to vector<8x8xf32>
    %1251 = vector.extract_strided_slice %1069 {offsets = [8, 0], sizes = [8, 8], strides = [1, 1]} : vector<16x8xf32> to vector<8x8xf32>
    %1252 = vector.extract_strided_slice %1097 {offsets = [8, 0], sizes = [8, 8], strides = [1, 1]} : vector<16x8xf32> to vector<8x8xf32>
    %cst_445 = arith.constant dense<0.000000e+00> : vector<8x8xf32>
    %1253 = tpu.matmul %1250, %1251, %cst_445 {dimension_numbers = #tpu.dot_dimension_numbers<[1], [1], [0], [0], [0, 0, 1, 0], [], []>} : vector<8x8xf32>, vector<8x8xf32>, vector<8x8xf32> -> vector<8x8xf32>
    %cst_446 = arith.constant 0.353553385 : f32
    %1254 = vector.broadcast %cst_446 : f32 to vector<8x8xf32>
    %1255 = arith.mulf %1253, %1254 : vector<8x8xf32>
    %1256 = vector.broadcast %26 : vector<1x8xf32> to vector<8x8xf32>
    %1257 = arith.addf %1255, %1256 : vector<8x8xf32>
    %cst_447 = arith.constant dense<0xFF800000> : vector<8xf32>
    %1258 = vector.multi_reduction <maximumf>, %1257, %cst_447 [1] : vector<8x8xf32> to vector<8xf32>
    %1259 = vector.shape_cast %1258 : vector<8xf32> to vector<8x1xf32>
    %1260 = vector.broadcast %1259 : vector<8x1xf32> to vector<8x8xf32>
    %1261 = arith.subf %1257, %1260 : vector<8x8xf32>
    %1262 = math.exp %1261 : vector<8x8xf32>
    %cst_448 = arith.constant dense<0.000000e+00> : vector<8xf32>
    %1263 = vector.multi_reduction <add>, %1262, %cst_448 [1] : vector<8x8xf32> to vector<8xf32>
    %1264 = vector.shape_cast %1263 : vector<8xf32> to vector<8x1xf32>
    %1265 = vector.broadcast %1264 : vector<8x1xf32> to vector<8x8xf32>
    %1266 = arith.divf %1262, %1265 : vector<8x8xf32>
    %cst_449 = arith.constant dense<0.000000e+00> : vector<8x8xf32>
    %1267 = tpu.matmul %1266, %1252, %cst_449 {dimension_numbers = #tpu.dot_dimension_numbers<[1], [0], [0], [1], [0, 0, 1, 1], [], []>} : vector<8x8xf32>, vector<8x8xf32>, vector<8x8xf32> -> vector<8x8xf32>
    %1268 = vector.extract_strided_slice %1005 {offsets = [3, 0, 0], sizes = [1, 8, 32], strides = [1, 1, 1]} : vector<4x8x32xf32> to vector<1x8x32xf32>
    %1269 = vector.shape_cast %1268 : vector<1x8x32xf32> to vector<8x32xf32>
    %cst_450 = arith.constant dense<0.000000e+00> : vector<8x32xf32>
    %1270 = tpu.matmul %1267, %1269, %cst_450 {dimension_numbers = #tpu.dot_dimension_numbers<[1], [0], [0], [1], [0, 0, 1, 1], [], []>} : vector<8x8xf32>, vector<8x32xf32>, vector<8x32xf32> -> vector<8x32xf32>
    %1271 = arith.addf %1207, %1228 : vector<8x32xf32>
    %1272 = arith.addf %1249, %1270 : vector<8x32xf32>
    %1273 = arith.addf %1271, %1272 : vector<8x32xf32>
    %1274 = vector.broadcast %1013 : vector<1x32xf32> to vector<8x32xf32>
    %1275 = arith.addf %1273, %1274 : vector<8x32xf32>
    %1276 = tpu.concatenate %1186, %1275 in 0 : vector<8x32xf32>, vector<8x32xf32> -> vector<16x32xf32>
    %1277 = arith.addf %971, %1276 : vector<16x32xf32>
    %c5 = arith.constant 5 : index
    %c0_451 = arith.constant 0 : index
    %c0_452 = arith.constant 0 : index
    %1278 = vector.load %arg6[%c5, %c0_451, %c0_452] : memref<7x1x32xf32, #tpu.memory_space<vmem>>, vector<1x1x32xf32>
    %1279 = vector.shape_cast %1278 : vector<1x1x32xf32> to vector<1x32xf32>
    %c5_453 = arith.constant 5 : index
    %c0_454 = arith.constant 0 : index
    %c0_455 = arith.constant 0 : index
    %1280 = vector.load %arg7[%c5_453, %c0_454, %c0_455] : memref<7x1x32xf32, #tpu.memory_space<vmem>>, vector<1x1x32xf32>
    %1281 = vector.shape_cast %1280 : vector<1x1x32xf32> to vector<1x32xf32>
    %cst_456 = arith.constant dense<0.000000e+00> : vector<16xf32>
    %1282 = vector.multi_reduction <add>, %1277, %cst_456 [1] : vector<16x32xf32> to vector<16xf32>
    %1283 = vector.shape_cast %1282 : vector<16xf32> to vector<16x1xf32>
    %cst_457 = arith.constant 3.200000e+01 : f32
    %1284 = vector.broadcast %cst_457 : f32 to vector<16x1xf32>
    %1285 = arith.divf %1283, %1284 : vector<16x1xf32>
    %1286 = vector.broadcast %1285 : vector<16x1xf32> to vector<16x32xf32>
    %1287 = arith.subf %1277, %1286 : vector<16x32xf32>
    %1288 = arith.mulf %1287, %1287 : vector<16x32xf32>
    %cst_458 = arith.constant dense<0.000000e+00> : vector<16xf32>
    %1289 = vector.multi_reduction <add>, %1288, %cst_458 [1] : vector<16x32xf32> to vector<16xf32>
    %1290 = vector.shape_cast %1289 : vector<16xf32> to vector<16x1xf32>
    %cst_459 = arith.constant 0.0322580636 : f32
    %1291 = vector.broadcast %cst_459 : f32 to vector<16x1xf32>
    %1292 = arith.mulf %1290, %1291 : vector<16x1xf32>
    %1293 = math.sqrt %1292 : vector<16x1xf32>
    %cst_460 = arith.constant 9.99999997E-7 : f32
    %1294 = vector.broadcast %cst_460 : f32 to vector<16x1xf32>
    %1295 = arith.addf %1293, %1294 : vector<16x1xf32>
    %cst_461 = arith.constant 1.000000e+00 : f32
    %1296 = vector.broadcast %cst_461 : f32 to vector<16x1xf32>
    %1297 = arith.divf %1296, %1295 : vector<16x1xf32>
    %1298 = vector.broadcast %1297 : vector<16x1xf32> to vector<16x32xf32>
    %1299 = arith.mulf %1287, %1298 : vector<16x32xf32>
    %1300 = vector.broadcast %1279 : vector<1x32xf32> to vector<16x32xf32>
    %1301 = arith.mulf %1300, %1299 : vector<16x32xf32>
    %1302 = vector.broadcast %1281 : vector<1x32xf32> to vector<16x32xf32>
    %1303 = arith.addf %1301, %1302 : vector<16x32xf32>
    %c1_462 = arith.constant 1 : index
    %c0_463 = arith.constant 0 : index
    %c0_464 = arith.constant 0 : index
    %1304 = vector.load %arg24[%c1_462, %c0_463, %c0_464] : memref<2x32x128xf32, #tpu.memory_space<vmem>>, vector<1x32x128xf32>
    %1305 = vector.shape_cast %1304 : vector<1x32x128xf32> to vector<32x128xf32>
    %cst_465 = arith.constant dense<0.000000e+00> : vector<16x128xf32>
    %1306 = tpu.matmul %1303, %1305, %cst_465 {dimension_numbers = #tpu.dot_dimension_numbers<[1], [0], [0], [1], [0, 0, 1, 1], [], []>} : vector<16x32xf32>, vector<32x128xf32>, vector<16x128xf32> -> vector<16x128xf32>
    %c1_466 = arith.constant 1 : index
    %c0_467 = arith.constant 0 : index
    %c0_468 = arith.constant 0 : index
    %1307 = vector.load %arg25[%c1_466, %c0_467, %c0_468] : memref<2x1x128xf32, #tpu.memory_space<vmem>>, vector<1x1x128xf32>
    %1308 = vector.shape_cast %1307 : vector<1x1x128xf32> to vector<1x128xf32>
    %1309 = vector.broadcast %1308 : vector<1x128xf32> to vector<16x128xf32>
    %1310 = arith.addf %1306, %1309 : vector<16x128xf32>
    %cst_469 = arith.constant 0.000000e+00 : f32
    %1311 = vector.broadcast %cst_469 : f32 to vector<16x128xf32>
    %1312 = arith.maximumf %1310, %1311 : vector<16x128xf32>
    %c1_470 = arith.constant 1 : index
    %c0_471 = arith.constant 0 : index
    %c0_472 = arith.constant 0 : index
    %1313 = vector.load %arg26[%c1_470, %c0_471, %c0_472] : memref<2x128x32xf32, #tpu.memory_space<vmem>>, vector<1x128x32xf32>
    %1314 = vector.shape_cast %1313 : vector<1x128x32xf32> to vector<128x32xf32>
    %cst_473 = arith.constant dense<0.000000e+00> : vector<16x32xf32>
    %1315 = tpu.matmul %1312, %1314, %cst_473 {dimension_numbers = #tpu.dot_dimension_numbers<[1], [0], [0], [1], [0, 0, 1, 1], [], []>} : vector<16x128xf32>, vector<128x32xf32>, vector<16x32xf32> -> vector<16x32xf32>
    %1316 = arith.addf %1277, %1315 : vector<16x32xf32>
    %c1_474 = arith.constant 1 : index
    %c0_475 = arith.constant 0 : index
    %c0_476 = arith.constant 0 : index
    %1317 = vector.load %arg27[%c1_474, %c0_475, %c0_476] : memref<2x1x32xf32, #tpu.memory_space<vmem>>, vector<1x1x32xf32>
    %1318 = vector.shape_cast %1317 : vector<1x1x32xf32> to vector<1x32xf32>
    %1319 = vector.broadcast %1318 : vector<1x32xf32> to vector<16x32xf32>
    %1320 = arith.addf %1316, %1319 : vector<16x32xf32>
    %c6 = arith.constant 6 : index
    %c0_477 = arith.constant 0 : index
    %c0_478 = arith.constant 0 : index
    %1321 = vector.load %arg6[%c6, %c0_477, %c0_478] : memref<7x1x32xf32, #tpu.memory_space<vmem>>, vector<1x1x32xf32>
    %1322 = vector.shape_cast %1321 : vector<1x1x32xf32> to vector<1x32xf32>
    %c6_479 = arith.constant 6 : index
    %c0_480 = arith.constant 0 : index
    %c0_481 = arith.constant 0 : index
    %1323 = vector.load %arg7[%c6_479, %c0_480, %c0_481] : memref<7x1x32xf32, #tpu.memory_space<vmem>>, vector<1x1x32xf32>
    %1324 = vector.shape_cast %1323 : vector<1x1x32xf32> to vector<1x32xf32>
    %cst_482 = arith.constant dense<0.000000e+00> : vector<16xf32>
    %1325 = vector.multi_reduction <add>, %1320, %cst_482 [1] : vector<16x32xf32> to vector<16xf32>
    %1326 = vector.shape_cast %1325 : vector<16xf32> to vector<16x1xf32>
    %cst_483 = arith.constant 3.200000e+01 : f32
    %1327 = vector.broadcast %cst_483 : f32 to vector<16x1xf32>
    %1328 = arith.divf %1326, %1327 : vector<16x1xf32>
    %1329 = vector.broadcast %1328 : vector<16x1xf32> to vector<16x32xf32>
    %1330 = arith.subf %1320, %1329 : vector<16x32xf32>
    %1331 = arith.mulf %1330, %1330 : vector<16x32xf32>
    %cst_484 = arith.constant dense<0.000000e+00> : vector<16xf32>
    %1332 = vector.multi_reduction <add>, %1331, %cst_484 [1] : vector<16x32xf32> to vector<16xf32>
    %1333 = vector.shape_cast %1332 : vector<16xf32> to vector<16x1xf32>
    %cst_485 = arith.constant 0.0322580636 : f32
    %1334 = vector.broadcast %cst_485 : f32 to vector<16x1xf32>
    %1335 = arith.mulf %1333, %1334 : vector<16x1xf32>
    %1336 = math.sqrt %1335 : vector<16x1xf32>
    %cst_486 = arith.constant 9.99999997E-7 : f32
    %1337 = vector.broadcast %cst_486 : f32 to vector<16x1xf32>
    %1338 = arith.addf %1336, %1337 : vector<16x1xf32>
    %cst_487 = arith.constant 1.000000e+00 : f32
    %1339 = vector.broadcast %cst_487 : f32 to vector<16x1xf32>
    %1340 = arith.divf %1339, %1338 : vector<16x1xf32>
    %1341 = vector.broadcast %1340 : vector<16x1xf32> to vector<16x32xf32>
    %1342 = arith.mulf %1330, %1341 : vector<16x32xf32>
    %1343 = vector.broadcast %1322 : vector<1x32xf32> to vector<16x32xf32>
    %1344 = arith.mulf %1343, %1342 : vector<16x32xf32>
    %1345 = vector.broadcast %1324 : vector<1x32xf32> to vector<16x32xf32>
    %1346 = arith.addf %1344, %1345 : vector<16x32xf32>
    %c0_488 = arith.constant 0 : index
    %c0_489 = arith.constant 0 : index
    %1347 = vector.load %arg28[%c0_488, %c0_489] : memref<16x32xf32, #tpu.memory_space<vmem>>, vector<16x32xf32>
    tpu.vector_store %arg28[%c0_488, %c0_489], %1346 {strides = array<i32>} : memref<16x32xf32, #tpu.memory_space<vmem>>, vector<16x32xf32>,
    return
  }
}

</mosaic_0001>

<llo_original>
// kernel: decoder_forward.1
$region0: #{decoder_forward.1}
  #allocation0 [shape = 'u32[]', space=smem, size = 0x4, offset = 0x4, fixed_abs, tag = 'smem constant byte address 0x4 - core index']
  #allocation1 [shape = 'u32[72,128]{1,0:T(1,128)}', space=vmem, size = 0x9000, scoped, tag = 'internal scratch']
  %s0 = inlined_call_operand.vmem [shape: s32[16,1], index: 0, kind: input, shape index: {}]
  %s1 = inlined_call_operand.vmem [shape: f32[50,32], index: 1, kind: input, shape index: {}]
  %s2 = inlined_call_operand.vmem [shape: f32[16,32], index: 2, kind: input, shape index: {}]
  %s3 = inlined_call_operand.vmem [shape: f32[16,32], index: 3, kind: input, shape index: {}]
  %s4 = inlined_call_operand.vmem [shape: f32[16,8], index: 4, kind: input, shape index: {}]
  %s5 = inlined_call_operand.vmem [shape: f32[2,8], index: 5, kind: input, shape index: {}]
  %s6 = inlined_call_operand.vmem [shape: f32[7,1,32], index: 6, kind: input, shape index: {}]
  %s7 = inlined_call_operand.vmem [shape: f32[7,1,32], index: 7, kind: input, shape index: {}]
  %s8 = inlined_call_operand.vmem [shape: f32[2,4,32,8], index: 8, kind: input, shape index: {}]
  %s9 = inlined_call_operand.vmem [shape: f32[2,4,1,8], index: 9, kind: input, shape index: {}]
  %s10 = inlined_call_operand.vmem [shape: f32[2,4,32,8], index: 10, kind: input, shape index: {}]
  %s11 = inlined_call_operand.vmem [shape: f32[2,4,1,8], index: 11, kind: input, shape index: {}]
  %s12 = inlined_call_operand.vmem [shape: f32[2,4,32,8], index: 12, kind: input, shape index: {}]
  %s13 = inlined_call_operand.vmem [shape: f32[2,4,1,8], index: 13, kind: input, shape index: {}]
  %s14 = inlined_call_operand.vmem [shape: f32[2,4,8,32], index: 14, kind: input, shape index: {}]
  %s15 = inlined_call_operand.vmem [shape: f32[2,1,32], index: 15, kind: input, shape index: {}]
  %s16 = inlined_call_operand.vmem [shape: f32[2,4,32,8], index: 16, kind: input, shape index: {}]
  %s17 = inlined_call_operand.vmem [shape: f32[2,4,1,8], index: 17, kind: input, shape index: {}]
  %s18 = inlined_call_operand.vmem [shape: f32[2,4,32,8], index: 18, kind: input, shape index: {}]
  %s19 = inlined_call_operand.vmem [shape: f32[2,4,1,8], index: 19, kind: input, shape index: {}]
  %s20 = inlined_call_operand.vmem [shape: f32[2,4,32,8], index: 20, kind: input, shape index: {}]
  %s21 = inlined_call_operand.vmem [shape: f32[2,4,1,8], index: 21, kind: input, shape index: {}]
  %s22 = inlined_call_operand.vmem [shape: f32[2,4,8,32], index: 22, kind: input, shape index: {}]
  %s23 = inlined_call_operand.vmem [shape: f32[2,1,32], index: 23, kind: input, shape index: {}]
  %s24 = inlined_call_operand.vmem [shape: f32[2,32,128], index: 24, kind: input, shape index: {}]
  %s25 = inlined_call_operand.vmem [shape: f32[2,1,128], index: 25, kind: input, shape index: {}]
  %s26 = inlined_call_operand.vmem [shape: f32[2,128,32], index: 26, kind: input, shape index: {}]
  %s27 = inlined_call_operand.vmem [shape: f32[2,1,32], index: 27, kind: input, shape index: {}]
  %s28 = inlined_call_operand.hbm [shape: f32[16,32], index: 28, kind: output, shape index: {}]
  %s29 = sld [smem:[#allocation0]]
  $region122: #{decoder_forward.1} parent=0
    _
  %s31 = ssub.s32 1, %s29
  %s32 = scalar_select 0, %s31, %s29
  $region1: #{decoder_forward.1} parent=0
    #allocation2 [shape = 'u8[8192]{0}', space=vmem, size = 0x2000, scoped, tag = 'output window, operand 0, single buffered']
    #allocation3 [shape = 's32[1]{0}', space=sflag, size = 0x4, scoped, tag = 'scoped memory for decoder_forward.1']
    %33 = vsyncpa [#allocation3], 0
    // Predicated region
    $region2: #{decoder_forward.1} parent=1 // pred_check
      _
    $region3: #{decoder_forward.1} parent=1 // pred_check_branch
      %35 = sbr.rel (0) target = $region5
    $region4: #{decoder_forward.1} parent=1 // pred_region
      _
    $region5: #{decoder_forward.1} parent=1 // pred_fallthru
      _
    // Predicated region
    $region6: #{decoder_forward.1} parent=1 // pred_check
      _
    $region7: #{decoder_forward.1} parent=1 // pred_check_branch
      %37 = sbr.rel (0) target = $region9
    $region8: #{decoder_forward.1} parent=1 // pred_region
      _
    $region9: #{decoder_forward.1} parent=1 // pred_fallthru
      _
    // Predicated region
    $region10: #{decoder_forward.1} parent=1 // pred_check
      _
    $region11: #{decoder_forward.1} parent=1 // pred_check_branch
      %39 = sbr.rel (0) target = $region13
    $region12: #{decoder_forward.1} parent=1 // pred_region
      _
    $region13: #{decoder_forward.1} parent=1 // pred_fallthru
      _
    // Predicated region
    $region14: #{decoder_forward.1} parent=1 // pred_check
      _
    $region15: #{decoder_forward.1} parent=1 // pred_check_branch
      %41 = sbr.rel (0) target = $region17
    $region16: #{decoder_forward.1} parent=1 // pred_region
      _
    $region17: #{decoder_forward.1} parent=1 // pred_fallthru
      _
    // Predicated region
    $region18: #{decoder_forward.1} parent=1 // pred_check
      _
    $region19: #{decoder_forward.1} parent=1 // pred_check_branch
      %43 = sbr.rel (0) target = $region21
    $region20: #{decoder_forward.1} parent=1 // pred_region
      _
    $region21: #{decoder_forward.1} parent=1 // pred_fallthru
      _
    // Predicated region
    $region22: #{decoder_forward.1} parent=1 // pred_check
      _
    $region23: #{decoder_forward.1} parent=1 // pred_check_branch
      %45 = sbr.rel (0) target = $region25
    $region24: #{decoder_forward.1} parent=1 // pred_region
      _
    $region25: #{decoder_forward.1} parent=1 // pred_fallthru
      _
    // Predicated region
    $region26: #{decoder_forward.1} parent=1 // pred_check
      _
    $region27: #{decoder_forward.1} parent=1 // pred_check_branch
      %47 = sbr.rel (0) target = $region29
    $region28: #{decoder_forward.1} parent=1 // pred_region
      _
    $region29: #{decoder_forward.1} parent=1 // pred_fallthru
      _
    // Predicated region
    $region30: #{decoder_forward.1} parent=1 // pred_check
      _
    $region31: #{decoder_forward.1} parent=1 // pred_check_branch
      %49 = sbr.rel (0) target = $region33
    $region32: #{decoder_forward.1} parent=1 // pred_region
      _
    $region33: #{decoder_forward.1} parent=1 // pred_fallthru
      _
    // Predicated region
    $region34: #{decoder_forward.1} parent=1 // pred_check
      _
    $region35: #{decoder_forward.1} parent=1 // pred_check_branch
      %51 = sbr.rel (0) target = $region37
    $region36: #{decoder_forward.1} parent=1 // pred_region
      _
    $region37: #{decoder_forward.1} parent=1 // pred_fallthru
      _
    // Predicated region
    $region38: #{decoder_forward.1} parent=1 // pred_check
      _
    $region39: #{decoder_forward.1} parent=1 // pred_check_branch
      %53 = sbr.rel (0) target = $region41
    $region40: #{decoder_forward.1} parent=1 // pred_region
      _
    $region41: #{decoder_forward.1} parent=1 // pred_fallthru
      _
    // Predicated region
    $region42: #{decoder_forward.1} parent=1 // pred_check
      _
    $region43: #{decoder_forward.1} parent=1 // pred_check_branch
      %55 = sbr.rel (0) target = $region45
    $region44: #{decoder_forward.1} parent=1 // pred_region
      _
    $region45: #{decoder_forward.1} parent=1 // pred_fallthru
      _
    // Predicated region
    $region46: #{decoder_forward.1} parent=1 // pred_check
      _
    $region47: #{decoder_forward.1} parent=1 // pred_check_branch
      %57 = sbr.rel (0) target = $region49
    $region48: #{decoder_forward.1} parent=1 // pred_region
      _
    $region49: #{decoder_forward.1} parent=1 // pred_fallthru
      _
    // Predicated region
    $region50: #{decoder_forward.1} parent=1 // pred_check
      _
    $region51: #{decoder_forward.1} parent=1 // pred_check_branch
      %59 = sbr.rel (0) target = $region53
    $region52: #{decoder_forward.1} parent=1 // pred_region
      _
    $region53: #{decoder_forward.1} parent=1 // pred_fallthru
      _
    // Predicated region
    $region54: #{decoder_forward.1} parent=1 // pred_check
      _
    $region55: #{decoder_forward.1} parent=1 // pred_check_branch
      %61 = sbr.rel (0) target = $region57
    $region56: #{decoder_forward.1} parent=1 // pred_region
      _
    $region57: #{decoder_forward.1} parent=1 // pred_fallthru
      _
    // Predicated region
    $region58: #{decoder_forward.1} parent=1 // pred_check
      _
    $region59: #{decoder_forward.1} parent=1 // pred_check_branch
      %63 = sbr.rel (0) target = $region61
    $region60: #{decoder_forward.1} parent=1 // pred_region
      _
    $region61: #{decoder_forward.1} parent=1 // pred_fallthru
      _
    // Predicated region
    $region62: #{decoder_forward.1} parent=1 // pred_check
      _
    $region63: #{decoder_forward.1} parent=1 // pred_check_branch
      %65 = sbr.rel (0) target = $region65
    $region64: #{decoder_forward.1} parent=1 // pred_region
      _
    $region65: #{decoder_forward.1} parent=1 // pred_fallthru
      _
    // Predicated region
    $region66: #{decoder_forward.1} parent=1 // pred_check
      _
    $region67: #{decoder_forward.1} parent=1 // pred_check_branch
      %67 = sbr.rel (0) target = $region69
    $region68: #{decoder_forward.1} parent=1 // pred_region
      _
    $region69: #{decoder_forward.1} parent=1 // pred_fallthru
      _
    // Predicated region
    $region70: #{decoder_forward.1} parent=1 // pred_check
      _
    $region71: #{decoder_forward.1} parent=1 // pred_check_branch
      %69 = sbr.rel (0) target = $region73
    $region72: #{decoder_forward.1} parent=1 // pred_region
      _
    $region73: #{decoder_forward.1} parent=1 // pred_fallthru
      _
    // Predicated region
    $region74: #{decoder_forward.1} parent=1 // pred_check
      _
    $region75: #{decoder_forward.1} parent=1 // pred_check_branch
      %71 = sbr.rel (0) target = $region77
    $region76: #{decoder_forward.1} parent=1 // pred_region
      _
    $region77: #{decoder_forward.1} parent=1 // pred_fallthru
      _
    // Predicated region
    $region78: #{decoder_forward.1} parent=1 // pred_check
      _
    $region79: #{decoder_forward.1} parent=1 // pred_check_branch
      %73 = sbr.rel (0) target = $region81
    $region80: #{decoder_forward.1} parent=1 // pred_region
      _
    $region81: #{decoder_forward.1} parent=1 // pred_fallthru
      _
    // Predicated region
    $region82: #{decoder_forward.1} parent=1 // pred_check
      _
    $region83: #{decoder_forward.1} parent=1 // pred_check_branch
      %75 = sbr.rel (0) target = $region85
    $region84: #{decoder_forward.1} parent=1 // pred_region
      _
    $region85: #{decoder_forward.1} parent=1 // pred_fallthru
      _
    // Predicated region
    $region86: #{decoder_forward.1} parent=1 // pred_check
      _
    $region87: #{decoder_forward.1} parent=1 // pred_check_branch
      %77 = sbr.rel (0) target = $region89
    $region88: #{decoder_forward.1} parent=1 // pred_region
      _
    $region89: #{decoder_forward.1} parent=1 // pred_fallthru
      _
    // Predicated region
    $region90: #{decoder_forward.1} parent=1 // pred_check
      _
    $region91: #{decoder_forward.1} parent=1 // pred_check_branch
      %79 = sbr.rel (0) target = $region93
    $region92: #{decoder_forward.1} parent=1 // pred_region
      _
    $region93: #{decoder_forward.1} parent=1 // pred_fallthru
      _
    // Predicated region
    $region94: #{decoder_forward.1} parent=1 // pred_check
      _
    $region95: #{decoder_forward.1} parent=1 // pred_check_branch
      %81 = sbr.rel (0) target = $region97
    $region96: #{decoder_forward.1} parent=1 // pred_region
      _
    $region97: #{decoder_forward.1} parent=1 // pred_fallthru
      _
    // Predicated region
    $region98: #{decoder_forward.1} parent=1 // pred_check
      _
    $region99: #{decoder_forward.1} parent=1 // pred_check_branch
      %83 = sbr.rel (0) target = $region101
    $region100: #{decoder_forward.1} parent=1 // pred_region
      _
    $region101: #{decoder_forward.1} parent=1 // pred_fallthru
      _
    // Predicated region
    $region102: #{decoder_forward.1} parent=1 // pred_check
      _
    $region103: #{decoder_forward.1} parent=1 // pred_check_branch
      %85 = sbr.rel (0) target = $region105
    $region104: #{decoder_forward.1} parent=1 // pred_region
      _
    $region105: #{decoder_forward.1} parent=1 // pred_fallthru
      _
    // Predicated region
    $region106: #{decoder_forward.1} parent=1 // pred_check
      _
    $region107: #{decoder_forward.1} parent=1 // pred_check_branch
      %87 = sbr.rel (0) target = $region109
    $region108: #{decoder_forward.1} parent=1 // pred_region
      _
    $region109: #{decoder_forward.1} parent=1 // pred_fallthru
      _
    // Predicated region
    $region110: #{decoder_forward.1} parent=1 // pred_check
      _
    $region111: #{decoder_forward.1} parent=1 // pred_check_branch
      %89 = sbr.rel (0) target = $region113
    $region112: #{decoder_forward.1} parent=1 // pred_region
      _
    $region113: #{decoder_forward.1} parent=1 // pred_fallthru
      _
    %v90 = vld [vmem:[%s0] sm:$0xff]
    %v91 = vld [vmem:[%s0 + $0x8] sm:$0xff]
    %v92 = vlaneseq
    %v93 = vand.u32 %v92, 127
    %94 = vset.pattern.permute.xlu0 0
    %95 = vperm.xlu0 %94, %v90
    %v96 = vpop.permute.xlu0 %95
    %97 = vset.pattern.permute.xlu0 0
    %98 = vperm.xlu0 %97, %v91
    %v99 = vpop.permute.xlu0 %98
    %vm100 = vcmp.eq.s32.totalorder %v93, %v96
    %vm101 = vcmp.eq.s32.totalorder %v93, %v99
    %v102 = vsel %vm100, 1, 0
    %v103 = vsel %vm101, 1, 0
    %v104 = vcvt.s32.f32 %v102
    %v105 = vcvt.s32.f32 %v103
    %v106 = vld [vmem:[%s1] sm:$0xff]
    %v107 = vld [vmem:[%s1 + $0x8] sm:$0xff]
    %v108 = vld [vmem:[%s1 + $0x10] sm:$0xff]
    %v109 = vld [vmem:[%s1 + $0x18] sm:$0xff]
    %v110 = vld [vmem:[%s1 + $0x20] sm:$0xff]
    %v111 = vld [vmem:[%s1 + $0x28] sm:$0xff]
    %v112 = vld [vmem:[%s1 + $0x30] sm:$0x3]
    %vm113 = vcmask 408576
    %v115 = vsel %vm113, %v104, 0
    %v118 = vsel %vm113, %v105, 0
    %vm120 = vcmask 1041408
    %v122 = vsel %vm120, %v112, 0
    %124 = vmatpush.msra.mxu0 0.0
    %125 = vmatpush.msra.mxu0 0.0
    %126 = vmatpush.msra.mxu0 0.0
    %127 = vmatpush.msra.mxu0 0.0
    %128 = vmatpush.msra.mxu0 0.0
    %129 = vmatpush.msra.mxu0 0.0
    %130 = vmatpush.msra.mxu0 0.0
    %131 = vmatpush.msra.mxu0 0.0
    %132 = vmatpush.msra.mxu0 0.0
    %133 = vmatpush.msra.mxu0 %v122
    %134 = vmatpush.msra.mxu0 %v111
    %135 = vmatpush.msra.mxu0 %v110
    %136 = vmatpush.msra.mxu0 %v109
    %137 = vmatpush.msra.mxu0 %v108
    %138 = vmatpush.msra.mxu0 %v107
    %139 = vmatpush.msra.mxu0 %v106
    %140 = vmatmul.f32.gmra.mxu0 %v115
    %v141 = vpop.f32.mrf.mxu0
    %v142 = vadd.f32 0.0, %v141
    %143 = vmatmul.f32.gmra.mxu0 %v118
    %v144 = vpop.f32.mrf.mxu0
    %v145 = vadd.f32 0.0, %v144
    %146 = vdwg.mxu0
    %v147 = vmul.f32 %v142, 5.656854
    %v148 = vmul.f32 %v145, 5.656854
    %v149 = vld [vmem:[%s2] sm:$0xff]
    %v150 = vld [vmem:[%s2 + $0x8] sm:$0xff]
    %v151 = vadd.f32 %v147, %v149
    %v152 = vadd.f32 %v148, %v150
    %v153 = vld [vmem:[%s3] sm:$0xff]
    %v154 = vld [vmem:[%s3 + $0x8] sm:$0xff]
    %v155 = vld [vmem:[%s4] sm:$0xff]
    %v156 = vld [vmem:[%s4 + $0x8] sm:$0xff]
    %v157 = vsub.f32 %v155, 1.0
    %v158 = vsub.f32 %v156, 1.0
    %v159 = vmul.f32 %v157, 1e+09
    %v160 = vmul.f32 %v158, 1e+09
    %v161 = vld [vmem:[%s5] sm:$0x3]
    %v162 = vsub.f32 %v161, 1.0
    %v163 = vmul.f32 %v162, 1e+09
    %v164 = vld [vmem:[%s6] sm:$0x1]
    %v165 = vld [vmem:[%s7] sm:$0x1]
    %vm166 = vcmask 261120
    %v167 = vsel %vm166, %v151, 0.0
    %168 = vadd.xlane.f32.xlu0 %v167
    %v169 = vpop.xlane.xlu0 %168
    %v170 = vsel %vm166, %v152, 0.0
    %171 = vadd.xlane.f32.xlu0 %v170
    %v172 = vpop.xlane.xlu0 %171
    %v173 = vrcp.pop 32.0
    %v174 = vmul.f32 32.0, %v173
    %v175 = vsub.f32 1.0, %v174
    %v176 = vmul.f32 %v173, %v175
    %v177 = vadd.f32 %v173, %v176
    %vm178 = vweird.f32 %v173
    %v179 = vsel %vm178, %v173, %v177
    %v180 = vmul.f32 %v169, %v179
    %v181 = vmul.f32 %v172, %v179
    %v182 = vsub.f32 %v151, %v180
    %v183 = vsub.f32 %v152, %v181
    %v184 = vmul.f32 %v182, %v182
    %v185 = vmul.f32 %v183, %v183
    %v186 = vsel %vm166, %v184, 0.0
    %187 = vadd.xlane.f32.xlu0 %v186
    %v188 = vpop.xlane.xlu0 %187
    %v189 = vsel %vm166, %v185, 0.0
    %190 = vadd.xlane.f32.xlu0 %v189
    %v191 = vpop.xlane.xlu0 %190
    %v192 = vmul.f32 %v188, 0.032258064
    %v193 = vmul.f32 %v191, 0.032258064
    %v194 = vrsqrt.pop %v192
    %v195 = vmul.f32 %v194, %v192
    %v196 = vmul.f32 %v195, %v194
    %v197 = vmul.f32 0.5, %v196
    %v198 = vsub.f32 1.5, %v197
    %v199 = vmul.f32 %v194, %v198
    %v200 = vmul.f32 %v192, %v199
    %vm201 = vcmp.eq.f32.partialorder %v192, inf
    %v202 = vsel %vm201, %v192, %v200
    %vm203 = vcmp.eq.f32.partialorder %v192, 0.0
    %v204 = vand.u32 %v192, 2147483648
    %v205 = vsel %vm203, %v204, %v202
    %v206 = vrsqrt.pop %v193
    %v207 = vmul.f32 %v206, %v193
    %v208 = vmul.f32 %v207, %v206
    %v209 = vmul.f32 0.5, %v208
    %v210 = vsub.f32 1.5, %v209
    %v211 = vmul.f32 %v206, %v210
    %v212 = vmul.f32 %v193, %v211
    %vm213 = vcmp.eq.f32.partialorder %v193, inf
    %v214 = vsel %vm213, %v193, %v212
    %vm215 = vcmp.eq.f32.partialorder %v193, 0.0
    %v216 = vand.u32 %v193, 2147483648
    %v217 = vsel %vm215, %v216, %v214
    %v218 = vadd.f32 %v205, 1e-06
    %v219 = vadd.f32 %v217, 1e-06
    %v220 = vrcp.pop %v218
    %v221 = vmul.f32 %v218, %v220
    %v222 = vsub.f32 1.0, %v221
    %v223 = vmul.f32 %v220, %v222
    %v224 = vadd.f32 %v220, %v223
    %vm225 = vweird.f32 %v218
    %vm226 = vweird.f32 %v220
    %vm227 = vmor %vm225, %vm226
    %v228 = vsel %vm227, %v220, %v224
    %v229 = vand.u32 2147483647, %v218
    %vm230 = vcmp.eq.f32.partialorder %v229, 8.507059e+37
    %v231 = vand.u32 %v218, 2147483648
    %v232 = vor.u32 1.1754944e-38, %v231
    %v233 = vsel %vm230, %v232, %v228
    %v234 = vmul.f32 1.0, %v233
    %v235 = vrcp.pop %v219
    %v236 = vmul.f32 %v219, %v235
    %v237 = vsub.f32 1.0, %v236
    %v238 = vmul.f32 %v235, %v237
    %v239 = vadd.f32 %v235, %v238
    %vm240 = vweird.f32 %v219
    %vm241 = vweird.f32 %v235
    %vm242 = vmor %vm240, %vm241
    %v243 = vsel %vm242, %v235, %v239
    %v244 = vand.u32 2147483647, %v219
    %vm245 = vcmp.eq.f32.partialorder %v244, 8.507059e+37
    %v246 = vand.u32 %v219, 2147483648
    %v247 = vor.u32 1.1754944e-38, %v246
    %v248 = vsel %vm245, %v247, %v243
    %v249 = vmul.f32 1.0, %v248
    %v250 = vmul.f32 %v182, %v234
    %v251 = vmul.f32 %v183, %v249
    %v253 = vperm.slane %v164, 0
    %v255 = vmul.f32 %v253, %v250
    %v256 = vmul.f32 %v253, %v251
    %v258 = vperm.slane %v165, 0
    %v260 = vadd.f32 %v255, %v258
    %v261 = vadd.f32 %v256, %v258
    %v262 = vld [vmem:[%s8] sm:$0xff]
    %v263 = vld [vmem:[%s8 + $0x8] sm:$0xff]
    %v264 = vld [vmem:[%s8 + $0x10] sm:$0xff]
    %v265 = vld [vmem:[%s8 + $0x18] sm:$0xff]
    %v266 = vld [vmem:[%s8 + $0x20] sm:$0xff]
    %v267 = vld [vmem:[%s8 + $0x28] sm:$0xff]
    %v268 = vld [vmem:[%s8 + $0x30] sm:$0xff]
    %v269 = vld [vmem:[%s8 + $0x38] sm:$0xff]
    %v270 = vld [vmem:[%s8 + $0x40] sm:$0xff]
    %v271 = vld [vmem:[%s8 + $0x48] sm:$0xff]
    %v272 = vld [vmem:[%s8 + $0x50] sm:$0xff]
    %v273 = vld [vmem:[%s8 + $0x58] sm:$0xff]
    %v274 = vld [vmem:[%s8 + $0x60] sm:$0xff]
    %v275 = vld [vmem:[%s8 + $0x68] sm:$0xff]
    %v276 = vld [vmem:[%s8 + $0x70] sm:$0xff]
    %v277 = vld [vmem:[%s8 + $0x78] sm:$0xff]
    %v278 = vld [vmem:[%s10] sm:$0xff]
    %v279 = vld [vmem:[%s10 + $0x8] sm:$0xff]
    %v280 = vld [vmem:[%s10 + $0x10] sm:$0xff]
    %v281 = vld [vmem:[%s10 + $0x18] sm:$0xff]
    %v282 = vld [vmem:[%s10 + $0x20] sm:$0xff]
    %v283 = vld [vmem:[%s10 + $0x28] sm:$0xff]
    %v284 = vld [vmem:[%s10 + $0x30] sm:$0xff]
    %v285 = vld [vmem:[%s10 + $0x38] sm:$0xff]
    %v286 = vld [vmem:[%s10 + $0x40] sm:$0xff]
    %v287 = vld [vmem:[%s10 + $0x48] sm:$0xff]
    %v288 = vld [vmem:[%s10 + $0x50] sm:$0xff]
    %v289 = vld [vmem:[%s10 + $0x58] sm:$0xff]
    %v290 = vld [vmem:[%s10 + $0x60] sm:$0xff]
    %v291 = vld [vmem:[%s10 + $0x68] sm:$0xff]
    %v292 = vld [vmem:[%s10 + $0x70] sm:$0xff]
    %v293 = vld [vmem:[%s10 + $0x78] sm:$0xff]
    %v294 = vld [vmem:[%s12] sm:$0xff]
    %v295 = vld [vmem:[%s12 + $0x8] sm:$0xff]
    %v296 = vld [vmem:[%s12 + $0x10] sm:$0xff]
    %v297 = vld [vmem:[%s12 + $0x18] sm:$0xff]
    %v298 = vld [vmem:[%s12 + $0x20] sm:$0xff]
    %v299 = vld [vmem:[%s12 + $0x28] sm:$0xff]
    %v300 = vld [vmem:[%s12 + $0x30] sm:$0xff]
    %v301 = vld [vmem:[%s12 + $0x38] sm:$0xff]
    %v302 = vld [vmem:[%s12 + $0x40] sm:$0xff]
    %v303 = vld [vmem:[%s12 + $0x48] sm:$0xff]
    %v304 = vld [vmem:[%s12 + $0x50] sm:$0xff]
    %v305 = vld [vmem:[%s12 + $0x58] sm:$0xff]
    %v306 = vld [vmem:[%s12 + $0x60] sm:$0xff]
    %v307 = vld [vmem:[%s12 + $0x68] sm:$0xff]
    %v308 = vld [vmem:[%s12 + $0x70] sm:$0xff]
    %v309 = vld [vmem:[%s12 + $0x78] sm:$0xff]
    %v310 = vld [vmem:[%s14] sm:$0xff]
    %v311 = vld [vmem:[%s14 + $0x8] sm:$0xff]
    %v312 = vld [vmem:[%s14 + $0x10] sm:$0xff]
    %v313 = vld [vmem:[%s14 + $0x18] sm:$0xff]
    %v314 = vld [vmem:[%s9] sm:$0x1]
    %v315 = vld [vmem:[%s9 + $0x1] sm:$0x1]
    %v316 = vld [vmem:[%s9 + $0x2] sm:$0x1]
    %v317 = vld [vmem:[%s9 + $0x3] sm:$0x1]
    %v318 = vld [vmem:[%s11] sm:$0x1]
    %v319 = vld [vmem:[%s11 + $0x1] sm:$0x1]
    %v320 = vld [vmem:[%s11 + $0x2] sm:$0x1]
    %v321 = vld [vmem:[%s11 + $0x3] sm:$0x1]
    %v322 = vld [vmem:[%s13] sm:$0x1]
    %v323 = vld [vmem:[%s13 + $0x1] sm:$0x1]
    %v324 = vld [vmem:[%s13 + $0x2] sm:$0x1]
    %v325 = vld [vmem:[%s13 + $0x3] sm:$0x1]
    %v326 = vld [vmem:[%s15] sm:$0x1]
    %v328 = vperm.slane %v314, 0
    %v331 = vsel %vm166, %v260, 0
    %v334 = vsel %vm166, %v261, 0
    %336 = vmatpush.msra.mxu0 0.0
    %337 = vmatpush.msra.mxu0 0.0
    %338 = vmatpush.msra.mxu0 0.0
    %339 = vmatpush.msra.mxu0 0.0
    %340 = vmatpush.msra.mxu0 0.0
    %341 = vmatpush.msra.mxu0 0.0
    %342 = vmatpush.msra.mxu0 0.0
    %343 = vmatpush.msra.mxu0 0.0
    %344 = vmatpush.msra.mxu0 0.0
    %345 = vmatpush.msra.mxu0 0.0
    %346 = vmatpush.msra.mxu0 0.0
    %347 = vmatpush.msra.mxu0 0.0
    %348 = vmatpush.msra.mxu0 %v265
    %349 = vmatpush.msra.mxu0 %v264
    %350 = vmatpush.msra.mxu0 %v263
    %351 = vmatpush.msra.mxu0 %v262
    %352 = vmatmul.f32.gmra.mxu0 %v331
    %v353 = vpop.f32.mrf.mxu0
    %v354 = vadd.f32 %v328, %v353
    %355 = vmatmul.f32.gmra.mxu0 %v334
    %v356 = vpop.f32.mrf.mxu0
    %v357 = vadd.f32 %v328, %v356
    %358 = vdwg.mxu0
    %v360 = vperm.slane %v315, 0
    %362 = vmatpush.msra.mxu0 0.0
    %363 = vmatpush.msra.mxu0 0.0
    %364 = vmatpush.msra.mxu0 0.0
    %365 = vmatpush.msra.mxu0 0.0
    %366 = vmatpush.msra.mxu0 0.0
    %367 = vmatpush.msra.mxu0 0.0
    %368 = vmatpush.msra.mxu0 0.0
    %369 = vmatpush.msra.mxu0 0.0
    %370 = vmatpush.msra.mxu0 0.0
    %371 = vmatpush.msra.mxu0 0.0
    %372 = vmatpush.msra.mxu0 0.0
    %373 = vmatpush.msra.mxu0 0.0
    %374 = vmatpush.msra.mxu0 %v269
    %375 = vmatpush.msra.mxu0 %v268
    %376 = vmatpush.msra.mxu0 %v267
    %377 = vmatpush.msra.mxu0 %v266
    %378 = vmatmul.f32.gmra.mxu0 %v331
    %v379 = vpop.f32.mrf.mxu0
    %v380 = vadd.f32 %v360, %v379
    %381 = vmatmul.f32.gmra.mxu0 %v334
    %v382 = vpop.f32.mrf.mxu0
    %v383 = vadd.f32 %v360, %v382
    %384 = vdwg.mxu0
    %v386 = vperm.slane %v316, 0
    %388 = vmatpush.msra.mxu0 0.0
    %389 = vmatpush.msra.mxu0 0.0
    %390 = vmatpush.msra.mxu0 0.0
    %391 = vmatpush.msra.mxu0 0.0
    %392 = vmatpush.msra.mxu0 0.0
    %393 = vmatpush.msra.mxu0 0.0
    %394 = vmatpush.msra.mxu0 0.0
    %395 = vmatpush.msra.mxu0 0.0
    %396 = vmatpush.msra.mxu0 0.0
    %397 = vmatpush.msra.mxu0 0.0
    %398 = vmatpush.msra.mxu0 0.0
    %399 = vmatpush.msra.mxu0 0.0
    %400 = vmatpush.msra.mxu0 %v273
    %401 = vmatpush.msra.mxu0 %v272
    %402 = vmatpush.msra.mxu0 %v271
    %403 = vmatpush.msra.mxu0 %v270
    %404 = vmatmul.f32.gmra.mxu0 %v331
    %v405 = vpop.f32.mrf.mxu0
    %v406 = vadd.f32 %v386, %v405
    %407 = vmatmul.f32.gmra.mxu0 %v334
    %v408 = vpop.f32.mrf.mxu0
    %v409 = vadd.f32 %v386, %v408
    %410 = vdwg.mxu0
    %v412 = vperm.slane %v317, 0
    %414 = vmatpush.msra.mxu0 0.0
    %415 = vmatpush.msra.mxu0 0.0
    %416 = vmatpush.msra.mxu0 0.0
    %417 = vmatpush.msra.mxu0 0.0
    %418 = vmatpush.msra.mxu0 0.0
    %419 = vmatpush.msra.mxu0 0.0
    %420 = vmatpush.msra.mxu0 0.0
    %421 = vmatpush.msra.mxu0 0.0
    %422 = vmatpush.msra.mxu0 0.0
    %423 = vmatpush.msra.mxu0 0.0
    %424 = vmatpush.msra.mxu0 0.0
    %425 = vmatpush.msra.mxu0 0.0
    %426 = vmatpush.msra.mxu0 %v277
    %427 = vmatpush.msra.mxu0 %v276
    %428 = vmatpush.msra.mxu0 %v275
    %429 = vmatpush.msra.mxu0 %v274
    %430 = vmatmul.f32.gmra.mxu0 %v331
    %v431 = vpop.f32.mrf.mxu0
    %v432 = vadd.f32 %v412, %v431
    %433 = vmatmul.f32.gmra.mxu0 %v334
    %v434 = vpop.f32.mrf.mxu0
    %v435 = vadd.f32 %v412, %v434
    %436 = vdwg.mxu0
    %v438 = vperm.slane %v318, 0
    %440 = vmatpush.msra.mxu0 0.0
    %441 = vmatpush.msra.mxu0 0.0
    %442 = vmatpush.msra.mxu0 0.0
    %443 = vmatpush.msra.mxu0 0.0
    %444 = vmatpush.msra.mxu0 0.0
    %445 = vmatpush.msra.mxu0 0.0
    %446 = vmatpush.msra.mxu0 0.0
    %447 = vmatpush.msra.mxu0 0.0
    %448 = vmatpush.msra.mxu0 0.0
    %449 = vmatpush.msra.mxu0 0.0
    %450 = vmatpush.msra.mxu0 0.0
    %451 = vmatpush.msra.mxu0 0.0
    %452 = vmatpush.msra.mxu0 %v281
    %453 = vmatpush.msra.mxu0 %v280
    %454 = vmatpush.msra.mxu0 %v279
    %455 = vmatpush.msra.mxu0 %v278
    %456 = vmatmul.f32.gmra.mxu0 %v331
    %v457 = vpop.f32.mrf.mxu0
    %v458 = vadd.f32 %v438, %v457
    %459 = vmatmul.f32.gmra.mxu0 %v334
    %v460 = vpop.f32.mrf.mxu0
    %v461 = vadd.f32 %v438, %v460
    %462 = vdwg.mxu0
    %v464 = vperm.slane %v319, 0
    %466 = vmatpush.msra.mxu0 0.0
    %467 = vmatpush.msra.mxu0 0.0
    %468 = vmatpush.msra.mxu0 0.0
    %469 = vmatpush.msra.mxu0 0.0
    %470 = vmatpush.msra.mxu0 0.0
    %471 = vmatpush.msra.mxu0 0.0
    %472 = vmatpush.msra.mxu0 0.0
    %473 = vmatpush.msra.mxu0 0.0
    %474 = vmatpush.msra.mxu0 0.0
    %475 = vmatpush.msra.mxu0 0.0
    %476 = vmatpush.msra.mxu0 0.0
    %477 = vmatpush.msra.mxu0 0.0
    %478 = vmatpush.msra.mxu0 %v285
    %479 = vmatpush.msra.mxu0 %v284
    %480 = vmatpush.msra.mxu0 %v283
    %481 = vmatpush.msra.mxu0 %v282
    %482 = vmatmul.f32.gmra.mxu0 %v331
    %v483 = vpop.f32.mrf.mxu0
    %v484 = vadd.f32 %v464, %v483
    %485 = vmatmul.f32.gmra.mxu0 %v334
    %v486 = vpop.f32.mrf.mxu0
    %v487 = vadd.f32 %v464, %v486
    %488 = vdwg.mxu0
    %v490 = vperm.slane %v320, 0
    %492 = vmatpush.msra.mxu0 0.0
    %493 = vmatpush.msra.mxu0 0.0
    %494 = vmatpush.msra.mxu0 0.0
    %495 = vmatpush.msra.mxu0 0.0
    %496 = vmatpush.msra.mxu0 0.0
    %497 = vmatpush.msra.mxu0 0.0
    %498 = vmatpush.msra.mxu0 0.0
    %499 = vmatpush.msra.mxu0 0.0
    %500 = vmatpush.msra.mxu0 0.0
    %501 = vmatpush.msra.mxu0 0.0
    %502 = vmatpush.msra.mxu0 0.0
    %503 = vmatpush.msra.mxu0 0.0
    %504 = vmatpush.msra.mxu0 %v289
    %505 = vmatpush.msra.mxu0 %v288
    %506 = vmatpush.msra.mxu0 %v287
    %507 = vmatpush.msra.mxu0 %v286
    %508 = vmatmul.f32.gmra.mxu0 %v331
    %v509 = vpop.f32.mrf.mxu0
    %v510 = vadd.f32 %v490, %v509
    %511 = vmatmul.f32.gmra.mxu0 %v334
    %v512 = vpop.f32.mrf.mxu0
    %v513 = vadd.f32 %v490, %v512
    %514 = vdwg.mxu0
    %v516 = vperm.slane %v321, 0
    %518 = vmatpush.msra.mxu0 0.0
    %519 = vmatpush.msra.mxu0 0.0
    %520 = vmatpush.msra.mxu0 0.0
    %521 = vmatpush.msra.mxu0 0.0
    %522 = vmatpush.msra.mxu0 0.0
    %523 = vmatpush.msra.mxu0 0.0
    %524 = vmatpush.msra.mxu0 0.0
    %525 = vmatpush.msra.mxu0 0.0
    %526 = vmatpush.msra.mxu0 0.0
    %527 = vmatpush.msra.mxu0 0.0
    %528 = vmatpush.msra.mxu0 0.0
    %529 = vmatpush.msra.mxu0 0.0
    %530 = vmatpush.msra.mxu0 %v293
    %531 = vmatpush.msra.mxu0 %v292
    %532 = vmatpush.msra.mxu0 %v291
    %533 = vmatpush.msra.mxu0 %v290
    %534 = vmatmul.f32.gmra.mxu0 %v331
    %v535 = vpop.f32.mrf.mxu0
    %v536 = vadd.f32 %v516, %v535
    %537 = vmatmul.f32.gmra.mxu0 %v334
    %v538 = vpop.f32.mrf.mxu0
    %v539 = vadd.f32 %v516, %v538
    %540 = vdwg.mxu0
    %v542 = vperm.slane %v322, 0
    %544 = vmatpush.msra.mxu0 0.0
    %545 = vmatpush.msra.mxu0 0.0
    %546 = vmatpush.msra.mxu0 0.0
    %547 = vmatpush.msra.mxu0 0.0
    %548 = vmatpush.msra.mxu0 0.0
    %549 = vmatpush.msra.mxu0 0.0
    %550 = vmatpush.msra.mxu0 0.0
    %551 = vmatpush.msra.mxu0 0.0
    %552 = vmatpush.msra.mxu0 0.0
    %553 = vmatpush.msra.mxu0 0.0
    %554 = vmatpush.msra.mxu0 0.0
    %555 = vmatpush.msra.mxu0 0.0
    %556 = vmatpush.msra.mxu0 %v297
    %557 = vmatpush.msra.mxu0 %v296
    %558 = vmatpush.msra.mxu0 %v295
    %559 = vmatpush.msra.mxu0 %v294
    %560 = vmatmul.f32.gmra.mxu0 %v331
    %v561 = vpop.f32.mrf.mxu0
    %v562 = vadd.f32 %v542, %v561
    %563 = vmatmul.f32.gmra.mxu0 %v334
    %v564 = vpop.f32.mrf.mxu0
    %v565 = vadd.f32 %v542, %v564
    %566 = vdwg.mxu0
    %v568 = vperm.slane %v323, 0
    %570 = vmatpush.msra.mxu0 0.0
    %571 = vmatpush.msra.mxu0 0.0
    %572 = vmatpush.msra.mxu0 0.0
    %573 = vmatpush.msra.mxu0 0.0
    %574 = vmatpush.msra.mxu0 0.0
    %575 = vmatpush.msra.mxu0 0.0
    %576 = vmatpush.msra.mxu0 0.0
    %577 = vmatpush.msra.mxu0 0.0
    %578 = vmatpush.msra.mxu0 0.0
    %579 = vmatpush.msra.mxu0 0.0
    %580 = vmatpush.msra.mxu0 0.0
    %581 = vmatpush.msra.mxu0 0.0
    %582 = vmatpush.msra.mxu0 %v301
    %583 = vmatpush.msra.mxu0 %v300
    %584 = vmatpush.msra.mxu0 %v299
    %585 = vmatpush.msra.mxu0 %v298
    %586 = vmatmul.f32.gmra.mxu0 %v331
    %v587 = vpop.f32.mrf.mxu0
    %v588 = vadd.f32 %v568, %v587
    %589 = vmatmul.f32.gmra.mxu0 %v334
    %v590 = vpop.f32.mrf.mxu0
    %v591 = vadd.f32 %v568, %v590
    %592 = vdwg.mxu0
    %v594 = vperm.slane %v324, 0
    %596 = vmatpush.msra.mxu0 0.0
    %597 = vmatpush.msra.mxu0 0.0
    %598 = vmatpush.msra.mxu0 0.0
    %599 = vmatpush.msra.mxu0 0.0
    %600 = vmatpush.msra.mxu0 0.0
    %601 = vmatpush.msra.mxu0 0.0
    %602 = vmatpush.msra.mxu0 0.0
    %603 = vmatpush.msra.mxu0 0.0
    %604 = vmatpush.msra.mxu0 0.0
    %605 = vmatpush.msra.mxu0 0.0
    %606 = vmatpush.msra.mxu0 0.0
    %607 = vmatpush.msra.mxu0 0.0
    %608 = vmatpush.msra.mxu0 %v305
    %609 = vmatpush.msra.mxu0 %v304
    %610 = vmatpush.msra.mxu0 %v303
    %611 = vmatpush.msra.mxu0 %v302
    %612 = vmatmul.f32.gmra.mxu0 %v331
    %v613 = vpop.f32.mrf.mxu0
    %v614 = vadd.f32 %v594, %v613
    %615 = vmatmul.f32.gmra.mxu0 %v334
    %v616 = vpop.f32.mrf.mxu0
    %v617 = vadd.f32 %v594, %v616
    %618 = vdwg.mxu0
    %v620 = vperm.slane %v325, 0
    %622 = vmatpush.msra.mxu0 0.0
    %623 = vmatpush.msra.mxu0 0.0
    %624 = vmatpush.msra.mxu0 0.0
    %625 = vmatpush.msra.mxu0 0.0
    %626 = vmatpush.msra.mxu0 0.0
    %627 = vmatpush.msra.mxu0 0.0
    %628 = vmatpush.msra.mxu0 0.0
    %629 = vmatpush.msra.mxu0 0.0
    %630 = vmatpush.msra.mxu0 0.0
    %631 = vmatpush.msra.mxu0 0.0
    %632 = vmatpush.msra.mxu0 0.0
    %633 = vmatpush.msra.mxu0 0.0
    %634 = vmatpush.msra.mxu0 %v309
    %635 = vmatpush.msra.mxu0 %v308
    %636 = vmatpush.msra.mxu0 %v307
    %637 = vmatpush.msra.mxu0 %v306
    %638 = vmatmul.f32.gmra.mxu0 %v331
    %v639 = vpop.f32.mrf.mxu0
    %v640 = vadd.f32 %v620, %v639
    %641 = vmatmul.f32.gmra.mxu0 %v334
    %v642 = vpop.f32.mrf.mxu0
    %v643 = vadd.f32 %v620, %v642
    %644 = vdwg.mxu0
    %vm645 = vcmask 64512
    %v647 = vsel %vm645, %v354, 0
    %v650 = vsel %vm645, %v458, 0
    %652 = vmatpush.xpose.msra.mxu0 0.0
    %653 = vmatpush.xpose.msra.mxu0 0.0
    %654 = vmatpush.xpose.msra.mxu0 0.0
    %655 = vmatpush.xpose.msra.mxu0 0.0
    %656 = vmatpush.xpose.msra.mxu0 0.0
    %657 = vmatpush.xpose.msra.mxu0 0.0
    %658 = vmatpush.xpose.msra.mxu0 0.0
    %659 = vmatpush.xpose.msra.mxu0 0.0
    %660 = vmatpush.xpose.msra.mxu0 0.0
    %661 = vmatpush.xpose.msra.mxu0 0.0
    %662 = vmatpush.xpose.msra.mxu0 0.0
    %663 = vmatpush.xpose.msra.mxu0 0.0
    %664 = vmatpush.xpose.msra.mxu0 0.0
    %665 = vmatpush.xpose.msra.mxu0 0.0
    %666 = vmatpush.xpose.msra.mxu0 0.0
    %667 = vmatpush.xpose.msra.mxu0 %v650
    %668 = vmatmul.f32.gmra.mxu0 %v647
    %v669 = vpop.f32.mrf.mxu0
    %v670 = vadd.f32 0.0, %v669
    %671 = vdwg.mxu0
    %v672 = vmul.f32 %v670, 0.35355338
    %v673 = vadd.f32 %v672, %v159
    %v674 = vsel %vm645, %v673, -inf
    %675 = vmax.xlane.f32.xlu0 %v674
    %v676 = vpop.xlane.xlu0 %675
    %v677 = vsub.f32 %v673, %v676
    %v678 = vmul.f32 %v677, 1.442695
    %v679 = vpow.pop %v678
    %v680 = vsel %vm645, %v679, 0.0
    %681 = vadd.xlane.f32.xlu0 %v680
    %v682 = vpop.xlane.xlu0 %681
    %v683 = vrcp.pop %v682
    %v684 = vmul.f32 %v682, %v683
    %v685 = vsub.f32 1.0, %v684
    %v686 = vmul.f32 %v683, %v685
    %v687 = vadd.f32 %v683, %v686
    %vm688 = vweird.f32 %v682
    %vm689 = vweird.f32 %v683
    %vm690 = vmor %vm688, %vm689
    %v691 = vsel %vm690, %v683, %v687
    %v692 = vand.u32 2147483647, %v682
    %vm693 = vcmp.eq.f32.partialorder %v692, 8.507059e+37
    %v694 = vand.u32 %v682, 2147483648
    %v695 = vor.u32 1.1754944e-38, %v694
    %v696 = vsel %vm693, %v695, %v691
    %v697 = vmul.f32 %v679, %v696
    %v699 = vsel %vm645, %v697, 0
    %701 = vmatpush.msra.mxu0 0.0
    %702 = vmatpush.msra.mxu0 0.0
    %703 = vmatpush.msra.mxu0 0.0
    %704 = vmatpush.msra.mxu0 0.0
    %705 = vmatpush.msra.mxu0 0.0
    %706 = vmatpush.msra.mxu0 0.0
    %707 = vmatpush.msra.mxu0 0.0
    %708 = vmatpush.msra.mxu0 0.0
    %709 = vmatpush.msra.mxu0 0.0
    %710 = vmatpush.msra.mxu0 0.0
    %711 = vmatpush.msra.mxu0 0.0
    %712 = vmatpush.msra.mxu0 0.0
    %713 = vmatpush.msra.mxu0 0.0
    %714 = vmatpush.msra.mxu0 0.0
    %715 = vmatpush.msra.mxu0 0.0
    %716 = vmatpush.msra.mxu0 %v562
    %717 = vmatmul.f32.gmra.mxu0 %v699
    %v718 = vpop.f32.mrf.mxu0
    %v719 = vadd.f32 0.0, %v718
    %720 = vdwg.mxu0
    %v722 = vsel %vm645, %v380, 0
    %v725 = vsel %vm645, %v484, 0
    %727 = vmatpush.xpose.msra.mxu0 0.0
    %728 = vmatpush.xpose.msra.mxu0 0.0
    %729 = vmatpush.xpose.msra.mxu0 0.0
    %730 = vmatpush.xpose.msra.mxu0 0.0
    %731 = vmatpush.xpose.msra.mxu0 0.0
    %732 = vmatpush.xpose.msra.mxu0 0.0
    %733 = vmatpush.xpose.msra.mxu0 0.0
    %734 = vmatpush.xpose.msra.mxu0 0.0
    %735 = vmatpush.xpose.msra.mxu0 0.0
    %736 = vmatpush.xpose.msra.mxu0 0.0
    %737 = vmatpush.xpose.msra.mxu0 0.0
    %738 = vmatpush.xpose.msra.mxu0 0.0
    %739 = vmatpush.xpose.msra.mxu0 0.0
    %740 = vmatpush.xpose.msra.mxu0 0.0
    %741 = vmatpush.xpose.msra.mxu0 0.0
    %742 = vmatpush.xpose.msra.mxu0 %v725
    %743 = vmatmul.f32.gmra.mxu0 %v722
    %v744 = vpop.f32.mrf.mxu0
    %v745 = vadd.f32 0.0, %v744
    %746 = vdwg.mxu0
    %v747 = vmul.f32 %v745, 0.35355338
    %v748 = vadd.f32 %v747, %v159
    %v749 = vsel %vm645, %v748, -inf
    %750 = vmax.xlane.f32.xlu0 %v749
    %v751 = vpop.xlane.xlu0 %750
    %v752 = vsub.f32 %v748, %v751
    %v753 = vmul.f32 %v752, 1.442695
    %v754 = vpow.pop %v753
    %v755 = vsel %vm645, %v754, 0.0
    %756 = vadd.xlane.f32.xlu0 %v755
    %v757 = vpop.xlane.xlu0 %756
    %v758 = vrcp.pop %v757
    %v759 = vmul.f32 %v757, %v758
    %v760 = vsub.f32 1.0, %v759
    %v761 = vmul.f32 %v758, %v760
    %v762 = vadd.f32 %v758, %v761
    %vm763 = vweird.f32 %v757
    %vm764 = vweird.f32 %v758
    %vm765 = vmor %vm763, %vm764
    %v766 = vsel %vm765, %v758, %v762
    %v767 = vand.u32 2147483647, %v757
    %vm768 = vcmp.eq.f32.partialorder %v767, 8.507059e+37
    %v769 = vand.u32 %v757, 2147483648
    %v770 = vor.u32 1.1754944e-38, %v769
    %v771 = vsel %vm768, %v770, %v766
    %v772 = vmul.f32 %v754, %v771
    %v774 = vsel %vm645, %v772, 0
    %776 = vmatpush.msra.mxu0 0.0
    %777 = vmatpush.msra.mxu0 0.0
    %778 = vmatpush.msra.mxu0 0.0
    %779 = vmatpush.msra.mxu0 0.0
    %780 = vmatpush.msra.mxu0 0.0
    %781 = vmatpush.msra.mxu0 0.0
    %782 = vmatpush.msra.mxu0 0.0
    %783 = vmatpush.msra.mxu0 0.0
    %784 = vmatpush.msra.mxu0 0.0
    %785 = vmatpush.msra.mxu0 0.0
    %786 = vmatpush.msra.mxu0 0.0
    %787 = vmatpush.msra.mxu0 0.0
    %788 = vmatpush.msra.mxu0 0.0
    %789 = vmatpush.msra.mxu0 0.0
    %790 = vmatpush.msra.mxu0 0.0
    %791 = vmatpush.msra.mxu0 %v588
    %792 = vmatmul.f32.gmra.mxu0 %v774
    %v793 = vpop.f32.mrf.mxu0
    %v794 = vadd.f32 0.0, %v793
    %795 = vdwg.mxu0
    %v797 = vsel %vm645, %v794, 0
    %799 = vmatpush.msra.mxu0 0.0
    %800 = vmatpush.msra.mxu0 0.0
    %801 = vmatpush.msra.mxu0 0.0
    %802 = vmatpush.msra.mxu0 0.0
    %803 = vmatpush.msra.mxu0 0.0
    %804 = vmatpush.msra.mxu0 0.0
    %805 = vmatpush.msra.mxu0 0.0
    %806 = vmatpush.msra.mxu0 0.0
    %807 = vmatpush.msra.mxu0 0.0
    %808 = vmatpush.msra.mxu0 0.0
    %809 = vmatpush.msra.mxu0 0.0
    %810 = vmatpush.msra.mxu0 0.0
    %811 = vmatpush.msra.mxu0 0.0
    %812 = vmatpush.msra.mxu0 0.0
    %813 = vmatpush.msra.mxu0 0.0
    %814 = vmatpush.msra.mxu0 %v311
    %815 = vmatmul.f32.gmra.mxu0 %v797
    %v816 = vpop.f32.mrf.mxu0
    %v817 = vadd.f32 0.0, %v816
    %818 = vdwg.mxu0
    %v820 = vsel %vm645, %v406, 0
    %v823 = vsel %vm645, %v510, 0
    %825 = vmatpush.xpose.msra.mxu0 0.0
    %826 = vmatpush.xpose.msra.mxu0 0.0
    %827 = vmatpush.xpose.msra.mxu0 0.0
    %828 = vmatpush.xpose.msra.mxu0 0.0
    %829 = vmatpush.xpose.msra.mxu0 0.0
    %830 = vmatpush.xpose.msra.mxu0 0.0
    %831 = vmatpush.xpose.msra.mxu0 0.0
    %832 = vmatpush.xpose.msra.mxu0 0.0
    %833 = vmatpush.xpose.msra.mxu0 0.0
    %834 = vmatpush.xpose.msra.mxu0 0.0
    %835 = vmatpush.xpose.msra.mxu0 0.0
    %836 = vmatpush.xpose.msra.mxu0 0.0
    %837 = vmatpush.xpose.msra.mxu0 0.0
    %838 = vmatpush.xpose.msra.mxu0 0.0
    %839 = vmatpush.xpose.msra.mxu0 0.0
    %840 = vmatpush.xpose.msra.mxu0 %v823
    %841 = vmatmul.f32.gmra.mxu0 %v820
    %v842 = vpop.f32.mrf.mxu0
    %v843 = vadd.f32 0.0, %v842
    %844 = vdwg.mxu0
    %v845 = vmul.f32 %v843, 0.35355338
    %v846 = vadd.f32 %v845, %v159
    %v847 = vsel %vm645, %v846, -inf
    %848 = vmax.xlane.f32.xlu0 %v847
    %v849 = vpop.xlane.xlu0 %848
    %v850 = vsub.f32 %v846, %v849
    %v851 = vmul.f32 %v850, 1.442695
    %v852 = vpow.pop %v851
    %v853 = vsel %vm645, %v852, 0.0
    %854 = vadd.xlane.f32.xlu0 %v853
    %v855 = vpop.xlane.xlu0 %854
    %v856 = vrcp.pop %v855
    %v857 = vmul.f32 %v855, %v856
    %v858 = vsub.f32 1.0, %v857
    %v859 = vmul.f32 %v856, %v858
    %v860 = vadd.f32 %v856, %v859
    %vm861 = vweird.f32 %v855
    %vm862 = vweird.f32 %v856
    %vm863 = vmor %vm861, %vm862
    %v864 = vsel %vm863, %v856, %v860
    %v865 = vand.u32 2147483647, %v855
    %vm866 = vcmp.eq.f32.partialorder %v865, 8.507059e+37
    %v867 = vand.u32 %v855, 2147483648
    %v868 = vor.u32 1.1754944e-38, %v867
    %v869 = vsel %vm866, %v868, %v864
    %v870 = vmul.f32 %v852, %v869
    %v872 = vsel %vm645, %v870, 0
    %874 = vmatpush.msra.mxu0 0.0
    %875 = vmatpush.msra.mxu0 0.0
    %876 = vmatpush.msra.mxu0 0.0
    %877 = vmatpush.msra.mxu0 0.0
    %878 = vmatpush.msra.mxu0 0.0
    %879 = vmatpush.msra.mxu0 0.0
    %880 = vmatpush.msra.mxu0 0.0
    %881 = vmatpush.msra.mxu0 0.0
    %882 = vmatpush.msra.mxu0 0.0
    %883 = vmatpush.msra.mxu0 0.0
    %884 = vmatpush.msra.mxu0 0.0
    %885 = vmatpush.msra.mxu0 0.0
    %886 = vmatpush.msra.mxu0 0.0
    %887 = vmatpush.msra.mxu0 0.0
    %888 = vmatpush.msra.mxu0 0.0
    %889 = vmatpush.msra.mxu0 %v614
    %890 = vmatmul.f32.gmra.mxu0 %v872
    %v891 = vpop.f32.mrf.mxu0
    %v892 = vadd.f32 0.0, %v891
    %893 = vdwg.mxu0
    %v895 = vsel %vm645, %v432, 0
    %v898 = vsel %vm645, %v536, 0
    %900 = vmatpush.xpose.msra.mxu0 0.0
    %901 = vmatpush.xpose.msra.mxu0 0.0
    %902 = vmatpush.xpose.msra.mxu0 0.0
    %903 = vmatpush.xpose.msra.mxu0 0.0
    %904 = vmatpush.xpose.msra.mxu0 0.0
    %905 = vmatpush.xpose.msra.mxu0 0.0
    %906 = vmatpush.xpose.msra.mxu0 0.0
    %907 = vmatpush.xpose.msra.mxu0 0.0
    %908 = vmatpush.xpose.msra.mxu0 0.0
    %909 = vmatpush.xpose.msra.mxu0 0.0
    %910 = vmatpush.xpose.msra.mxu0 0.0
    %911 = vmatpush.xpose.msra.mxu0 0.0
    %912 = vmatpush.xpose.msra.mxu0 0.0
    %913 = vmatpush.xpose.msra.mxu0 0.0
    %914 = vmatpush.xpose.msra.mxu0 0.0
    %915 = vmatpush.xpose.msra.mxu0 %v898
    %916 = vmatmul.f32.gmra.mxu0 %v895
    %v917 = vpop.f32.mrf.mxu0
    %v918 = vadd.f32 0.0, %v917
    %919 = vdwg.mxu0
    %v920 = vmul.f32 %v918, 0.35355338
    %v921 = vadd.f32 %v920, %v159
    %v922 = vsel %vm645, %v921, -inf
    %923 = vmax.xlane.f32.xlu0 %v922
    %v924 = vpop.xlane.xlu0 %923
    %v925 = vsub.f32 %v921, %v924
    %v926 = vmul.f32 %v925, 1.442695
    %v927 = vpow.pop %v926
    %v928 = vsel %vm645, %v927, 0.0
    %929 = vadd.xlane.f32.xlu0 %v928
    %v930 = vpop.xlane.xlu0 %929
    %v931 = vrcp.pop %v930
    %v932 = vmul.f32 %v930, %v931
    %v933 = vsub.f32 1.0, %v932
    %v934 = vmul.f32 %v931, %v933
    %v935 = vadd.f32 %v931, %v934
    %vm936 = vweird.f32 %v930
    %vm937 = vweird.f32 %v931
    %vm938 = vmor %vm936, %vm937
    %v939 = vsel %vm938, %v931, %v935
    %v940 = vand.u32 2147483647, %v930
    %vm941 = vcmp.eq.f32.partialorder %v940, 8.507059e+37
    %v942 = vand.u32 %v930, 2147483648
    %v943 = vor.u32 1.1754944e-38, %v942
    %v944 = vsel %vm941, %v943, %v939
    %v945 = vmul.f32 %v927, %v944
    %v947 = vsel %vm645, %v945, 0
    %949 = vmatpush.msra.mxu0 0.0
    %950 = vmatpush.msra.mxu0 0.0
    %951 = vmatpush.msra.mxu0 0.0
    %952 = vmatpush.msra.mxu0 0.0
    %953 = vmatpush.msra.mxu0 0.0
    %954 = vmatpush.msra.mxu0 0.0
    %955 = vmatpush.msra.mxu0 0.0
    %956 = vmatpush.msra.mxu0 0.0
    %957 = vmatpush.msra.mxu0 0.0
    %958 = vmatpush.msra.mxu0 0.0
    %959 = vmatpush.msra.mxu0 0.0
    %960 = vmatpush.msra.mxu0 0.0
    %961 = vmatpush.msra.mxu0 0.0
    %962 = vmatpush.msra.mxu0 0.0
    %963 = vmatpush.msra.mxu0 0.0
    %964 = vmatpush.msra.mxu0 %v640
    %965 = vmatmul.f32.gmra.mxu0 %v947
    %v966 = vpop.f32.mrf.mxu0
    %v967 = vadd.f32 0.0, %v966
    %968 = vdwg.mxu0
    %v970 = vsel %vm645, %v967, 0
    %972 = vmatpush.msra.mxu0 0.0
    %973 = vmatpush.msra.mxu0 0.0
    %974 = vmatpush.msra.mxu0 0.0
    %975 = vmatpush.msra.mxu0 0.0
    %976 = vmatpush.msra.mxu0 0.0
    %977 = vmatpush.msra.mxu0 0.0
    %978 = vmatpush.msra.mxu0 0.0
    %979 = vmatpush.msra.mxu0 0.0
    %980 = vmatpush.msra.mxu0 0.0
    %981 = vmatpush.msra.mxu0 0.0
    %982 = vmatpush.msra.mxu0 0.0
    %983 = vmatpush.msra.mxu0 0.0
    %984 = vmatpush.msra.mxu0 0.0
    %985 = vmatpush.msra.mxu0 0.0
    %986 = vmatpush.msra.mxu0 0.0
    %987 = vmatpush.msra.mxu0 %v313
    %988 = vmatmul.f32.gmra.mxu0 %v970
    %v989 = vpop.f32.mrf.mxu0
    %v990 = vadd.f32 0.0, %v989
    %991 = vdwg.mxu0
    %v993 = vsel %vm645, %v719, 0
    %995 = vmatpush.msra.mxu0 0.0
    %996 = vmatpush.msra.mxu0 0.0
    %997 = vmatpush.msra.mxu0 0.0
    %998 = vmatpush.msra.mxu0 0.0
    %999 = vmatpush.msra.mxu0 0.0
    %1000 = vmatpush.msra.mxu0 0.0
    %1001 = vmatpush.msra.mxu0 0.0
    %1002 = vmatpush.msra.mxu0 0.0
    %1003 = vmatpush.msra.mxu0 0.0
    %1004 = vmatpush.msra.mxu0 0.0
    %1005 = vmatpush.msra.mxu0 0.0
    %1006 = vmatpush.msra.mxu0 0.0
    %1007 = vmatpush.msra.mxu0 0.0
    %1008 = vmatpush.msra.mxu0 0.0
    %1009 = vmatpush.msra.mxu0 0.0
    %1010 = vmatpush.msra.mxu0 %v310
    %1011 = vmatmul.f32.gmra.mxu0 %v993
    %v1012 = vpop.f32.mrf.mxu0
    %v1013 = vadd.f32 %v817, %v1012
    %1014 = vdwg.mxu0
    %v1016 = vsel %vm645, %v892, 0
    %1018 = vmatpush.msra.mxu0 0.0
    %1019 = vmatpush.msra.mxu0 0.0
    %1020 = vmatpush.msra.mxu0 0.0
    %1021 = vmatpush.msra.mxu0 0.0
    %1022 = vmatpush.msra.mxu0 0.0
    %1023 = vmatpush.msra.mxu0 0.0
    %1024 = vmatpush.msra.mxu0 0.0
    %1025 = vmatpush.msra.mxu0 0.0
    %1026 = vmatpush.msra.mxu0 0.0
    %1027 = vmatpush.msra.mxu0 0.0
    %1028 = vmatpush.msra.mxu0 0.0
    %1029 = vmatpush.msra.mxu0 0.0
    %1030 = vmatpush.msra.mxu0 0.0
    %1031 = vmatpush.msra.mxu0 0.0
    %1032 = vmatpush.msra.mxu0 0.0
    %1033 = vmatpush.msra.mxu0 %v312
    %1034 = vmatmul.f32.gmra.mxu0 %v1016
    %v1035 = vpop.f32.mrf.mxu0
    %v1036 = vadd.f32 %v990, %v1035
    %1037 = vdwg.mxu0
    %v1038 = vadd.f32 %v1013, %v1036
    %v1040 = vperm.slane %v326, 0
    %v1042 = vadd.f32 %v1038, %v1040
    %v1044 = vsel %vm645, %v357, 0
    %v1047 = vsel %vm645, %v461, 0
    %1049 = vmatpush.xpose.msra.mxu0 0.0
    %1050 = vmatpush.xpose.msra.mxu0 0.0
    %1051 = vmatpush.xpose.msra.mxu0 0.0
    %1052 = vmatpush.xpose.msra.mxu0 0.0
    %1053 = vmatpush.xpose.msra.mxu0 0.0
    %1054 = vmatpush.xpose.msra.mxu0 0.0
    %1055 = vmatpush.xpose.msra.mxu0 0.0
    %1056 = vmatpush.xpose.msra.mxu0 0.0
    %1057 = vmatpush.xpose.msra.mxu0 0.0
    %1058 = vmatpush.xpose.msra.mxu0 0.0
    %1059 = vmatpush.xpose.msra.mxu0 0.0
    %1060 = vmatpush.xpose.msra.mxu0 0.0
    %1061 = vmatpush.xpose.msra.mxu0 0.0
    %1062 = vmatpush.xpose.msra.mxu0 0.0
    %1063 = vmatpush.xpose.msra.mxu0 0.0
    %1064 = vmatpush.xpose.msra.mxu0 %v1047
    %1065 = vmatmul.f32.gmra.mxu0 %v1044
    %v1066 = vpop.f32.mrf.mxu0
    %v1067 = vadd.f32 0.0, %v1066
    %1068 = vdwg.mxu0
    %v1069 = vmul.f32 %v1067, 0.35355338
    %v1070 = vadd.f32 %v1069, %v160
    %v1071 = vsel %vm645, %v1070, -inf
    %1072 = vmax.xlane.f32.xlu0 %v1071
    %v1073 = vpop.xlane.xlu0 %1072
    %v1074 = vsub.f32 %v1070, %v1073
    %v1075 = vmul.f32 %v1074, 1.442695
    %v1076 = vpow.pop %v1075
    %v1077 = vsel %vm645, %v1076, 0.0
    %1078 = vadd.xlane.f32.xlu0 %v1077
    %v1079 = vpop.xlane.xlu0 %1078
    %v1080 = vrcp.pop %v1079
    %v1081 = vmul.f32 %v1079, %v1080
    %v1082 = vsub.f32 1.0, %v1081
    %v1083 = vmul.f32 %v1080, %v1082
    %v1084 = vadd.f32 %v1080, %v1083
    %vm1085 = vweird.f32 %v1079
    %vm1086 = vweird.f32 %v1080
    %vm1087 = vmor %vm1085, %vm1086
    %v1088 = vsel %vm1087, %v1080, %v1084
    %v1089 = vand.u32 2147483647, %v1079
    %vm1090 = vcmp.eq.f32.partialorder %v1089, 8.507059e+37
    %v1091 = vand.u32 %v1079, 2147483648
    %v1092 = vor.u32 1.1754944e-38, %v1091
    %v1093 = vsel %vm1090, %v1092, %v1088
    %v1094 = vmul.f32 %v1076, %v1093
    %v1096 = vsel %vm645, %v1094, 0
    %1098 = vmatpush.msra.mxu0 0.0
    %1099 = vmatpush.msra.mxu0 0.0
    %1100 = vmatpush.msra.mxu0 0.0
    %1101 = vmatpush.msra.mxu0 0.0
    %1102 = vmatpush.msra.mxu0 0.0
    %1103 = vmatpush.msra.mxu0 0.0
    %1104 = vmatpush.msra.mxu0 0.0
    %1105 = vmatpush.msra.mxu0 0.0
    %1106 = vmatpush.msra.mxu0 0.0
    %1107 = vmatpush.msra.mxu0 0.0
    %1108 = vmatpush.msra.mxu0 0.0
    %1109 = vmatpush.msra.mxu0 0.0
    %1110 = vmatpush.msra.mxu0 0.0
    %1111 = vmatpush.msra.mxu0 0.0
    %1112 = vmatpush.msra.mxu0 0.0
    %1113 = vmatpush.msra.mxu0 %v565
    %1114 = vmatmul.f32.gmra.mxu0 %v1096
    %v1115 = vpop.f32.mrf.mxu0
    %v1116 = vadd.f32 0.0, %v1115
    %1117 = vdwg.mxu0
    %v1119 = vsel %vm645, %v383, 0
    %v1122 = vsel %vm645, %v487, 0
    %1124 = vmatpush.xpose.msra.mxu0 0.0
    %1125 = vmatpush.xpose.msra.mxu0 0.0
    %1126 = vmatpush.xpose.msra.mxu0 0.0
    %1127 = vmatpush.xpose.msra.mxu0 0.0
    %1128 = vmatpush.xpose.msra.mxu0 0.0
    %1129 = vmatpush.xpose.msra.mxu0 0.0
    %1130 = vmatpush.xpose.msra.mxu0 0.0
    %1131 = vmatpush.xpose.msra.mxu0 0.0
    %1132 = vmatpush.xpose.msra.mxu0 0.0
    %1133 = vmatpush.xpose.msra.mxu0 0.0
    %1134 = vmatpush.xpose.msra.mxu0 0.0
    %1135 = vmatpush.xpose.msra.mxu0 0.0
    %1136 = vmatpush.xpose.msra.mxu0 0.0
    %1137 = vmatpush.xpose.msra.mxu0 0.0
    %1138 = vmatpush.xpose.msra.mxu0 0.0
    %1139 = vmatpush.xpose.msra.mxu0 %v1122
    %1140 = vmatmul.f32.gmra.mxu0 %v1119
    %v1141 = vpop.f32.mrf.mxu0
    %v1142 = vadd.f32 0.0, %v1141
    %1143 = vdwg.mxu0
    %v1144 = vmul.f32 %v1142, 0.35355338
    %v1145 = vadd.f32 %v1144, %v160
    %v1146 = vsel %vm645, %v1145, -inf
    %1147 = vmax.xlane.f32.xlu0 %v1146
    %v1148 = vpop.xlane.xlu0 %1147
    %v1149 = vsub.f32 %v1145, %v1148
    %v1150 = vmul.f32 %v1149, 1.442695
    %v1151 = vpow.pop %v1150
    %v1152 = vsel %vm645, %v1151, 0.0
    %1153 = vadd.xlane.f32.xlu0 %v1152
    %v1154 = vpop.xlane.xlu0 %1153
    %v1155 = vrcp.pop %v1154
    %v1156 = vmul.f32 %v1154, %v1155
    %v1157 = vsub.f32 1.0, %v1156
    %v1158 = vmul.f32 %v1155, %v1157
    %v1159 = vadd.f32 %v1155, %v1158
    %vm1160 = vweird.f32 %v1154
    %vm1161 = vweird.f32 %v1155
    %vm1162 = vmor %vm1160, %vm1161
    %v1163 = vsel %vm1162, %v1155, %v1159
    %v1164 = vand.u32 2147483647, %v1154
    %vm1165 = vcmp.eq.f32.partialorder %v1164, 8.507059e+37
    %v1166 = vand.u32 %v1154, 2147483648
    %v1167 = vor.u32 1.1754944e-38, %v1166
    %v1168 = vsel %vm1165, %v1167, %v1163
    %v1169 = vmul.f32 %v1151, %v1168
    %v1171 = vsel %vm645, %v1169, 0
    %1173 = vmatpush.msra.mxu0 0.0
    %1174 = vmatpush.msra.mxu0 0.0
    %1175 = vmatpush.msra.mxu0 0.0
    %1176 = vmatpush.msra.mxu0 0.0
    %1177 = vmatpush.msra.mxu0 0.0
    %1178 = vmatpush.msra.mxu0 0.0
    %1179 = vmatpush.msra.mxu0 0.0
    %1180 = vmatpush.msra.mxu0 0.0
    %1181 = vmatpush.msra.mxu0 0.0
    %1182 = vmatpush.msra.mxu0 0.0
    %1183 = vmatpush.msra.mxu0 0.0
    %1184 = vmatpush.msra.mxu0 0.0
    %1185 = vmatpush.msra.mxu0 0.0
    %1186 = vmatpush.msra.mxu0 0.0
    %1187 = vmatpush.msra.mxu0 0.0
    %1188 = vmatpush.msra.mxu0 %v591
    %1189 = vmatmul.f32.gmra.mxu0 %v1171
    %v1190 = vpop.f32.mrf.mxu0
    %v1191 = vadd.f32 0.0, %v1190
    %1192 = vdwg.mxu0
    %v1194 = vsel %vm645, %v1191, 0
    %1196 = vmatpush.msra.mxu0 0.0
    %1197 = vmatpush.msra.mxu0 0.0
    %1198 = vmatpush.msra.mxu0 0.0
    %1199 = vmatpush.msra.mxu0 0.0
    %1200 = vmatpush.msra.mxu0 0.0
    %1201 = vmatpush.msra.mxu0 0.0
    %1202 = vmatpush.msra.mxu0 0.0
    %1203 = vmatpush.msra.mxu0 0.0
    %1204 = vmatpush.msra.mxu0 0.0
    %1205 = vmatpush.msra.mxu0 0.0
    %1206 = vmatpush.msra.mxu0 0.0
    %1207 = vmatpush.msra.mxu0 0.0
    %1208 = vmatpush.msra.mxu0 0.0
    %1209 = vmatpush.msra.mxu0 0.0
    %1210 = vmatpush.msra.mxu0 0.0
    %1211 = vmatpush.msra.mxu0 %v311
    %1212 = vmatmul.f32.gmra.mxu0 %v1194
    %v1213 = vpop.f32.mrf.mxu0
    %v1214 = vadd.f32 0.0, %v1213
    %1215 = vdwg.mxu0
    %v1217 = vsel %vm645, %v409, 0
    %v1220 = vsel %vm645, %v513, 0
    %1222 = vmatpush.xpose.msra.mxu0 0.0
    %1223 = vmatpush.xpose.msra.mxu0 0.0
    %1224 = vmatpush.xpose.msra.mxu0 0.0
    %1225 = vmatpush.xpose.msra.mxu0 0.0
    %1226 = vmatpush.xpose.msra.mxu0 0.0
    %1227 = vmatpush.xpose.msra.mxu0 0.0
    %1228 = vmatpush.xpose.msra.mxu0 0.0
    %1229 = vmatpush.xpose.msra.mxu0 0.0
    %1230 = vmatpush.xpose.msra.mxu0 0.0
    %1231 = vmatpush.xpose.msra.mxu0 0.0
    %1232 = vmatpush.xpose.msra.mxu0 0.0
    %1233 = vmatpush.xpose.msra.mxu0 0.0
    %1234 = vmatpush.xpose.msra.mxu0 0.0
    %1235 = vmatpush.xpose.msra.mxu0 0.0
    %1236 = vmatpush.xpose.msra.mxu0 0.0
    %1237 = vmatpush.xpose.msra.mxu0 %v1220
    %1238 = vmatmul.f32.gmra.mxu0 %v1217
    %v1239 = vpop.f32.mrf.mxu0
    %v1240 = vadd.f32 0.0, %v1239
    %1241 = vdwg.mxu0
    %v1242 = vmul.f32 %v1240, 0.35355338
    %v1243 = vadd.f32 %v1242, %v160
    %v1244 = vsel %vm645, %v1243, -inf
    %1245 = vmax.xlane.f32.xlu0 %v1244
    %v1246 = vpop.xlane.xlu0 %1245
    %v1247 = vsub.f32 %v1243, %v1246
    %v1248 = vmul.f32 %v1247, 1.442695
    %v1249 = vpow.pop %v1248
    %v1250 = vsel %vm645, %v1249, 0.0
    %1251 = vadd.xlane.f32.xlu0 %v1250
    %v1252 = vpop.xlane.xlu0 %1251
    %v1253 = vrcp.pop %v1252
    %v1254 = vmul.f32 %v1252, %v1253
    %v1255 = vsub.f32 1.0, %v1254
    %v1256 = vmul.f32 %v1253, %v1255
    %v1257 = vadd.f32 %v1253, %v1256
    %vm1258 = vweird.f32 %v1252
    %vm1259 = vweird.f32 %v1253
    %vm1260 = vmor %vm1258, %vm1259
    %v1261 = vsel %vm1260, %v1253, %v1257
    %v1262 = vand.u32 2147483647, %v1252
    %vm1263 = vcmp.eq.f32.partialorder %v1262, 8.507059e+37
    %v1264 = vand.u32 %v1252, 2147483648
    %v1265 = vor.u32 1.1754944e-38, %v1264
    %v1266 = vsel %vm1263, %v1265, %v1261
    %v1267 = vmul.f32 %v1249, %v1266
    %v1269 = vsel %vm645, %v1267, 0
    %1271 = vmatpush.msra.mxu0 0.0
    %1272 = vmatpush.msra.mxu0 0.0
    %1273 = vmatpush.msra.mxu0 0.0
    %1274 = vmatpush.msra.mxu0 0.0
    %1275 = vmatpush.msra.mxu0 0.0
    %1276 = vmatpush.msra.mxu0 0.0
    %1277 = vmatpush.msra.mxu0 0.0
    %1278 = vmatpush.msra.mxu0 0.0
    %1279 = vmatpush.msra.mxu0 0.0
    %1280 = vmatpush.msra.mxu0 0.0
    %1281 = vmatpush.msra.mxu0 0.0
    %1282 = vmatpush.msra.mxu0 0.0
    %1283 = vmatpush.msra.mxu0 0.0
    %1284 = vmatpush.msra.mxu0 0.0
    %1285 = vmatpush.msra.mxu0 0.0
    %1286 = vmatpush.msra.mxu0 %v617
    %1287 = vmatmul.f32.gmra.mxu0 %v1269
    %v1288 = vpop.f32.mrf.mxu0
    %v1289 = vadd.f32 0.0, %v1288
    %1290 = vdwg.mxu0
    %v1292 = vsel %vm645, %v435, 0
    %v1295 = vsel %vm645, %v539, 0
    %1297 = vmatpush.xpose.msra.mxu0 0.0
    %1298 = vmatpush.xpose.msra.mxu0 0.0
    %1299 = vmatpush.xpose.msra.mxu0 0.0
    %1300 = vmatpush.xpose.msra.mxu0 0.0
    %1301 = vmatpush.xpose.msra.mxu0 0.0
    %1302 = vmatpush.xpose.msra.mxu0 0.0
    %1303 = vmatpush.xpose.msra.mxu0 0.0
    %1304 = vmatpush.xpose.msra.mxu0 0.0
    %1305 = vmatpush.xpose.msra.mxu0 0.0
    %1306 = vmatpush.xpose.msra.mxu0 0.0
    %1307 = vmatpush.xpose.msra.mxu0 0.0
    %1308 = vmatpush.xpose.msra.mxu0 0.0
    %1309 = vmatpush.xpose.msra.mxu0 0.0
    %1310 = vmatpush.xpose.msra.mxu0 0.0
    %1311 = vmatpush.xpose.msra.mxu0 0.0
    %1312 = vmatpush.xpose.msra.mxu0 %v1295
    %1313 = vmatmul.f32.gmra.mxu0 %v1292
    %v1314 = vpop.f32.mrf.mxu0
    %v1315 = vadd.f32 0.0, %v1314
    %1316 = vdwg.mxu0
    %v1317 = vmul.f32 %v1315, 0.35355338
    %v1318 = vadd.f32 %v1317, %v160
    %v1319 = vsel %vm645, %v1318, -inf
    %1320 = vmax.xlane.f32.xlu0 %v1319
    %v1321 = vpop.xlane.xlu0 %1320
    %v1322 = vsub.f32 %v1318, %v1321
    %v1323 = vmul.f32 %v1322, 1.442695
    %v1324 = vpow.pop %v1323
    %v1325 = vsel %vm645, %v1324, 0.0
    %1326 = vadd.xlane.f32.xlu0 %v1325
    %v1327 = vpop.xlane.xlu0 %1326
    %v1328 = vrcp.pop %v1327
    %v1329 = vmul.f32 %v1327, %v1328
    %v1330 = vsub.f32 1.0, %v1329
    %v1331 = vmul.f32 %v1328, %v1330
    %v1332 = vadd.f32 %v1328, %v1331
    %vm1333 = vweird.f32 %v1327
    %vm1334 = vweird.f32 %v1328
    %vm1335 = vmor %vm1333, %vm1334
    %v1336 = vsel %vm1335, %v1328, %v1332
    %v1337 = vand.u32 2147483647, %v1327
    %vm1338 = vcmp.eq.f32.partialorder %v1337, 8.507059e+37
    %v1339 = vand.u32 %v1327, 2147483648
    %v1340 = vor.u32 1.1754944e-38, %v1339
    %v1341 = vsel %vm1338, %v1340, %v1336
    %v1342 = vmul.f32 %v1324, %v1341
    %v1344 = vsel %vm645, %v1342, 0
    %1346 = vmatpush.msra.mxu0 0.0
    %1347 = vmatpush.msra.mxu0 0.0
    %1348 = vmatpush.msra.mxu0 0.0
    %1349 = vmatpush.msra.mxu0 0.0
    %1350 = vmatpush.msra.mxu0 0.0
    %1351 = vmatpush.msra.mxu0 0.0
    %1352 = vmatpush.msra.mxu0 0.0
    %1353 = vmatpush.msra.mxu0 0.0
    %1354 = vmatpush.msra.mxu0 0.0
    %1355 = vmatpush.msra.mxu0 0.0
    %1356 = vmatpush.msra.mxu0 0.0
    %1357 = vmatpush.msra.mxu0 0.0
    %1358 = vmatpush.msra.mxu0 0.0
    %1359 = vmatpush.msra.mxu0 0.0
    %1360 = vmatpush.msra.mxu0 0.0
    %1361 = vmatpush.msra.mxu0 %v643
    %1362 = vmatmul.f32.gmra.mxu0 %v1344
    %v1363 = vpop.f32.mrf.mxu0
    %v1364 = vadd.f32 0.0, %v1363
    %1365 = vdwg.mxu0
    %v1367 = vsel %vm645, %v1364, 0
    %1369 = vmatpush.msra.mxu0 0.0
    %1370 = vmatpush.msra.mxu0 0.0
    %1371 = vmatpush.msra.mxu0 0.0
    %1372 = vmatpush.msra.mxu0 0.0
    %1373 = vmatpush.msra.mxu0 0.0
    %1374 = vmatpush.msra.mxu0 0.0
    %1375 = vmatpush.msra.mxu0 0.0
    %1376 = vmatpush.msra.mxu0 0.0
    %1377 = vmatpush.msra.mxu0 0.0
    %1378 = vmatpush.msra.mxu0 0.0
    %1379 = vmatpush.msra.mxu0 0.0
    %1380 = vmatpush.msra.mxu0 0.0
    %1381 = vmatpush.msra.mxu0 0.0
    %1382 = vmatpush.msra.mxu0 0.0
    %1383 = vmatpush.msra.mxu0 0.0
    %1384 = vmatpush.msra.mxu0 %v313
    %1385 = vmatmul.f32.gmra.mxu0 %v1367
    %v1386 = vpop.f32.mrf.mxu0
    %v1387 = vadd.f32 0.0, %v1386
    %1388 = vdwg.mxu0
    %v1390 = vsel %vm645, %v1116, 0
    %1392 = vmatpush.msra.mxu0 0.0
    %1393 = vmatpush.msra.mxu0 0.0
    %1394 = vmatpush.msra.mxu0 0.0
    %1395 = vmatpush.msra.mxu0 0.0
    %1396 = vmatpush.msra.mxu0 0.0
    %1397 = vmatpush.msra.mxu0 0.0
    %1398 = vmatpush.msra.mxu0 0.0
    %1399 = vmatpush.msra.mxu0 0.0
    %1400 = vmatpush.msra.mxu0 0.0
    %1401 = vmatpush.msra.mxu0 0.0
    %1402 = vmatpush.msra.mxu0 0.0
    %1403 = vmatpush.msra.mxu0 0.0
    %1404 = vmatpush.msra.mxu0 0.0
    %1405 = vmatpush.msra.mxu0 0.0
    %1406 = vmatpush.msra.mxu0 0.0
    %1407 = vmatpush.msra.mxu0 %v310
    %1408 = vmatmul.f32.gmra.mxu0 %v1390
    %v1409 = vpop.f32.mrf.mxu0
    %v1410 = vadd.f32 %v1214, %v1409
    %1411 = vdwg.mxu0
    %v1413 = vsel %vm645, %v1289, 0
    %1415 = vmatpush.msra.mxu0 0.0
    %1416 = vmatpush.msra.mxu0 0.0
    %1417 = vmatpush.msra.mxu0 0.0
    %1418 = vmatpush.msra.mxu0 0.0
    %1419 = vmatpush.msra.mxu0 0.0
    %1420 = vmatpush.msra.mxu0 0.0
    %1421 = vmatpush.msra.mxu0 0.0
    %1422 = vmatpush.msra.mxu0 0.0
    %1423 = vmatpush.msra.mxu0 0.0
    %1424 = vmatpush.msra.mxu0 0.0
    %1425 = vmatpush.msra.mxu0 0.0
    %1426 = vmatpush.msra.mxu0 0.0
    %1427 = vmatpush.msra.mxu0 0.0
    %1428 = vmatpush.msra.mxu0 0.0
    %1429 = vmatpush.msra.mxu0 0.0
    %1430 = vmatpush.msra.mxu0 %v312
    %1431 = vmatmul.f32.gmra.mxu0 %v1413
    %v1432 = vpop.f32.mrf.mxu0
    %v1433 = vadd.f32 %v1387, %v1432
    %1434 = vdwg.mxu0
    %v1435 = vadd.f32 %v1410, %v1433
    %v1436 = vadd.f32 %v1435, %v1040
    %v1437 = vadd.f32 %v151, %v1042
    %v1438 = vadd.f32 %v152, %v1436
    %s1439 = scalar_lea.vmem %s6, 1
    %v1440 = vld [vmem:[%s1439] sm:$0x1]
    %s1441 = scalar_lea.vmem %s7, 1
    %v1442 = vld [vmem:[%s1441] sm:$0x1]
    %v1443 = vsel %vm166, %v1437, 0.0
    %1444 = vadd.xlane.f32.xlu0 %v1443
    %v1445 = vpop.xlane.xlu0 %1444
    %v1446 = vsel %vm166, %v1438, 0.0
    %1447 = vadd.xlane.f32.xlu0 %v1446
    %v1448 = vpop.xlane.xlu0 %1447
    %v1449 = vmul.f32 %v1445, %v179
    %v1450 = vmul.f32 %v1448, %v179
    %v1451 = vsub.f32 %v1437, %v1449
    %v1452 = vsub.f32 %v1438, %v1450
    %v1453 = vmul.f32 %v1451, %v1451
    %v1454 = vmul.f32 %v1452, %v1452
    %v1455 = vsel %vm166, %v1453, 0.0
    %1456 = vadd.xlane.f32.xlu0 %v1455
    %v1457 = vpop.xlane.xlu0 %1456
    %v1458 = vsel %vm166, %v1454, 0.0
    %1459 = vadd.xlane.f32.xlu0 %v1458
    %v1460 = vpop.xlane.xlu0 %1459
    %v1461 = vmul.f32 %v1457, 0.032258064
    %v1462 = vmul.f32 %v1460, 0.032258064
    %v1463 = vrsqrt.pop %v1461
    %v1464 = vmul.f32 %v1463, %v1461
    %v1465 = vmul.f32 %v1464, %v1463
    %v1466 = vmul.f32 0.5, %v1465
    %v1467 = vsub.f32 1.5, %v1466
    %v1468 = vmul.f32 %v1463, %v1467
    %v1469 = vmul.f32 %v1461, %v1468
    %vm1470 = vcmp.eq.f32.partialorder %v1461, inf
    %v1471 = vsel %vm1470, %v1461, %v1469
    %vm1472 = vcmp.eq.f32.partialorder %v1461, 0.0
    %v1473 = vand.u32 %v1461, 2147483648
    %v1474 = vsel %vm1472, %v1473, %v1471
    %v1475 = vrsqrt.pop %v1462
    %v1476 = vmul.f32 %v1475, %v1462
    %v1477 = vmul.f32 %v1476, %v1475
    %v1478 = vmul.f32 0.5, %v1477
    %v1479 = vsub.f32 1.5, %v1478
    %v1480 = vmul.f32 %v1475, %v1479
    %v1481 = vmul.f32 %v1462, %v1480
    %vm1482 = vcmp.eq.f32.partialorder %v1462, inf
    %v1483 = vsel %vm1482, %v1462, %v1481
    %vm1484 = vcmp.eq.f32.partialorder %v1462, 0.0
    %v1485 = vand.u32 %v1462, 2147483648
    %v1486 = vsel %vm1484, %v1485, %v1483
    %v1487 = vadd.f32 %v1474, 1e-06
    %v1488 = vadd.f32 %v1486, 1e-06
    %v1489 = vrcp.pop %v1487
    %v1490 = vmul.f32 %v1487, %v1489
    %v1491 = vsub.f32 1.0, %v1490
    %v1492 = vmul.f32 %v1489, %v1491
    %v1493 = vadd.f32 %v1489, %v1492
    %vm1494 = vweird.f32 %v1487
    %vm1495 = vweird.f32 %v1489
    %vm1496 = vmor %vm1494, %vm1495
    %v1497 = vsel %vm1496, %v1489, %v1493
    %v1498 = vand.u32 2147483647, %v1487
    %vm1499 = vcmp.eq.f32.partialorder %v1498, 8.507059e+37
    %v1500 = vand.u32 %v1487, 2147483648
    %v1501 = vor.u32 1.1754944e-38, %v1500
    %v1502 = vsel %vm1499, %v1501, %v1497
    %v1503 = vmul.f32 1.0, %v1502
    %v1504 = vrcp.pop %v1488
    %v1505 = vmul.f32 %v1488, %v1504
    %v1506 = vsub.f32 1.0, %v1505
    %v1507 = vmul.f32 %v1504, %v1506
    %v1508 = vadd.f32 %v1504, %v1507
    %vm1509 = vweird.f32 %v1488
    %vm1510 = vweird.f32 %v1504
    %vm1511 = vmor %vm1509, %vm1510
    %v1512 = vsel %vm1511, %v1504, %v1508
    %v1513 = vand.u32 2147483647, %v1488
    %vm1514 = vcmp.eq.f32.partialorder %v1513, 8.507059e+37
    %v1515 = vand.u32 %v1488, 2147483648
    %v1516 = vor.u32 1.1754944e-38, %v1515
    %v1517 = vsel %vm1514, %v1516, %v1512
    %v1518 = vmul.f32 1.0, %v1517
    %v1519 = vmul.f32 %v1451, %v1503
    %v1520 = vmul.f32 %v1452, %v1518
    %v1522 = vperm.slane %v1440, 0
    %v1524 = vmul.f32 %v1522, %v1519
    %v1525 = vmul.f32 %v1522, %v1520
    %v1527 = vperm.slane %v1442, 0
    %v1529 = vadd.f32 %v1524, %v1527
    %v1530 = vadd.f32 %v1525, %v1527
    %v1531 = vld [vmem:[%s16] sm:$0xff]
    %v1532 = vld [vmem:[%s16 + $0x8] sm:$0xff]
    %v1533 = vld [vmem:[%s16 + $0x10] sm:$0xff]
    %v1534 = vld [vmem:[%s16 + $0x18] sm:$0xff]
    %v1535 = vld [vmem:[%s16 + $0x20] sm:$0xff]
    %v1536 = vld [vmem:[%s16 + $0x28] sm:$0xff]
    %v1537 = vld [vmem:[%s16 + $0x30] sm:$0xff]
    %v1538 = vld [vmem:[%s16 + $0x38] sm:$0xff]
    %v1539 = vld [vmem:[%s16 + $0x40] sm:$0xff]
    %v1540 = vld [vmem:[%s16 + $0x48] sm:$0xff]
    %v1541 = vld [vmem:[%s16 + $0x50] sm:$0xff]
    %v1542 = vld [vmem:[%s16 + $0x58] sm:$0xff]
    %v1543 = vld [vmem:[%s16 + $0x60] sm:$0xff]
    %v1544 = vld [vmem:[%s16 + $0x68] sm:$0xff]
    %v1545 = vld [vmem:[%s16 + $0x70] sm:$0xff]
    %v1546 = vld [vmem:[%s16 + $0x78] sm:$0xff]
    %v1547 = vld [vmem:[%s18] sm:$0xff]
    %v1548 = vld [vmem:[%s18 + $0x8] sm:$0xff]
    %v1549 = vld [vmem:[%s18 + $0x10] sm:$0xff]
    %v1550 = vld [vmem:[%s18 + $0x18] sm:$0xff]
    %v1551 = vld [vmem:[%s18 + $0x20] sm:$0xff]
    %v1552 = vld [vmem:[%s18 + $0x28] sm:$0xff]
    %v1553 = vld [vmem:[%s18 + $0x30] sm:$0xff]
    %v1554 = vld [vmem:[%s18 + $0x38] sm:$0xff]
    %v1555 = vld [vmem:[%s18 + $0x40] sm:$0xff]
    %v1556 = vld [vmem:[%s18 + $0x48] sm:$0xff]
    %v1557 = vld [vmem:[%s18 + $0x50] sm:$0xff]
    %v1558 = vld [vmem:[%s18 + $0x58] sm:$0xff]
    %v1559 = vld [vmem:[%s18 + $0x60] sm:$0xff]
    %v1560 = vld [vmem:[%s18 + $0x68] sm:$0xff]
    %v1561 = vld [vmem:[%s18 + $0x70] sm:$0xff]
    %v1562 = vld [vmem:[%s18 + $0x78] sm:$0xff]
    %v1563 = vld [vmem:[%s20] sm:$0xff]
    %v1564 = vld [vmem:[%s20 + $0x8] sm:$0xff]
    %v1565 = vld [vmem:[%s20 + $0x10] sm:$0xff]
    %v1566 = vld [vmem:[%s20 + $0x18] sm:$0xff]
    %v1567 = vld [vmem:[%s20 + $0x20] sm:$0xff]
    %v1568 = vld [vmem:[%s20 + $0x28] sm:$0xff]
    %v1569 = vld [vmem:[%s20 + $0x30] sm:$0xff]
    %v1570 = vld [vmem:[%s20 + $0x38] sm:$0xff]
    %v1571 = vld [vmem:[%s20 + $0x40] sm:$0xff]
    %v1572 = vld [vmem:[%s20 + $0x48] sm:$0xff]
    %v1573 = vld [vmem:[%s20 + $0x50] sm:$0xff]
    %v1574 = vld [vmem:[%s20 + $0x58] sm:$0xff]
    %v1575 = vld [vmem:[%s20 + $0x60] sm:$0xff]
    %v1576 = vld [vmem:[%s20 + $0x68] sm:$0xff]
    %v1577 = vld [vmem:[%s20 + $0x70] sm:$0xff]
    %v1578 = vld [vmem:[%s20 + $0x78] sm:$0xff]
    %v1579 = vld [vmem:[%s22] sm:$0xff]
    %v1580 = vld [vmem:[%s22 + $0x8] sm:$0xff]
    %v1581 = vld [vmem:[%s22 + $0x10] sm:$0xff]
    %v1582 = vld [vmem:[%s22 + $0x18] sm:$0xff]
    %v1583 = vld [vmem:[%s17] sm:$0x1]
    %v1584 = vld [vmem:[%s17 + $0x1] sm:$0x1]
    %v1585 = vld [vmem:[%s17 + $0x2] sm:$0x1]
    %v1586 = vld [vmem:[%s17 + $0x3] sm:$0x1]
    %v1587 = vld [vmem:[%s19] sm:$0x1]
    %v1588 = vld [vmem:[%s19 + $0x1] sm:$0x1]
    %v1589 = vld [vmem:[%s19 + $0x2] sm:$0x1]
    %v1590 = vld [vmem:[%s19 + $0x3] sm:$0x1]
    %v1591 = vld [vmem:[%s21] sm:$0x1]
    %v1592 = vld [vmem:[%s21 + $0x1] sm:$0x1]
    %v1593 = vld [vmem:[%s21 + $0x2] sm:$0x1]
    %v1594 = vld [vmem:[%s21 + $0x3] sm:$0x1]
    %v1595 = vld [vmem:[%s23] sm:$0x1]
    %v1597 = vperm.slane %v1583, 0
    %v1600 = vsel %vm166, %v1529, 0
    %v1603 = vsel %vm166, %v1530, 0
    %1605 = vmatpush.msra.mxu0 0.0
    %1606 = vmatpush.msra.mxu0 0.0
    %1607 = vmatpush.msra.mxu0 0.0
    %1608 = vmatpush.msra.mxu0 0.0
    %1609 = vmatpush.msra.mxu0 0.0
    %1610 = vmatpush.msra.mxu0 0.0
    %1611 = vmatpush.msra.mxu0 0.0
    %1612 = vmatpush.msra.mxu0 0.0
    %1613 = vmatpush.msra.mxu0 0.0
    %1614 = vmatpush.msra.mxu0 0.0
    %1615 = vmatpush.msra.mxu0 0.0
    %1616 = vmatpush.msra.mxu0 0.0
    %1617 = vmatpush.msra.mxu0 %v1534
    %1618 = vmatpush.msra.mxu0 %v1533
    %1619 = vmatpush.msra.mxu0 %v1532
    %1620 = vmatpush.msra.mxu0 %v1531
    %1621 = vmatmul.f32.gmra.mxu0 %v1600
    %v1622 = vpop.f32.mrf.mxu0
    %v1623 = vadd.f32 %v1597, %v1622
    %1624 = vmatmul.f32.gmra.mxu0 %v1603
    %v1625 = vpop.f32.mrf.mxu0
    %v1626 = vadd.f32 %v1597, %v1625
    %1627 = vdwg.mxu0
    %v1629 = vperm.slane %v1584, 0
    %1631 = vmatpush.msra.mxu0 0.0
    %1632 = vmatpush.msra.mxu0 0.0
    %1633 = vmatpush.msra.mxu0 0.0
    %1634 = vmatpush.msra.mxu0 0.0
    %1635 = vmatpush.msra.mxu0 0.0
    %1636 = vmatpush.msra.mxu0 0.0
    %1637 = vmatpush.msra.mxu0 0.0
    %1638 = vmatpush.msra.mxu0 0.0
    %1639 = vmatpush.msra.mxu0 0.0
    %1640 = vmatpush.msra.mxu0 0.0
    %1641 = vmatpush.msra.mxu0 0.0
    %1642 = vmatpush.msra.mxu0 0.0
    %1643 = vmatpush.msra.mxu0 %v1538
    %1644 = vmatpush.msra.mxu0 %v1537
    %1645 = vmatpush.msra.mxu0 %v1536
    %1646 = vmatpush.msra.mxu0 %v1535
    %1647 = vmatmul.f32.gmra.mxu0 %v1600
    %v1648 = vpop.f32.mrf.mxu0
    %v1649 = vadd.f32 %v1629, %v1648
    %1650 = vmatmul.f32.gmra.mxu0 %v1603
    %v1651 = vpop.f32.mrf.mxu0
    %v1652 = vadd.f32 %v1629, %v1651
    %1653 = vdwg.mxu0
    %v1655 = vperm.slane %v1585, 0
    %1657 = vmatpush.msra.mxu0 0.0
    %1658 = vmatpush.msra.mxu0 0.0
    %1659 = vmatpush.msra.mxu0 0.0
    %1660 = vmatpush.msra.mxu0 0.0
    %1661 = vmatpush.msra.mxu0 0.0
    %1662 = vmatpush.msra.mxu0 0.0
    %1663 = vmatpush.msra.mxu0 0.0
    %1664 = vmatpush.msra.mxu0 0.0
    %1665 = vmatpush.msra.mxu0 0.0
    %1666 = vmatpush.msra.mxu0 0.0
    %1667 = vmatpush.msra.mxu0 0.0
    %1668 = vmatpush.msra.mxu0 0.0
    %1669 = vmatpush.msra.mxu0 %v1542
    %1670 = vmatpush.msra.mxu0 %v1541
    %1671 = vmatpush.msra.mxu0 %v1540
    %1672 = vmatpush.msra.mxu0 %v1539
    %1673 = vmatmul.f32.gmra.mxu0 %v1600
    %v1674 = vpop.f32.mrf.mxu0
    %v1675 = vadd.f32 %v1655, %v1674
    %1676 = vmatmul.f32.gmra.mxu0 %v1603
    %v1677 = vpop.f32.mrf.mxu0
    %v1678 = vadd.f32 %v1655, %v1677
    %1679 = vdwg.mxu0
    %v1681 = vperm.slane %v1586, 0
    %1683 = vmatpush.msra.mxu0 0.0
    %1684 = vmatpush.msra.mxu0 0.0
    %1685 = vmatpush.msra.mxu0 0.0
    %1686 = vmatpush.msra.mxu0 0.0
    %1687 = vmatpush.msra.mxu0 0.0
    %1688 = vmatpush.msra.mxu0 0.0
    %1689 = vmatpush.msra.mxu0 0.0
    %1690 = vmatpush.msra.mxu0 0.0
    %1691 = vmatpush.msra.mxu0 0.0
    %1692 = vmatpush.msra.mxu0 0.0
    %1693 = vmatpush.msra.mxu0 0.0
    %1694 = vmatpush.msra.mxu0 0.0
    %1695 = vmatpush.msra.mxu0 %v1546
    %1696 = vmatpush.msra.mxu0 %v1545
    %1697 = vmatpush.msra.mxu0 %v1544
    %1698 = vmatpush.msra.mxu0 %v1543
    %1699 = vmatmul.f32.gmra.mxu0 %v1600
    %v1700 = vpop.f32.mrf.mxu0
    %v1701 = vadd.f32 %v1681, %v1700
    %1702 = vmatmul.f32.gmra.mxu0 %v1603
    %v1703 = vpop.f32.mrf.mxu0
    %v1704 = vadd.f32 %v1681, %v1703
    %1705 = vdwg.mxu0
    %v1707 = vperm.slane %v1587, 0
    %v1710 = vsel %vm166, %v153, 0
    %v1713 = vsel %vm166, %v154, 0
    %1715 = vmatpush.msra.mxu0 0.0
    %1716 = vmatpush.msra.mxu0 0.0
    %1717 = vmatpush.msra.mxu0 0.0
    %1718 = vmatpush.msra.mxu0 0.0
    %1719 = vmatpush.msra.mxu0 0.0
    %1720 = vmatpush.msra.mxu0 0.0
    %1721 = vmatpush.msra.mxu0 0.0
    %1722 = vmatpush.msra.mxu0 0.0
    %1723 = vmatpush.msra.mxu0 0.0
    %1724 = vmatpush.msra.mxu0 0.0
    %1725 = vmatpush.msra.mxu0 0.0
    %1726 = vmatpush.msra.mxu0 0.0
    %1727 = vmatpush.msra.mxu0 %v1550
    %1728 = vmatpush.msra.mxu0 %v1549
    %1729 = vmatpush.msra.mxu0 %v1548
    %1730 = vmatpush.msra.mxu0 %v1547
    %1731 = vmatmul.f32.gmra.mxu0 %v1710
    %v1732 = vpop.f32.mrf.mxu0
    %v1733 = vadd.f32 %v1707, %v1732
    %1734 = vmatmul.f32.gmra.mxu0 %v1713
    %v1735 = vpop.f32.mrf.mxu0
    %v1736 = vadd.f32 %v1707, %v1735
    %1737 = vdwg.mxu0
    %v1739 = vperm.slane %v1588, 0
    %1741 = vmatpush.msra.mxu0 0.0
    %1742 = vmatpush.msra.mxu0 0.0
    %1743 = vmatpush.msra.mxu0 0.0
    %1744 = vmatpush.msra.mxu0 0.0
    %1745 = vmatpush.msra.mxu0 0.0
    %1746 = vmatpush.msra.mxu0 0.0
    %1747 = vmatpush.msra.mxu0 0.0
    %1748 = vmatpush.msra.mxu0 0.0
    %1749 = vmatpush.msra.mxu0 0.0
    %1750 = vmatpush.msra.mxu0 0.0
    %1751 = vmatpush.msra.mxu0 0.0
    %1752 = vmatpush.msra.mxu0 0.0
    %1753 = vmatpush.msra.mxu0 %v1554
    %1754 = vmatpush.msra.mxu0 %v1553
    %1755 = vmatpush.msra.mxu0 %v1552
    %1756 = vmatpush.msra.mxu0 %v1551
    %1757 = vmatmul.f32.gmra.mxu0 %v1710
    %v1758 = vpop.f32.mrf.mxu0
    %v1759 = vadd.f32 %v1739, %v1758
    %1760 = vmatmul.f32.gmra.mxu0 %v1713
    %v1761 = vpop.f32.mrf.mxu0
    %v1762 = vadd.f32 %v1739, %v1761
    %1763 = vdwg.mxu0
    %v1765 = vperm.slane %v1589, 0
    %1767 = vmatpush.msra.mxu0 0.0
    %1768 = vmatpush.msra.mxu0 0.0
    %1769 = vmatpush.msra.mxu0 0.0
    %1770 = vmatpush.msra.mxu0 0.0
    %1771 = vmatpush.msra.mxu0 0.0
    %1772 = vmatpush.msra.mxu0 0.0
    %1773 = vmatpush.msra.mxu0 0.0
    %1774 = vmatpush.msra.mxu0 0.0
    %1775 = vmatpush.msra.mxu0 0.0
    %1776 = vmatpush.msra.mxu0 0.0
    %1777 = vmatpush.msra.mxu0 0.0
    %1778 = vmatpush.msra.mxu0 0.0
    %1779 = vmatpush.msra.mxu0 %v1558
    %1780 = vmatpush.msra.mxu0 %v1557
    %1781 = vmatpush.msra.mxu0 %v1556
    %1782 = vmatpush.msra.mxu0 %v1555
    %1783 = vmatmul.f32.gmra.mxu0 %v1710
    %v1784 = vpop.f32.mrf.mxu0
    %v1785 = vadd.f32 %v1765, %v1784
    %1786 = vmatmul.f32.gmra.mxu0 %v1713
    %v1787 = vpop.f32.mrf.mxu0
    %v1788 = vadd.f32 %v1765, %v1787
    %1789 = vdwg.mxu0
    %v1791 = vperm.slane %v1590, 0
    %1793 = vmatpush.msra.mxu0 0.0
    %1794 = vmatpush.msra.mxu0 0.0
    %1795 = vmatpush.msra.mxu0 0.0
    %1796 = vmatpush.msra.mxu0 0.0
    %1797 = vmatpush.msra.mxu0 0.0
    %1798 = vmatpush.msra.mxu0 0.0
    %1799 = vmatpush.msra.mxu0 0.0
    %1800 = vmatpush.msra.mxu0 0.0
    %1801 = vmatpush.msra.mxu0 0.0
    %1802 = vmatpush.msra.mxu0 0.0
    %1803 = vmatpush.msra.mxu0 0.0
    %1804 = vmatpush.msra.mxu0 0.0
    %1805 = vmatpush.msra.mxu0 %v1562
    %1806 = vmatpush.msra.mxu0 %v1561
    %1807 = vmatpush.msra.mxu0 %v1560
    %1808 = vmatpush.msra.mxu0 %v1559
    %1809 = vmatmul.f32.gmra.mxu0 %v1710
    %v1810 = vpop.f32.mrf.mxu0
    %v1811 = vadd.f32 %v1791, %v1810
    %1812 = vmatmul.f32.gmra.mxu0 %v1713
    %v1813 = vpop.f32.mrf.mxu0
    %v1814 = vadd.f32 %v1791, %v1813
    %1815 = vdwg.mxu0
    %v1817 = vperm.slane %v1591, 0
    %1819 = vmatpush.msra.mxu0 0.0
    %1820 = vmatpush.msra.mxu0 0.0
    %1821 = vmatpush.msra.mxu0 0.0
    %1822 = vmatpush.msra.mxu0 0.0
    %1823 = vmatpush.msra.mxu0 0.0
    %1824 = vmatpush.msra.mxu0 0.0
    %1825 = vmatpush.msra.mxu0 0.0
    %1826 = vmatpush.msra.mxu0 0.0
    %1827 = vmatpush.msra.mxu0 0.0
    %1828 = vmatpush.msra.mxu0 0.0
    %1829 = vmatpush.msra.mxu0 0.0
    %1830 = vmatpush.msra.mxu0 0.0
    %1831 = vmatpush.msra.mxu0 %v1566
    %1832 = vmatpush.msra.mxu0 %v1565
    %1833 = vmatpush.msra.mxu0 %v1564
    %1834 = vmatpush.msra.mxu0 %v1563
    %1835 = vmatmul.f32.gmra.mxu0 %v1710
    %v1836 = vpop.f32.mrf.mxu0
    %v1837 = vadd.f32 %v1817, %v1836
    %1838 = vmatmul.f32.gmra.mxu0 %v1713
    %v1839 = vpop.f32.mrf.mxu0
    %v1840 = vadd.f32 %v1817, %v1839
    %1841 = vdwg.mxu0
    %v1843 = vperm.slane %v1592, 0
    %1845 = vmatpush.msra.mxu0 0.0
    %1846 = vmatpush.msra.mxu0 0.0
    %1847 = vmatpush.msra.mxu0 0.0
    %1848 = vmatpush.msra.mxu0 0.0
    %1849 = vmatpush.msra.mxu0 0.0
    %1850 = vmatpush.msra.mxu0 0.0
    %1851 = vmatpush.msra.mxu0 0.0
    %1852 = vmatpush.msra.mxu0 0.0
    %1853 = vmatpush.msra.mxu0 0.0
    %1854 = vmatpush.msra.mxu0 0.0
    %1855 = vmatpush.msra.mxu0 0.0
    %1856 = vmatpush.msra.mxu0 0.0
    %1857 = vmatpush.msra.mxu0 %v1570
    %1858 = vmatpush.msra.mxu0 %v1569
    %1859 = vmatpush.msra.mxu0 %v1568
    %1860 = vmatpush.msra.mxu0 %v1567
    %1861 = vmatmul.f32.gmra.mxu0 %v1710
    %v1862 = vpop.f32.mrf.mxu0
    %v1863 = vadd.f32 %v1843, %v1862
    %1864 = vmatmul.f32.gmra.mxu0 %v1713
    %v1865 = vpop.f32.mrf.mxu0
    %v1866 = vadd.f32 %v1843, %v1865
    %1867 = vdwg.mxu0
    %v1869 = vperm.slane %v1593, 0
    %1871 = vmatpush.msra.mxu0 0.0
    %1872 = vmatpush.msra.mxu0 0.0
    %1873 = vmatpush.msra.mxu0 0.0
    %1874 = vmatpush.msra.mxu0 0.0
    %1875 = vmatpush.msra.mxu0 0.0
    %1876 = vmatpush.msra.mxu0 0.0
    %1877 = vmatpush.msra.mxu0 0.0
    %1878 = vmatpush.msra.mxu0 0.0
    %1879 = vmatpush.msra.mxu0 0.0
    %1880 = vmatpush.msra.mxu0 0.0
    %1881 = vmatpush.msra.mxu0 0.0
    %1882 = vmatpush.msra.mxu0 0.0
    %1883 = vmatpush.msra.mxu0 %v1574
    %1884 = vmatpush.msra.mxu0 %v1573
    %1885 = vmatpush.msra.mxu0 %v1572
    %1886 = vmatpush.msra.mxu0 %v1571
    %1887 = vmatmul.f32.gmra.mxu0 %v1710
    %v1888 = vpop.f32.mrf.mxu0
    %v1889 = vadd.f32 %v1869, %v1888
    %1890 = vmatmul.f32.gmra.mxu0 %v1713
    %v1891 = vpop.f32.mrf.mxu0
    %v1892 = vadd.f32 %v1869, %v1891
    %1893 = vdwg.mxu0
    %v1895 = vperm.slane %v1594, 0
    %1897 = vmatpush.msra.mxu0 0.0
    %1898 = vmatpush.msra.mxu0 0.0
    %1899 = vmatpush.msra.mxu0 0.0
    %1900 = vmatpush.msra.mxu0 0.0
    %1901 = vmatpush.msra.mxu0 0.0
    %1902 = vmatpush.msra.mxu0 0.0
    %1903 = vmatpush.msra.mxu0 0.0
    %1904 = vmatpush.msra.mxu0 0.0
    %1905 = vmatpush.msra.mxu0 0.0
    %1906 = vmatpush.msra.mxu0 0.0
    %1907 = vmatpush.msra.mxu0 0.0
    %1908 = vmatpush.msra.mxu0 0.0
    %1909 = vmatpush.msra.mxu0 %v1578
    %1910 = vmatpush.msra.mxu0 %v1577
    %1911 = vmatpush.msra.mxu0 %v1576
    %1912 = vmatpush.msra.mxu0 %v1575
    %1913 = vmatmul.f32.gmra.mxu0 %v1710
    %v1914 = vpop.f32.mrf.mxu0
    %v1915 = vadd.f32 %v1895, %v1914
    %1916 = vmatmul.f32.gmra.mxu0 %v1713
    %v1917 = vpop.f32.mrf.mxu0
    %v1918 = vadd.f32 %v1895, %v1917
    %1919 = vdwg.mxu0
    %v1921 = vsel %vm645, %v1623, 0
    %v1924 = vsel %vm645, %v1733, 0
    %1926 = vmatpush.xpose.msra.mxu0 0.0
    %1927 = vmatpush.xpose.msra.mxu0 0.0
    %1928 = vmatpush.xpose.msra.mxu0 0.0
    %1929 = vmatpush.xpose.msra.mxu0 0.0
    %1930 = vmatpush.xpose.msra.mxu0 0.0
    %1931 = vmatpush.xpose.msra.mxu0 0.0
    %1932 = vmatpush.xpose.msra.mxu0 0.0
    %1933 = vmatpush.xpose.msra.mxu0 0.0
    %1934 = vmatpush.xpose.msra.mxu0 0.0
    %1935 = vmatpush.xpose.msra.mxu0 0.0
    %1936 = vmatpush.xpose.msra.mxu0 0.0
    %1937 = vmatpush.xpose.msra.mxu0 0.0
    %1938 = vmatpush.xpose.msra.mxu0 0.0
    %1939 = vmatpush.xpose.msra.mxu0 0.0
    %1940 = vmatpush.xpose.msra.mxu0 0.0
    %1941 = vmatpush.xpose.msra.mxu0 %v1924
    %1942 = vmatmul.f32.gmra.mxu0 %v1921
    %v1943 = vpop.f32.mrf.mxu0
    %v1944 = vadd.f32 0.0, %v1943
    %1945 = vdwg.mxu0
    %v1946 = vmul.f32 %v1944, 0.35355338
    %v1947 = vperm.slane %v163, 0
    %v1948 = vadd.f32 %v1946, %v1947
    %v1949 = vsel %vm645, %v1948, -inf
    %1950 = vmax.xlane.f32.xlu0 %v1949
    %v1951 = vpop.xlane.xlu0 %1950
    %v1952 = vsub.f32 %v1948, %v1951
    %v1953 = vmul.f32 %v1952, 1.442695
    %v1954 = vpow.pop %v1953
    %v1955 = vsel %vm645, %v1954, 0.0
    %1956 = vadd.xlane.f32.xlu0 %v1955
    %v1957 = vpop.xlane.xlu0 %1956
    %v1958 = vrcp.pop %v1957
    %v1959 = vmul.f32 %v1957, %v1958
    %v1960 = vsub.f32 1.0, %v1959
    %v1961 = vmul.f32 %v1958, %v1960
    %v1962 = vadd.f32 %v1958, %v1961
    %vm1963 = vweird.f32 %v1957
    %vm1964 = vweird.f32 %v1958
    %vm1965 = vmor %vm1963, %vm1964
    %v1966 = vsel %vm1965, %v1958, %v1962
    %v1967 = vand.u32 2147483647, %v1957
    %vm1968 = vcmp.eq.f32.partialorder %v1967, 8.507059e+37
    %v1969 = vand.u32 %v1957, 2147483648
    %v1970 = vor.u32 1.1754944e-38, %v1969
    %v1971 = vsel %vm1968, %v1970, %v1966
    %v1972 = vmul.f32 %v1954, %v1971
    %v1974 = vsel %vm645, %v1972, 0
    %1976 = vmatpush.msra.mxu0 0.0
    %1977 = vmatpush.msra.mxu0 0.0
    %1978 = vmatpush.msra.mxu0 0.0
    %1979 = vmatpush.msra.mxu0 0.0
    %1980 = vmatpush.msra.mxu0 0.0
    %1981 = vmatpush.msra.mxu0 0.0
    %1982 = vmatpush.msra.mxu0 0.0
    %1983 = vmatpush.msra.mxu0 0.0
    %1984 = vmatpush.msra.mxu0 0.0
    %1985 = vmatpush.msra.mxu0 0.0
    %1986 = vmatpush.msra.mxu0 0.0
    %1987 = vmatpush.msra.mxu0 0.0
    %1988 = vmatpush.msra.mxu0 0.0
    %1989 = vmatpush.msra.mxu0 0.0
    %1990 = vmatpush.msra.mxu0 0.0
    %1991 = vmatpush.msra.mxu0 %v1837
    %1992 = vmatmul.f32.gmra.mxu0 %v1974
    %v1993 = vpop.f32.mrf.mxu0
    %v1994 = vadd.f32 0.0, %v1993
    %1995 = vdwg.mxu0
    %v1997 = vsel %vm645, %v1649, 0
    %v2000 = vsel %vm645, %v1759, 0
    %2002 = vmatpush.xpose.msra.mxu0 0.0
    %2003 = vmatpush.xpose.msra.mxu0 0.0
    %2004 = vmatpush.xpose.msra.mxu0 0.0
    %2005 = vmatpush.xpose.msra.mxu0 0.0
    %2006 = vmatpush.xpose.msra.mxu0 0.0
    %2007 = vmatpush.xpose.msra.mxu0 0.0
    %2008 = vmatpush.xpose.msra.mxu0 0.0
    %2009 = vmatpush.xpose.msra.mxu0 0.0
    %2010 = vmatpush.xpose.msra.mxu0 0.0
    %2011 = vmatpush.xpose.msra.mxu0 0.0
    %2012 = vmatpush.xpose.msra.mxu0 0.0
    %2013 = vmatpush.xpose.msra.mxu0 0.0
    %2014 = vmatpush.xpose.msra.mxu0 0.0
    %2015 = vmatpush.xpose.msra.mxu0 0.0
    %2016 = vmatpush.xpose.msra.mxu0 0.0
    %2017 = vmatpush.xpose.msra.mxu0 %v2000
    %2018 = vmatmul.f32.gmra.mxu0 %v1997
    %v2019 = vpop.f32.mrf.mxu0
    %v2020 = vadd.f32 0.0, %v2019
    %2021 = vdwg.mxu0
    %v2022 = vmul.f32 %v2020, 0.35355338
    %v2023 = vadd.f32 %v2022, %v1947
    %v2024 = vsel %vm645, %v2023, -inf
    %2025 = vmax.xlane.f32.xlu0 %v2024
    %v2026 = vpop.xlane.xlu0 %2025
    %v2027 = vsub.f32 %v2023, %v2026
    %v2028 = vmul.f32 %v2027, 1.442695
    %v2029 = vpow.pop %v2028
    %v2030 = vsel %vm645, %v2029, 0.0
    %2031 = vadd.xlane.f32.xlu0 %v2030
    %v2032 = vpop.xlane.xlu0 %2031
    %v2033 = vrcp.pop %v2032
    %v2034 = vmul.f32 %v2032, %v2033
    %v2035 = vsub.f32 1.0, %v2034
    %v2036 = vmul.f32 %v2033, %v2035
    %v2037 = vadd.f32 %v2033, %v2036
    %vm2038 = vweird.f32 %v2032
    %vm2039 = vweird.f32 %v2033
    %vm2040 = vmor %vm2038, %vm2039
    %v2041 = vsel %vm2040, %v2033, %v2037
    %v2042 = vand.u32 2147483647, %v2032
    %vm2043 = vcmp.eq.f32.partialorder %v2042, 8.507059e+37
    %v2044 = vand.u32 %v2032, 2147483648
    %v2045 = vor.u32 1.1754944e-38, %v2044
    %v2046 = vsel %vm2043, %v2045, %v2041
    %v2047 = vmul.f32 %v2029, %v2046
    %v2049 = vsel %vm645, %v2047, 0
    %2051 = vmatpush.msra.mxu0 0.0
    %2052 = vmatpush.msra.mxu0 0.0
    %2053 = vmatpush.msra.mxu0 0.0
    %2054 = vmatpush.msra.mxu0 0.0
    %2055 = vmatpush.msra.mxu0 0.0
    %2056 = vmatpush.msra.mxu0 0.0
    %2057 = vmatpush.msra.mxu0 0.0
    %2058 = vmatpush.msra.mxu0 0.0
    %2059 = vmatpush.msra.mxu0 0.0
    %2060 = vmatpush.msra.mxu0 0.0
    %2061 = vmatpush.msra.mxu0 0.0
    %2062 = vmatpush.msra.mxu0 0.0
    %2063 = vmatpush.msra.mxu0 0.0
    %2064 = vmatpush.msra.mxu0 0.0
    %2065 = vmatpush.msra.mxu0 0.0
    %2066 = vmatpush.msra.mxu0 %v1863
    %2067 = vmatmul.f32.gmra.mxu0 %v2049
    %v2068 = vpop.f32.mrf.mxu0
    %v2069 = vadd.f32 0.0, %v2068
    %2070 = vdwg.mxu0
    %v2072 = vsel %vm645, %v2069, 0
    %2074 = vmatpush.msra.mxu0 0.0
    %2075 = vmatpush.msra.mxu0 0.0
    %2076 = vmatpush.msra.mxu0 0.0
    %2077 = vmatpush.msra.mxu0 0.0
    %2078 = vmatpush.msra.mxu0 0.0
    %2079 = vmatpush.msra.mxu0 0.0
    %2080 = vmatpush.msra.mxu0 0.0
    %2081 = vmatpush.msra.mxu0 0.0
    %2082 = vmatpush.msra.mxu0 0.0
    %2083 = vmatpush.msra.mxu0 0.0
    %2084 = vmatpush.msra.mxu0 0.0
    %2085 = vmatpush.msra.mxu0 0.0
    %2086 = vmatpush.msra.mxu0 0.0
    %2087 = vmatpush.msra.mxu0 0.0
    %2088 = vmatpush.msra.mxu0 0.0
    %2089 = vmatpush.msra.mxu0 %v1580
    %2090 = vmatmul.f32.gmra.mxu0 %v2072
    %v2091 = vpop.f32.mrf.mxu0
    %v2092 = vadd.f32 0.0, %v2091
    %2093 = vdwg.mxu0
    %v2095 = vsel %vm645, %v1675, 0
    %v2098 = vsel %vm645, %v1785, 0
    %2100 = vmatpush.xpose.msra.mxu0 0.0
    %2101 = vmatpush.xpose.msra.mxu0 0.0
    %2102 = vmatpush.xpose.msra.mxu0 0.0
    %2103 = vmatpush.xpose.msra.mxu0 0.0
    %2104 = vmatpush.xpose.msra.mxu0 0.0
    %2105 = vmatpush.xpose.msra.mxu0 0.0
    %2106 = vmatpush.xpose.msra.mxu0 0.0
    %2107 = vmatpush.xpose.msra.mxu0 0.0
    %2108 = vmatpush.xpose.msra.mxu0 0.0
    %2109 = vmatpush.xpose.msra.mxu0 0.0
    %2110 = vmatpush.xpose.msra.mxu0 0.0
    %2111 = vmatpush.xpose.msra.mxu0 0.0
    %2112 = vmatpush.xpose.msra.mxu0 0.0
    %2113 = vmatpush.xpose.msra.mxu0 0.0
    %2114 = vmatpush.xpose.msra.mxu0 0.0
    %2115 = vmatpush.xpose.msra.mxu0 %v2098
    %2116 = vmatmul.f32.gmra.mxu0 %v2095
    %v2117 = vpop.f32.mrf.mxu0
    %v2118 = vadd.f32 0.0, %v2117
    %2119 = vdwg.mxu0
    %v2120 = vmul.f32 %v2118, 0.35355338
    %v2121 = vadd.f32 %v2120, %v1947
    %v2122 = vsel %vm645, %v2121, -inf
    %2123 = vmax.xlane.f32.xlu0 %v2122
    %v2124 = vpop.xlane.xlu0 %2123
    %v2125 = vsub.f32 %v2121, %v2124
    %v2126 = vmul.f32 %v2125, 1.442695
    %v2127 = vpow.pop %v2126
    %v2128 = vsel %vm645, %v2127, 0.0
    %2129 = vadd.xlane.f32.xlu0 %v2128
    %v2130 = vpop.xlane.xlu0 %2129
    %v2131 = vrcp.pop %v2130
    %v2132 = vmul.f32 %v2130, %v2131
    %v2133 = vsub.f32 1.0, %v2132
    %v2134 = vmul.f32 %v2131, %v2133
    %v2135 = vadd.f32 %v2131, %v2134
    %vm2136 = vweird.f32 %v2130
    %vm2137 = vweird.f32 %v2131
    %vm2138 = vmor %vm2136, %vm2137
    %v2139 = vsel %vm2138, %v2131, %v2135
    %v2140 = vand.u32 2147483647, %v2130
    %vm2141 = vcmp.eq.f32.partialorder %v2140, 8.507059e+37
    %v2142 = vand.u32 %v2130, 2147483648
    %v2143 = vor.u32 1.1754944e-38, %v2142
    %v2144 = vsel %vm2141, %v2143, %v2139
    %v2145 = vmul.f32 %v2127, %v2144
    %v2147 = vsel %vm645, %v2145, 0
    %2149 = vmatpush.msra.mxu0 0.0
    %2150 = vmatpush.msra.mxu0 0.0
    %2151 = vmatpush.msra.mxu0 0.0
    %2152 = vmatpush.msra.mxu0 0.0
    %2153 = vmatpush.msra.mxu0 0.0
    %2154 = vmatpush.msra.mxu0 0.0
    %2155 = vmatpush.msra.mxu0 0.0
    %2156 = vmatpush.msra.mxu0 0.0
    %2157 = vmatpush.msra.mxu0 0.0
    %2158 = vmatpush.msra.mxu0 0.0
    %2159 = vmatpush.msra.mxu0 0.0
    %2160 = vmatpush.msra.mxu0 0.0
    %2161 = vmatpush.msra.mxu0 0.0
    %2162 = vmatpush.msra.mxu0 0.0
    %2163 = vmatpush.msra.mxu0 0.0
    %2164 = vmatpush.msra.mxu0 %v1889
    %2165 = vmatmul.f32.gmra.mxu0 %v2147
    %v2166 = vpop.f32.mrf.mxu0
    %v2167 = vadd.f32 0.0, %v2166
    %2168 = vdwg.mxu0
    %v2170 = vsel %vm645, %v1701, 0
    %v2173 = vsel %vm645, %v1811, 0
    %2175 = vmatpush.xpose.msra.mxu0 0.0
    %2176 = vmatpush.xpose.msra.mxu0 0.0
    %2177 = vmatpush.xpose.msra.mxu0 0.0
    %2178 = vmatpush.xpose.msra.mxu0 0.0
    %2179 = vmatpush.xpose.msra.mxu0 0.0
    %2180 = vmatpush.xpose.msra.mxu0 0.0
    %2181 = vmatpush.xpose.msra.mxu0 0.0
    %2182 = vmatpush.xpose.msra.mxu0 0.0
    %2183 = vmatpush.xpose.msra.mxu0 0.0
    %2184 = vmatpush.xpose.msra.mxu0 0.0
    %2185 = vmatpush.xpose.msra.mxu0 0.0
    %2186 = vmatpush.xpose.msra.mxu0 0.0
    %2187 = vmatpush.xpose.msra.mxu0 0.0
    %2188 = vmatpush.xpose.msra.mxu0 0.0
    %2189 = vmatpush.xpose.msra.mxu0 0.0
    %2190 = vmatpush.xpose.msra.mxu0 %v2173
    %2191 = vmatmul.f32.gmra.mxu0 %v2170
    %v2192 = vpop.f32.mrf.mxu0
    %v2193 = vadd.f32 0.0, %v2192
    %2194 = vdwg.mxu0
    %v2195 = vmul.f32 %v2193, 0.35355338
    %v2196 = vadd.f32 %v2195, %v1947
    %v2197 = vsel %vm645, %v2196, -inf
    %2198 = vmax.xlane.f32.xlu0 %v2197
    %v2199 = vpop.xlane.xlu0 %2198
    %v2200 = vsub.f32 %v2196, %v2199
    %v2201 = vmul.f32 %v2200, 1.442695
    %v2202 = vpow.pop %v2201
    %v2203 = vsel %vm645, %v2202, 0.0
    %2204 = vadd.xlane.f32.xlu0 %v2203
    %v2205 = vpop.xlane.xlu0 %2204
    %v2206 = vrcp.pop %v2205
    %v2207 = vmul.f32 %v2205, %v2206
    %v2208 = vsub.f32 1.0, %v2207
    %v2209 = vmul.f32 %v2206, %v2208
    %v2210 = vadd.f32 %v2206, %v2209
    %vm2211 = vweird.f32 %v2205
    %vm2212 = vweird.f32 %v2206
    %vm2213 = vmor %vm2211, %vm2212
    %v2214 = vsel %vm2213, %v2206, %v2210
    %v2215 = vand.u32 2147483647, %v2205
    %vm2216 = vcmp.eq.f32.partialorder %v2215, 8.507059e+37
    %v2217 = vand.u32 %v2205, 2147483648
    %v2218 = vor.u32 1.1754944e-38, %v2217
    %v2219 = vsel %vm2216, %v2218, %v2214
    %v2220 = vmul.f32 %v2202, %v2219
    %v2222 = vsel %vm645, %v2220, 0
    %2224 = vmatpush.msra.mxu0 0.0
    %2225 = vmatpush.msra.mxu0 0.0
    %2226 = vmatpush.msra.mxu0 0.0
    %2227 = vmatpush.msra.mxu0 0.0
    %2228 = vmatpush.msra.mxu0 0.0
    %2229 = vmatpush.msra.mxu0 0.0
    %2230 = vmatpush.msra.mxu0 0.0
    %2231 = vmatpush.msra.mxu0 0.0
    %2232 = vmatpush.msra.mxu0 0.0
    %2233 = vmatpush.msra.mxu0 0.0
    %2234 = vmatpush.msra.mxu0 0.0
    %2235 = vmatpush.msra.mxu0 0.0
    %2236 = vmatpush.msra.mxu0 0.0
    %2237 = vmatpush.msra.mxu0 0.0
    %2238 = vmatpush.msra.mxu0 0.0
    %2239 = vmatpush.msra.mxu0 %v1915
    %2240 = vmatmul.f32.gmra.mxu0 %v2222
    %v2241 = vpop.f32.mrf.mxu0
    %v2242 = vadd.f32 0.0, %v2241
    %2243 = vdwg.mxu0
    %v2245 = vsel %vm645, %v2242, 0
    %2247 = vmatpush.msra.mxu0 0.0
    %2248 = vmatpush.msra.mxu0 0.0
    %2249 = vmatpush.msra.mxu0 0.0
    %2250 = vmatpush.msra.mxu0 0.0
    %2251 = vmatpush.msra.mxu0 0.0
    %2252 = vmatpush.msra.mxu0 0.0
    %2253 = vmatpush.msra.mxu0 0.0
    %2254 = vmatpush.msra.mxu0 0.0
    %2255 = vmatpush.msra.mxu0 0.0
    %2256 = vmatpush.msra.mxu0 0.0
    %2257 = vmatpush.msra.mxu0 0.0
    %2258 = vmatpush.msra.mxu0 0.0
    %2259 = vmatpush.msra.mxu0 0.0
    %2260 = vmatpush.msra.mxu0 0.0
    %2261 = vmatpush.msra.mxu0 0.0
    %2262 = vmatpush.msra.mxu0 %v1582
    %2263 = vmatmul.f32.gmra.mxu0 %v2245
    %v2264 = vpop.f32.mrf.mxu0
    %v2265 = vadd.f32 0.0, %v2264
    %2266 = vdwg.mxu0
    %v2268 = vsel %vm645, %v1994, 0
    %2270 = vmatpush.msra.mxu0 0.0
    %2271 = vmatpush.msra.mxu0 0.0
    %2272 = vmatpush.msra.mxu0 0.0
    %2273 = vmatpush.msra.mxu0 0.0
    %2274 = vmatpush.msra.mxu0 0.0
    %2275 = vmatpush.msra.mxu0 0.0
    %2276 = vmatpush.msra.mxu0 0.0
    %2277 = vmatpush.msra.mxu0 0.0
    %2278 = vmatpush.msra.mxu0 0.0
    %2279 = vmatpush.msra.mxu0 0.0
    %2280 = vmatpush.msra.mxu0 0.0
    %2281 = vmatpush.msra.mxu0 0.0
    %2282 = vmatpush.msra.mxu0 0.0
    %2283 = vmatpush.msra.mxu0 0.0
    %2284 = vmatpush.msra.mxu0 0.0
    %2285 = vmatpush.msra.mxu0 %v1579
    %2286 = vmatmul.f32.gmra.mxu0 %v2268
    %v2287 = vpop.f32.mrf.mxu0
    %v2288 = vadd.f32 %v2092, %v2287
    %2289 = vdwg.mxu0
    %v2291 = vsel %vm645, %v2167, 0
    %2293 = vmatpush.msra.mxu0 0.0
    %2294 = vmatpush.msra.mxu0 0.0
    %2295 = vmatpush.msra.mxu0 0.0
    %2296 = vmatpush.msra.mxu0 0.0
    %2297 = vmatpush.msra.mxu0 0.0
    %2298 = vmatpush.msra.mxu0 0.0
    %2299 = vmatpush.msra.mxu0 0.0
    %2300 = vmatpush.msra.mxu0 0.0
    %2301 = vmatpush.msra.mxu0 0.0
    %2302 = vmatpush.msra.mxu0 0.0
    %2303 = vmatpush.msra.mxu0 0.0
    %2304 = vmatpush.msra.mxu0 0.0
    %2305 = vmatpush.msra.mxu0 0.0
    %2306 = vmatpush.msra.mxu0 0.0
    %2307 = vmatpush.msra.mxu0 0.0
    %2308 = vmatpush.msra.mxu0 %v1581
    %2309 = vmatmul.f32.gmra.mxu0 %v2291
    %v2310 = vpop.f32.mrf.mxu0
    %v2311 = vadd.f32 %v2265, %v2310
    %2312 = vdwg.mxu0
    %v2313 = vadd.f32 %v2288, %v2311
    %v2315 = vperm.slane %v1595, 0
    %v2317 = vadd.f32 %v2313, %v2315
    %v2319 = vsel %vm645, %v1626, 0
    %v2322 = vsel %vm645, %v1736, 0
    %2324 = vmatpush.xpose.msra.mxu0 0.0
    %2325 = vmatpush.xpose.msra.mxu0 0.0
    %2326 = vmatpush.xpose.msra.mxu0 0.0
    %2327 = vmatpush.xpose.msra.mxu0 0.0
    %2328 = vmatpush.xpose.msra.mxu0 0.0
    %2329 = vmatpush.xpose.msra.mxu0 0.0
    %2330 = vmatpush.xpose.msra.mxu0 0.0
    %2331 = vmatpush.xpose.msra.mxu0 0.0
    %2332 = vmatpush.xpose.msra.mxu0 0.0
    %2333 = vmatpush.xpose.msra.mxu0 0.0
    %2334 = vmatpush.xpose.msra.mxu0 0.0
    %2335 = vmatpush.xpose.msra.mxu0 0.0
    %2336 = vmatpush.xpose.msra.mxu0 0.0
    %2337 = vmatpush.xpose.msra.mxu0 0.0
    %2338 = vmatpush.xpose.msra.mxu0 0.0
    %2339 = vmatpush.xpose.msra.mxu0 %v2322
    %2340 = vmatmul.f32.gmra.mxu0 %v2319
    %v2341 = vpop.f32.mrf.mxu0
    %v2342 = vadd.f32 0.0, %v2341
    %2343 = vdwg.mxu0
    %v2344 = vmul.f32 %v2342, 0.35355338
    %v2345 = vperm.slane %v163, 1
    %v2346 = vadd.f32 %v2344, %v2345
    %v2347 = vsel %vm645, %v2346, -inf
    %2348 = vmax.xlane.f32.xlu0 %v2347
    %v2349 = vpop.xlane.xlu0 %2348
    %v2350 = vsub.f32 %v2346, %v2349
    %v2351 = vmul.f32 %v2350, 1.442695
    %v2352 = vpow.pop %v2351
    %v2353 = vsel %vm645, %v2352, 0.0
    %2354 = vadd.xlane.f32.xlu0 %v2353
    %v2355 = vpop.xlane.xlu0 %2354
    %v2356 = vrcp.pop %v2355
    %v2357 = vmul.f32 %v2355, %v2356
    %v2358 = vsub.f32 1.0, %v2357
    %v2359 = vmul.f32 %v2356, %v2358
    %v2360 = vadd.f32 %v2356, %v2359
    %vm2361 = vweird.f32 %v2355
    %vm2362 = vweird.f32 %v2356
    %vm2363 = vmor %vm2361, %vm2362
    %v2364 = vsel %vm2363, %v2356, %v2360
    %v2365 = vand.u32 2147483647, %v2355
    %vm2366 = vcmp.eq.f32.partialorder %v2365, 8.507059e+37
    %v2367 = vand.u32 %v2355, 2147483648
    %v2368 = vor.u32 1.1754944e-38, %v2367
    %v2369 = vsel %vm2366, %v2368, %v2364
    %v2370 = vmul.f32 %v2352, %v2369
    %v2372 = vsel %vm645, %v2370, 0
    %2374 = vmatpush.msra.mxu0 0.0
    %2375 = vmatpush.msra.mxu0 0.0
    %2376 = vmatpush.msra.mxu0 0.0
    %2377 = vmatpush.msra.mxu0 0.0
    %2378 = vmatpush.msra.mxu0 0.0
    %2379 = vmatpush.msra.mxu0 0.0
    %2380 = vmatpush.msra.mxu0 0.0
    %2381 = vmatpush.msra.mxu0 0.0
    %2382 = vmatpush.msra.mxu0 0.0
    %2383 = vmatpush.msra.mxu0 0.0
    %2384 = vmatpush.msra.mxu0 0.0
    %2385 = vmatpush.msra.mxu0 0.0
    %2386 = vmatpush.msra.mxu0 0.0
    %2387 = vmatpush.msra.mxu0 0.0
    %2388 = vmatpush.msra.mxu0 0.0
    %2389 = vmatpush.msra.mxu0 %v1840
    %2390 = vmatmul.f32.gmra.mxu0 %v2372
    %v2391 = vpop.f32.mrf.mxu0
    %v2392 = vadd.f32 0.0, %v2391
    %2393 = vdwg.mxu0
    %v2395 = vsel %vm645, %v1652, 0
    %v2398 = vsel %vm645, %v1762, 0
    %2400 = vmatpush.xpose.msra.mxu0 0.0
    %2401 = vmatpush.xpose.msra.mxu0 0.0
    %2402 = vmatpush.xpose.msra.mxu0 0.0
    %2403 = vmatpush.xpose.msra.mxu0 0.0
    %2404 = vmatpush.xpose.msra.mxu0 0.0
    %2405 = vmatpush.xpose.msra.mxu0 0.0
    %2406 = vmatpush.xpose.msra.mxu0 0.0
    %2407 = vmatpush.xpose.msra.mxu0 0.0
    %2408 = vmatpush.xpose.msra.mxu0 0.0
    %2409 = vmatpush.xpose.msra.mxu0 0.0
    %2410 = vmatpush.xpose.msra.mxu0 0.0
    %2411 = vmatpush.xpose.msra.mxu0 0.0
    %2412 = vmatpush.xpose.msra.mxu0 0.0
    %2413 = vmatpush.xpose.msra.mxu0 0.0
    %2414 = vmatpush.xpose.msra.mxu0 0.0
    %2415 = vmatpush.xpose.msra.mxu0 %v2398
    %2416 = vmatmul.f32.gmra.mxu0 %v2395
    %v2417 = vpop.f32.mrf.mxu0
    %v2418 = vadd.f32 0.0, %v2417
    %2419 = vdwg.mxu0
    %v2420 = vmul.f32 %v2418, 0.35355338
    %v2421 = vadd.f32 %v2420, %v2345
    %v2422 = vsel %vm645, %v2421, -inf
    %2423 = vmax.xlane.f32.xlu0 %v2422
    %v2424 = vpop.xlane.xlu0 %2423
    %v2425 = vsub.f32 %v2421, %v2424
    %v2426 = vmul.f32 %v2425, 1.442695
    %v2427 = vpow.pop %v2426
    %v2428 = vsel %vm645, %v2427, 0.0
    %2429 = vadd.xlane.f32.xlu0 %v2428
    %v2430 = vpop.xlane.xlu0 %2429
    %v2431 = vrcp.pop %v2430
    %v2432 = vmul.f32 %v2430, %v2431
    %v2433 = vsub.f32 1.0, %v2432
    %v2434 = vmul.f32 %v2431, %v2433
    %v2435 = vadd.f32 %v2431, %v2434
    %vm2436 = vweird.f32 %v2430
    %vm2437 = vweird.f32 %v2431
    %vm2438 = vmor %vm2436, %vm2437
    %v2439 = vsel %vm2438, %v2431, %v2435
    %v2440 = vand.u32 2147483647, %v2430
    %vm2441 = vcmp.eq.f32.partialorder %v2440, 8.507059e+37
    %v2442 = vand.u32 %v2430, 2147483648
    %v2443 = vor.u32 1.1754944e-38, %v2442
    %v2444 = vsel %vm2441, %v2443, %v2439
    %v2445 = vmul.f32 %v2427, %v2444
    %v2447 = vsel %vm645, %v2445, 0
    %2449 = vmatpush.msra.mxu0 0.0
    %2450 = vmatpush.msra.mxu0 0.0
    %2451 = vmatpush.msra.mxu0 0.0
    %2452 = vmatpush.msra.mxu0 0.0
    %2453 = vmatpush.msra.mxu0 0.0
    %2454 = vmatpush.msra.mxu0 0.0
    %2455 = vmatpush.msra.mxu0 0.0
    %2456 = vmatpush.msra.mxu0 0.0
    %2457 = vmatpush.msra.mxu0 0.0
    %2458 = vmatpush.msra.mxu0 0.0
    %2459 = vmatpush.msra.mxu0 0.0
    %2460 = vmatpush.msra.mxu0 0.0
    %2461 = vmatpush.msra.mxu0 0.0
    %2462 = vmatpush.msra.mxu0 0.0
    %2463 = vmatpush.msra.mxu0 0.0
    %2464 = vmatpush.msra.mxu0 %v1866
    %2465 = vmatmul.f32.gmra.mxu0 %v2447
    %v2466 = vpop.f32.mrf.mxu0
    %v2467 = vadd.f32 0.0, %v2466
    %2468 = vdwg.mxu0
    %v2470 = vsel %vm645, %v2467, 0
    %2472 = vmatpush.msra.mxu0 0.0
    %2473 = vmatpush.msra.mxu0 0.0
    %2474 = vmatpush.msra.mxu0 0.0
    %2475 = vmatpush.msra.mxu0 0.0
    %2476 = vmatpush.msra.mxu0 0.0
    %2477 = vmatpush.msra.mxu0 0.0
    %2478 = vmatpush.msra.mxu0 0.0
    %2479 = vmatpush.msra.mxu0 0.0
    %2480 = vmatpush.msra.mxu0 0.0
    %2481 = vmatpush.msra.mxu0 0.0
    %2482 = vmatpush.msra.mxu0 0.0
    %2483 = vmatpush.msra.mxu0 0.0
    %2484 = vmatpush.msra.mxu0 0.0
    %2485 = vmatpush.msra.mxu0 0.0
    %2486 = vmatpush.msra.mxu0 0.0
    %2487 = vmatpush.msra.mxu0 %v1580
    %2488 = vmatmul.f32.gmra.mxu0 %v2470
    %v2489 = vpop.f32.mrf.mxu0
    %v2490 = vadd.f32 0.0, %v2489
    %2491 = vdwg.mxu0
    %v2493 = vsel %vm645, %v1678, 0
    %v2496 = vsel %vm645, %v1788, 0
    %2498 = vmatpush.xpose.msra.mxu0 0.0
    %2499 = vmatpush.xpose.msra.mxu0 0.0
    %2500 = vmatpush.xpose.msra.mxu0 0.0
    %2501 = vmatpush.xpose.msra.mxu0 0.0
    %2502 = vmatpush.xpose.msra.mxu0 0.0
    %2503 = vmatpush.xpose.msra.mxu0 0.0
    %2504 = vmatpush.xpose.msra.mxu0 0.0
    %2505 = vmatpush.xpose.msra.mxu0 0.0
    %2506 = vmatpush.xpose.msra.mxu0 0.0
    %2507 = vmatpush.xpose.msra.mxu0 0.0
    %2508 = vmatpush.xpose.msra.mxu0 0.0
    %2509 = vmatpush.xpose.msra.mxu0 0.0
    %2510 = vmatpush.xpose.msra.mxu0 0.0
    %2511 = vmatpush.xpose.msra.mxu0 0.0
    %2512 = vmatpush.xpose.msra.mxu0 0.0
    %2513 = vmatpush.xpose.msra.mxu0 %v2496
    %2514 = vmatmul.f32.gmra.mxu0 %v2493
    %v2515 = vpop.f32.mrf.mxu0
    %v2516 = vadd.f32 0.0, %v2515
    %2517 = vdwg.mxu0
    %v2518 = vmul.f32 %v2516, 0.35355338
    %v2519 = vadd.f32 %v2518, %v2345
    %v2520 = vsel %vm645, %v2519, -inf
    %2521 = vmax.xlane.f32.xlu0 %v2520
    %v2522 = vpop.xlane.xlu0 %2521
    %v2523 = vsub.f32 %v2519, %v2522
    %v2524 = vmul.f32 %v2523, 1.442695
    %v2525 = vpow.pop %v2524
    %v2526 = vsel %vm645, %v2525, 0.0
    %2527 = vadd.xlane.f32.xlu0 %v2526
    %v2528 = vpop.xlane.xlu0 %2527
    %v2529 = vrcp.pop %v2528
    %v2530 = vmul.f32 %v2528, %v2529
    %v2531 = vsub.f32 1.0, %v2530
    %v2532 = vmul.f32 %v2529, %v2531
    %v2533 = vadd.f32 %v2529, %v2532
    %vm2534 = vweird.f32 %v2528
    %vm2535 = vweird.f32 %v2529
    %vm2536 = vmor %vm2534, %vm2535
    %v2537 = vsel %vm2536, %v2529, %v2533
    %v2538 = vand.u32 2147483647, %v2528
    %vm2539 = vcmp.eq.f32.partialorder %v2538, 8.507059e+37
    %v2540 = vand.u32 %v2528, 2147483648
    %v2541 = vor.u32 1.1754944e-38, %v2540
    %v2542 = vsel %vm2539, %v2541, %v2537
    %v2543 = vmul.f32 %v2525, %v2542
    %v2545 = vsel %vm645, %v2543, 0
    %2547 = vmatpush.msra.mxu0 0.0
    %2548 = vmatpush.msra.mxu0 0.0
    %2549 = vmatpush.msra.mxu0 0.0
    %2550 = vmatpush.msra.mxu0 0.0
    %2551 = vmatpush.msra.mxu0 0.0
    %2552 = vmatpush.msra.mxu0 0.0
    %2553 = vmatpush.msra.mxu0 0.0
    %2554 = vmatpush.msra.mxu0 0.0
    %2555 = vmatpush.msra.mxu0 0.0
    %2556 = vmatpush.msra.mxu0 0.0
    %2557 = vmatpush.msra.mxu0 0.0
    %2558 = vmatpush.msra.mxu0 0.0
    %2559 = vmatpush.msra.mxu0 0.0
    %2560 = vmatpush.msra.mxu0 0.0
    %2561 = vmatpush.msra.mxu0 0.0
    %2562 = vmatpush.msra.mxu0 %v1892
    %2563 = vmatmul.f32.gmra.mxu0 %v2545
    %v2564 = vpop.f32.mrf.mxu0
    %v2565 = vadd.f32 0.0, %v2564
    %2566 = vdwg.mxu0
    %v2568 = vsel %vm645, %v1704, 0
    %v2571 = vsel %vm645, %v1814, 0
    %2573 = vmatpush.xpose.msra.mxu0 0.0
    %2574 = vmatpush.xpose.msra.mxu0 0.0
    %2575 = vmatpush.xpose.msra.mxu0 0.0
    %2576 = vmatpush.xpose.msra.mxu0 0.0
    %2577 = vmatpush.xpose.msra.mxu0 0.0
    %2578 = vmatpush.xpose.msra.mxu0 0.0
    %2579 = vmatpush.xpose.msra.mxu0 0.0
    %2580 = vmatpush.xpose.msra.mxu0 0.0
    %2581 = vmatpush.xpose.msra.mxu0 0.0
    %2582 = vmatpush.xpose.msra.mxu0 0.0
    %2583 = vmatpush.xpose.msra.mxu0 0.0
    %2584 = vmatpush.xpose.msra.mxu0 0.0
    %2585 = vmatpush.xpose.msra.mxu0 0.0
    %2586 = vmatpush.xpose.msra.mxu0 0.0
    %2587 = vmatpush.xpose.msra.mxu0 0.0
    %2588 = vmatpush.xpose.msra.mxu0 %v2571
    %2589 = vmatmul.f32.gmra.mxu0 %v2568
    %v2590 = vpop.f32.mrf.mxu0
    %v2591 = vadd.f32 0.0, %v2590
    %2592 = vdwg.mxu0
    %v2593 = vmul.f32 %v2591, 0.35355338
    %v2594 = vadd.f32 %v2593, %v2345
    %v2595 = vsel %vm645, %v2594, -inf
    %2596 = vmax.xlane.f32.xlu0 %v2595
    %v2597 = vpop.xlane.xlu0 %2596
    %v2598 = vsub.f32 %v2594, %v2597
    %v2599 = vmul.f32 %v2598, 1.442695
    %v2600 = vpow.pop %v2599
    %v2601 = vsel %vm645, %v2600, 0.0
    %2602 = vadd.xlane.f32.xlu0 %v2601
    %v2603 = vpop.xlane.xlu0 %2602
    %v2604 = vrcp.pop %v2603
    %v2605 = vmul.f32 %v2603, %v2604
    %v2606 = vsub.f32 1.0, %v2605
    %v2607 = vmul.f32 %v2604, %v2606
    %v2608 = vadd.f32 %v2604, %v2607
    %vm2609 = vweird.f32 %v2603
    %vm2610 = vweird.f32 %v2604
    %vm2611 = vmor %vm2609, %vm2610
    %v2612 = vsel %vm2611, %v2604, %v2608
    %v2613 = vand.u32 2147483647, %v2603
    %vm2614 = vcmp.eq.f32.partialorder %v2613, 8.507059e+37
    %v2615 = vand.u32 %v2603, 2147483648
    %v2616 = vor.u32 1.1754944e-38, %v2615
    %v2617 = vsel %vm2614, %v2616, %v2612
    %v2618 = vmul.f32 %v2600, %v2617
    %v2620 = vsel %vm645, %v2618, 0
    %2622 = vmatpush.msra.mxu0 0.0
    %2623 = vmatpush.msra.mxu0 0.0
    %2624 = vmatpush.msra.mxu0 0.0
    %2625 = vmatpush.msra.mxu0 0.0
    %2626 = vmatpush.msra.mxu0 0.0
    %2627 = vmatpush.msra.mxu0 0.0
    %2628 = vmatpush.msra.mxu0 0.0
    %2629 = vmatpush.msra.mxu0 0.0
    %2630 = vmatpush.msra.mxu0 0.0
    %2631 = vmatpush.msra.mxu0 0.0
    %2632 = vmatpush.msra.mxu0 0.0
    %2633 = vmatpush.msra.mxu0 0.0
    %2634 = vmatpush.msra.mxu0 0.0
    %2635 = vmatpush.msra.mxu0 0.0
    %2636 = vmatpush.msra.mxu0 0.0
    %2637 = vmatpush.msra.mxu0 %v1918
    %2638 = vmatmul.f32.gmra.mxu0 %v2620
    %v2639 = vpop.f32.mrf.mxu0
    %v2640 = vadd.f32 0.0, %v2639
    %2641 = vdwg.mxu0
    %v2643 = vsel %vm645, %v2640, 0
    %2645 = vmatpush.msra.mxu0 0.0
    %2646 = vmatpush.msra.mxu0 0.0
    %2647 = vmatpush.msra.mxu0 0.0
    %2648 = vmatpush.msra.mxu0 0.0
    %2649 = vmatpush.msra.mxu0 0.0
    %2650 = vmatpush.msra.mxu0 0.0
    %2651 = vmatpush.msra.mxu0 0.0
    %2652 = vmatpush.msra.mxu0 0.0
    %2653 = vmatpush.msra.mxu0 0.0
    %2654 = vmatpush.msra.mxu0 0.0
    %2655 = vmatpush.msra.mxu0 0.0
    %2656 = vmatpush.msra.mxu0 0.0
    %2657 = vmatpush.msra.mxu0 0.0
    %2658 = vmatpush.msra.mxu0 0.0
    %2659 = vmatpush.msra.mxu0 0.0
    %2660 = vmatpush.msra.mxu0 %v1582
    %2661 = vmatmul.f32.gmra.mxu0 %v2643
    %v2662 = vpop.f32.mrf.mxu0
    %v2663 = vadd.f32 0.0, %v2662
    %2664 = vdwg.mxu0
    %v2666 = vsel %vm645, %v2392, 0
    %2668 = vmatpush.msra.mxu0 0.0
    %2669 = vmatpush.msra.mxu0 0.0
    %2670 = vmatpush.msra.mxu0 0.0
    %2671 = vmatpush.msra.mxu0 0.0
    %2672 = vmatpush.msra.mxu0 0.0
    %2673 = vmatpush.msra.mxu0 0.0
    %2674 = vmatpush.msra.mxu0 0.0
    %2675 = vmatpush.msra.mxu0 0.0
    %2676 = vmatpush.msra.mxu0 0.0
    %2677 = vmatpush.msra.mxu0 0.0
    %2678 = vmatpush.msra.mxu0 0.0
    %2679 = vmatpush.msra.mxu0 0.0
    %2680 = vmatpush.msra.mxu0 0.0
    %2681 = vmatpush.msra.mxu0 0.0
    %2682 = vmatpush.msra.mxu0 0.0
    %2683 = vmatpush.msra.mxu0 %v1579
    %2684 = vmatmul.f32.gmra.mxu0 %v2666
    %v2685 = vpop.f32.mrf.mxu0
    %v2686 = vadd.f32 %v2490, %v2685
    %2687 = vdwg.mxu0
    %v2689 = vsel %vm645, %v2565, 0
    %2691 = vmatpush.msra.mxu0 0.0
    %2692 = vmatpush.msra.mxu0 0.0
    %2693 = vmatpush.msra.mxu0 0.0
    %2694 = vmatpush.msra.mxu0 0.0
    %2695 = vmatpush.msra.mxu0 0.0
    %2696 = vmatpush.msra.mxu0 0.0
    %2697 = vmatpush.msra.mxu0 0.0
    %2698 = vmatpush.msra.mxu0 0.0
    %2699 = vmatpush.msra.mxu0 0.0
    %2700 = vmatpush.msra.mxu0 0.0
    %2701 = vmatpush.msra.mxu0 0.0
    %2702 = vmatpush.msra.mxu0 0.0
    %2703 = vmatpush.msra.mxu0 0.0
    %2704 = vmatpush.msra.mxu0 0.0
    %2705 = vmatpush.msra.mxu0 0.0
    %2706 = vmatpush.msra.mxu0 %v1581
    %2707 = vmatmul.f32.gmra.mxu0 %v2689
    %v2708 = vpop.f32.mrf.mxu0
    %v2709 = vadd.f32 %v2663, %v2708
    %2710 = vdwg.mxu0
    %v2711 = vadd.f32 %v2686, %v2709
    %v2712 = vadd.f32 %v2711, %v2315
    %v2713 = vadd.f32 %v1437, %v2317
    %v2714 = vadd.f32 %v1438, %v2712
    %s2715 = scalar_lea.vmem %s6, 2
    %v2716 = vld [vmem:[%s2715] sm:$0x1]
    %s2717 = scalar_lea.vmem %s7, 2
    %v2718 = vld [vmem:[%s2717] sm:$0x1]
    %v2719 = vsel %vm166, %v2713, 0.0
    %2720 = vadd.xlane.f32.xlu0 %v2719
    %v2721 = vpop.xlane.xlu0 %2720
    %v2722 = vsel %vm166, %v2714, 0.0
    %2723 = vadd.xlane.f32.xlu0 %v2722
    %v2724 = vpop.xlane.xlu0 %2723
    %v2725 = vmul.f32 %v2721, %v179
    %v2726 = vmul.f32 %v2724, %v179
    %v2727 = vsub.f32 %v2713, %v2725
    %v2728 = vsub.f32 %v2714, %v2726
    %v2729 = vmul.f32 %v2727, %v2727
    %v2730 = vmul.f32 %v2728, %v2728
    %v2731 = vsel %vm166, %v2729, 0.0
    %2732 = vadd.xlane.f32.xlu0 %v2731
    %v2733 = vpop.xlane.xlu0 %2732
    %v2734 = vsel %vm166, %v2730, 0.0
    %2735 = vadd.xlane.f32.xlu0 %v2734
    %v2736 = vpop.xlane.xlu0 %2735
    %v2737 = vmul.f32 %v2733, 0.032258064
    %v2738 = vmul.f32 %v2736, 0.032258064
    %v2739 = vrsqrt.pop %v2737
    %v2740 = vmul.f32 %v2739, %v2737
    %v2741 = vmul.f32 %v2740, %v2739
    %v2742 = vmul.f32 0.5, %v2741
    %v2743 = vsub.f32 1.5, %v2742
    %v2744 = vmul.f32 %v2739, %v2743
    %v2745 = vmul.f32 %v2737, %v2744
    %vm2746 = vcmp.eq.f32.partialorder %v2737, inf
    %v2747 = vsel %vm2746, %v2737, %v2745
    %vm2748 = vcmp.eq.f32.partialorder %v2737, 0.0
    %v2749 = vand.u32 %v2737, 2147483648
    %v2750 = vsel %vm2748, %v2749, %v2747
    %v2751 = vrsqrt.pop %v2738
    %v2752 = vmul.f32 %v2751, %v2738
    %v2753 = vmul.f32 %v2752, %v2751
    %v2754 = vmul.f32 0.5, %v2753
    %v2755 = vsub.f32 1.5, %v2754
    %v2756 = vmul.f32 %v2751, %v2755
    %v2757 = vmul.f32 %v2738, %v2756
    %vm2758 = vcmp.eq.f32.partialorder %v2738, inf
    %v2759 = vsel %vm2758, %v2738, %v2757
    %vm2760 = vcmp.eq.f32.partialorder %v2738, 0.0
    %v2761 = vand.u32 %v2738, 2147483648
    %v2762 = vsel %vm2760, %v2761, %v2759
    %v2763 = vadd.f32 %v2750, 1e-06
    %v2764 = vadd.f32 %v2762, 1e-06
    %v2765 = vrcp.pop %v2763
    %v2766 = vmul.f32 %v2763, %v2765
    %v2767 = vsub.f32 1.0, %v2766
    %v2768 = vmul.f32 %v2765, %v2767
    %v2769 = vadd.f32 %v2765, %v2768
    %vm2770 = vweird.f32 %v2763
    %vm2771 = vweird.f32 %v2765
    %vm2772 = vmor %vm2770, %vm2771
    %v2773 = vsel %vm2772, %v2765, %v2769
    %v2774 = vand.u32 2147483647, %v2763
    %vm2775 = vcmp.eq.f32.partialorder %v2774, 8.507059e+37
    %v2776 = vand.u32 %v2763, 2147483648
    %v2777 = vor.u32 1.1754944e-38, %v2776
    %v2778 = vsel %vm2775, %v2777, %v2773
    %v2779 = vmul.f32 1.0, %v2778
    %v2780 = vrcp.pop %v2764
    %v2781 = vmul.f32 %v2764, %v2780
    %v2782 = vsub.f32 1.0, %v2781
    %v2783 = vmul.f32 %v2780, %v2782
    %v2784 = vadd.f32 %v2780, %v2783
    %vm2785 = vweird.f32 %v2764
    %vm2786 = vweird.f32 %v2780
    %vm2787 = vmor %vm2785, %vm2786
    %v2788 = vsel %vm2787, %v2780, %v2784
    %v2789 = vand.u32 2147483647, %v2764
    %vm2790 = vcmp.eq.f32.partialorder %v2789, 8.507059e+37
    %v2791 = vand.u32 %v2764, 2147483648
    %v2792 = vor.u32 1.1754944e-38, %v2791
    %v2793 = vsel %vm2790, %v2792, %v2788
    %v2794 = vmul.f32 1.0, %v2793
    %v2795 = vmul.f32 %v2727, %v2779
    %v2796 = vmul.f32 %v2728, %v2794
    %v2798 = vperm.slane %v2716, 0
    %v2800 = vmul.f32 %v2798, %v2795
    %v2801 = vmul.f32 %v2798, %v2796
    %v2803 = vperm.slane %v2718, 0
    %v2805 = vadd.f32 %v2800, %v2803
    %v2806 = vadd.f32 %v2801, %v2803
    %v2807 = vld [vmem:[%s24] sm:$0xff]
    %v2808 = vld [vmem:[%s24 + $0x8] sm:$0xff]
    %v2809 = vld [vmem:[%s24 + $0x10] sm:$0xff]
    %v2810 = vld [vmem:[%s24 + $0x18] sm:$0xff]
    %v2811 = vld [vmem:[%s25] sm:$0x1]
    %v2813 = vperm.slane %v2811, 0
    %v2816 = vsel %vm166, %v2805, 0
    %v2819 = vsel %vm166, %v2806, 0
    %2821 = vmatpush.msra.mxu0 0.0
    %2822 = vmatpush.msra.mxu0 0.0
    %2823 = vmatpush.msra.mxu0 0.0
    %2824 = vmatpush.msra.mxu0 0.0
    %2825 = vmatpush.msra.mxu0 0.0
    %2826 = vmatpush.msra.mxu0 0.0
    %2827 = vmatpush.msra.mxu0 0.0
    %2828 = vmatpush.msra.mxu0 0.0
    %2829 = vmatpush.msra.mxu0 0.0
    %2830 = vmatpush.msra.mxu0 0.0
    %2831 = vmatpush.msra.mxu0 0.0
    %2832 = vmatpush.msra.mxu0 0.0
    %2833 = vmatpush.msra.mxu0 %v2810
    %2834 = vmatpush.msra.mxu0 %v2809
    %2835 = vmatpush.msra.mxu0 %v2808
    %2836 = vmatpush.msra.mxu0 %v2807
    %2837 = vmatmul.f32.gmra.mxu0 %v2816
    %v2838 = vpop.f32.mrf.mxu0
    %v2839 = vadd.f32 %v2813, %v2838
    %2840 = vmatmul.f32.gmra.mxu0 %v2819
    %v2841 = vpop.f32.mrf.mxu0
    %v2842 = vadd.f32 %v2813, %v2841
    %2843 = vdwg.mxu0
    %v2844 = vmax.f32 %v2839, 0.0
    %v2845 = vmax.f32 %v2842, 0.0
    %v2846 = vld [vmem:[%s26] sm:$0xff]
    %v2847 = vld [vmem:[%s26 + $0x8] sm:$0xff]
    %v2848 = vld [vmem:[%s26 + $0x10] sm:$0xff]
    %v2849 = vld [vmem:[%s26 + $0x18] sm:$0xff]
    %v2850 = vld [vmem:[%s26 + $0x20] sm:$0xff]
    %v2851 = vld [vmem:[%s26 + $0x28] sm:$0xff]
    %v2852 = vld [vmem:[%s26 + $0x30] sm:$0xff]
    %v2853 = vld [vmem:[%s26 + $0x38] sm:$0xff]
    %v2854 = vld [vmem:[%s26 + $0x40] sm:$0xff]
    %v2855 = vld [vmem:[%s26 + $0x48] sm:$0xff]
    %v2856 = vld [vmem:[%s26 + $0x50] sm:$0xff]
    %v2857 = vld [vmem:[%s26 + $0x58] sm:$0xff]
    %v2858 = vld [vmem:[%s26 + $0x60] sm:$0xff]
    %v2859 = vld [vmem:[%s26 + $0x68] sm:$0xff]
    %v2860 = vld [vmem:[%s26 + $0x70] sm:$0xff]
    %v2861 = vld [vmem:[%s26 + $0x78] sm:$0xff]
    %2862 = vmatpush.msra.mxu0 %v2861
    %2863 = vmatpush.msra.mxu0 %v2860
    %2864 = vmatpush.msra.mxu0 %v2859
    %2865 = vmatpush.msra.mxu0 %v2858
    %2866 = vmatpush.msra.mxu0 %v2857
    %2867 = vmatpush.msra.mxu0 %v2856
    %2868 = vmatpush.msra.mxu0 %v2855
    %2869 = vmatpush.msra.mxu0 %v2854
    %2870 = vmatpush.msra.mxu0 %v2853
    %2871 = vmatpush.msra.mxu0 %v2852
    %2872 = vmatpush.msra.mxu0 %v2851
    %2873 = vmatpush.msra.mxu0 %v2850
    %2874 = vmatpush.msra.mxu0 %v2849
    %2875 = vmatpush.msra.mxu0 %v2848
    %2876 = vmatpush.msra.mxu0 %v2847
    %2877 = vmatpush.msra.mxu0 %v2846
    %2878 = vmatmul.f32.gmra.mxu0 %v2844
    %v2879 = vpop.f32.mrf.mxu0
    %v2880 = vadd.f32 0.0, %v2879
    %2881 = vmatmul.f32.gmra.mxu0 %v2845
    %v2882 = vpop.f32.mrf.mxu0
    %v2883 = vadd.f32 0.0, %v2882
    %2884 = vdwg.mxu0
    %v2885 = vadd.f32 %v2713, %v2880
    %v2886 = vadd.f32 %v2714, %v2883
    %v2887 = vld [vmem:[%s27] sm:$0x1]
    %v2889 = vperm.slane %v2887, 0
    %v2891 = vadd.f32 %v2885, %v2889
    %v2892 = vadd.f32 %v2886, %v2889
    %s2893 = scalar_lea.vmem %s6, 3
    %v2894 = vld [vmem:[%s2893] sm:$0x1]
    %s2895 = scalar_lea.vmem %s7, 3
    %v2896 = vld [vmem:[%s2895] sm:$0x1]
    %v2897 = vsel %vm166, %v2891, 0.0
    %2898 = vadd.xlane.f32.xlu0 %v2897
    %v2899 = vpop.xlane.xlu0 %2898
    %v2900 = vsel %vm166, %v2892, 0.0
    %2901 = vadd.xlane.f32.xlu0 %v2900
    %v2902 = vpop.xlane.xlu0 %2901
    %v2903 = vmul.f32 %v2899, %v179
    %v2904 = vmul.f32 %v2902, %v179
    %v2905 = vsub.f32 %v2891, %v2903
    %v2906 = vsub.f32 %v2892, %v2904
    %v2907 = vmul.f32 %v2905, %v2905
    %v2908 = vmul.f32 %v2906, %v2906
    %v2909 = vsel %vm166, %v2907, 0.0
    %2910 = vadd.xlane.f32.xlu0 %v2909
    %v2911 = vpop.xlane.xlu0 %2910
    %v2912 = vsel %vm166, %v2908, 0.0
    %2913 = vadd.xlane.f32.xlu0 %v2912
    %v2914 = vpop.xlane.xlu0 %2913
    %v2915 = vmul.f32 %v2911, 0.032258064
    %v2916 = vmul.f32 %v2914, 0.032258064
    %v2917 = vrsqrt.pop %v2915
    %v2918 = vmul.f32 %v2917, %v2915
    %v2919 = vmul.f32 %v2918, %v2917
    %v2920 = vmul.f32 0.5, %v2919
    %v2921 = vsub.f32 1.5, %v2920
    %v2922 = vmul.f32 %v2917, %v2921
    %v2923 = vmul.f32 %v2915, %v2922
    %vm2924 = vcmp.eq.f32.partialorder %v2915, inf
    %v2925 = vsel %vm2924, %v2915, %v2923
    %vm2926 = vcmp.eq.f32.partialorder %v2915, 0.0
    %v2927 = vand.u32 %v2915, 2147483648
    %v2928 = vsel %vm2926, %v2927, %v2925
    %v2929 = vrsqrt.pop %v2916
    %v2930 = vmul.f32 %v2929, %v2916
    %v2931 = vmul.f32 %v2930, %v2929
    %v2932 = vmul.f32 0.5, %v2931
    %v2933 = vsub.f32 1.5, %v2932
    %v2934 = vmul.f32 %v2929, %v2933
    %v2935 = vmul.f32 %v2916, %v2934
    %vm2936 = vcmp.eq.f32.partialorder %v2916, inf
    %v2937 = vsel %vm2936, %v2916, %v2935
    %vm2938 = vcmp.eq.f32.partialorder %v2916, 0.0
    %v2939 = vand.u32 %v2916, 2147483648
    %v2940 = vsel %vm2938, %v2939, %v2937
    %v2941 = vadd.f32 %v2928, 1e-06
    %v2942 = vadd.f32 %v2940, 1e-06
    %v2943 = vrcp.pop %v2941
    %v2944 = vmul.f32 %v2941, %v2943
    %v2945 = vsub.f32 1.0, %v2944
    %v2946 = vmul.f32 %v2943, %v2945
    %v2947 = vadd.f32 %v2943, %v2946
    %vm2948 = vweird.f32 %v2941
    %vm2949 = vweird.f32 %v2943
    %vm2950 = vmor %vm2948, %vm2949
    %v2951 = vsel %vm2950, %v2943, %v2947
    %v2952 = vand.u32 2147483647, %v2941
    %vm2953 = vcmp.eq.f32.partialorder %v2952, 8.507059e+37
    %v2954 = vand.u32 %v2941, 2147483648
    %v2955 = vor.u32 1.1754944e-38, %v2954
    %v2956 = vsel %vm2953, %v2955, %v2951
    %v2957 = vmul.f32 1.0, %v2956
    %v2958 = vrcp.pop %v2942
    %v2959 = vmul.f32 %v2942, %v2958
    %v2960 = vsub.f32 1.0, %v2959
    %v2961 = vmul.f32 %v2958, %v2960
    %v2962 = vadd.f32 %v2958, %v2961
    %vm2963 = vweird.f32 %v2942
    %vm2964 = vweird.f32 %v2958
    %vm2965 = vmor %vm2963, %vm2964
    %v2966 = vsel %vm2965, %v2958, %v2962
    %v2967 = vand.u32 2147483647, %v2942
    %vm2968 = vcmp.eq.f32.partialorder %v2967, 8.507059e+37
    %v2969 = vand.u32 %v2942, 2147483648
    %v2970 = vor.u32 1.1754944e-38, %v2969
    %v2971 = vsel %vm2968, %v2970, %v2966
    %v2972 = vmul.f32 1.0, %v2971
    %v2973 = vmul.f32 %v2905, %v2957
    %v2974 = vmul.f32 %v2906, %v2972
    %v2976 = vperm.slane %v2894, 0
    %v2978 = vmul.f32 %v2976, %v2973
    %v2979 = vmul.f32 %v2976, %v2974
    %v2981 = vperm.slane %v2896, 0
    %v2983 = vadd.f32 %v2978, %v2981
    %v2984 = vadd.f32 %v2979, %v2981
    %s2985 = scalar_lea.vmem %s8, 128
    %v2986 = vld [vmem:[%s2985] sm:$0xff]
    %v2987 = vld [vmem:[%s2985 + $0x8] sm:$0xff]
    %v2988 = vld [vmem:[%s2985 + $0x10] sm:$0xff]
    %v2989 = vld [vmem:[%s2985 + $0x18] sm:$0xff]
    %v2990 = vld [vmem:[%s2985 + $0x20] sm:$0xff]
    %v2991 = vld [vmem:[%s2985 + $0x28] sm:$0xff]
    %v2992 = vld [vmem:[%s2985 + $0x30] sm:$0xff]
    %v2993 = vld [vmem:[%s2985 + $0x38] sm:$0xff]
    %v2994 = vld [vmem:[%s2985 + $0x40] sm:$0xff]
    %v2995 = vld [vmem:[%s2985 + $0x48] sm:$0xff]
    %v2996 = vld [vmem:[%s2985 + $0x50] sm:$0xff]
    %v2997 = vld [vmem:[%s2985 + $0x58] sm:$0xff]
    %v2998 = vld [vmem:[%s2985 + $0x60] sm:$0xff]
    %v2999 = vld [vmem:[%s2985 + $0x68] sm:$0xff]
    %v3000 = vld [vmem:[%s2985 + $0x70] sm:$0xff]
    %v3001 = vld [vmem:[%s2985 + $0x78] sm:$0xff]
    %s3002 = scalar_lea.vmem %s10, 128
    %v3003 = vld [vmem:[%s3002] sm:$0xff]
    %v3004 = vld [vmem:[%s3002 + $0x8] sm:$0xff]
    %v3005 = vld [vmem:[%s3002 + $0x10] sm:$0xff]
    %v3006 = vld [vmem:[%s3002 + $0x18] sm:$0xff]
    %v3007 = vld [vmem:[%s3002 + $0x20] sm:$0xff]
    %v3008 = vld [vmem:[%s3002 + $0x28] sm:$0xff]
    %v3009 = vld [vmem:[%s3002 + $0x30] sm:$0xff]
    %v3010 = vld [vmem:[%s3002 + $0x38] sm:$0xff]
    %v3011 = vld [vmem:[%s3002 + $0x40] sm:$0xff]
    %v3012 = vld [vmem:[%s3002 + $0x48] sm:$0xff]
    %v3013 = vld [vmem:[%s3002 + $0x50] sm:$0xff]
    %v3014 = vld [vmem:[%s3002 + $0x58] sm:$0xff]
    %v3015 = vld [vmem:[%s3002 + $0x60] sm:$0xff]
    %v3016 = vld [vmem:[%s3002 + $0x68] sm:$0xff]
    %v3017 = vld [vmem:[%s3002 + $0x70] sm:$0xff]
    %v3018 = vld [vmem:[%s3002 + $0x78] sm:$0xff]
    %s3019 = scalar_lea.vmem %s12, 128
    %v3020 = vld [vmem:[%s3019] sm:$0xff]
    %v3021 = vld [vmem:[%s3019 + $0x8] sm:$0xff]
    %v3022 = vld [vmem:[%s3019 + $0x10] sm:$0xff]
    %v3023 = vld [vmem:[%s3019 + $0x18] sm:$0xff]
    %v3024 = vld [vmem:[%s3019 + $0x20] sm:$0xff]
    %v3025 = vld [vmem:[%s3019 + $0x28] sm:$0xff]
    %v3026 = vld [vmem:[%s3019 + $0x30] sm:$0xff]
    %v3027 = vld [vmem:[%s3019 + $0x38] sm:$0xff]
    %v3028 = vld [vmem:[%s3019 + $0x40] sm:$0xff]
    %v3029 = vld [vmem:[%s3019 + $0x48] sm:$0xff]
    %v3030 = vld [vmem:[%s3019 + $0x50] sm:$0xff]
    %v3031 = vld [vmem:[%s3019 + $0x58] sm:$0xff]
    %v3032 = vld [vmem:[%s3019 + $0x60] sm:$0xff]
    %v3033 = vld [vmem:[%s3019 + $0x68] sm:$0xff]
    %v3034 = vld [vmem:[%s3019 + $0x70] sm:$0xff]
    %v3035 = vld [vmem:[%s3019 + $0x78] sm:$0xff]
    %s3036 = scalar_lea.vmem %s14, 32
    %v3037 = vld [vmem:[%s3036] sm:$0xff]
    %v3038 = vld [vmem:[%s3036 + $0x8] sm:$0xff]
    %v3039 = vld [vmem:[%s3036 + $0x10] sm:$0xff]
    %v3040 = vld [vmem:[%s3036 + $0x18] sm:$0xff]
    %s3041 = scalar_lea.vmem %s9, 4
    %v3042 = vld [vmem:[%s3041] sm:$0x1]
    %v3043 = vld [vmem:[%s3041 + $0x1] sm:$0x1]
    %v3044 = vld [vmem:[%s3041 + $0x2] sm:$0x1]
    %v3045 = vld [vmem:[%s3041 + $0x3] sm:$0x1]
    %s3046 = scalar_lea.vmem %s11, 4
    %v3047 = vld [vmem:[%s3046] sm:$0x1]
    %v3048 = vld [vmem:[%s3046 + $0x1] sm:$0x1]
    %v3049 = vld [vmem:[%s3046 + $0x2] sm:$0x1]
    %v3050 = vld [vmem:[%s3046 + $0x3] sm:$0x1]
    %s3051 = scalar_lea.vmem %s13, 4
    %v3052 = vld [vmem:[%s3051] sm:$0x1]
    %v3053 = vld [vmem:[%s3051 + $0x1] sm:$0x1]
    %v3054 = vld [vmem:[%s3051 + $0x2] sm:$0x1]
    %v3055 = vld [vmem:[%s3051 + $0x3] sm:$0x1]
    %s3056 = scalar_lea.vmem %s15, 1
    %v3057 = vld [vmem:[%s3056] sm:$0x1]
    %v3059 = vperm.slane %v3042, 0
    %v3062 = vsel %vm166, %v2983, 0
    %v3065 = vsel %vm166, %v2984, 0
    %3067 = vmatpush.msra.mxu0 0.0
    %3068 = vmatpush.msra.mxu0 0.0
    %3069 = vmatpush.msra.mxu0 0.0
    %3070 = vmatpush.msra.mxu0 0.0
    %3071 = vmatpush.msra.mxu0 0.0
    %3072 = vmatpush.msra.mxu0 0.0
    %3073 = vmatpush.msra.mxu0 0.0
    %3074 = vmatpush.msra.mxu0 0.0
    %3075 = vmatpush.msra.mxu0 0.0
    %3076 = vmatpush.msra.mxu0 0.0
    %3077 = vmatpush.msra.mxu0 0.0
    %3078 = vmatpush.msra.mxu0 0.0
    %3079 = vmatpush.msra.mxu0 %v2989
    %3080 = vmatpush.msra.mxu0 %v2988
    %3081 = vmatpush.msra.mxu0 %v2987
    %3082 = vmatpush.msra.mxu0 %v2986
    %3083 = vmatmul.f32.gmra.mxu0 %v3062
    %v3084 = vpop.f32.mrf.mxu0
    %v3085 = vadd.f32 %v3059, %v3084
    %3086 = vmatmul.f32.gmra.mxu0 %v3065
    %v3087 = vpop.f32.mrf.mxu0
    %v3088 = vadd.f32 %v3059, %v3087
    %3089 = vdwg.mxu0
    %v3091 = vperm.slane %v3043, 0
    %3093 = vmatpush.msra.mxu0 0.0
    %3094 = vmatpush.msra.mxu0 0.0
    %3095 = vmatpush.msra.mxu0 0.0
    %3096 = vmatpush.msra.mxu0 0.0
    %3097 = vmatpush.msra.mxu0 0.0
    %3098 = vmatpush.msra.mxu0 0.0
    %3099 = vmatpush.msra.mxu0 0.0
    %3100 = vmatpush.msra.mxu0 0.0
    %3101 = vmatpush.msra.mxu0 0.0
    %3102 = vmatpush.msra.mxu0 0.0
    %3103 = vmatpush.msra.mxu0 0.0
    %3104 = vmatpush.msra.mxu0 0.0
    %3105 = vmatpush.msra.mxu0 %v2993
    %3106 = vmatpush.msra.mxu0 %v2992
    %3107 = vmatpush.msra.mxu0 %v2991
    %3108 = vmatpush.msra.mxu0 %v2990
    %3109 = vmatmul.f32.gmra.mxu0 %v3062
    %v3110 = vpop.f32.mrf.mxu0
    %v3111 = vadd.f32 %v3091, %v3110
    %3112 = vmatmul.f32.gmra.mxu0 %v3065
    %v3113 = vpop.f32.mrf.mxu0
    %v3114 = vadd.f32 %v3091, %v3113
    %3115 = vdwg.mxu0
    %v3117 = vperm.slane %v3044, 0
    %3119 = vmatpush.msra.mxu0 0.0
    %3120 = vmatpush.msra.mxu0 0.0
    %3121 = vmatpush.msra.mxu0 0.0
    %3122 = vmatpush.msra.mxu0 0.0
    %3123 = vmatpush.msra.mxu0 0.0
    %3124 = vmatpush.msra.mxu0 0.0
    %3125 = vmatpush.msra.mxu0 0.0
    %3126 = vmatpush.msra.mxu0 0.0
    %3127 = vmatpush.msra.mxu0 0.0
    %3128 = vmatpush.msra.mxu0 0.0
    %3129 = vmatpush.msra.mxu0 0.0
    %3130 = vmatpush.msra.mxu0 0.0
    %3131 = vmatpush.msra.mxu0 %v2997
    %3132 = vmatpush.msra.mxu0 %v2996
    %3133 = vmatpush.msra.mxu0 %v2995
    %3134 = vmatpush.msra.mxu0 %v2994
    %3135 = vmatmul.f32.gmra.mxu0 %v3062
    %v3136 = vpop.f32.mrf.mxu0
    %v3137 = vadd.f32 %v3117, %v3136
    %3138 = vmatmul.f32.gmra.mxu0 %v3065
    %v3139 = vpop.f32.mrf.mxu0
    %v3140 = vadd.f32 %v3117, %v3139
    %3141 = vdwg.mxu0
    %v3143 = vperm.slane %v3045, 0
    %3145 = vmatpush.msra.mxu0 0.0
    %3146 = vmatpush.msra.mxu0 0.0
    %3147 = vmatpush.msra.mxu0 0.0
    %3148 = vmatpush.msra.mxu0 0.0
    %3149 = vmatpush.msra.mxu0 0.0
    %3150 = vmatpush.msra.mxu0 0.0
    %3151 = vmatpush.msra.mxu0 0.0
    %3152 = vmatpush.msra.mxu0 0.0
    %3153 = vmatpush.msra.mxu0 0.0
    %3154 = vmatpush.msra.mxu0 0.0
    %3155 = vmatpush.msra.mxu0 0.0
    %3156 = vmatpush.msra.mxu0 0.0
    %3157 = vmatpush.msra.mxu0 %v3001
    %3158 = vmatpush.msra.mxu0 %v3000
    %3159 = vmatpush.msra.mxu0 %v2999
    %3160 = vmatpush.msra.mxu0 %v2998
    %3161 = vmatmul.f32.gmra.mxu0 %v3062
    %v3162 = vpop.f32.mrf.mxu0
    %v3163 = vadd.f32 %v3143, %v3162
    %3164 = vmatmul.f32.gmra.mxu0 %v3065
    %v3165 = vpop.f32.mrf.mxu0
    %v3166 = vadd.f32 %v3143, %v3165
    %3167 = vdwg.mxu0
    %v3169 = vperm.slane %v3047, 0
    %3171 = vmatpush.msra.mxu0 0.0
    %3172 = vmatpush.msra.mxu0 0.0
    %3173 = vmatpush.msra.mxu0 0.0
    %3174 = vmatpush.msra.mxu0 0.0
    %3175 = vmatpush.msra.mxu0 0.0
    %3176 = vmatpush.msra.mxu0 0.0
    %3177 = vmatpush.msra.mxu0 0.0
    %3178 = vmatpush.msra.mxu0 0.0
    %3179 = vmatpush.msra.mxu0 0.0
    %3180 = vmatpush.msra.mxu0 0.0
    %3181 = vmatpush.msra.mxu0 0.0
    %3182 = vmatpush.msra.mxu0 0.0
    %3183 = vmatpush.msra.mxu0 %v3006
    %3184 = vmatpush.msra.mxu0 %v3005
    %3185 = vmatpush.msra.mxu0 %v3004
    %3186 = vmatpush.msra.mxu0 %v3003
    %3187 = vmatmul.f32.gmra.mxu0 %v3062
    %v3188 = vpop.f32.mrf.mxu0
    %v3189 = vadd.f32 %v3169, %v3188
    %3190 = vmatmul.f32.gmra.mxu0 %v3065
    %v3191 = vpop.f32.mrf.mxu0
    %v3192 = vadd.f32 %v3169, %v3191
    %3193 = vdwg.mxu0
    %v3195 = vperm.slane %v3048, 0
    %3197 = vmatpush.msra.mxu0 0.0
    %3198 = vmatpush.msra.mxu0 0.0
    %3199 = vmatpush.msra.mxu0 0.0
    %3200 = vmatpush.msra.mxu0 0.0
    %3201 = vmatpush.msra.mxu0 0.0
    %3202 = vmatpush.msra.mxu0 0.0
    %3203 = vmatpush.msra.mxu0 0.0
    %3204 = vmatpush.msra.mxu0 0.0
    %3205 = vmatpush.msra.mxu0 0.0
    %3206 = vmatpush.msra.mxu0 0.0
    %3207 = vmatpush.msra.mxu0 0.0
    %3208 = vmatpush.msra.mxu0 0.0
    %3209 = vmatpush.msra.mxu0 %v3010
    %3210 = vmatpush.msra.mxu0 %v3009
    %3211 = vmatpush.msra.mxu0 %v3008
    %3212 = vmatpush.msra.mxu0 %v3007
    %3213 = vmatmul.f32.gmra.mxu0 %v3062
    %v3214 = vpop.f32.mrf.mxu0
    %v3215 = vadd.f32 %v3195, %v3214
    %3216 = vmatmul.f32.gmra.mxu0 %v3065
    %v3217 = vpop.f32.mrf.mxu0
    %v3218 = vadd.f32 %v3195, %v3217
    %3219 = vdwg.mxu0
    %v3221 = vperm.slane %v3049, 0
    %3223 = vmatpush.msra.mxu0 0.0
    %3224 = vmatpush.msra.mxu0 0.0
    %3225 = vmatpush.msra.mxu0 0.0
    %3226 = vmatpush.msra.mxu0 0.0
    %3227 = vmatpush.msra.mxu0 0.0
    %3228 = vmatpush.msra.mxu0 0.0
    %3229 = vmatpush.msra.mxu0 0.0
    %3230 = vmatpush.msra.mxu0 0.0
    %3231 = vmatpush.msra.mxu0 0.0
    %3232 = vmatpush.msra.mxu0 0.0
    %3233 = vmatpush.msra.mxu0 0.0
    %3234 = vmatpush.msra.mxu0 0.0
    %3235 = vmatpush.msra.mxu0 %v3014
    %3236 = vmatpush.msra.mxu0 %v3013
    %3237 = vmatpush.msra.mxu0 %v3012
    %3238 = vmatpush.msra.mxu0 %v3011
    %3239 = vmatmul.f32.gmra.mxu0 %v3062
    %v3240 = vpop.f32.mrf.mxu0
    %v3241 = vadd.f32 %v3221, %v3240
    %3242 = vmatmul.f32.gmra.mxu0 %v3065
    %v3243 = vpop.f32.mrf.mxu0
    %v3244 = vadd.f32 %v3221, %v3243
    %3245 = vdwg.mxu0
    %v3247 = vperm.slane %v3050, 0
    %3249 = vmatpush.msra.mxu0 0.0
    %3250 = vmatpush.msra.mxu0 0.0
    %3251 = vmatpush.msra.mxu0 0.0
    %3252 = vmatpush.msra.mxu0 0.0
    %3253 = vmatpush.msra.mxu0 0.0
    %3254 = vmatpush.msra.mxu0 0.0
    %3255 = vmatpush.msra.mxu0 0.0
    %3256 = vmatpush.msra.mxu0 0.0
    %3257 = vmatpush.msra.mxu0 0.0
    %3258 = vmatpush.msra.mxu0 0.0
    %3259 = vmatpush.msra.mxu0 0.0
    %3260 = vmatpush.msra.mxu0 0.0
    %3261 = vmatpush.msra.mxu0 %v3018
    %3262 = vmatpush.msra.mxu0 %v3017
    %3263 = vmatpush.msra.mxu0 %v3016
    %3264 = vmatpush.msra.mxu0 %v3015
    %3265 = vmatmul.f32.gmra.mxu0 %v3062
    %v3266 = vpop.f32.mrf.mxu0
    %v3267 = vadd.f32 %v3247, %v3266
    %3268 = vmatmul.f32.gmra.mxu0 %v3065
    %v3269 = vpop.f32.mrf.mxu0
    %v3270 = vadd.f32 %v3247, %v3269
    %3271 = vdwg.mxu0
    %v3273 = vperm.slane %v3052, 0
    %3275 = vmatpush.msra.mxu0 0.0
    %3276 = vmatpush.msra.mxu0 0.0
    %3277 = vmatpush.msra.mxu0 0.0
    %3278 = vmatpush.msra.mxu0 0.0
    %3279 = vmatpush.msra.mxu0 0.0
    %3280 = vmatpush.msra.mxu0 0.0
    %3281 = vmatpush.msra.mxu0 0.0
    %3282 = vmatpush.msra.mxu0 0.0
    %3283 = vmatpush.msra.mxu0 0.0
    %3284 = vmatpush.msra.mxu0 0.0
    %3285 = vmatpush.msra.mxu0 0.0
    %3286 = vmatpush.msra.mxu0 0.0
    %3287 = vmatpush.msra.mxu0 %v3023
    %3288 = vmatpush.msra.mxu0 %v3022
    %3289 = vmatpush.msra.mxu0 %v3021
    %3290 = vmatpush.msra.mxu0 %v3020
    %3291 = vmatmul.f32.gmra.mxu0 %v3062
    %v3292 = vpop.f32.mrf.mxu0
    %v3293 = vadd.f32 %v3273, %v3292
    %3294 = vmatmul.f32.gmra.mxu0 %v3065
    %v3295 = vpop.f32.mrf.mxu0
    %v3296 = vadd.f32 %v3273, %v3295
    %3297 = vdwg.mxu0
    %v3299 = vperm.slane %v3053, 0
    %3301 = vmatpush.msra.mxu0 0.0
    %3302 = vmatpush.msra.mxu0 0.0
    %3303 = vmatpush.msra.mxu0 0.0
    %3304 = vmatpush.msra.mxu0 0.0
    %3305 = vmatpush.msra.mxu0 0.0
    %3306 = vmatpush.msra.mxu0 0.0
    %3307 = vmatpush.msra.mxu0 0.0
    %3308 = vmatpush.msra.mxu0 0.0
    %3309 = vmatpush.msra.mxu0 0.0
    %3310 = vmatpush.msra.mxu0 0.0
    %3311 = vmatpush.msra.mxu0 0.0
    %3312 = vmatpush.msra.mxu0 0.0
    %3313 = vmatpush.msra.mxu0 %v3027
    %3314 = vmatpush.msra.mxu0 %v3026
    %3315 = vmatpush.msra.mxu0 %v3025
    %3316 = vmatpush.msra.mxu0 %v3024
    %3317 = vmatmul.f32.gmra.mxu0 %v3062
    %v3318 = vpop.f32.mrf.mxu0
    %v3319 = vadd.f32 %v3299, %v3318
    %3320 = vmatmul.f32.gmra.mxu0 %v3065
    %v3321 = vpop.f32.mrf.mxu0
    %v3322 = vadd.f32 %v3299, %v3321
    %3323 = vdwg.mxu0
    %v3325 = vperm.slane %v3054, 0
    %3327 = vmatpush.msra.mxu0 0.0
    %3328 = vmatpush.msra.mxu0 0.0
    %3329 = vmatpush.msra.mxu0 0.0
    %3330 = vmatpush.msra.mxu0 0.0
    %3331 = vmatpush.msra.mxu0 0.0
    %3332 = vmatpush.msra.mxu0 0.0
    %3333 = vmatpush.msra.mxu0 0.0
    %3334 = vmatpush.msra.mxu0 0.0
    %3335 = vmatpush.msra.mxu0 0.0
    %3336 = vmatpush.msra.mxu0 0.0
    %3337 = vmatpush.msra.mxu0 0.0
    %3338 = vmatpush.msra.mxu0 0.0
    %3339 = vmatpush.msra.mxu0 %v3031
    %3340 = vmatpush.msra.mxu0 %v3030
    %3341 = vmatpush.msra.mxu0 %v3029
    %3342 = vmatpush.msra.mxu0 %v3028
    %3343 = vmatmul.f32.gmra.mxu0 %v3062
    %v3344 = vpop.f32.mrf.mxu0
    %v3345 = vadd.f32 %v3325, %v3344
    %3346 = vmatmul.f32.gmra.mxu0 %v3065
    %v3347 = vpop.f32.mrf.mxu0
    %v3348 = vadd.f32 %v3325, %v3347
    %3349 = vdwg.mxu0
    %v3351 = vperm.slane %v3055, 0
    %3353 = vmatpush.msra.mxu0 0.0
    %3354 = vmatpush.msra.mxu0 0.0
    %3355 = vmatpush.msra.mxu0 0.0
    %3356 = vmatpush.msra.mxu0 0.0
    %3357 = vmatpush.msra.mxu0 0.0
    %3358 = vmatpush.msra.mxu0 0.0
    %3359 = vmatpush.msra.mxu0 0.0
    %3360 = vmatpush.msra.mxu0 0.0
    %3361 = vmatpush.msra.mxu0 0.0
    %3362 = vmatpush.msra.mxu0 0.0
    %3363 = vmatpush.msra.mxu0 0.0
    %3364 = vmatpush.msra.mxu0 0.0
    %3365 = vmatpush.msra.mxu0 %v3035
    %3366 = vmatpush.msra.mxu0 %v3034
    %3367 = vmatpush.msra.mxu0 %v3033
    %3368 = vmatpush.msra.mxu0 %v3032
    %3369 = vmatmul.f32.gmra.mxu0 %v3062
    %v3370 = vpop.f32.mrf.mxu0
    %v3371 = vadd.f32 %v3351, %v3370
    %3372 = vmatmul.f32.gmra.mxu0 %v3065
    %v3373 = vpop.f32.mrf.mxu0
    %v3374 = vadd.f32 %v3351, %v3373
    %3375 = vdwg.mxu0
    %v3377 = vsel %vm645, %v3085, 0
    %v3380 = vsel %vm645, %v3189, 0
    %3382 = vmatpush.xpose.msra.mxu0 0.0
    %3383 = vmatpush.xpose.msra.mxu0 0.0
    %3384 = vmatpush.xpose.msra.mxu0 0.0
    %3385 = vmatpush.xpose.msra.mxu0 0.0
    %3386 = vmatpush.xpose.msra.mxu0 0.0
    %3387 = vmatpush.xpose.msra.mxu0 0.0
    %3388 = vmatpush.xpose.msra.mxu0 0.0
    %3389 = vmatpush.xpose.msra.mxu0 0.0
    %3390 = vmatpush.xpose.msra.mxu0 0.0
    %3391 = vmatpush.xpose.msra.mxu0 0.0
    %3392 = vmatpush.xpose.msra.mxu0 0.0
    %3393 = vmatpush.xpose.msra.mxu0 0.0
    %3394 = vmatpush.xpose.msra.mxu0 0.0
    %3395 = vmatpush.xpose.msra.mxu0 0.0
    %3396 = vmatpush.xpose.msra.mxu0 0.0
    %3397 = vmatpush.xpose.msra.mxu0 %v3380
    %3398 = vmatmul.f32.gmra.mxu0 %v3377
    %v3399 = vpop.f32.mrf.mxu0
    %v3400 = vadd.f32 0.0, %v3399
    %3401 = vdwg.mxu0
    %v3402 = vmul.f32 %v3400, 0.35355338
    %v3403 = vadd.f32 %v3402, %v159
    %v3404 = vsel %vm645, %v3403, -inf
    %3405 = vmax.xlane.f32.xlu0 %v3404
    %v3406 = vpop.xlane.xlu0 %3405
    %v3407 = vsub.f32 %v3403, %v3406
    %v3408 = vmul.f32 %v3407, 1.442695
    %v3409 = vpow.pop %v3408
    %v3410 = vsel %vm645, %v3409, 0.0
    %3411 = vadd.xlane.f32.xlu0 %v3410
    %v3412 = vpop.xlane.xlu0 %3411
    %v3413 = vrcp.pop %v3412
    %v3414 = vmul.f32 %v3412, %v3413
    %v3415 = vsub.f32 1.0, %v3414
    %v3416 = vmul.f32 %v3413, %v3415
    %v3417 = vadd.f32 %v3413, %v3416
    %vm3418 = vweird.f32 %v3412
    %vm3419 = vweird.f32 %v3413
    %vm3420 = vmor %vm3418, %vm3419
    %v3421 = vsel %vm3420, %v3413, %v3417
    %v3422 = vand.u32 2147483647, %v3412
    %vm3423 = vcmp.eq.f32.partialorder %v3422, 8.507059e+37
    %v3424 = vand.u32 %v3412, 2147483648
    %v3425 = vor.u32 1.1754944e-38, %v3424
    %v3426 = vsel %vm3423, %v3425, %v3421
    %v3427 = vmul.f32 %v3409, %v3426
    %v3429 = vsel %vm645, %v3427, 0
    %3431 = vmatpush.msra.mxu0 0.0
    %3432 = vmatpush.msra.mxu0 0.0
    %3433 = vmatpush.msra.mxu0 0.0
    %3434 = vmatpush.msra.mxu0 0.0
    %3435 = vmatpush.msra.mxu0 0.0
    %3436 = vmatpush.msra.mxu0 0.0
    %3437 = vmatpush.msra.mxu0 0.0
    %3438 = vmatpush.msra.mxu0 0.0
    %3439 = vmatpush.msra.mxu0 0.0
    %3440 = vmatpush.msra.mxu0 0.0
    %3441 = vmatpush.msra.mxu0 0.0
    %3442 = vmatpush.msra.mxu0 0.0
    %3443 = vmatpush.msra.mxu0 0.0
    %3444 = vmatpush.msra.mxu0 0.0
    %3445 = vmatpush.msra.mxu0 0.0
    %3446 = vmatpush.msra.mxu0 %v3293
    %3447 = vmatmul.f32.gmra.mxu0 %v3429
    %v3448 = vpop.f32.mrf.mxu0
    %v3449 = vadd.f32 0.0, %v3448
    %3450 = vdwg.mxu0
    %v3452 = vsel %vm645, %v3111, 0
    %v3455 = vsel %vm645, %v3215, 0
    %3457 = vmatpush.xpose.msra.mxu0 0.0
    %3458 = vmatpush.xpose.msra.mxu0 0.0
    %3459 = vmatpush.xpose.msra.mxu0 0.0
    %3460 = vmatpush.xpose.msra.mxu0 0.0
    %3461 = vmatpush.xpose.msra.mxu0 0.0
    %3462 = vmatpush.xpose.msra.mxu0 0.0
    %3463 = vmatpush.xpose.msra.mxu0 0.0
    %3464 = vmatpush.xpose.msra.mxu0 0.0
    %3465 = vmatpush.xpose.msra.mxu0 0.0
    %3466 = vmatpush.xpose.msra.mxu0 0.0
    %3467 = vmatpush.xpose.msra.mxu0 0.0
    %3468 = vmatpush.xpose.msra.mxu0 0.0
    %3469 = vmatpush.xpose.msra.mxu0 0.0
    %3470 = vmatpush.xpose.msra.mxu0 0.0
    %3471 = vmatpush.xpose.msra.mxu0 0.0
    %3472 = vmatpush.xpose.msra.mxu0 %v3455
    %3473 = vmatmul.f32.gmra.mxu0 %v3452
    %v3474 = vpop.f32.mrf.mxu0
    %v3475 = vadd.f32 0.0, %v3474
    %3476 = vdwg.mxu0
    %v3477 = vmul.f32 %v3475, 0.35355338
    %v3478 = vadd.f32 %v3477, %v159
    %v3479 = vsel %vm645, %v3478, -inf
    %3480 = vmax.xlane.f32.xlu0 %v3479
    %v3481 = vpop.xlane.xlu0 %3480
    %v3482 = vsub.f32 %v3478, %v3481
    %v3483 = vmul.f32 %v3482, 1.442695
    %v3484 = vpow.pop %v3483
    %v3485 = vsel %vm645, %v3484, 0.0
    %3486 = vadd.xlane.f32.xlu0 %v3485
    %v3487 = vpop.xlane.xlu0 %3486
    %v3488 = vrcp.pop %v3487
    %v3489 = vmul.f32 %v3487, %v3488
    %v3490 = vsub.f32 1.0, %v3489
    %v3491 = vmul.f32 %v3488, %v3490
    %v3492 = vadd.f32 %v3488, %v3491
    %vm3493 = vweird.f32 %v3487
    %vm3494 = vweird.f32 %v3488
    %vm3495 = vmor %vm3493, %vm3494
    %v3496 = vsel %vm3495, %v3488, %v3492
    %v3497 = vand.u32 2147483647, %v3487
    %vm3498 = vcmp.eq.f32.partialorder %v3497, 8.507059e+37
    %v3499 = vand.u32 %v3487, 2147483648
    %v3500 = vor.u32 1.1754944e-38, %v3499
    %v3501 = vsel %vm3498, %v3500, %v3496
    %v3502 = vmul.f32 %v3484, %v3501
    %v3504 = vsel %vm645, %v3502, 0
    %3506 = vmatpush.msra.mxu0 0.0
    %3507 = vmatpush.msra.mxu0 0.0
    %3508 = vmatpush.msra.mxu0 0.0
    %3509 = vmatpush.msra.mxu0 0.0
    %3510 = vmatpush.msra.mxu0 0.0
    %3511 = vmatpush.msra.mxu0 0.0
    %3512 = vmatpush.msra.mxu0 0.0
    %3513 = vmatpush.msra.mxu0 0.0
    %3514 = vmatpush.msra.mxu0 0.0
    %3515 = vmatpush.msra.mxu0 0.0
    %3516 = vmatpush.msra.mxu0 0.0
    %3517 = vmatpush.msra.mxu0 0.0
    %3518 = vmatpush.msra.mxu0 0.0
    %3519 = vmatpush.msra.mxu0 0.0
    %3520 = vmatpush.msra.mxu0 0.0
    %3521 = vmatpush.msra.mxu0 %v3319
    %3522 = vmatmul.f32.gmra.mxu0 %v3504
    %v3523 = vpop.f32.mrf.mxu0
    %v3524 = vadd.f32 0.0, %v3523
    %3525 = vdwg.mxu0
    %v3527 = vsel %vm645, %v3524, 0
    %3529 = vmatpush.msra.mxu0 0.0
    %3530 = vmatpush.msra.mxu0 0.0
    %3531 = vmatpush.msra.mxu0 0.0
    %3532 = vmatpush.msra.mxu0 0.0
    %3533 = vmatpush.msra.mxu0 0.0
    %3534 = vmatpush.msra.mxu0 0.0
    %3535 = vmatpush.msra.mxu0 0.0
    %3536 = vmatpush.msra.mxu0 0.0
    %3537 = vmatpush.msra.mxu0 0.0
    %3538 = vmatpush.msra.mxu0 0.0
    %3539 = vmatpush.msra.mxu0 0.0
    %3540 = vmatpush.msra.mxu0 0.0
    %3541 = vmatpush.msra.mxu0 0.0
    %3542 = vmatpush.msra.mxu0 0.0
    %3543 = vmatpush.msra.mxu0 0.0
    %3544 = vmatpush.msra.mxu0 %v3038
    %3545 = vmatmul.f32.gmra.mxu0 %v3527
    %v3546 = vpop.f32.mrf.mxu0
    %v3547 = vadd.f32 0.0, %v3546
    %3548 = vdwg.mxu0
    %v3550 = vsel %vm645, %v3137, 0
    %v3553 = vsel %vm645, %v3241, 0
    %3555 = vmatpush.xpose.msra.mxu0 0.0
    %3556 = vmatpush.xpose.msra.mxu0 0.0
    %3557 = vmatpush.xpose.msra.mxu0 0.0
    %3558 = vmatpush.xpose.msra.mxu0 0.0
    %3559 = vmatpush.xpose.msra.mxu0 0.0
    %3560 = vmatpush.xpose.msra.mxu0 0.0
    %3561 = vmatpush.xpose.msra.mxu0 0.0
    %3562 = vmatpush.xpose.msra.mxu0 0.0
    %3563 = vmatpush.xpose.msra.mxu0 0.0
    %3564 = vmatpush.xpose.msra.mxu0 0.0
    %3565 = vmatpush.xpose.msra.mxu0 0.0
    %3566 = vmatpush.xpose.msra.mxu0 0.0
    %3567 = vmatpush.xpose.msra.mxu0 0.0
    %3568 = vmatpush.xpose.msra.mxu0 0.0
    %3569 = vmatpush.xpose.msra.mxu0 0.0
    %3570 = vmatpush.xpose.msra.mxu0 %v3553
    %3571 = vmatmul.f32.gmra.mxu0 %v3550
    %v3572 = vpop.f32.mrf.mxu0
    %v3573 = vadd.f32 0.0, %v3572
    %3574 = vdwg.mxu0
    %v3575 = vmul.f32 %v3573, 0.35355338
    %v3576 = vadd.f32 %v3575, %v159
    %v3577 = vsel %vm645, %v3576, -inf
    %3578 = vmax.xlane.f32.xlu0 %v3577
    %v3579 = vpop.xlane.xlu0 %3578
    %v3580 = vsub.f32 %v3576, %v3579
    %v3581 = vmul.f32 %v3580, 1.442695
    %v3582 = vpow.pop %v3581
    %v3583 = vsel %vm645, %v3582, 0.0
    %3584 = vadd.xlane.f32.xlu0 %v3583
    %v3585 = vpop.xlane.xlu0 %3584
    %v3586 = vrcp.pop %v3585
    %v3587 = vmul.f32 %v3585, %v3586
    %v3588 = vsub.f32 1.0, %v3587
    %v3589 = vmul.f32 %v3586, %v3588
    %v3590 = vadd.f32 %v3586, %v3589
    %vm3591 = vweird.f32 %v3585
    %vm3592 = vweird.f32 %v3586
    %vm3593 = vmor %vm3591, %vm3592
    %v3594 = vsel %vm3593, %v3586, %v3590
    %v3595 = vand.u32 2147483647, %v3585
    %vm3596 = vcmp.eq.f32.partialorder %v3595, 8.507059e+37
    %v3597 = vand.u32 %v3585, 2147483648
    %v3598 = vor.u32 1.1754944e-38, %v3597
    %v3599 = vsel %vm3596, %v3598, %v3594
    %v3600 = vmul.f32 %v3582, %v3599
    %v3602 = vsel %vm645, %v3600, 0
    %3604 = vmatpush.msra.mxu0 0.0
    %3605 = vmatpush.msra.mxu0 0.0
    %3606 = vmatpush.msra.mxu0 0.0
    %3607 = vmatpush.msra.mxu0 0.0
    %3608 = vmatpush.msra.mxu0 0.0
    %3609 = vmatpush.msra.mxu0 0.0
    %3610 = vmatpush.msra.mxu0 0.0
    %3611 = vmatpush.msra.mxu0 0.0
    %3612 = vmatpush.msra.mxu0 0.0
    %3613 = vmatpush.msra.mxu0 0.0
    %3614 = vmatpush.msra.mxu0 0.0
    %3615 = vmatpush.msra.mxu0 0.0
    %3616 = vmatpush.msra.mxu0 0.0
    %3617 = vmatpush.msra.mxu0 0.0
    %3618 = vmatpush.msra.mxu0 0.0
    %3619 = vmatpush.msra.mxu0 %v3345
    %3620 = vmatmul.f32.gmra.mxu0 %v3602
    %v3621 = vpop.f32.mrf.mxu0
    %v3622 = vadd.f32 0.0, %v3621
    %3623 = vdwg.mxu0
    %v3625 = vsel %vm645, %v3163, 0
    %v3628 = vsel %vm645, %v3267, 0
    %3630 = vmatpush.xpose.msra.mxu0 0.0
    %3631 = vmatpush.xpose.msra.mxu0 0.0
    %3632 = vmatpush.xpose.msra.mxu0 0.0
    %3633 = vmatpush.xpose.msra.mxu0 0.0
    %3634 = vmatpush.xpose.msra.mxu0 0.0
    %3635 = vmatpush.xpose.msra.mxu0 0.0
    %3636 = vmatpush.xpose.msra.mxu0 0.0
    %3637 = vmatpush.xpose.msra.mxu0 0.0
    %3638 = vmatpush.xpose.msra.mxu0 0.0
    %3639 = vmatpush.xpose.msra.mxu0 0.0
    %3640 = vmatpush.xpose.msra.mxu0 0.0
    %3641 = vmatpush.xpose.msra.mxu0 0.0
    %3642 = vmatpush.xpose.msra.mxu0 0.0
    %3643 = vmatpush.xpose.msra.mxu0 0.0
    %3644 = vmatpush.xpose.msra.mxu0 0.0
    %3645 = vmatpush.xpose.msra.mxu0 %v3628
    %3646 = vmatmul.f32.gmra.mxu0 %v3625
    %v3647 = vpop.f32.mrf.mxu0
    %v3648 = vadd.f32 0.0, %v3647
    %3649 = vdwg.mxu0
    %v3650 = vmul.f32 %v3648, 0.35355338
    %v3651 = vadd.f32 %v3650, %v159
    %v3652 = vsel %vm645, %v3651, -inf
    %3653 = vmax.xlane.f32.xlu0 %v3652
    %v3654 = vpop.xlane.xlu0 %3653
    %v3655 = vsub.f32 %v3651, %v3654
    %v3656 = vmul.f32 %v3655, 1.442695
    %v3657 = vpow.pop %v3656
    %v3658 = vsel %vm645, %v3657, 0.0
    %3659 = vadd.xlane.f32.xlu0 %v3658
    %v3660 = vpop.xlane.xlu0 %3659
    %v3661 = vrcp.pop %v3660
    %v3662 = vmul.f32 %v3660, %v3661
    %v3663 = vsub.f32 1.0, %v3662
    %v3664 = vmul.f32 %v3661, %v3663
    %v3665 = vadd.f32 %v3661, %v3664
    %vm3666 = vweird.f32 %v3660
    %vm3667 = vweird.f32 %v3661
    %vm3668 = vmor %vm3666, %vm3667
    %v3669 = vsel %vm3668, %v3661, %v3665
    %v3670 = vand.u32 2147483647, %v3660
    %vm3671 = vcmp.eq.f32.partialorder %v3670, 8.507059e+37
    %v3672 = vand.u32 %v3660, 2147483648
    %v3673 = vor.u32 1.1754944e-38, %v3672
    %v3674 = vsel %vm3671, %v3673, %v3669
    %v3675 = vmul.f32 %v3657, %v3674
    %v3677 = vsel %vm645, %v3675, 0
    %3679 = vmatpush.msra.mxu0 0.0
    %3680 = vmatpush.msra.mxu0 0.0
    %3681 = vmatpush.msra.mxu0 0.0
    %3682 = vmatpush.msra.mxu0 0.0
    %3683 = vmatpush.msra.mxu0 0.0
    %3684 = vmatpush.msra.mxu0 0.0
    %3685 = vmatpush.msra.mxu0 0.0
    %3686 = vmatpush.msra.mxu0 0.0
    %3687 = vmatpush.msra.mxu0 0.0
    %3688 = vmatpush.msra.mxu0 0.0
    %3689 = vmatpush.msra.mxu0 0.0
    %3690 = vmatpush.msra.mxu0 0.0
    %3691 = vmatpush.msra.mxu0 0.0
    %3692 = vmatpush.msra.mxu0 0.0
    %3693 = vmatpush.msra.mxu0 0.0
    %3694 = vmatpush.msra.mxu0 %v3371
    %3695 = vmatmul.f32.gmra.mxu0 %v3677
    %v3696 = vpop.f32.mrf.mxu0
    %v3697 = vadd.f32 0.0, %v3696
    %3698 = vdwg.mxu0
    %v3700 = vsel %vm645, %v3697, 0
    %3702 = vmatpush.msra.mxu0 0.0
    %3703 = vmatpush.msra.mxu0 0.0
    %3704 = vmatpush.msra.mxu0 0.0
    %3705 = vmatpush.msra.mxu0 0.0
    %3706 = vmatpush.msra.mxu0 0.0
    %3707 = vmatpush.msra.mxu0 0.0
    %3708 = vmatpush.msra.mxu0 0.0
    %3709 = vmatpush.msra.mxu0 0.0
    %3710 = vmatpush.msra.mxu0 0.0
    %3711 = vmatpush.msra.mxu0 0.0
    %3712 = vmatpush.msra.mxu0 0.0
    %3713 = vmatpush.msra.mxu0 0.0
    %3714 = vmatpush.msra.mxu0 0.0
    %3715 = vmatpush.msra.mxu0 0.0
    %3716 = vmatpush.msra.mxu0 0.0
    %3717 = vmatpush.msra.mxu0 %v3040
    %3718 = vmatmul.f32.gmra.mxu0 %v3700
    %v3719 = vpop.f32.mrf.mxu0
    %v3720 = vadd.f32 0.0, %v3719
    %3721 = vdwg.mxu0
    %v3723 = vsel %vm645, %v3449, 0
    %3725 = vmatpush.msra.mxu0 0.0
    %3726 = vmatpush.msra.mxu0 0.0
    %3727 = vmatpush.msra.mxu0 0.0
    %3728 = vmatpush.msra.mxu0 0.0
    %3729 = vmatpush.msra.mxu0 0.0
    %3730 = vmatpush.msra.mxu0 0.0
    %3731 = vmatpush.msra.mxu0 0.0
    %3732 = vmatpush.msra.mxu0 0.0
    %3733 = vmatpush.msra.mxu0 0.0
    %3734 = vmatpush.msra.mxu0 0.0
    %3735 = vmatpush.msra.mxu0 0.0
    %3736 = vmatpush.msra.mxu0 0.0
    %3737 = vmatpush.msra.mxu0 0.0
    %3738 = vmatpush.msra.mxu0 0.0
    %3739 = vmatpush.msra.mxu0 0.0
    %3740 = vmatpush.msra.mxu0 %v3037
    %3741 = vmatmul.f32.gmra.mxu0 %v3723
    %v3742 = vpop.f32.mrf.mxu0
    %v3743 = vadd.f32 %v3547, %v3742
    %3744 = vdwg.mxu0
    %v3746 = vsel %vm645, %v3622, 0
    %3748 = vmatpush.msra.mxu0 0.0
    %3749 = vmatpush.msra.mxu0 0.0
    %3750 = vmatpush.msra.mxu0 0.0
    %3751 = vmatpush.msra.mxu0 0.0
    %3752 = vmatpush.msra.mxu0 0.0
    %3753 = vmatpush.msra.mxu0 0.0
    %3754 = vmatpush.msra.mxu0 0.0
    %3755 = vmatpush.msra.mxu0 0.0
    %3756 = vmatpush.msra.mxu0 0.0
    %3757 = vmatpush.msra.mxu0 0.0
    %3758 = vmatpush.msra.mxu0 0.0
    %3759 = vmatpush.msra.mxu0 0.0
    %3760 = vmatpush.msra.mxu0 0.0
    %3761 = vmatpush.msra.mxu0 0.0
    %3762 = vmatpush.msra.mxu0 0.0
    %3763 = vmatpush.msra.mxu0 %v3039
    %3764 = vmatmul.f32.gmra.mxu0 %v3746
    %v3765 = vpop.f32.mrf.mxu0
    %v3766 = vadd.f32 %v3720, %v3765
    %3767 = vdwg.mxu0
    %v3768 = vadd.f32 %v3743, %v3766
    %v3770 = vperm.slane %v3057, 0
    %v3772 = vadd.f32 %v3768, %v3770
    %v3774 = vsel %vm645, %v3088, 0
    %v3777 = vsel %vm645, %v3192, 0
    %3779 = vmatpush.xpose.msra.mxu0 0.0
    %3780 = vmatpush.xpose.msra.mxu0 0.0
    %3781 = vmatpush.xpose.msra.mxu0 0.0
    %3782 = vmatpush.xpose.msra.mxu0 0.0
    %3783 = vmatpush.xpose.msra.mxu0 0.0
    %3784 = vmatpush.xpose.msra.mxu0 0.0
    %3785 = vmatpush.xpose.msra.mxu0 0.0
    %3786 = vmatpush.xpose.msra.mxu0 0.0
    %3787 = vmatpush.xpose.msra.mxu0 0.0
    %3788 = vmatpush.xpose.msra.mxu0 0.0
    %3789 = vmatpush.xpose.msra.mxu0 0.0
    %3790 = vmatpush.xpose.msra.mxu0 0.0
    %3791 = vmatpush.xpose.msra.mxu0 0.0
    %3792 = vmatpush.xpose.msra.mxu0 0.0
    %3793 = vmatpush.xpose.msra.mxu0 0.0
    %3794 = vmatpush.xpose.msra.mxu0 %v3777
    %3795 = vmatmul.f32.gmra.mxu0 %v3774
    %v3796 = vpop.f32.mrf.mxu0
    %v3797 = vadd.f32 0.0, %v3796
    %3798 = vdwg.mxu0
    %v3799 = vmul.f32 %v3797, 0.35355338
    %v3800 = vadd.f32 %v3799, %v160
    %v3801 = vsel %vm645, %v3800, -inf
    %3802 = vmax.xlane.f32.xlu0 %v3801
    %v3803 = vpop.xlane.xlu0 %3802
    %v3804 = vsub.f32 %v3800, %v3803
    %v3805 = vmul.f32 %v3804, 1.442695
    %v3806 = vpow.pop %v3805
    %v3807 = vsel %vm645, %v3806, 0.0
    %3808 = vadd.xlane.f32.xlu0 %v3807
    %v3809 = vpop.xlane.xlu0 %3808
    %v3810 = vrcp.pop %v3809
    %v3811 = vmul.f32 %v3809, %v3810
    %v3812 = vsub.f32 1.0, %v3811
    %v3813 = vmul.f32 %v3810, %v3812
    %v3814 = vadd.f32 %v3810, %v3813
    %vm3815 = vweird.f32 %v3809
    %vm3816 = vweird.f32 %v3810
    %vm3817 = vmor %vm3815, %vm3816
    %v3818 = vsel %vm3817, %v3810, %v3814
    %v3819 = vand.u32 2147483647, %v3809
    %vm3820 = vcmp.eq.f32.partialorder %v3819, 8.507059e+37
    %v3821 = vand.u32 %v3809, 2147483648
    %v3822 = vor.u32 1.1754944e-38, %v3821
    %v3823 = vsel %vm3820, %v3822, %v3818
    %v3824 = vmul.f32 %v3806, %v3823
    %v3826 = vsel %vm645, %v3824, 0
    %3828 = vmatpush.msra.mxu0 0.0
    %3829 = vmatpush.msra.mxu0 0.0
    %3830 = vmatpush.msra.mxu0 0.0
    %3831 = vmatpush.msra.mxu0 0.0
    %3832 = vmatpush.msra.mxu0 0.0
    %3833 = vmatpush.msra.mxu0 0.0
    %3834 = vmatpush.msra.mxu0 0.0
    %3835 = vmatpush.msra.mxu0 0.0
    %3836 = vmatpush.msra.mxu0 0.0
    %3837 = vmatpush.msra.mxu0 0.0
    %3838 = vmatpush.msra.mxu0 0.0
    %3839 = vmatpush.msra.mxu0 0.0
    %3840 = vmatpush.msra.mxu0 0.0
    %3841 = vmatpush.msra.mxu0 0.0
    %3842 = vmatpush.msra.mxu0 0.0
    %3843 = vmatpush.msra.mxu0 %v3296
    %3844 = vmatmul.f32.gmra.mxu0 %v3826
    %v3845 = vpop.f32.mrf.mxu0
    %v3846 = vadd.f32 0.0, %v3845
    %3847 = vdwg.mxu0
    %v3849 = vsel %vm645, %v3114, 0
    %v3852 = vsel %vm645, %v3218, 0
    %3854 = vmatpush.xpose.msra.mxu0 0.0
    %3855 = vmatpush.xpose.msra.mxu0 0.0
    %3856 = vmatpush.xpose.msra.mxu0 0.0
    %3857 = vmatpush.xpose.msra.mxu0 0.0
    %3858 = vmatpush.xpose.msra.mxu0 0.0
    %3859 = vmatpush.xpose.msra.mxu0 0.0
    %3860 = vmatpush.xpose.msra.mxu0 0.0
    %3861 = vmatpush.xpose.msra.mxu0 0.0
    %3862 = vmatpush.xpose.msra.mxu0 0.0
    %3863 = vmatpush.xpose.msra.mxu0 0.0
    %3864 = vmatpush.xpose.msra.mxu0 0.0
    %3865 = vmatpush.xpose.msra.mxu0 0.0
    %3866 = vmatpush.xpose.msra.mxu0 0.0
    %3867 = vmatpush.xpose.msra.mxu0 0.0
    %3868 = vmatpush.xpose.msra.mxu0 0.0
    %3869 = vmatpush.xpose.msra.mxu0 %v3852
    %3870 = vmatmul.f32.gmra.mxu0 %v3849
    %v3871 = vpop.f32.mrf.mxu0
    %v3872 = vadd.f32 0.0, %v3871
    %3873 = vdwg.mxu0
    %v3874 = vmul.f32 %v3872, 0.35355338
    %v3875 = vadd.f32 %v3874, %v160
    %v3876 = vsel %vm645, %v3875, -inf
    %3877 = vmax.xlane.f32.xlu0 %v3876
    %v3878 = vpop.xlane.xlu0 %3877
    %v3879 = vsub.f32 %v3875, %v3878
    %v3880 = vmul.f32 %v3879, 1.442695
    %v3881 = vpow.pop %v3880
    %v3882 = vsel %vm645, %v3881, 0.0
    %3883 = vadd.xlane.f32.xlu0 %v3882
    %v3884 = vpop.xlane.xlu0 %3883
    %v3885 = vrcp.pop %v3884
    %v3886 = vmul.f32 %v3884, %v3885
    %v3887 = vsub.f32 1.0, %v3886
    %v3888 = vmul.f32 %v3885, %v3887
    %v3889 = vadd.f32 %v3885, %v3888
    %vm3890 = vweird.f32 %v3884
    %vm3891 = vweird.f32 %v3885
    %vm3892 = vmor %vm3890, %vm3891
    %v3893 = vsel %vm3892, %v3885, %v3889
    %v3894 = vand.u32 2147483647, %v3884
    %vm3895 = vcmp.eq.f32.partialorder %v3894, 8.507059e+37
    %v3896 = vand.u32 %v3884, 2147483648
    %v3897 = vor.u32 1.1754944e-38, %v3896
    %v3898 = vsel %vm3895, %v3897, %v3893
    %v3899 = vmul.f32 %v3881, %v3898
    %v3901 = vsel %vm645, %v3899, 0
    %3903 = vmatpush.msra.mxu0 0.0
    %3904 = vmatpush.msra.mxu0 0.0
    %3905 = vmatpush.msra.mxu0 0.0
    %3906 = vmatpush.msra.mxu0 0.0
    %3907 = vmatpush.msra.mxu0 0.0
    %3908 = vmatpush.msra.mxu0 0.0
    %3909 = vmatpush.msra.mxu0 0.0
    %3910 = vmatpush.msra.mxu0 0.0
    %3911 = vmatpush.msra.mxu0 0.0
    %3912 = vmatpush.msra.mxu0 0.0
    %3913 = vmatpush.msra.mxu0 0.0
    %3914 = vmatpush.msra.mxu0 0.0
    %3915 = vmatpush.msra.mxu0 0.0
    %3916 = vmatpush.msra.mxu0 0.0
    %3917 = vmatpush.msra.mxu0 0.0
    %3918 = vmatpush.msra.mxu0 %v3322
    %3919 = vmatmul.f32.gmra.mxu0 %v3901
    %v3920 = vpop.f32.mrf.mxu0
    %v3921 = vadd.f32 0.0, %v3920
    %3922 = vdwg.mxu0
    %v3924 = vsel %vm645, %v3921, 0
    %3926 = vmatpush.msra.mxu0 0.0
    %3927 = vmatpush.msra.mxu0 0.0
    %3928 = vmatpush.msra.mxu0 0.0
    %3929 = vmatpush.msra.mxu0 0.0
    %3930 = vmatpush.msra.mxu0 0.0
    %3931 = vmatpush.msra.mxu0 0.0
    %3932 = vmatpush.msra.mxu0 0.0
    %3933 = vmatpush.msra.mxu0 0.0
    %3934 = vmatpush.msra.mxu0 0.0
    %3935 = vmatpush.msra.mxu0 0.0
    %3936 = vmatpush.msra.mxu0 0.0
    %3937 = vmatpush.msra.mxu0 0.0
    %3938 = vmatpush.msra.mxu0 0.0
    %3939 = vmatpush.msra.mxu0 0.0
    %3940 = vmatpush.msra.mxu0 0.0
    %3941 = vmatpush.msra.mxu0 %v3038
    %3942 = vmatmul.f32.gmra.mxu0 %v3924
    %v3943 = vpop.f32.mrf.mxu0
    %v3944 = vadd.f32 0.0, %v3943
    %3945 = vdwg.mxu0
    %v3947 = vsel %vm645, %v3140, 0
    %v3950 = vsel %vm645, %v3244, 0
    %3952 = vmatpush.xpose.msra.mxu0 0.0
    %3953 = vmatpush.xpose.msra.mxu0 0.0
    %3954 = vmatpush.xpose.msra.mxu0 0.0
    %3955 = vmatpush.xpose.msra.mxu0 0.0
    %3956 = vmatpush.xpose.msra.mxu0 0.0
    %3957 = vmatpush.xpose.msra.mxu0 0.0
    %3958 = vmatpush.xpose.msra.mxu0 0.0
    %3959 = vmatpush.xpose.msra.mxu0 0.0
    %3960 = vmatpush.xpose.msra.mxu0 0.0
    %3961 = vmatpush.xpose.msra.mxu0 0.0
    %3962 = vmatpush.xpose.msra.mxu0 0.0
    %3963 = vmatpush.xpose.msra.mxu0 0.0
    %3964 = vmatpush.xpose.msra.mxu0 0.0
    %3965 = vmatpush.xpose.msra.mxu0 0.0
    %3966 = vmatpush.xpose.msra.mxu0 0.0
    %3967 = vmatpush.xpose.msra.mxu0 %v3950
    %3968 = vmatmul.f32.gmra.mxu0 %v3947
    %v3969 = vpop.f32.mrf.mxu0
    %v3970 = vadd.f32 0.0, %v3969
    %3971 = vdwg.mxu0
    %v3972 = vmul.f32 %v3970, 0.35355338
    %v3973 = vadd.f32 %v3972, %v160
    %v3974 = vsel %vm645, %v3973, -inf
    %3975 = vmax.xlane.f32.xlu0 %v3974
    %v3976 = vpop.xlane.xlu0 %3975
    %v3977 = vsub.f32 %v3973, %v3976
    %v3978 = vmul.f32 %v3977, 1.442695
    %v3979 = vpow.pop %v3978
    %v3980 = vsel %vm645, %v3979, 0.0
    %3981 = vadd.xlane.f32.xlu0 %v3980
    %v3982 = vpop.xlane.xlu0 %3981
    %v3983 = vrcp.pop %v3982
    %v3984 = vmul.f32 %v3982, %v3983
    %v3985 = vsub.f32 1.0, %v3984
    %v3986 = vmul.f32 %v3983, %v3985
    %v3987 = vadd.f32 %v3983, %v3986
    %vm3988 = vweird.f32 %v3982
    %vm3989 = vweird.f32 %v3983
    %vm3990 = vmor %vm3988, %vm3989
    %v3991 = vsel %vm3990, %v3983, %v3987
    %v3992 = vand.u32 2147483647, %v3982
    %vm3993 = vcmp.eq.f32.partialorder %v3992, 8.507059e+37
    %v3994 = vand.u32 %v3982, 2147483648
    %v3995 = vor.u32 1.1754944e-38, %v3994
    %v3996 = vsel %vm3993, %v3995, %v3991
    %v3997 = vmul.f32 %v3979, %v3996
    %v3999 = vsel %vm645, %v3997, 0
    %4001 = vmatpush.msra.mxu0 0.0
    %4002 = vmatpush.msra.mxu0 0.0
    %4003 = vmatpush.msra.mxu0 0.0
    %4004 = vmatpush.msra.mxu0 0.0
    %4005 = vmatpush.msra.mxu0 0.0
    %4006 = vmatpush.msra.mxu0 0.0
    %4007 = vmatpush.msra.mxu0 0.0
    %4008 = vmatpush.msra.mxu0 0.0
    %4009 = vmatpush.msra.mxu0 0.0
    %4010 = vmatpush.msra.mxu0 0.0
    %4011 = vmatpush.msra.mxu0 0.0
    %4012 = vmatpush.msra.mxu0 0.0
    %4013 = vmatpush.msra.mxu0 0.0
    %4014 = vmatpush.msra.mxu0 0.0
    %4015 = vmatpush.msra.mxu0 0.0
    %4016 = vmatpush.msra.mxu0 %v3348
    %4017 = vmatmul.f32.gmra.mxu0 %v3999
    %v4018 = vpop.f32.mrf.mxu0
    %v4019 = vadd.f32 0.0, %v4018
    %4020 = vdwg.mxu0
    %v4022 = vsel %vm645, %v3166, 0
    %v4025 = vsel %vm645, %v3270, 0
    %4027 = vmatpush.xpose.msra.mxu0 0.0
    %4028 = vmatpush.xpose.msra.mxu0 0.0
    %4029 = vmatpush.xpose.msra.mxu0 0.0
    %4030 = vmatpush.xpose.msra.mxu0 0.0
    %4031 = vmatpush.xpose.msra.mxu0 0.0
    %4032 = vmatpush.xpose.msra.mxu0 0.0
    %4033 = vmatpush.xpose.msra.mxu0 0.0
    %4034 = vmatpush.xpose.msra.mxu0 0.0
    %4035 = vmatpush.xpose.msra.mxu0 0.0
    %4036 = vmatpush.xpose.msra.mxu0 0.0
    %4037 = vmatpush.xpose.msra.mxu0 0.0
    %4038 = vmatpush.xpose.msra.mxu0 0.0
    %4039 = vmatpush.xpose.msra.mxu0 0.0
    %4040 = vmatpush.xpose.msra.mxu0 0.0
    %4041 = vmatpush.xpose.msra.mxu0 0.0
    %4042 = vmatpush.xpose.msra.mxu0 %v4025
    %4043 = vmatmul.f32.gmra.mxu0 %v4022
    %v4044 = vpop.f32.mrf.mxu0
    %v4045 = vadd.f32 0.0, %v4044
    %4046 = vdwg.mxu0
    %v4047 = vmul.f32 %v4045, 0.35355338
    %v4048 = vadd.f32 %v4047, %v160
    %v4049 = vsel %vm645, %v4048, -inf
    %4050 = vmax.xlane.f32.xlu0 %v4049
    %v4051 = vpop.xlane.xlu0 %4050
    %v4052 = vsub.f32 %v4048, %v4051
    %v4053 = vmul.f32 %v4052, 1.442695
    %v4054 = vpow.pop %v4053
    %v4055 = vsel %vm645, %v4054, 0.0
    %4056 = vadd.xlane.f32.xlu0 %v4055
    %v4057 = vpop.xlane.xlu0 %4056
    %v4058 = vrcp.pop %v4057
    %v4059 = vmul.f32 %v4057, %v4058
    %v4060 = vsub.f32 1.0, %v4059
    %v4061 = vmul.f32 %v4058, %v4060
    %v4062 = vadd.f32 %v4058, %v4061
    %vm4063 = vweird.f32 %v4057
    %vm4064 = vweird.f32 %v4058
    %vm4065 = vmor %vm4063, %vm4064
    %v4066 = vsel %vm4065, %v4058, %v4062
    %v4067 = vand.u32 2147483647, %v4057
    %vm4068 = vcmp.eq.f32.partialorder %v4067, 8.507059e+37
    %v4069 = vand.u32 %v4057, 2147483648
    %v4070 = vor.u32 1.1754944e-38, %v4069
    %v4071 = vsel %vm4068, %v4070, %v4066
    %v4072 = vmul.f32 %v4054, %v4071
    %v4074 = vsel %vm645, %v4072, 0
    %4076 = vmatpush.msra.mxu0 0.0
    %4077 = vmatpush.msra.mxu0 0.0
    %4078 = vmatpush.msra.mxu0 0.0
    %4079 = vmatpush.msra.mxu0 0.0
    %4080 = vmatpush.msra.mxu0 0.0
    %4081 = vmatpush.msra.mxu0 0.0
    %4082 = vmatpush.msra.mxu0 0.0
    %4083 = vmatpush.msra.mxu0 0.0
    %4084 = vmatpush.msra.mxu0 0.0
    %4085 = vmatpush.msra.mxu0 0.0
    %4086 = vmatpush.msra.mxu0 0.0
    %4087 = vmatpush.msra.mxu0 0.0
    %4088 = vmatpush.msra.mxu0 0.0
    %4089 = vmatpush.msra.mxu0 0.0
    %4090 = vmatpush.msra.mxu0 0.0
    %4091 = vmatpush.msra.mxu0 %v3374
    %4092 = vmatmul.f32.gmra.mxu0 %v4074
    %v4093 = vpop.f32.mrf.mxu0
    %v4094 = vadd.f32 0.0, %v4093
    %4095 = vdwg.mxu0
    %v4097 = vsel %vm645, %v4094, 0
    %4099 = vmatpush.msra.mxu0 0.0
    %4100 = vmatpush.msra.mxu0 0.0
    %4101 = vmatpush.msra.mxu0 0.0
    %4102 = vmatpush.msra.mxu0 0.0
    %4103 = vmatpush.msra.mxu0 0.0
    %4104 = vmatpush.msra.mxu0 0.0
    %4105 = vmatpush.msra.mxu0 0.0
    %4106 = vmatpush.msra.mxu0 0.0
    %4107 = vmatpush.msra.mxu0 0.0
    %4108 = vmatpush.msra.mxu0 0.0
    %4109 = vmatpush.msra.mxu0 0.0
    %4110 = vmatpush.msra.mxu0 0.0
    %4111 = vmatpush.msra.mxu0 0.0
    %4112 = vmatpush.msra.mxu0 0.0
    %4113 = vmatpush.msra.mxu0 0.0
    %4114 = vmatpush.msra.mxu0 %v3040
    %4115 = vmatmul.f32.gmra.mxu0 %v4097
    %v4116 = vpop.f32.mrf.mxu0
    %v4117 = vadd.f32 0.0, %v4116
    %4118 = vdwg.mxu0
    %v4120 = vsel %vm645, %v3846, 0
    %4122 = vmatpush.msra.mxu0 0.0
    %4123 = vmatpush.msra.mxu0 0.0
    %4124 = vmatpush.msra.mxu0 0.0
    %4125 = vmatpush.msra.mxu0 0.0
    %4126 = vmatpush.msra.mxu0 0.0
    %4127 = vmatpush.msra.mxu0 0.0
    %4128 = vmatpush.msra.mxu0 0.0
    %4129 = vmatpush.msra.mxu0 0.0
    %4130 = vmatpush.msra.mxu0 0.0
    %4131 = vmatpush.msra.mxu0 0.0
    %4132 = vmatpush.msra.mxu0 0.0
    %4133 = vmatpush.msra.mxu0 0.0
    %4134 = vmatpush.msra.mxu0 0.0
    %4135 = vmatpush.msra.mxu0 0.0
    %4136 = vmatpush.msra.mxu0 0.0
    %4137 = vmatpush.msra.mxu0 %v3037
    %4138 = vmatmul.f32.gmra.mxu0 %v4120
    %v4139 = vpop.f32.mrf.mxu0
    %v4140 = vadd.f32 %v3944, %v4139
    %4141 = vdwg.mxu0
    %v4143 = vsel %vm645, %v4019, 0
    %4145 = vmatpush.msra.mxu0 0.0
    %4146 = vmatpush.msra.mxu0 0.0
    %4147 = vmatpush.msra.mxu0 0.0
    %4148 = vmatpush.msra.mxu0 0.0
    %4149 = vmatpush.msra.mxu0 0.0
    %4150 = vmatpush.msra.mxu0 0.0
    %4151 = vmatpush.msra.mxu0 0.0
    %4152 = vmatpush.msra.mxu0 0.0
    %4153 = vmatpush.msra.mxu0 0.0
    %4154 = vmatpush.msra.mxu0 0.0
    %4155 = vmatpush.msra.mxu0 0.0
    %4156 = vmatpush.msra.mxu0 0.0
    %4157 = vmatpush.msra.mxu0 0.0
    %4158 = vmatpush.msra.mxu0 0.0
    %4159 = vmatpush.msra.mxu0 0.0
    %4160 = vmatpush.msra.mxu0 %v3039
    %4161 = vmatmul.f32.gmra.mxu0 %v4143
    %v4162 = vpop.f32.mrf.mxu0
    %v4163 = vadd.f32 %v4117, %v4162
    %4164 = vdwg.mxu0
    %v4165 = vadd.f32 %v4140, %v4163
    %v4166 = vadd.f32 %v4165, %v3770
    %v4167 = vadd.f32 %v2891, %v3772
    %v4168 = vadd.f32 %v2892, %v4166
    %s4169 = scalar_lea.vmem %s6, 4
    %v4170 = vld [vmem:[%s4169] sm:$0x1]
    %s4171 = scalar_lea.vmem %s7, 4
    %v4172 = vld [vmem:[%s4171] sm:$0x1]
    %v4173 = vsel %vm166, %v4167, 0.0
    %4174 = vadd.xlane.f32.xlu0 %v4173
    %v4175 = vpop.xlane.xlu0 %4174
    %v4176 = vsel %vm166, %v4168, 0.0
    %4177 = vadd.xlane.f32.xlu0 %v4176
    %v4178 = vpop.xlane.xlu0 %4177
    %v4179 = vmul.f32 %v4175, %v179
    %v4180 = vmul.f32 %v4178, %v179
    %v4181 = vsub.f32 %v4167, %v4179
    %v4182 = vsub.f32 %v4168, %v4180
    %v4183 = vmul.f32 %v4181, %v4181
    %v4184 = vmul.f32 %v4182, %v4182
    %v4185 = vsel %vm166, %v4183, 0.0
    %4186 = vadd.xlane.f32.xlu0 %v4185
    %v4187 = vpop.xlane.xlu0 %4186
    %v4188 = vsel %vm166, %v4184, 0.0
    %4189 = vadd.xlane.f32.xlu0 %v4188
    %v4190 = vpop.xlane.xlu0 %4189
    %v4191 = vmul.f32 %v4187, 0.032258064
    %v4192 = vmul.f32 %v4190, 0.032258064
    %v4193 = vrsqrt.pop %v4191
    %v4194 = vmul.f32 %v4193, %v4191
    %v4195 = vmul.f32 %v4194, %v4193
    %v4196 = vmul.f32 0.5, %v4195
    %v4197 = vsub.f32 1.5, %v4196
    %v4198 = vmul.f32 %v4193, %v4197
    %v4199 = vmul.f32 %v4191, %v4198
    %vm4200 = vcmp.eq.f32.partialorder %v4191, inf
    %v4201 = vsel %vm4200, %v4191, %v4199
    %vm4202 = vcmp.eq.f32.partialorder %v4191, 0.0
    %v4203 = vand.u32 %v4191, 2147483648
    %v4204 = vsel %vm4202, %v4203, %v4201
    %v4205 = vrsqrt.pop %v4192
    %v4206 = vmul.f32 %v4205, %v4192
    %v4207 = vmul.f32 %v4206, %v4205
    %v4208 = vmul.f32 0.5, %v4207
    %v4209 = vsub.f32 1.5, %v4208
    %v4210 = vmul.f32 %v4205, %v4209
    %v4211 = vmul.f32 %v4192, %v4210
    %vm4212 = vcmp.eq.f32.partialorder %v4192, inf
    %v4213 = vsel %vm4212, %v4192, %v4211
    %vm4214 = vcmp.eq.f32.partialorder %v4192, 0.0
    %v4215 = vand.u32 %v4192, 2147483648
    %v4216 = vsel %vm4214, %v4215, %v4213
    %v4217 = vadd.f32 %v4204, 1e-06
    %v4218 = vadd.f32 %v4216, 1e-06
    %v4219 = vrcp.pop %v4217
    %v4220 = vmul.f32 %v4217, %v4219
    %v4221 = vsub.f32 1.0, %v4220
    %v4222 = vmul.f32 %v4219, %v4221
    %v4223 = vadd.f32 %v4219, %v4222
    %vm4224 = vweird.f32 %v4217
    %vm4225 = vweird.f32 %v4219
    %vm4226 = vmor %vm4224, %vm4225
    %v4227 = vsel %vm4226, %v4219, %v4223
    %v4228 = vand.u32 2147483647, %v4217
    %vm4229 = vcmp.eq.f32.partialorder %v4228, 8.507059e+37
    %v4230 = vand.u32 %v4217, 2147483648
    %v4231 = vor.u32 1.1754944e-38, %v4230
    %v4232 = vsel %vm4229, %v4231, %v4227
    %v4233 = vmul.f32 1.0, %v4232
    %v4234 = vrcp.pop %v4218
    %v4235 = vmul.f32 %v4218, %v4234
    %v4236 = vsub.f32 1.0, %v4235
    %v4237 = vmul.f32 %v4234, %v4236
    %v4238 = vadd.f32 %v4234, %v4237
    %vm4239 = vweird.f32 %v4218
    %vm4240 = vweird.f32 %v4234
    %vm4241 = vmor %vm4239, %vm4240
    %v4242 = vsel %vm4241, %v4234, %v4238
    %v4243 = vand.u32 2147483647, %v4218
    %vm4244 = vcmp.eq.f32.partialorder %v4243, 8.507059e+37
    %v4245 = vand.u32 %v4218, 2147483648
    %v4246 = vor.u32 1.1754944e-38, %v4245
    %v4247 = vsel %vm4244, %v4246, %v4242
    %v4248 = vmul.f32 1.0, %v4247
    %v4249 = vmul.f32 %v4181, %v4233
    %v4250 = vmul.f32 %v4182, %v4248
    %v4252 = vperm.slane %v4170, 0
    %v4254 = vmul.f32 %v4252, %v4249
    %v4255 = vmul.f32 %v4252, %v4250
    %v4257 = vperm.slane %v4172, 0
    %v4259 = vadd.f32 %v4254, %v4257
    %v4260 = vadd.f32 %v4255, %v4257
    %s4261 = scalar_lea.vmem %s16, 128
    %v4262 = vld [vmem:[%s4261] sm:$0xff]
    %v4263 = vld [vmem:[%s4261 + $0x8] sm:$0xff]
    %v4264 = vld [vmem:[%s4261 + $0x10] sm:$0xff]
    %v4265 = vld [vmem:[%s4261 + $0x18] sm:$0xff]
    %v4266 = vld [vmem:[%s4261 + $0x20] sm:$0xff]
    %v4267 = vld [vmem:[%s4261 + $0x28] sm:$0xff]
    %v4268 = vld [vmem:[%s4261 + $0x30] sm:$0xff]
    %v4269 = vld [vmem:[%s4261 + $0x38] sm:$0xff]
    %v4270 = vld [vmem:[%s4261 + $0x40] sm:$0xff]
    %v4271 = vld [vmem:[%s4261 + $0x48] sm:$0xff]
    %v4272 = vld [vmem:[%s4261 + $0x50] sm:$0xff]
    %v4273 = vld [vmem:[%s4261 + $0x58] sm:$0xff]
    %v4274 = vld [vmem:[%s4261 + $0x60] sm:$0xff]
    %v4275 = vld [vmem:[%s4261 + $0x68] sm:$0xff]
    %v4276 = vld [vmem:[%s4261 + $0x70] sm:$0xff]
    %v4277 = vld [vmem:[%s4261 + $0x78] sm:$0xff]
    %s4278 = scalar_lea.vmem %s18, 128
    %v4279 = vld [vmem:[%s4278] sm:$0xff]
    %v4280 = vld [vmem:[%s4278 + $0x8] sm:$0xff]
    %v4281 = vld [vmem:[%s4278 + $0x10] sm:$0xff]
    %v4282 = vld [vmem:[%s4278 + $0x18] sm:$0xff]
    %v4283 = vld [vmem:[%s4278 + $0x20] sm:$0xff]
    %v4284 = vld [vmem:[%s4278 + $0x28] sm:$0xff]
    %v4285 = vld [vmem:[%s4278 + $0x30] sm:$0xff]
    %v4286 = vld [vmem:[%s4278 + $0x38] sm:$0xff]
    %v4287 = vld [vmem:[%s4278 + $0x40] sm:$0xff]
    %v4288 = vld [vmem:[%s4278 + $0x48] sm:$0xff]
    %v4289 = vld [vmem:[%s4278 + $0x50] sm:$0xff]
    %v4290 = vld [vmem:[%s4278 + $0x58] sm:$0xff]
    %v4291 = vld [vmem:[%s4278 + $0x60] sm:$0xff]
    %v4292 = vld [vmem:[%s4278 + $0x68] sm:$0xff]
    %v4293 = vld [vmem:[%s4278 + $0x70] sm:$0xff]
    %v4294 = vld [vmem:[%s4278 + $0x78] sm:$0xff]
    %s4295 = scalar_lea.vmem %s20, 128
    %v4296 = vld [vmem:[%s4295] sm:$0xff]
    %v4297 = vld [vmem:[%s4295 + $0x8] sm:$0xff]
    %v4298 = vld [vmem:[%s4295 + $0x10] sm:$0xff]
    %v4299 = vld [vmem:[%s4295 + $0x18] sm:$0xff]
    %v4300 = vld [vmem:[%s4295 + $0x20] sm:$0xff]
    %v4301 = vld [vmem:[%s4295 + $0x28] sm:$0xff]
    %v4302 = vld [vmem:[%s4295 + $0x30] sm:$0xff]
    %v4303 = vld [vmem:[%s4295 + $0x38] sm:$0xff]
    %v4304 = vld [vmem:[%s4295 + $0x40] sm:$0xff]
    %v4305 = vld [vmem:[%s4295 + $0x48] sm:$0xff]
    %v4306 = vld [vmem:[%s4295 + $0x50] sm:$0xff]
    %v4307 = vld [vmem:[%s4295 + $0x58] sm:$0xff]
    %v4308 = vld [vmem:[%s4295 + $0x60] sm:$0xff]
    %v4309 = vld [vmem:[%s4295 + $0x68] sm:$0xff]
    %v4310 = vld [vmem:[%s4295 + $0x70] sm:$0xff]
    %v4311 = vld [vmem:[%s4295 + $0x78] sm:$0xff]
    %s4312 = scalar_lea.vmem %s22, 32
    %v4313 = vld [vmem:[%s4312] sm:$0xff]
    %v4314 = vld [vmem:[%s4312 + $0x8] sm:$0xff]
    %v4315 = vld [vmem:[%s4312 + $0x10] sm:$0xff]
    %v4316 = vld [vmem:[%s4312 + $0x18] sm:$0xff]
    %s4317 = scalar_lea.vmem %s17, 4
    %v4318 = vld [vmem:[%s4317] sm:$0x1]
    %v4319 = vld [vmem:[%s4317 + $0x1] sm:$0x1]
    %v4320 = vld [vmem:[%s4317 + $0x2] sm:$0x1]
    %v4321 = vld [vmem:[%s4317 + $0x3] sm:$0x1]
    %s4322 = scalar_lea.vmem %s19, 4
    %v4323 = vld [vmem:[%s4322] sm:$0x1]
    %v4324 = vld [vmem:[%s4322 + $0x1] sm:$0x1]
    %v4325 = vld [vmem:[%s4322 + $0x2] sm:$0x1]
    %v4326 = vld [vmem:[%s4322 + $0x3] sm:$0x1]
    %s4327 = scalar_lea.vmem %s21, 4
    %v4328 = vld [vmem:[%s4327] sm:$0x1]
    %v4329 = vld [vmem:[%s4327 + $0x1] sm:$0x1]
    %v4330 = vld [vmem:[%s4327 + $0x2] sm:$0x1]
    %v4331 = vld [vmem:[%s4327 + $0x3] sm:$0x1]
    %s4332 = scalar_lea.vmem %s23, 1
    %v4333 = vld [vmem:[%s4332] sm:$0x1]
    %v4335 = vperm.slane %v4318, 0
    %v4338 = vsel %vm166, %v4259, 0
    %v4341 = vsel %vm166, %v4260, 0
    %4343 = vmatpush.msra.mxu0 0.0
    %4344 = vmatpush.msra.mxu0 0.0
    %4345 = vmatpush.msra.mxu0 0.0
    %4346 = vmatpush.msra.mxu0 0.0
    %4347 = vmatpush.msra.mxu0 0.0
    %4348 = vmatpush.msra.mxu0 0.0
    %4349 = vmatpush.msra.mxu0 0.0
    %4350 = vmatpush.msra.mxu0 0.0
    %4351 = vmatpush.msra.mxu0 0.0
    %4352 = vmatpush.msra.mxu0 0.0
    %4353 = vmatpush.msra.mxu0 0.0
    %4354 = vmatpush.msra.mxu0 0.0
    %4355 = vmatpush.msra.mxu0 %v4265
    %4356 = vmatpush.msra.mxu0 %v4264
    %4357 = vmatpush.msra.mxu0 %v4263
    %4358 = vmatpush.msra.mxu0 %v4262
    %4359 = vmatmul.f32.gmra.mxu0 %v4338
    %v4360 = vpop.f32.mrf.mxu0
    %v4361 = vadd.f32 %v4335, %v4360
    %4362 = vmatmul.f32.gmra.mxu0 %v4341
    %v4363 = vpop.f32.mrf.mxu0
    %v4364 = vadd.f32 %v4335, %v4363
    %4365 = vdwg.mxu0
    %v4367 = vperm.slane %v4319, 0
    %4369 = vmatpush.msra.mxu0 0.0
    %4370 = vmatpush.msra.mxu0 0.0
    %4371 = vmatpush.msra.mxu0 0.0
    %4372 = vmatpush.msra.mxu0 0.0
    %4373 = vmatpush.msra.mxu0 0.0
    %4374 = vmatpush.msra.mxu0 0.0
    %4375 = vmatpush.msra.mxu0 0.0
    %4376 = vmatpush.msra.mxu0 0.0
    %4377 = vmatpush.msra.mxu0 0.0
    %4378 = vmatpush.msra.mxu0 0.0
    %4379 = vmatpush.msra.mxu0 0.0
    %4380 = vmatpush.msra.mxu0 0.0
    %4381 = vmatpush.msra.mxu0 %v4269
    %4382 = vmatpush.msra.mxu0 %v4268
    %4383 = vmatpush.msra.mxu0 %v4267
    %4384 = vmatpush.msra.mxu0 %v4266
    %4385 = vmatmul.f32.gmra.mxu0 %v4338
    %v4386 = vpop.f32.mrf.mxu0
    %v4387 = vadd.f32 %v4367, %v4386
    %4388 = vmatmul.f32.gmra.mxu0 %v4341
    %v4389 = vpop.f32.mrf.mxu0
    %v4390 = vadd.f32 %v4367, %v4389
    %4391 = vdwg.mxu0
    %v4393 = vperm.slane %v4320, 0
    %4395 = vmatpush.msra.mxu0 0.0
    %4396 = vmatpush.msra.mxu0 0.0
    %4397 = vmatpush.msra.mxu0 0.0
    %4398 = vmatpush.msra.mxu0 0.0
    %4399 = vmatpush.msra.mxu0 0.0
    %4400 = vmatpush.msra.mxu0 0.0
    %4401 = vmatpush.msra.mxu0 0.0
    %4402 = vmatpush.msra.mxu0 0.0
    %4403 = vmatpush.msra.mxu0 0.0
    %4404 = vmatpush.msra.mxu0 0.0
    %4405 = vmatpush.msra.mxu0 0.0
    %4406 = vmatpush.msra.mxu0 0.0
    %4407 = vmatpush.msra.mxu0 %v4273
    %4408 = vmatpush.msra.mxu0 %v4272
    %4409 = vmatpush.msra.mxu0 %v4271
    %4410 = vmatpush.msra.mxu0 %v4270
    %4411 = vmatmul.f32.gmra.mxu0 %v4338
    %v4412 = vpop.f32.mrf.mxu0
    %v4413 = vadd.f32 %v4393, %v4412
    %4414 = vmatmul.f32.gmra.mxu0 %v4341
    %v4415 = vpop.f32.mrf.mxu0
    %v4416 = vadd.f32 %v4393, %v4415
    %4417 = vdwg.mxu0
    %v4419 = vperm.slane %v4321, 0
    %4421 = vmatpush.msra.mxu0 0.0
    %4422 = vmatpush.msra.mxu0 0.0
    %4423 = vmatpush.msra.mxu0 0.0
    %4424 = vmatpush.msra.mxu0 0.0
    %4425 = vmatpush.msra.mxu0 0.0
    %4426 = vmatpush.msra.mxu0 0.0
    %4427 = vmatpush.msra.mxu0 0.0
    %4428 = vmatpush.msra.mxu0 0.0
    %4429 = vmatpush.msra.mxu0 0.0
    %4430 = vmatpush.msra.mxu0 0.0
    %4431 = vmatpush.msra.mxu0 0.0
    %4432 = vmatpush.msra.mxu0 0.0
    %4433 = vmatpush.msra.mxu0 %v4277
    %4434 = vmatpush.msra.mxu0 %v4276
    %4435 = vmatpush.msra.mxu0 %v4275
    %4436 = vmatpush.msra.mxu0 %v4274
    %4437 = vmatmul.f32.gmra.mxu0 %v4338
    %v4438 = vpop.f32.mrf.mxu0
    %v4439 = vadd.f32 %v4419, %v4438
    %4440 = vmatmul.f32.gmra.mxu0 %v4341
    %v4441 = vpop.f32.mrf.mxu0
    %v4442 = vadd.f32 %v4419, %v4441
    %4443 = vdwg.mxu0
    %v4445 = vperm.slane %v4323, 0
    %4447 = vmatpush.msra.mxu0 0.0
    %4448 = vmatpush.msra.mxu0 0.0
    %4449 = vmatpush.msra.mxu0 0.0
    %4450 = vmatpush.msra.mxu0 0.0
    %4451 = vmatpush.msra.mxu0 0.0
    %4452 = vmatpush.msra.mxu0 0.0
    %4453 = vmatpush.msra.mxu0 0.0
    %4454 = vmatpush.msra.mxu0 0.0
    %4455 = vmatpush.msra.mxu0 0.0
    %4456 = vmatpush.msra.mxu0 0.0
    %4457 = vmatpush.msra.mxu0 0.0
    %4458 = vmatpush.msra.mxu0 0.0
    %4459 = vmatpush.msra.mxu0 %v4282
    %4460 = vmatpush.msra.mxu0 %v4281
    %4461 = vmatpush.msra.mxu0 %v4280
    %4462 = vmatpush.msra.mxu0 %v4279
    %4463 = vmatmul.f32.gmra.mxu0 %v1710
    %v4464 = vpop.f32.mrf.mxu0
    %v4465 = vadd.f32 %v4445, %v4464
    %4466 = vmatmul.f32.gmra.mxu0 %v1713
    %v4467 = vpop.f32.mrf.mxu0
    %v4468 = vadd.f32 %v4445, %v4467
    %4469 = vdwg.mxu0
    %v4471 = vperm.slane %v4324, 0
    %4473 = vmatpush.msra.mxu0 0.0
    %4474 = vmatpush.msra.mxu0 0.0
    %4475 = vmatpush.msra.mxu0 0.0
    %4476 = vmatpush.msra.mxu0 0.0
    %4477 = vmatpush.msra.mxu0 0.0
    %4478 = vmatpush.msra.mxu0 0.0
    %4479 = vmatpush.msra.mxu0 0.0
    %4480 = vmatpush.msra.mxu0 0.0
    %4481 = vmatpush.msra.mxu0 0.0
    %4482 = vmatpush.msra.mxu0 0.0
    %4483 = vmatpush.msra.mxu0 0.0
    %4484 = vmatpush.msra.mxu0 0.0
    %4485 = vmatpush.msra.mxu0 %v4286
    %4486 = vmatpush.msra.mxu0 %v4285
    %4487 = vmatpush.msra.mxu0 %v4284
    %4488 = vmatpush.msra.mxu0 %v4283
    %4489 = vmatmul.f32.gmra.mxu0 %v1710
    %v4490 = vpop.f32.mrf.mxu0
    %v4491 = vadd.f32 %v4471, %v4490
    %4492 = vmatmul.f32.gmra.mxu0 %v1713
    %v4493 = vpop.f32.mrf.mxu0
    %v4494 = vadd.f32 %v4471, %v4493
    %4495 = vdwg.mxu0
    %v4497 = vperm.slane %v4325, 0
    %4499 = vmatpush.msra.mxu0 0.0
    %4500 = vmatpush.msra.mxu0 0.0
    %4501 = vmatpush.msra.mxu0 0.0
    %4502 = vmatpush.msra.mxu0 0.0
    %4503 = vmatpush.msra.mxu0 0.0
    %4504 = vmatpush.msra.mxu0 0.0
    %4505 = vmatpush.msra.mxu0 0.0
    %4506 = vmatpush.msra.mxu0 0.0
    %4507 = vmatpush.msra.mxu0 0.0
    %4508 = vmatpush.msra.mxu0 0.0
    %4509 = vmatpush.msra.mxu0 0.0
    %4510 = vmatpush.msra.mxu0 0.0
    %4511 = vmatpush.msra.mxu0 %v4290
    %4512 = vmatpush.msra.mxu0 %v4289
    %4513 = vmatpush.msra.mxu0 %v4288
    %4514 = vmatpush.msra.mxu0 %v4287
    %4515 = vmatmul.f32.gmra.mxu0 %v1710
    %v4516 = vpop.f32.mrf.mxu0
    %v4517 = vadd.f32 %v4497, %v4516
    %4518 = vmatmul.f32.gmra.mxu0 %v1713
    %v4519 = vpop.f32.mrf.mxu0
    %v4520 = vadd.f32 %v4497, %v4519
    %4521 = vdwg.mxu0
    %v4523 = vperm.slane %v4326, 0
    %4525 = vmatpush.msra.mxu0 0.0
    %4526 = vmatpush.msra.mxu0 0.0
    %4527 = vmatpush.msra.mxu0 0.0
    %4528 = vmatpush.msra.mxu0 0.0
    %4529 = vmatpush.msra.mxu0 0.0
    %4530 = vmatpush.msra.mxu0 0.0
    %4531 = vmatpush.msra.mxu0 0.0
    %4532 = vmatpush.msra.mxu0 0.0
    %4533 = vmatpush.msra.mxu0 0.0
    %4534 = vmatpush.msra.mxu0 0.0
    %4535 = vmatpush.msra.mxu0 0.0
    %4536 = vmatpush.msra.mxu0 0.0
    %4537 = vmatpush.msra.mxu0 %v4294
    %4538 = vmatpush.msra.mxu0 %v4293
    %4539 = vmatpush.msra.mxu0 %v4292
    %4540 = vmatpush.msra.mxu0 %v4291
    %4541 = vmatmul.f32.gmra.mxu0 %v1710
    %v4542 = vpop.f32.mrf.mxu0
    %v4543 = vadd.f32 %v4523, %v4542
    %4544 = vmatmul.f32.gmra.mxu0 %v1713
    %v4545 = vpop.f32.mrf.mxu0
    %v4546 = vadd.f32 %v4523, %v4545
    %4547 = vdwg.mxu0
    %v4549 = vperm.slane %v4328, 0
    %4551 = vmatpush.msra.mxu0 0.0
    %4552 = vmatpush.msra.mxu0 0.0
    %4553 = vmatpush.msra.mxu0 0.0
    %4554 = vmatpush.msra.mxu0 0.0
    %4555 = vmatpush.msra.mxu0 0.0
    %4556 = vmatpush.msra.mxu0 0.0
    %4557 = vmatpush.msra.mxu0 0.0
    %4558 = vmatpush.msra.mxu0 0.0
    %4559 = vmatpush.msra.mxu0 0.0
    %4560 = vmatpush.msra.mxu0 0.0
    %4561 = vmatpush.msra.mxu0 0.0
    %4562 = vmatpush.msra.mxu0 0.0
    %4563 = vmatpush.msra.mxu0 %v4299
    %4564 = vmatpush.msra.mxu0 %v4298
    %4565 = vmatpush.msra.mxu0 %v4297
    %4566 = vmatpush.msra.mxu0 %v4296
    %4567 = vmatmul.f32.gmra.mxu0 %v1710
    %v4568 = vpop.f32.mrf.mxu0
    %v4569 = vadd.f32 %v4549, %v4568
    %4570 = vmatmul.f32.gmra.mxu0 %v1713
    %v4571 = vpop.f32.mrf.mxu0
    %v4572 = vadd.f32 %v4549, %v4571
    %4573 = vdwg.mxu0
    %v4575 = vperm.slane %v4329, 0
    %4577 = vmatpush.msra.mxu0 0.0
    %4578 = vmatpush.msra.mxu0 0.0
    %4579 = vmatpush.msra.mxu0 0.0
    %4580 = vmatpush.msra.mxu0 0.0
    %4581 = vmatpush.msra.mxu0 0.0
    %4582 = vmatpush.msra.mxu0 0.0
    %4583 = vmatpush.msra.mxu0 0.0
    %4584 = vmatpush.msra.mxu0 0.0
    %4585 = vmatpush.msra.mxu0 0.0
    %4586 = vmatpush.msra.mxu0 0.0
    %4587 = vmatpush.msra.mxu0 0.0
    %4588 = vmatpush.msra.mxu0 0.0
    %4589 = vmatpush.msra.mxu0 %v4303
    %4590 = vmatpush.msra.mxu0 %v4302
    %4591 = vmatpush.msra.mxu0 %v4301
    %4592 = vmatpush.msra.mxu0 %v4300
    %4593 = vmatmul.f32.gmra.mxu0 %v1710
    %v4594 = vpop.f32.mrf.mxu0
    %v4595 = vadd.f32 %v4575, %v4594
    %4596 = vmatmul.f32.gmra.mxu0 %v1713
    %v4597 = vpop.f32.mrf.mxu0
    %v4598 = vadd.f32 %v4575, %v4597
    %4599 = vdwg.mxu0
    %v4601 = vperm.slane %v4330, 0
    %4603 = vmatpush.msra.mxu0 0.0
    %4604 = vmatpush.msra.mxu0 0.0
    %4605 = vmatpush.msra.mxu0 0.0
    %4606 = vmatpush.msra.mxu0 0.0
    %4607 = vmatpush.msra.mxu0 0.0
    %4608 = vmatpush.msra.mxu0 0.0
    %4609 = vmatpush.msra.mxu0 0.0
    %4610 = vmatpush.msra.mxu0 0.0
    %4611 = vmatpush.msra.mxu0 0.0
    %4612 = vmatpush.msra.mxu0 0.0
    %4613 = vmatpush.msra.mxu0 0.0
    %4614 = vmatpush.msra.mxu0 0.0
    %4615 = vmatpush.msra.mxu0 %v4307
    %4616 = vmatpush.msra.mxu0 %v4306
    %4617 = vmatpush.msra.mxu0 %v4305
    %4618 = vmatpush.msra.mxu0 %v4304
    %4619 = vmatmul.f32.gmra.mxu0 %v1710
    %v4620 = vpop.f32.mrf.mxu0
    %v4621 = vadd.f32 %v4601, %v4620
    %4622 = vmatmul.f32.gmra.mxu0 %v1713
    %v4623 = vpop.f32.mrf.mxu0
    %v4624 = vadd.f32 %v4601, %v4623
    %4625 = vdwg.mxu0
    %v4627 = vperm.slane %v4331, 0
    %4629 = vmatpush.msra.mxu0 0.0
    %4630 = vmatpush.msra.mxu0 0.0
    %4631 = vmatpush.msra.mxu0 0.0
    %4632 = vmatpush.msra.mxu0 0.0
    %4633 = vmatpush.msra.mxu0 0.0
    %4634 = vmatpush.msra.mxu0 0.0
    %4635 = vmatpush.msra.mxu0 0.0
    %4636 = vmatpush.msra.mxu0 0.0
    %4637 = vmatpush.msra.mxu0 0.0
    %4638 = vmatpush.msra.mxu0 0.0
    %4639 = vmatpush.msra.mxu0 0.0
    %4640 = vmatpush.msra.mxu0 0.0
    %4641 = vmatpush.msra.mxu0 %v4311
    %4642 = vmatpush.msra.mxu0 %v4310
    %4643 = vmatpush.msra.mxu0 %v4309
    %4644 = vmatpush.msra.mxu0 %v4308
    %4645 = vmatmul.f32.gmra.mxu0 %v1710
    %v4646 = vpop.f32.mrf.mxu0
    %v4647 = vadd.f32 %v4627, %v4646
    %4648 = vmatmul.f32.gmra.mxu0 %v1713
    %v4649 = vpop.f32.mrf.mxu0
    %v4650 = vadd.f32 %v4627, %v4649
    %4651 = vdwg.mxu0
    %v4653 = vsel %vm645, %v4361, 0
    %v4656 = vsel %vm645, %v4465, 0
    %4658 = vmatpush.xpose.msra.mxu0 0.0
    %4659 = vmatpush.xpose.msra.mxu0 0.0
    %4660 = vmatpush.xpose.msra.mxu0 0.0
    %4661 = vmatpush.xpose.msra.mxu0 0.0
    %4662 = vmatpush.xpose.msra.mxu0 0.0
    %4663 = vmatpush.xpose.msra.mxu0 0.0
    %4664 = vmatpush.xpose.msra.mxu0 0.0
    %4665 = vmatpush.xpose.msra.mxu0 0.0
    %4666 = vmatpush.xpose.msra.mxu0 0.0
    %4667 = vmatpush.xpose.msra.mxu0 0.0
    %4668 = vmatpush.xpose.msra.mxu0 0.0
    %4669 = vmatpush.xpose.msra.mxu0 0.0
    %4670 = vmatpush.xpose.msra.mxu0 0.0
    %4671 = vmatpush.xpose.msra.mxu0 0.0
    %4672 = vmatpush.xpose.msra.mxu0 0.0
    %4673 = vmatpush.xpose.msra.mxu0 %v4656
    %4674 = vmatmul.f32.gmra.mxu0 %v4653
    %v4675 = vpop.f32.mrf.mxu0
    %v4676 = vadd.f32 0.0, %v4675
    %4677 = vdwg.mxu0
    %v4678 = vmul.f32 %v4676, 0.35355338
    %v4679 = vadd.f32 %v4678, %v1947
    %v4680 = vsel %vm645, %v4679, -inf
    %4681 = vmax.xlane.f32.xlu0 %v4680
    %v4682 = vpop.xlane.xlu0 %4681
    %v4683 = vsub.f32 %v4679, %v4682
    %v4684 = vmul.f32 %v4683, 1.442695
    %v4685 = vpow.pop %v4684
    %v4686 = vsel %vm645, %v4685, 0.0
    %4687 = vadd.xlane.f32.xlu0 %v4686
    %v4688 = vpop.xlane.xlu0 %4687
    %v4689 = vrcp.pop %v4688
    %v4690 = vmul.f32 %v4688, %v4689
    %v4691 = vsub.f32 1.0, %v4690
    %v4692 = vmul.f32 %v4689, %v4691
    %v4693 = vadd.f32 %v4689, %v4692
    %vm4694 = vweird.f32 %v4688
    %vm4695 = vweird.f32 %v4689
    %vm4696 = vmor %vm4694, %vm4695
    %v4697 = vsel %vm4696, %v4689, %v4693
    %v4698 = vand.u32 2147483647, %v4688
    %vm4699 = vcmp.eq.f32.partialorder %v4698, 8.507059e+37
    %v4700 = vand.u32 %v4688, 2147483648
    %v4701 = vor.u32 1.1754944e-38, %v4700
    %v4702 = vsel %vm4699, %v4701, %v4697
    %v4703 = vmul.f32 %v4685, %v4702
    %v4705 = vsel %vm645, %v4703, 0
    %4707 = vmatpush.msra.mxu0 0.0
    %4708 = vmatpush.msra.mxu0 0.0
    %4709 = vmatpush.msra.mxu0 0.0
    %4710 = vmatpush.msra.mxu0 0.0
    %4711 = vmatpush.msra.mxu0 0.0
    %4712 = vmatpush.msra.mxu0 0.0
    %4713 = vmatpush.msra.mxu0 0.0
    %4714 = vmatpush.msra.mxu0 0.0
    %4715 = vmatpush.msra.mxu0 0.0
    %4716 = vmatpush.msra.mxu0 0.0
    %4717 = vmatpush.msra.mxu0 0.0
    %4718 = vmatpush.msra.mxu0 0.0
    %4719 = vmatpush.msra.mxu0 0.0
    %4720 = vmatpush.msra.mxu0 0.0
    %4721 = vmatpush.msra.mxu0 0.0
    %4722 = vmatpush.msra.mxu0 %v4569
    %4723 = vmatmul.f32.gmra.mxu0 %v4705
    %v4724 = vpop.f32.mrf.mxu0
    %v4725 = vadd.f32 0.0, %v4724
    %4726 = vdwg.mxu0
    %v4728 = vsel %vm645, %v4387, 0
    %v4731 = vsel %vm645, %v4491, 0
    %4733 = vmatpush.xpose.msra.mxu0 0.0
    %4734 = vmatpush.xpose.msra.mxu0 0.0
    %4735 = vmatpush.xpose.msra.mxu0 0.0
    %4736 = vmatpush.xpose.msra.mxu0 0.0
    %4737 = vmatpush.xpose.msra.mxu0 0.0
    %4738 = vmatpush.xpose.msra.mxu0 0.0
    %4739 = vmatpush.xpose.msra.mxu0 0.0
    %4740 = vmatpush.xpose.msra.mxu0 0.0
    %4741 = vmatpush.xpose.msra.mxu0 0.0
    %4742 = vmatpush.xpose.msra.mxu0 0.0
    %4743 = vmatpush.xpose.msra.mxu0 0.0
    %4744 = vmatpush.xpose.msra.mxu0 0.0
    %4745 = vmatpush.xpose.msra.mxu0 0.0
    %4746 = vmatpush.xpose.msra.mxu0 0.0
    %4747 = vmatpush.xpose.msra.mxu0 0.0
    %4748 = vmatpush.xpose.msra.mxu0 %v4731
    %4749 = vmatmul.f32.gmra.mxu0 %v4728
    %v4750 = vpop.f32.mrf.mxu0
    %v4751 = vadd.f32 0.0, %v4750
    %4752 = vdwg.mxu0
    %v4753 = vmul.f32 %v4751, 0.35355338
    %v4754 = vadd.f32 %v4753, %v1947
    %v4755 = vsel %vm645, %v4754, -inf
    %4756 = vmax.xlane.f32.xlu0 %v4755
    %v4757 = vpop.xlane.xlu0 %4756
    %v4758 = vsub.f32 %v4754, %v4757
    %v4759 = vmul.f32 %v4758, 1.442695
    %v4760 = vpow.pop %v4759
    %v4761 = vsel %vm645, %v4760, 0.0
    %4762 = vadd.xlane.f32.xlu0 %v4761
    %v4763 = vpop.xlane.xlu0 %4762
    %v4764 = vrcp.pop %v4763
    %v4765 = vmul.f32 %v4763, %v4764
    %v4766 = vsub.f32 1.0, %v4765
    %v4767 = vmul.f32 %v4764, %v4766
    %v4768 = vadd.f32 %v4764, %v4767
    %vm4769 = vweird.f32 %v4763
    %vm4770 = vweird.f32 %v4764
    %vm4771 = vmor %vm4769, %vm4770
    %v4772 = vsel %vm4771, %v4764, %v4768
    %v4773 = vand.u32 2147483647, %v4763
    %vm4774 = vcmp.eq.f32.partialorder %v4773, 8.507059e+37
    %v4775 = vand.u32 %v4763, 2147483648
    %v4776 = vor.u32 1.1754944e-38, %v4775
    %v4777 = vsel %vm4774, %v4776, %v4772
    %v4778 = vmul.f32 %v4760, %v4777
    %v4780 = vsel %vm645, %v4778, 0
    %4782 = vmatpush.msra.mxu0 0.0
    %4783 = vmatpush.msra.mxu0 0.0
    %4784 = vmatpush.msra.mxu0 0.0
    %4785 = vmatpush.msra.mxu0 0.0
    %4786 = vmatpush.msra.mxu0 0.0
    %4787 = vmatpush.msra.mxu0 0.0
    %4788 = vmatpush.msra.mxu0 0.0
    %4789 = vmatpush.msra.mxu0 0.0
    %4790 = vmatpush.msra.mxu0 0.0
    %4791 = vmatpush.msra.mxu0 0.0
    %4792 = vmatpush.msra.mxu0 0.0
    %4793 = vmatpush.msra.mxu0 0.0
    %4794 = vmatpush.msra.mxu0 0.0
    %4795 = vmatpush.msra.mxu0 0.0
    %4796 = vmatpush.msra.mxu0 0.0
    %4797 = vmatpush.msra.mxu0 %v4595
    %4798 = vmatmul.f32.gmra.mxu0 %v4780
    %v4799 = vpop.f32.mrf.mxu0
    %v4800 = vadd.f32 0.0, %v4799
    %4801 = vdwg.mxu0
    %v4803 = vsel %vm645, %v4800, 0
    %4805 = vmatpush.msra.mxu0 0.0
    %4806 = vmatpush.msra.mxu0 0.0
    %4807 = vmatpush.msra.mxu0 0.0
    %4808 = vmatpush.msra.mxu0 0.0
    %4809 = vmatpush.msra.mxu0 0.0
    %4810 = vmatpush.msra.mxu0 0.0
    %4811 = vmatpush.msra.mxu0 0.0
    %4812 = vmatpush.msra.mxu0 0.0
    %4813 = vmatpush.msra.mxu0 0.0
    %4814 = vmatpush.msra.mxu0 0.0
    %4815 = vmatpush.msra.mxu0 0.0
    %4816 = vmatpush.msra.mxu0 0.0
    %4817 = vmatpush.msra.mxu0 0.0
    %4818 = vmatpush.msra.mxu0 0.0
    %4819 = vmatpush.msra.mxu0 0.0
    %4820 = vmatpush.msra.mxu0 %v4314
    %4821 = vmatmul.f32.gmra.mxu0 %v4803
    %v4822 = vpop.f32.mrf.mxu0
    %v4823 = vadd.f32 0.0, %v4822
    %4824 = vdwg.mxu0
    %v4826 = vsel %vm645, %v4413, 0
    %v4829 = vsel %vm645, %v4517, 0
    %4831 = vmatpush.xpose.msra.mxu0 0.0
    %4832 = vmatpush.xpose.msra.mxu0 0.0
    %4833 = vmatpush.xpose.msra.mxu0 0.0
    %4834 = vmatpush.xpose.msra.mxu0 0.0
    %4835 = vmatpush.xpose.msra.mxu0 0.0
    %4836 = vmatpush.xpose.msra.mxu0 0.0
    %4837 = vmatpush.xpose.msra.mxu0 0.0
    %4838 = vmatpush.xpose.msra.mxu0 0.0
    %4839 = vmatpush.xpose.msra.mxu0 0.0
    %4840 = vmatpush.xpose.msra.mxu0 0.0
    %4841 = vmatpush.xpose.msra.mxu0 0.0
    %4842 = vmatpush.xpose.msra.mxu0 0.0
    %4843 = vmatpush.xpose.msra.mxu0 0.0
    %4844 = vmatpush.xpose.msra.mxu0 0.0
    %4845 = vmatpush.xpose.msra.mxu0 0.0
    %4846 = vmatpush.xpose.msra.mxu0 %v4829
    %4847 = vmatmul.f32.gmra.mxu0 %v4826
    %v4848 = vpop.f32.mrf.mxu0
    %v4849 = vadd.f32 0.0, %v4848
    %4850 = vdwg.mxu0
    %v4851 = vmul.f32 %v4849, 0.35355338
    %v4852 = vadd.f32 %v4851, %v1947
    %v4853 = vsel %vm645, %v4852, -inf
    %4854 = vmax.xlane.f32.xlu0 %v4853
    %v4855 = vpop.xlane.xlu0 %4854
    %v4856 = vsub.f32 %v4852, %v4855
    %v4857 = vmul.f32 %v4856, 1.442695
    %v4858 = vpow.pop %v4857
    %v4859 = vsel %vm645, %v4858, 0.0
    %4860 = vadd.xlane.f32.xlu0 %v4859
    %v4861 = vpop.xlane.xlu0 %4860
    %v4862 = vrcp.pop %v4861
    %v4863 = vmul.f32 %v4861, %v4862
    %v4864 = vsub.f32 1.0, %v4863
    %v4865 = vmul.f32 %v4862, %v4864
    %v4866 = vadd.f32 %v4862, %v4865
    %vm4867 = vweird.f32 %v4861
    %vm4868 = vweird.f32 %v4862
    %vm4869 = vmor %vm4867, %vm4868
    %v4870 = vsel %vm4869, %v4862, %v4866
    %v4871 = vand.u32 2147483647, %v4861
    %vm4872 = vcmp.eq.f32.partialorder %v4871, 8.507059e+37
    %v4873 = vand.u32 %v4861, 2147483648
    %v4874 = vor.u32 1.1754944e-38, %v4873
    %v4875 = vsel %vm4872, %v4874, %v4870
    %v4876 = vmul.f32 %v4858, %v4875
    %v4878 = vsel %vm645, %v4876, 0
    %4880 = vmatpush.msra.mxu0 0.0
    %4881 = vmatpush.msra.mxu0 0.0
    %4882 = vmatpush.msra.mxu0 0.0
    %4883 = vmatpush.msra.mxu0 0.0
    %4884 = vmatpush.msra.mxu0 0.0
    %4885 = vmatpush.msra.mxu0 0.0
    %4886 = vmatpush.msra.mxu0 0.0
    %4887 = vmatpush.msra.mxu0 0.0
    %4888 = vmatpush.msra.mxu0 0.0
    %4889 = vmatpush.msra.mxu0 0.0
    %4890 = vmatpush.msra.mxu0 0.0
    %4891 = vmatpush.msra.mxu0 0.0
    %4892 = vmatpush.msra.mxu0 0.0
    %4893 = vmatpush.msra.mxu0 0.0
    %4894 = vmatpush.msra.mxu0 0.0
    %4895 = vmatpush.msra.mxu0 %v4621
    %4896 = vmatmul.f32.gmra.mxu0 %v4878
    %v4897 = vpop.f32.mrf.mxu0
    %v4898 = vadd.f32 0.0, %v4897
    %4899 = vdwg.mxu0
    %v4901 = vsel %vm645, %v4439, 0
    %v4904 = vsel %vm645, %v4543, 0
    %4906 = vmatpush.xpose.msra.mxu0 0.0
    %4907 = vmatpush.xpose.msra.mxu0 0.0
    %4908 = vmatpush.xpose.msra.mxu0 0.0
    %4909 = vmatpush.xpose.msra.mxu0 0.0
    %4910 = vmatpush.xpose.msra.mxu0 0.0
    %4911 = vmatpush.xpose.msra.mxu0 0.0
    %4912 = vmatpush.xpose.msra.mxu0 0.0
    %4913 = vmatpush.xpose.msra.mxu0 0.0
    %4914 = vmatpush.xpose.msra.mxu0 0.0
    %4915 = vmatpush.xpose.msra.mxu0 0.0
    %4916 = vmatpush.xpose.msra.mxu0 0.0
    %4917 = vmatpush.xpose.msra.mxu0 0.0
    %4918 = vmatpush.xpose.msra.mxu0 0.0
    %4919 = vmatpush.xpose.msra.mxu0 0.0
    %4920 = vmatpush.xpose.msra.mxu0 0.0
    %4921 = vmatpush.xpose.msra.mxu0 %v4904
    %4922 = vmatmul.f32.gmra.mxu0 %v4901
    %v4923 = vpop.f32.mrf.mxu0
    %v4924 = vadd.f32 0.0, %v4923
    %4925 = vdwg.mxu0
    %v4926 = vmul.f32 %v4924, 0.35355338
    %v4927 = vadd.f32 %v4926, %v1947
    %v4928 = vsel %vm645, %v4927, -inf
    %4929 = vmax.xlane.f32.xlu0 %v4928
    %v4930 = vpop.xlane.xlu0 %4929
    %v4931 = vsub.f32 %v4927, %v4930
    %v4932 = vmul.f32 %v4931, 1.442695
    %v4933 = vpow.pop %v4932
    %v4934 = vsel %vm645, %v4933, 0.0
    %4935 = vadd.xlane.f32.xlu0 %v4934
    %v4936 = vpop.xlane.xlu0 %4935
    %v4937 = vrcp.pop %v4936
    %v4938 = vmul.f32 %v4936, %v4937
    %v4939 = vsub.f32 1.0, %v4938
    %v4940 = vmul.f32 %v4937, %v4939
    %v4941 = vadd.f32 %v4937, %v4940
    %vm4942 = vweird.f32 %v4936
    %vm4943 = vweird.f32 %v4937
    %vm4944 = vmor %vm4942, %vm4943
    %v4945 = vsel %vm4944, %v4937, %v4941
    %v4946 = vand.u32 2147483647, %v4936
    %vm4947 = vcmp.eq.f32.partialorder %v4946, 8.507059e+37
    %v4948 = vand.u32 %v4936, 2147483648
    %v4949 = vor.u32 1.1754944e-38, %v4948
    %v4950 = vsel %vm4947, %v4949, %v4945
    %v4951 = vmul.f32 %v4933, %v4950
    %v4953 = vsel %vm645, %v4951, 0
    %4955 = vmatpush.msra.mxu0 0.0
    %4956 = vmatpush.msra.mxu0 0.0
    %4957 = vmatpush.msra.mxu0 0.0
    %4958 = vmatpush.msra.mxu0 0.0
    %4959 = vmatpush.msra.mxu0 0.0
    %4960 = vmatpush.msra.mxu0 0.0
    %4961 = vmatpush.msra.mxu0 0.0
    %4962 = vmatpush.msra.mxu0 0.0
    %4963 = vmatpush.msra.mxu0 0.0
    %4964 = vmatpush.msra.mxu0 0.0
    %4965 = vmatpush.msra.mxu0 0.0
    %4966 = vmatpush.msra.mxu0 0.0
    %4967 = vmatpush.msra.mxu0 0.0
    %4968 = vmatpush.msra.mxu0 0.0
    %4969 = vmatpush.msra.mxu0 0.0
    %4970 = vmatpush.msra.mxu0 %v4647
    %4971 = vmatmul.f32.gmra.mxu0 %v4953
    %v4972 = vpop.f32.mrf.mxu0
    %v4973 = vadd.f32 0.0, %v4972
    %4974 = vdwg.mxu0
    %v4976 = vsel %vm645, %v4973, 0
    %4978 = vmatpush.msra.mxu0 0.0
    %4979 = vmatpush.msra.mxu0 0.0
    %4980 = vmatpush.msra.mxu0 0.0
    %4981 = vmatpush.msra.mxu0 0.0
    %4982 = vmatpush.msra.mxu0 0.0
    %4983 = vmatpush.msra.mxu0 0.0
    %4984 = vmatpush.msra.mxu0 0.0
    %4985 = vmatpush.msra.mxu0 0.0
    %4986 = vmatpush.msra.mxu0 0.0
    %4987 = vmatpush.msra.mxu0 0.0
    %4988 = vmatpush.msra.mxu0 0.0
    %4989 = vmatpush.msra.mxu0 0.0
    %4990 = vmatpush.msra.mxu0 0.0
    %4991 = vmatpush.msra.mxu0 0.0
    %4992 = vmatpush.msra.mxu0 0.0
    %4993 = vmatpush.msra.mxu0 %v4316
    %4994 = vmatmul.f32.gmra.mxu0 %v4976
    %v4995 = vpop.f32.mrf.mxu0
    %v4996 = vadd.f32 0.0, %v4995
    %4997 = vdwg.mxu0
    %v4999 = vsel %vm645, %v4725, 0
    %5001 = vmatpush.msra.mxu0 0.0
    %5002 = vmatpush.msra.mxu0 0.0
    %5003 = vmatpush.msra.mxu0 0.0
    %5004 = vmatpush.msra.mxu0 0.0
    %5005 = vmatpush.msra.mxu0 0.0
    %5006 = vmatpush.msra.mxu0 0.0
    %5007 = vmatpush.msra.mxu0 0.0
    %5008 = vmatpush.msra.mxu0 0.0
    %5009 = vmatpush.msra.mxu0 0.0
    %5010 = vmatpush.msra.mxu0 0.0
    %5011 = vmatpush.msra.mxu0 0.0
    %5012 = vmatpush.msra.mxu0 0.0
    %5013 = vmatpush.msra.mxu0 0.0
    %5014 = vmatpush.msra.mxu0 0.0
    %5015 = vmatpush.msra.mxu0 0.0
    %5016 = vmatpush.msra.mxu0 %v4313
    %5017 = vmatmul.f32.gmra.mxu0 %v4999
    %v5018 = vpop.f32.mrf.mxu0
    %v5019 = vadd.f32 %v4823, %v5018
    %5020 = vdwg.mxu0
    %v5022 = vsel %vm645, %v4898, 0
    %5024 = vmatpush.msra.mxu0 0.0
    %5025 = vmatpush.msra.mxu0 0.0
    %5026 = vmatpush.msra.mxu0 0.0
    %5027 = vmatpush.msra.mxu0 0.0
    %5028 = vmatpush.msra.mxu0 0.0
    %5029 = vmatpush.msra.mxu0 0.0
    %5030 = vmatpush.msra.mxu0 0.0
    %5031 = vmatpush.msra.mxu0 0.0
    %5032 = vmatpush.msra.mxu0 0.0
    %5033 = vmatpush.msra.mxu0 0.0
    %5034 = vmatpush.msra.mxu0 0.0
    %5035 = vmatpush.msra.mxu0 0.0
    %5036 = vmatpush.msra.mxu0 0.0
    %5037 = vmatpush.msra.mxu0 0.0
    %5038 = vmatpush.msra.mxu0 0.0
    %5039 = vmatpush.msra.mxu0 %v4315
    %5040 = vmatmul.f32.gmra.mxu0 %v5022
    %v5041 = vpop.f32.mrf.mxu0
    %v5042 = vadd.f32 %v4996, %v5041
    %5043 = vdwg.mxu0
    %v5044 = vadd.f32 %v5019, %v5042
    %v5046 = vperm.slane %v4333, 0
    %v5048 = vadd.f32 %v5044, %v5046
    %v5050 = vsel %vm645, %v4364, 0
    %v5053 = vsel %vm645, %v4468, 0
    %5055 = vmatpush.xpose.msra.mxu0 0.0
    %5056 = vmatpush.xpose.msra.mxu0 0.0
    %5057 = vmatpush.xpose.msra.mxu0 0.0
    %5058 = vmatpush.xpose.msra.mxu0 0.0
    %5059 = vmatpush.xpose.msra.mxu0 0.0
    %5060 = vmatpush.xpose.msra.mxu0 0.0
    %5061 = vmatpush.xpose.msra.mxu0 0.0
    %5062 = vmatpush.xpose.msra.mxu0 0.0
    %5063 = vmatpush.xpose.msra.mxu0 0.0
    %5064 = vmatpush.xpose.msra.mxu0 0.0
    %5065 = vmatpush.xpose.msra.mxu0 0.0
    %5066 = vmatpush.xpose.msra.mxu0 0.0
    %5067 = vmatpush.xpose.msra.mxu0 0.0
    %5068 = vmatpush.xpose.msra.mxu0 0.0
    %5069 = vmatpush.xpose.msra.mxu0 0.0
    %5070 = vmatpush.xpose.msra.mxu0 %v5053
    %5071 = vmatmul.f32.gmra.mxu0 %v5050
    %v5072 = vpop.f32.mrf.mxu0
    %v5073 = vadd.f32 0.0, %v5072
    %5074 = vdwg.mxu0
    %v5075 = vmul.f32 %v5073, 0.35355338
    %v5076 = vadd.f32 %v5075, %v2345
    %v5077 = vsel %vm645, %v5076, -inf
    %5078 = vmax.xlane.f32.xlu0 %v5077
    %v5079 = vpop.xlane.xlu0 %5078
    %v5080 = vsub.f32 %v5076, %v5079
    %v5081 = vmul.f32 %v5080, 1.442695
    %v5082 = vpow.pop %v5081
    %v5083 = vsel %vm645, %v5082, 0.0
    %5084 = vadd.xlane.f32.xlu0 %v5083
    %v5085 = vpop.xlane.xlu0 %5084
    %v5086 = vrcp.pop %v5085
    %v5087 = vmul.f32 %v5085, %v5086
    %v5088 = vsub.f32 1.0, %v5087
    %v5089 = vmul.f32 %v5086, %v5088
    %v5090 = vadd.f32 %v5086, %v5089
    %vm5091 = vweird.f32 %v5085
    %vm5092 = vweird.f32 %v5086
    %vm5093 = vmor %vm5091, %vm5092
    %v5094 = vsel %vm5093, %v5086, %v5090
    %v5095 = vand.u32 2147483647, %v5085
    %vm5096 = vcmp.eq.f32.partialorder %v5095, 8.507059e+37
    %v5097 = vand.u32 %v5085, 2147483648
    %v5098 = vor.u32 1.1754944e-38, %v5097
    %v5099 = vsel %vm5096, %v5098, %v5094
    %v5100 = vmul.f32 %v5082, %v5099
    %v5102 = vsel %vm645, %v5100, 0
    %5104 = vmatpush.msra.mxu0 0.0
    %5105 = vmatpush.msra.mxu0 0.0
    %5106 = vmatpush.msra.mxu0 0.0
    %5107 = vmatpush.msra.mxu0 0.0
    %5108 = vmatpush.msra.mxu0 0.0
    %5109 = vmatpush.msra.mxu0 0.0
    %5110 = vmatpush.msra.mxu0 0.0
    %5111 = vmatpush.msra.mxu0 0.0
    %5112 = vmatpush.msra.mxu0 0.0
    %5113 = vmatpush.msra.mxu0 0.0
    %5114 = vmatpush.msra.mxu0 0.0
    %5115 = vmatpush.msra.mxu0 0.0
    %5116 = vmatpush.msra.mxu0 0.0
    %5117 = vmatpush.msra.mxu0 0.0
    %5118 = vmatpush.msra.mxu0 0.0
    %5119 = vmatpush.msra.mxu0 %v4572
    %5120 = vmatmul.f32.gmra.mxu0 %v5102
    %v5121 = vpop.f32.mrf.mxu0
    %v5122 = vadd.f32 0.0, %v5121
    %5123 = vdwg.mxu0
    %v5125 = vsel %vm645, %v4390, 0
    %v5128 = vsel %vm645, %v4494, 0
    %5130 = vmatpush.xpose.msra.mxu0 0.0
    %5131 = vmatpush.xpose.msra.mxu0 0.0
    %5132 = vmatpush.xpose.msra.mxu0 0.0
    %5133 = vmatpush.xpose.msra.mxu0 0.0
    %5134 = vmatpush.xpose.msra.mxu0 0.0
    %5135 = vmatpush.xpose.msra.mxu0 0.0
    %5136 = vmatpush.xpose.msra.mxu0 0.0
    %5137 = vmatpush.xpose.msra.mxu0 0.0
    %5138 = vmatpush.xpose.msra.mxu0 0.0
    %5139 = vmatpush.xpose.msra.mxu0 0.0
    %5140 = vmatpush.xpose.msra.mxu0 0.0
    %5141 = vmatpush.xpose.msra.mxu0 0.0
    %5142 = vmatpush.xpose.msra.mxu0 0.0
    %5143 = vmatpush.xpose.msra.mxu0 0.0
    %5144 = vmatpush.xpose.msra.mxu0 0.0
    %5145 = vmatpush.xpose.msra.mxu0 %v5128
    %5146 = vmatmul.f32.gmra.mxu0 %v5125
    %v5147 = vpop.f32.mrf.mxu0
    %v5148 = vadd.f32 0.0, %v5147
    %5149 = vdwg.mxu0
    %v5150 = vmul.f32 %v5148, 0.35355338
    %v5151 = vadd.f32 %v5150, %v2345
    %v5152 = vsel %vm645, %v5151, -inf
    %5153 = vmax.xlane.f32.xlu0 %v5152
    %v5154 = vpop.xlane.xlu0 %5153
    %v5155 = vsub.f32 %v5151, %v5154
    %v5156 = vmul.f32 %v5155, 1.442695
    %v5157 = vpow.pop %v5156
    %v5158 = vsel %vm645, %v5157, 0.0
    %5159 = vadd.xlane.f32.xlu0 %v5158
    %v5160 = vpop.xlane.xlu0 %5159
    %v5161 = vrcp.pop %v5160
    %v5162 = vmul.f32 %v5160, %v5161
    %v5163 = vsub.f32 1.0, %v5162
    %v5164 = vmul.f32 %v5161, %v5163
    %v5165 = vadd.f32 %v5161, %v5164
    %vm5166 = vweird.f32 %v5160
    %vm5167 = vweird.f32 %v5161
    %vm5168 = vmor %vm5166, %vm5167
    %v5169 = vsel %vm5168, %v5161, %v5165
    %v5170 = vand.u32 2147483647, %v5160
    %vm5171 = vcmp.eq.f32.partialorder %v5170, 8.507059e+37
    %v5172 = vand.u32 %v5160, 2147483648
    %v5173 = vor.u32 1.1754944e-38, %v5172
    %v5174 = vsel %vm5171, %v5173, %v5169
    %v5175 = vmul.f32 %v5157, %v5174
    %v5177 = vsel %vm645, %v5175, 0
    %5179 = vmatpush.msra.mxu0 0.0
    %5180 = vmatpush.msra.mxu0 0.0
    %5181 = vmatpush.msra.mxu0 0.0
    %5182 = vmatpush.msra.mxu0 0.0
    %5183 = vmatpush.msra.mxu0 0.0
    %5184 = vmatpush.msra.mxu0 0.0
    %5185 = vmatpush.msra.mxu0 0.0
    %5186 = vmatpush.msra.mxu0 0.0
    %5187 = vmatpush.msra.mxu0 0.0
    %5188 = vmatpush.msra.mxu0 0.0
    %5189 = vmatpush.msra.mxu0 0.0
    %5190 = vmatpush.msra.mxu0 0.0
    %5191 = vmatpush.msra.mxu0 0.0
    %5192 = vmatpush.msra.mxu0 0.0
    %5193 = vmatpush.msra.mxu0 0.0
    %5194 = vmatpush.msra.mxu0 %v4598
    %5195 = vmatmul.f32.gmra.mxu0 %v5177
    %v5196 = vpop.f32.mrf.mxu0
    %v5197 = vadd.f32 0.0, %v5196
    %5198 = vdwg.mxu0
    %v5200 = vsel %vm645, %v5197, 0
    %5202 = vmatpush.msra.mxu0 0.0
    %5203 = vmatpush.msra.mxu0 0.0
    %5204 = vmatpush.msra.mxu0 0.0
    %5205 = vmatpush.msra.mxu0 0.0
    %5206 = vmatpush.msra.mxu0 0.0
    %5207 = vmatpush.msra.mxu0 0.0
    %5208 = vmatpush.msra.mxu0 0.0
    %5209 = vmatpush.msra.mxu0 0.0
    %5210 = vmatpush.msra.mxu0 0.0
    %5211 = vmatpush.msra.mxu0 0.0
    %5212 = vmatpush.msra.mxu0 0.0
    %5213 = vmatpush.msra.mxu0 0.0
    %5214 = vmatpush.msra.mxu0 0.0
    %5215 = vmatpush.msra.mxu0 0.0
    %5216 = vmatpush.msra.mxu0 0.0
    %5217 = vmatpush.msra.mxu0 %v4314
    %5218 = vmatmul.f32.gmra.mxu0 %v5200
    %v5219 = vpop.f32.mrf.mxu0
    %v5220 = vadd.f32 0.0, %v5219
    %5221 = vdwg.mxu0
    %v5223 = vsel %vm645, %v4416, 0
    %v5226 = vsel %vm645, %v4520, 0
    %5228 = vmatpush.xpose.msra.mxu0 0.0
    %5229 = vmatpush.xpose.msra.mxu0 0.0
    %5230 = vmatpush.xpose.msra.mxu0 0.0
    %5231 = vmatpush.xpose.msra.mxu0 0.0
    %5232 = vmatpush.xpose.msra.mxu0 0.0
    %5233 = vmatpush.xpose.msra.mxu0 0.0
    %5234 = vmatpush.xpose.msra.mxu0 0.0
    %5235 = vmatpush.xpose.msra.mxu0 0.0
    %5236 = vmatpush.xpose.msra.mxu0 0.0
    %5237 = vmatpush.xpose.msra.mxu0 0.0
    %5238 = vmatpush.xpose.msra.mxu0 0.0
    %5239 = vmatpush.xpose.msra.mxu0 0.0
    %5240 = vmatpush.xpose.msra.mxu0 0.0
    %5241 = vmatpush.xpose.msra.mxu0 0.0
    %5242 = vmatpush.xpose.msra.mxu0 0.0
    %5243 = vmatpush.xpose.msra.mxu0 %v5226
    %5244 = vmatmul.f32.gmra.mxu0 %v5223
    %v5245 = vpop.f32.mrf.mxu0
    %v5246 = vadd.f32 0.0, %v5245
    %5247 = vdwg.mxu0
    %v5248 = vmul.f32 %v5246, 0.35355338
    %v5249 = vadd.f32 %v5248, %v2345
    %v5250 = vsel %vm645, %v5249, -inf
    %5251 = vmax.xlane.f32.xlu0 %v5250
    %v5252 = vpop.xlane.xlu0 %5251
    %v5253 = vsub.f32 %v5249, %v5252
    %v5254 = vmul.f32 %v5253, 1.442695
    %v5255 = vpow.pop %v5254
    %v5256 = vsel %vm645, %v5255, 0.0
    %5257 = vadd.xlane.f32.xlu0 %v5256
    %v5258 = vpop.xlane.xlu0 %5257
    %v5259 = vrcp.pop %v5258
    %v5260 = vmul.f32 %v5258, %v5259
    %v5261 = vsub.f32 1.0, %v5260
    %v5262 = vmul.f32 %v5259, %v5261
    %v5263 = vadd.f32 %v5259, %v5262
    %vm5264 = vweird.f32 %v5258
    %vm5265 = vweird.f32 %v5259
    %vm5266 = vmor %vm5264, %vm5265
    %v5267 = vsel %vm5266, %v5259, %v5263
    %v5268 = vand.u32 2147483647, %v5258
    %vm5269 = vcmp.eq.f32.partialorder %v5268, 8.507059e+37
    %v5270 = vand.u32 %v5258, 2147483648
    %v5271 = vor.u32 1.1754944e-38, %v5270
    %v5272 = vsel %vm5269, %v5271, %v5267
    %v5273 = vmul.f32 %v5255, %v5272
    %v5275 = vsel %vm645, %v5273, 0
    %5277 = vmatpush.msra.mxu0 0.0
    %5278 = vmatpush.msra.mxu0 0.0
    %5279 = vmatpush.msra.mxu0 0.0
    %5280 = vmatpush.msra.mxu0 0.0
    %5281 = vmatpush.msra.mxu0 0.0
    %5282 = vmatpush.msra.mxu0 0.0
    %5283 = vmatpush.msra.mxu0 0.0
    %5284 = vmatpush.msra.mxu0 0.0
    %5285 = vmatpush.msra.mxu0 0.0
    %5286 = vmatpush.msra.mxu0 0.0
    %5287 = vmatpush.msra.mxu0 0.0
    %5288 = vmatpush.msra.mxu0 0.0
    %5289 = vmatpush.msra.mxu0 0.0
    %5290 = vmatpush.msra.mxu0 0.0
    %5291 = vmatpush.msra.mxu0 0.0
    %5292 = vmatpush.msra.mxu0 %v4624
    %5293 = vmatmul.f32.gmra.mxu0 %v5275
    %v5294 = vpop.f32.mrf.mxu0
    %v5295 = vadd.f32 0.0, %v5294
    %5296 = vdwg.mxu0
    %v5298 = vsel %vm645, %v4442, 0
    %v5301 = vsel %vm645, %v4546, 0
    %5303 = vmatpush.xpose.msra.mxu0 0.0
    %5304 = vmatpush.xpose.msra.mxu0 0.0
    %5305 = vmatpush.xpose.msra.mxu0 0.0
    %5306 = vmatpush.xpose.msra.mxu0 0.0
    %5307 = vmatpush.xpose.msra.mxu0 0.0
    %5308 = vmatpush.xpose.msra.mxu0 0.0
    %5309 = vmatpush.xpose.msra.mxu0 0.0
    %5310 = vmatpush.xpose.msra.mxu0 0.0
    %5311 = vmatpush.xpose.msra.mxu0 0.0
    %5312 = vmatpush.xpose.msra.mxu0 0.0
    %5313 = vmatpush.xpose.msra.mxu0 0.0
    %5314 = vmatpush.xpose.msra.mxu0 0.0
    %5315 = vmatpush.xpose.msra.mxu0 0.0
    %5316 = vmatpush.xpose.msra.mxu0 0.0
    %5317 = vmatpush.xpose.msra.mxu0 0.0
    %5318 = vmatpush.xpose.msra.mxu0 %v5301
    %5319 = vmatmul.f32.gmra.mxu0 %v5298
    %v5320 = vpop.f32.mrf.mxu0
    %v5321 = vadd.f32 0.0, %v5320
    %5322 = vdwg.mxu0
    %v5323 = vmul.f32 %v5321, 0.35355338
    %v5324 = vadd.f32 %v5323, %v2345
    %v5325 = vsel %vm645, %v5324, -inf
    %5326 = vmax.xlane.f32.xlu0 %v5325
    %v5327 = vpop.xlane.xlu0 %5326
    %v5328 = vsub.f32 %v5324, %v5327
    %v5329 = vmul.f32 %v5328, 1.442695
    %v5330 = vpow.pop %v5329
    %v5331 = vsel %vm645, %v5330, 0.0
    %5332 = vadd.xlane.f32.xlu0 %v5331
    %v5333 = vpop.xlane.xlu0 %5332
    %v5334 = vrcp.pop %v5333
    %v5335 = vmul.f32 %v5333, %v5334
    %v5336 = vsub.f32 1.0, %v5335
    %v5337 = vmul.f32 %v5334, %v5336
    %v5338 = vadd.f32 %v5334, %v5337
    %vm5339 = vweird.f32 %v5333
    %vm5340 = vweird.f32 %v5334
    %vm5341 = vmor %vm5339, %vm5340
    %v5342 = vsel %vm5341, %v5334, %v5338
    %v5343 = vand.u32 2147483647, %v5333
    %vm5344 = vcmp.eq.f32.partialorder %v5343, 8.507059e+37
    %v5345 = vand.u32 %v5333, 2147483648
    %v5346 = vor.u32 1.1754944e-38, %v5345
    %v5347 = vsel %vm5344, %v5346, %v5342
    %v5348 = vmul.f32 %v5330, %v5347
    %v5350 = vsel %vm645, %v5348, 0
    %5352 = vmatpush.msra.mxu0 0.0
    %5353 = vmatpush.msra.mxu0 0.0
    %5354 = vmatpush.msra.mxu0 0.0
    %5355 = vmatpush.msra.mxu0 0.0
    %5356 = vmatpush.msra.mxu0 0.0
    %5357 = vmatpush.msra.mxu0 0.0
    %5358 = vmatpush.msra.mxu0 0.0
    %5359 = vmatpush.msra.mxu0 0.0
    %5360 = vmatpush.msra.mxu0 0.0
    %5361 = vmatpush.msra.mxu0 0.0
    %5362 = vmatpush.msra.mxu0 0.0
    %5363 = vmatpush.msra.mxu0 0.0
    %5364 = vmatpush.msra.mxu0 0.0
    %5365 = vmatpush.msra.mxu0 0.0
    %5366 = vmatpush.msra.mxu0 0.0
    %5367 = vmatpush.msra.mxu0 %v4650
    %5368 = vmatmul.f32.gmra.mxu0 %v5350
    %v5369 = vpop.f32.mrf.mxu0
    %v5370 = vadd.f32 0.0, %v5369
    %5371 = vdwg.mxu0
    %v5373 = vsel %vm645, %v5370, 0
    %5375 = vmatpush.msra.mxu0 0.0
    %5376 = vmatpush.msra.mxu0 0.0
    %5377 = vmatpush.msra.mxu0 0.0
    %5378 = vmatpush.msra.mxu0 0.0
    %5379 = vmatpush.msra.mxu0 0.0
    %5380 = vmatpush.msra.mxu0 0.0
    %5381 = vmatpush.msra.mxu0 0.0
    %5382 = vmatpush.msra.mxu0 0.0
    %5383 = vmatpush.msra.mxu0 0.0
    %5384 = vmatpush.msra.mxu0 0.0
    %5385 = vmatpush.msra.mxu0 0.0
    %5386 = vmatpush.msra.mxu0 0.0
    %5387 = vmatpush.msra.mxu0 0.0
    %5388 = vmatpush.msra.mxu0 0.0
    %5389 = vmatpush.msra.mxu0 0.0
    %5390 = vmatpush.msra.mxu0 %v4316
    %5391 = vmatmul.f32.gmra.mxu0 %v5373
    %v5392 = vpop.f32.mrf.mxu0
    %v5393 = vadd.f32 0.0, %v5392
    %5394 = vdwg.mxu0
    %v5396 = vsel %vm645, %v5122, 0
    %5398 = vmatpush.msra.mxu0 0.0
    %5399 = vmatpush.msra.mxu0 0.0
    %5400 = vmatpush.msra.mxu0 0.0
    %5401 = vmatpush.msra.mxu0 0.0
    %5402 = vmatpush.msra.mxu0 0.0
    %5403 = vmatpush.msra.mxu0 0.0
    %5404 = vmatpush.msra.mxu0 0.0
    %5405 = vmatpush.msra.mxu0 0.0
    %5406 = vmatpush.msra.mxu0 0.0
    %5407 = vmatpush.msra.mxu0 0.0
    %5408 = vmatpush.msra.mxu0 0.0
    %5409 = vmatpush.msra.mxu0 0.0
    %5410 = vmatpush.msra.mxu0 0.0
    %5411 = vmatpush.msra.mxu0 0.0
    %5412 = vmatpush.msra.mxu0 0.0
    %5413 = vmatpush.msra.mxu0 %v4313
    %5414 = vmatmul.f32.gmra.mxu0 %v5396
    %v5415 = vpop.f32.mrf.mxu0
    %v5416 = vadd.f32 %v5220, %v5415
    %5417 = vdwg.mxu0
    %v5419 = vsel %vm645, %v5295, 0
    %5421 = vmatpush.msra.mxu0 0.0
    %5422 = vmatpush.msra.mxu0 0.0
    %5423 = vmatpush.msra.mxu0 0.0
    %5424 = vmatpush.msra.mxu0 0.0
    %5425 = vmatpush.msra.mxu0 0.0
    %5426 = vmatpush.msra.mxu0 0.0
    %5427 = vmatpush.msra.mxu0 0.0
    %5428 = vmatpush.msra.mxu0 0.0
    %5429 = vmatpush.msra.mxu0 0.0
    %5430 = vmatpush.msra.mxu0 0.0
    %5431 = vmatpush.msra.mxu0 0.0
    %5432 = vmatpush.msra.mxu0 0.0
    %5433 = vmatpush.msra.mxu0 0.0
    %5434 = vmatpush.msra.mxu0 0.0
    %5435 = vmatpush.msra.mxu0 0.0
    %5436 = vmatpush.msra.mxu0 %v4315
    %5437 = vmatmul.f32.gmra.mxu0 %v5419
    %v5438 = vpop.f32.mrf.mxu0
    %v5439 = vadd.f32 %v5393, %v5438
    %5440 = vdwg.mxu0
    %v5441 = vadd.f32 %v5416, %v5439
    %v5442 = vadd.f32 %v5441, %v5046
    %v5443 = vadd.f32 %v4167, %v5048
    %v5444 = vadd.f32 %v4168, %v5442
    %s5445 = scalar_lea.vmem %s6, 5
    %v5446 = vld [vmem:[%s5445] sm:$0x1]
    %s5447 = scalar_lea.vmem %s7, 5
    %v5448 = vld [vmem:[%s5447] sm:$0x1]
    %v5449 = vsel %vm166, %v5443, 0.0
    %5450 = vadd.xlane.f32.xlu0 %v5449
    %v5451 = vpop.xlane.xlu0 %5450
    %v5452 = vsel %vm166, %v5444, 0.0
    %5453 = vadd.xlane.f32.xlu0 %v5452
    %v5454 = vpop.xlane.xlu0 %5453
    %v5455 = vmul.f32 %v5451, %v179
    %v5456 = vmul.f32 %v5454, %v179
    %v5457 = vsub.f32 %v5443, %v5455
    %v5458 = vsub.f32 %v5444, %v5456
    %v5459 = vmul.f32 %v5457, %v5457
    %v5460 = vmul.f32 %v5458, %v5458
    %v5461 = vsel %vm166, %v5459, 0.0
    %5462 = vadd.xlane.f32.xlu0 %v5461
    %v5463 = vpop.xlane.xlu0 %5462
    %v5464 = vsel %vm166, %v5460, 0.0
    %5465 = vadd.xlane.f32.xlu0 %v5464
    %v5466 = vpop.xlane.xlu0 %5465
    %v5467 = vmul.f32 %v5463, 0.032258064
    %v5468 = vmul.f32 %v5466, 0.032258064
    %v5469 = vrsqrt.pop %v5467
    %v5470 = vmul.f32 %v5469, %v5467
    %v5471 = vmul.f32 %v5470, %v5469
    %v5472 = vmul.f32 0.5, %v5471
    %v5473 = vsub.f32 1.5, %v5472
    %v5474 = vmul.f32 %v5469, %v5473
    %v5475 = vmul.f32 %v5467, %v5474
    %vm5476 = vcmp.eq.f32.partialorder %v5467, inf
    %v5477 = vsel %vm5476, %v5467, %v5475
    %vm5478 = vcmp.eq.f32.partialorder %v5467, 0.0
    %v5479 = vand.u32 %v5467, 2147483648
    %v5480 = vsel %vm5478, %v5479, %v5477
    %v5481 = vrsqrt.pop %v5468
    %v5482 = vmul.f32 %v5481, %v5468
    %v5483 = vmul.f32 %v5482, %v5481
    %v5484 = vmul.f32 0.5, %v5483
    %v5485 = vsub.f32 1.5, %v5484
    %v5486 = vmul.f32 %v5481, %v5485
    %v5487 = vmul.f32 %v5468, %v5486
    %vm5488 = vcmp.eq.f32.partialorder %v5468, inf
    %v5489 = vsel %vm5488, %v5468, %v5487
    %vm5490 = vcmp.eq.f32.partialorder %v5468, 0.0
    %v5491 = vand.u32 %v5468, 2147483648
    %v5492 = vsel %vm5490, %v5491, %v5489
    %v5493 = vadd.f32 %v5480, 1e-06
    %v5494 = vadd.f32 %v5492, 1e-06
    %v5495 = vrcp.pop %v5493
    %v5496 = vmul.f32 %v5493, %v5495
    %v5497 = vsub.f32 1.0, %v5496
    %v5498 = vmul.f32 %v5495, %v5497
    %v5499 = vadd.f32 %v5495, %v5498
    %vm5500 = vweird.f32 %v5493
    %vm5501 = vweird.f32 %v5495
    %vm5502 = vmor %vm5500, %vm5501
    %v5503 = vsel %vm5502, %v5495, %v5499
    %v5504 = vand.u32 2147483647, %v5493
    %vm5505 = vcmp.eq.f32.partialorder %v5504, 8.507059e+37
    %v5506 = vand.u32 %v5493, 2147483648
    %v5507 = vor.u32 1.1754944e-38, %v5506
    %v5508 = vsel %vm5505, %v5507, %v5503
    %v5509 = vmul.f32 1.0, %v5508
    %v5510 = vrcp.pop %v5494
    %v5511 = vmul.f32 %v5494, %v5510
    %v5512 = vsub.f32 1.0, %v5511
    %v5513 = vmul.f32 %v5510, %v5512
    %v5514 = vadd.f32 %v5510, %v5513
    %vm5515 = vweird.f32 %v5494
    %vm5516 = vweird.f32 %v5510
    %vm5517 = vmor %vm5515, %vm5516
    %v5518 = vsel %vm5517, %v5510, %v5514
    %v5519 = vand.u32 2147483647, %v5494
    %vm5520 = vcmp.eq.f32.partialorder %v5519, 8.507059e+37
    %v5521 = vand.u32 %v5494, 2147483648
    %v5522 = vor.u32 1.1754944e-38, %v5521
    %v5523 = vsel %vm5520, %v5522, %v5518
    %v5524 = vmul.f32 1.0, %v5523
    %v5525 = vmul.f32 %v5457, %v5509
    %v5526 = vmul.f32 %v5458, %v5524
    %v5528 = vperm.slane %v5446, 0
    %v5530 = vmul.f32 %v5528, %v5525
    %v5531 = vmul.f32 %v5528, %v5526
    %v5533 = vperm.slane %v5448, 0
    %v5535 = vadd.f32 %v5530, %v5533
    %v5536 = vadd.f32 %v5531, %v5533
    %s5537 = scalar_lea.vmem %s24, 32
    %v5538 = vld [vmem:[%s5537] sm:$0xff]
    %v5539 = vld [vmem:[%s5537 + $0x8] sm:$0xff]
    %v5540 = vld [vmem:[%s5537 + $0x10] sm:$0xff]
    %v5541 = vld [vmem:[%s5537 + $0x18] sm:$0xff]
    %s5542 = scalar_lea.vmem %s25, 1
    %v5543 = vld [vmem:[%s5542] sm:$0x1]
    %v5545 = vperm.slane %v5543, 0
    %v5548 = vsel %vm166, %v5535, 0
    %v5551 = vsel %vm166, %v5536, 0
    %5553 = vmatpush.msra.mxu0 0.0
    %5554 = vmatpush.msra.mxu0 0.0
    %5555 = vmatpush.msra.mxu0 0.0
    %5556 = vmatpush.msra.mxu0 0.0
    %5557 = vmatpush.msra.mxu0 0.0
    %5558 = vmatpush.msra.mxu0 0.0
    %5559 = vmatpush.msra.mxu0 0.0
    %5560 = vmatpush.msra.mxu0 0.0
    %5561 = vmatpush.msra.mxu0 0.0
    %5562 = vmatpush.msra.mxu0 0.0
    %5563 = vmatpush.msra.mxu0 0.0
    %5564 = vmatpush.msra.mxu0 0.0
    %5565 = vmatpush.msra.mxu0 %v5541
    %5566 = vmatpush.msra.mxu0 %v5540
    %5567 = vmatpush.msra.mxu0 %v5539
    %5568 = vmatpush.msra.mxu0 %v5538
    %5569 = vmatmul.f32.gmra.mxu0 %v5548
    %v5570 = vpop.f32.mrf.mxu0
    %v5571 = vadd.f32 %v5545, %v5570
    %5572 = vmatmul.f32.gmra.mxu0 %v5551
    %v5573 = vpop.f32.mrf.mxu0
    %v5574 = vadd.f32 %v5545, %v5573
    %5575 = vdwg.mxu0
    %v5576 = vmax.f32 %v5571, 0.0
    %v5577 = vmax.f32 %v5574, 0.0
    %s5578 = scalar_lea.vmem %s26, 128
    %v5579 = vld [vmem:[%s5578] sm:$0xff]
    %v5580 = vld [vmem:[%s5578 + $0x8] sm:$0xff]
    %v5581 = vld [vmem:[%s5578 + $0x10] sm:$0xff]
    %v5582 = vld [vmem:[%s5578 + $0x18] sm:$0xff]
    %v5583 = vld [vmem:[%s5578 + $0x20] sm:$0xff]
    %v5584 = vld [vmem:[%s5578 + $0x28] sm:$0xff]
    %v5585 = vld [vmem:[%s5578 + $0x30] sm:$0xff]
    %v5586 = vld [vmem:[%s5578 + $0x38] sm:$0xff]
    %v5587 = vld [vmem:[%s5578 + $0x40] sm:$0xff]
    %v5588 = vld [vmem:[%s5578 + $0x48] sm:$0xff]
    %v5589 = vld [vmem:[%s5578 + $0x50] sm:$0xff]
    %v5590 = vld [vmem:[%s5578 + $0x58] sm:$0xff]
    %v5591 = vld [vmem:[%s5578 + $0x60] sm:$0xff]
    %v5592 = vld [vmem:[%s5578 + $0x68] sm:$0xff]
    %v5593 = vld [vmem:[%s5578 + $0x70] sm:$0xff]
    %v5594 = vld [vmem:[%s5578 + $0x78] sm:$0xff]
    %5595 = vmatpush.msra.mxu0 %v5594
    %5596 = vmatpush.msra.mxu0 %v5593
    %5597 = vmatpush.msra.mxu0 %v5592
    %5598 = vmatpush.msra.mxu0 %v5591
    %5599 = vmatpush.msra.mxu0 %v5590
    %5600 = vmatpush.msra.mxu0 %v5589
    %5601 = vmatpush.msra.mxu0 %v5588
    %5602 = vmatpush.msra.mxu0 %v5587
    %5603 = vmatpush.msra.mxu0 %v5586
    %5604 = vmatpush.msra.mxu0 %v5585
    %5605 = vmatpush.msra.mxu0 %v5584
    %5606 = vmatpush.msra.mxu0 %v5583
    %5607 = vmatpush.msra.mxu0 %v5582
    %5608 = vmatpush.msra.mxu0 %v5581
    %5609 = vmatpush.msra.mxu0 %v5580
    %5610 = vmatpush.msra.mxu0 %v5579
    %5611 = vmatmul.f32.gmra.mxu0 %v5576
    %v5612 = vpop.f32.mrf.mxu0
    %v5613 = vadd.f32 0.0, %v5612
    %5614 = vmatmul.f32.gmra.mxu0 %v5577
    %v5615 = vpop.f32.mrf.mxu0
    %v5616 = vadd.f32 0.0, %v5615
    %5617 = vdwg.mxu0
    %v5618 = vadd.f32 %v5443, %v5613
    %v5619 = vadd.f32 %v5444, %v5616
    %s5620 = scalar_lea.vmem %s27, 1
    %v5621 = vld [vmem:[%s5620] sm:$0x1]
    %v5623 = vperm.slane %v5621, 0
    %v5625 = vadd.f32 %v5618, %v5623
    %v5626 = vadd.f32 %v5619, %v5623
    %s5627 = scalar_lea.vmem %s6, 6
    %v5628 = vld [vmem:[%s5627] sm:$0x1]
    %s5629 = scalar_lea.vmem %s7, 6
    %v5630 = vld [vmem:[%s5629] sm:$0x1]
    %v5631 = vsel %vm166, %v5625, 0.0
    %5632 = vadd.xlane.f32.xlu0 %v5631
    %v5633 = vpop.xlane.xlu0 %5632
    %v5634 = vsel %vm166, %v5626, 0.0
    %5635 = vadd.xlane.f32.xlu0 %v5634
    %v5636 = vpop.xlane.xlu0 %5635
    %v5637 = vmul.f32 %v5633, %v179
    %v5638 = vmul.f32 %v5636, %v179
    %v5639 = vsub.f32 %v5625, %v5637
    %v5640 = vsub.f32 %v5626, %v5638
    %v5641 = vmul.f32 %v5639, %v5639
    %v5642 = vmul.f32 %v5640, %v5640
    %v5643 = vsel %vm166, %v5641, 0.0
    %5644 = vadd.xlane.f32.xlu0 %v5643
    %v5645 = vpop.xlane.xlu0 %5644
    %v5646 = vsel %vm166, %v5642, 0.0
    %5647 = vadd.xlane.f32.xlu0 %v5646
    %v5648 = vpop.xlane.xlu0 %5647
    %v5649 = vmul.f32 %v5645, 0.032258064
    %v5650 = vmul.f32 %v5648, 0.032258064
    %v5651 = vrsqrt.pop %v5649
    %v5652 = vmul.f32 %v5651, %v5649
    %v5653 = vmul.f32 %v5652, %v5651
    %v5654 = vmul.f32 0.5, %v5653
    %v5655 = vsub.f32 1.5, %v5654
    %v5656 = vmul.f32 %v5651, %v5655
    %v5657 = vmul.f32 %v5649, %v5656
    %vm5658 = vcmp.eq.f32.partialorder %v5649, inf
    %v5659 = vsel %vm5658, %v5649, %v5657
    %vm5660 = vcmp.eq.f32.partialorder %v5649, 0.0
    %v5661 = vand.u32 %v5649, 2147483648
    %v5662 = vsel %vm5660, %v5661, %v5659
    %v5663 = vrsqrt.pop %v5650
    %v5664 = vmul.f32 %v5663, %v5650
    %v5665 = vmul.f32 %v5664, %v5663
    %v5666 = vmul.f32 0.5, %v5665
    %v5667 = vsub.f32 1.5, %v5666
    %v5668 = vmul.f32 %v5663, %v5667
    %v5669 = vmul.f32 %v5650, %v5668
    %vm5670 = vcmp.eq.f32.partialorder %v5650, inf
    %v5671 = vsel %vm5670, %v5650, %v5669
    %vm5672 = vcmp.eq.f32.partialorder %v5650, 0.0
    %v5673 = vand.u32 %v5650, 2147483648
    %v5674 = vsel %vm5672, %v5673, %v5671
    %v5675 = vadd.f32 %v5662, 1e-06
    %v5676 = vadd.f32 %v5674, 1e-06
    %v5677 = vrcp.pop %v5675
    %v5678 = vmul.f32 %v5675, %v5677
    %v5679 = vsub.f32 1.0, %v5678
    %v5680 = vmul.f32 %v5677, %v5679
    %v5681 = vadd.f32 %v5677, %v5680
    %vm5682 = vweird.f32 %v5675
    %vm5683 = vweird.f32 %v5677
    %vm5684 = vmor %vm5682, %vm5683
    %v5685 = vsel %vm5684, %v5677, %v5681
    %v5686 = vand.u32 2147483647, %v5675
    %vm5687 = vcmp.eq.f32.partialorder %v5686, 8.507059e+37
    %v5688 = vand.u32 %v5675, 2147483648
    %v5689 = vor.u32 1.1754944e-38, %v5688
    %v5690 = vsel %vm5687, %v5689, %v5685
    %v5691 = vmul.f32 1.0, %v5690
    %v5692 = vrcp.pop %v5676
    %v5693 = vmul.f32 %v5676, %v5692
    %v5694 = vsub.f32 1.0, %v5693
    %v5695 = vmul.f32 %v5692, %v5694
    %v5696 = vadd.f32 %v5692, %v5695
    %vm5697 = vweird.f32 %v5676
    %vm5698 = vweird.f32 %v5692
    %vm5699 = vmor %vm5697, %vm5698
    %v5700 = vsel %vm5699, %v5692, %v5696
    %v5701 = vand.u32 2147483647, %v5676
    %vm5702 = vcmp.eq.f32.partialorder %v5701, 8.507059e+37
    %v5703 = vand.u32 %v5676, 2147483648
    %v5704 = vor.u32 1.1754944e-38, %v5703
    %v5705 = vsel %vm5702, %v5704, %v5700
    %v5706 = vmul.f32 1.0, %v5705
    %v5707 = vmul.f32 %v5639, %v5691
    %v5708 = vmul.f32 %v5640, %v5706
    %v5710 = vperm.slane %v5628, 0
    %v5712 = vmul.f32 %v5710, %v5707
    %v5713 = vmul.f32 %v5710, %v5708
    %v5715 = vperm.slane %v5630, 0
    %v5717 = vadd.f32 %v5712, %v5715
    %v5718 = vadd.f32 %v5713, %v5715
    %5719 = vst.msk [vmem:[#allocation2] sm:$0xff] %vm166, %v5717
    %5720 = vst.msk [vmem:[#allocation2 + $0x8] sm:$0xff] %vm166, %v5718
    // Predicated region
    $region114: #{decoder_forward.1} parent=1 // pred_check
      _
    $region115: #{decoder_forward.1} parent=1 // pred_check_branch
      %5722 = sbr.rel (0) target = $region117
    $region116: #{decoder_forward.1} parent=1 // pred_region
      %5724 = vsyncadd [#allocation3], 0
      %s5725 = sshll.u32 [#allocation2], 4
      %s5726 = int_to_ptr.vmem [resolvable:$true] %s5725
      %s5727 = sshll.u32 %s28, 4
      %s5728 = int_to_ptr.hbm [resolvable:$true] %s5727
      %5733 = dma.vmem_to_hbm [thread:$0]  %s5726, 256, %s5728, [#allocation3], 128, 128, 8
    $region117: #{decoder_forward.1} parent=1 // pred_fallthru
      _
    // Predicated region
    $region118: #{decoder_forward.1} parent=1 // pred_check
      _
    $region119: #{decoder_forward.1} parent=1 // pred_check_branch
      %5735 = sbr.rel (0) target = $region121
    $region120: #{decoder_forward.1} parent=1 // pred_region
      %5737 = dma.done [#allocation3], 256
    $region121: #{decoder_forward.1} parent=1 // pred_fallthru
      _
    %5738 = vsyncpa [#allocation3], 1

</llo_original>
